<compile_context>
chip_gen: v5e
topology: v5e:2x2
jax: 0.10.0
libtpu: 0.0.40
codegen_flags: <defaults>
</compile_context>

<pallas_src>
import jax
import jax.numpy as jnp
from jax.experimental import pallas as pl
from jax.experimental.pallas import tpu as pltpu

# ---------------- config (small synthetic BLIP) ----------------
C, H, W = 3, 16, 16
PATCH = 8
D = 32
NUM_HEADS = 4
HEAD_DIM = D // NUM_HEADS          # 8
MLP_DIM = 128
S_TXT = 8
VOCAB = 100
VOCAB_PAD = 128                    # pad vocab to a full lane width for the one-hot embed matmul
ENC_TOKEN_ID = 2
LN_EPS = 1e-6
BATCH = 2
NUM_PICS = 2

NH_P = H // PATCH                  # 2
NW_P = W // PATCH                  # 2
N_PATCHES = NH_P * NW_P            # 4
S_VIS = N_PATCHES + 1              # 5 (CLS + patches)
S_VIS_PAD = 8                      # pad visual seq to a full sublane group; pad keys are masked
BP = BATCH * NUM_PICS              # 4
PATCH_DIM = C * PATCH * PATCH      # 192
NEG_INF = -1e30


# ---------------- in-kernel helpers (operate on VMEM-resident values) ----------------
def _layernorm(x, g, b):
    xf = x.astype(jnp.float32)
    mu = jnp.mean(xf, axis=-1, keepdims=True)
    var = jnp.mean((xf - mu) ** 2, axis=-1, keepdims=True)
    return (xf - mu) * jax.lax.rsqrt(var + LN_EPS) * g + b


def _heads_attention(q3, k3, v3, wo, bo, key_bias=None):
    """Multi-head attention, batched over samples via einsum; heads statically unrolled."""
    B, Sq, Dm = q3.shape
    scale = 1.0 / (HEAD_DIM ** 0.5)
    o_acc = jnp.zeros((B * Sq, Dm), jnp.float32)
    for h in range(NUM_HEADS):
        sl = slice(h * HEAD_DIM, (h + 1) * HEAD_DIM)
        qh, kh, vh = q3[:, :, sl], k3[:, :, sl], v3[:, :, sl]
        s = jnp.einsum("bqd,bkd->bqk", qh, kh, preferred_element_type=jnp.float32) * scale
        if key_bias is not None:
            s = s + key_bias                       # mask padded visual key positions
        s = s - jnp.max(s, axis=-1, keepdims=True)
        e = jnp.exp(s)
        prob = e * pl.reciprocal(jnp.sum(e, axis=-1, keepdims=True), approx=True)
        oh = jnp.einsum("bqk,bkd->bqd", prob, vh, preferred_element_type=jnp.float32)
        # fold the output projection per head (wo sliced on its rows -> 8-aligned slices)
        o_acc = o_acc + jnp.dot(oh.reshape(B * Sq, HEAD_DIM), wo[sl, :],
                                preferred_element_type=jnp.float32)
    return (o_acc + bo).reshape(B, Sq, Dm)


def _self_attention(x3, wqkv, bqkv, wo, bo, key_bias=None):
    B, S, Dm = x3.shape
    qkv = jnp.dot(x3.reshape(B * S, Dm), wqkv, preferred_element_type=jnp.float32) + bqkv
    q3 = qkv[:, 0 * Dm:1 * Dm].reshape(B, S, Dm)
    k3 = qkv[:, 1 * Dm:2 * Dm].reshape(B, S, Dm)
    v3 = qkv[:, 2 * Dm:3 * Dm].reshape(B, S, Dm)
    return _heads_attention(q3, k3, v3, wo, bo, key_bias)


def _cross_attention(xq3, xkv3, wq, bq, wkv, bkv, wo, bo, key_bias=None):
    B, Sq, Dm = xq3.shape
    Skv = xkv3.shape[1]
    q3 = (jnp.dot(xq3.reshape(B * Sq, Dm), wq, preferred_element_type=jnp.float32) + bq
          ).reshape(B, Sq, Dm)
    kv = jnp.dot(xkv3.reshape(B * Skv, Dm), wkv, preferred_element_type=jnp.float32) + bkv
    k3 = kv[:, :Dm].reshape(B, Skv, Dm)
    v3 = kv[:, Dm:].reshape(B, Skv, Dm)
    return _heads_attention(q3, k3, v3, wo, bo, key_bias)


def _mlp(x3, w1, b1, w2, b2):
    B, S, Dm = x3.shape
    h = jnp.dot(x3.reshape(B * S, Dm), w1, preferred_element_type=jnp.float32) + b1
    # TODO(synk): PyTorch nn.GELU default is exact erf; tanh approximation used here (EUP path).
    h = jax.nn.gelu(h, approximate=True)
    h = jnp.dot(h, w2, preferred_element_type=jnp.float32) + b2
    return h.reshape(B, S, Dm)


# ---------------- the fused forward kernel ----------------
def _make_fused_kernel(param_keys):
    n_params = len(param_keys)

    def kernel(*refs):
        patches_ref = refs[0]
        ids_ref = refs[1]
        p = {k: refs[2 + i] for i, k in enumerate(param_keys)}
        out_ref = refs[2 + n_params]
        vis_buf = refs[3 + n_params]     # (BP, S_VIS_PAD, D)  visual token assembly
        cls_buf = refs[4 + n_params]     # (BP, D)             text CLS gather
        score_buf = refs[5 + n_params]   # (BATCH, NUM_PICS)   itm score assembly

        f32 = jnp.float32
        vis_kbias = p["vis_kbias"][...]                               # (1, S_VIS_PAD)

        # ---- visual encoder: patch embed + CLS + pos, one pre-LN ViT block, final LN ----
        patches = patches_ref[...].astype(f32)                        # (BP*N_PATCHES, PATCH_DIM)
        pe = jnp.dot(patches, p["patch_w"][...],
                     preferred_element_type=f32) + p["patch_b"][...]  # (BP*N_PATCHES, D)
        vis_buf[:, 0:1, :] = jnp.broadcast_to(p["cls"][...], (BP, 1, D))
        for bp in range(BP):                                          # static unroll
            vis_buf[bp, 1:S_VIS, :] = pe[bp * N_PATCHES:(bp + 1) * N_PATCHES, :]
        vis_buf[:, S_VIS:, :] = jnp.zeros((BP, S_VIS_PAD - S_VIS, D), f32)   # zero the pad rows
        hv = vis_buf[...] + p["vis_pos"][...]                         # (BP, S_VIS_PAD, D)

        n1 = _layernorm(hv, p["v_ln1_g"][...], p["v_ln1_b"][...])
        hv = hv + _self_attention(n1, p["v_sa_wqkv"][...], p["v_sa_bqkv"][...],
                                  p["v_sa_wo"][...], p["v_sa_bo"][...], key_bias=vis_kbias)
        n2 = _layernorm(hv, p["v_ln2_g"][...], p["v_ln2_b"][...])
        hv = hv + _mlp(n2, p["v_mlp_w1"][...], p["v_mlp_b1"][...],
                       p["v_mlp_w2"][...], p["v_mlp_b2"][...])
        image_embeds = _layernorm(hv, p["v_lnf_g"][...], p["v_lnf_b"][...])

        # ---- text encoder: one-hot embed, self-attn, cross-attn to image, MLP (post-LN) ----
        ids = ids_ref[...]                                            # (BP*S_TXT, 1) int32
        vocab_iota = jax.lax.broadcasted_iota(jnp.int32, (BP * S_TXT, VOCAB_PAD), 1)
        onehot = (vocab_iota == ids).astype(f32)
        emb = jnp.dot(onehot, p["tok_embed"][...], preferred_element_type=f32)
        x = emb.reshape(BP, S_TXT, D) + p["txt_pos"][...]
        x = _layernorm(x, p["t_lne_g"][...], p["t_lne_b"][...])
        x = _layernorm(
            x + _self_attention(x, p["t_sa_wqkv"][...], p["t_sa_bqkv"][...],
                                p["t_sa_wo"][...], p["t_sa_bo"][...]),
            p["t_ln1_g"][...], p["t_ln1_b"][...])
        x = _layernorm(
            x + _cross_attention(x, image_embeds,
                                 p["t_ca_wq"][...], p["t_ca_bq"][...],
                                 p["t_ca_wkv"][...], p["t_ca_bkv"][...],
                                 p["t_ca_wo"][...], p["t_ca_bo"][...], key_bias=vis_kbias),
            p["t_ln2_g"][...], p["t_ln2_b"][...])
        x = _layernorm(
            x + _mlp(x, p["t_mlp_w1"][...], p["t_mlp_b1"][...],
                     p["t_mlp_w2"][...], p["t_mlp_b2"][...]),
            p["t_ln3_g"][...], p["t_ln3_b"][...])

        # ---- itm head on the text CLS token + softmax over num_pics ----
        for r in range(BP):                                           # gather CLS rows via VMEM
            cls_buf[r:r + 1, :] = x[r, 0:1, :]
        logits = jnp.dot(cls_buf[...], p["itm_w"][...],
                         preferred_element_type=f32) + p["itm_b"][...]   # (BP, 2)
        col1 = logits[:, 1:2]                                         # (BP, 1)
        # rows are pic-major (r = pic*BATCH + batch): each pic is a contiguous (BATCH, 1) column
        for pic in range(NUM_PICS):
            score_buf[:, pic:pic + 1] = col1[pic * BATCH:(pic + 1) * BATCH, :]
        scores = score_buf[...]                                       # (BATCH, NUM_PICS)
        scores = scores - jnp.max(scores, axis=-1, keepdims=True)
        e = jnp.exp(scores)
        out_ref[...] = (e / jnp.sum(e, axis=-1, keepdims=True)).astype(out_ref.dtype)  # exact

    return kernel


# ---------------- weight prep: fuse QKV, pad, reshape biases (host-side, tiny) ----------------
def _prep_kernel_params(params):
    q = {}
    q["patch_w"] = params["patch_w"]
    q["patch_b"] = params["patch_b"].reshape(1, D)
    q["cls"] = params["cls_token"].reshape(1, D)
    vis_pos = params["vis_pos"].reshape(S_VIS, D)
    q["vis_pos"] = jnp.pad(vis_pos, ((0, S_VIS_PAD - S_VIS), (0, 0)))
    q["vis_kbias"] = jnp.where(jnp.arange(S_VIS_PAD) < S_VIS, 0.0, NEG_INF
                               ).astype(jnp.float32).reshape(1, S_VIS_PAD)
    for name in ("v_ln1", "v_ln2", "v_lnf", "t_lne", "t_ln1", "t_ln2", "t_ln3"):
        q[f"{name}_g"] = params[f"{name}_g"].reshape(1, D)
        q[f"{name}_b"] = params[f"{name}_b"].reshape(1, D)
    for pre in ("v_sa", "t_sa"):   # fused QKV for self-attention
        q[f"{pre}_wqkv"] = jnp.concatenate(
            [params[f"{pre}_wq"], params[f"{pre}_wk"], params[f"{pre}_wv"]], axis=1)
        q[f"{pre}_bqkv"] = jnp.concatenate(
            [params[f"{pre}_bq"], params[f"{pre}_bk"], params[f"{pre}_bv"]]).reshape(1, 3 * D)
        q[f"{pre}_wo"] = params[f"{pre}_wo"]
        q[f"{pre}_bo"] = params[f"{pre}_bo"].reshape(1, D)
    q["t_ca_wq"] = params["t_ca_wq"]
    q["t_ca_bq"] = params["t_ca_bq"].reshape(1, D)
    q["t_ca_wkv"] = jnp.concatenate([params["t_ca_wk"], params["t_ca_wv"]], axis=1)
    q["t_ca_bkv"] = jnp.concatenate([params["t_ca_bk"], params["t_ca_bv"]]).reshape(1, 2 * D)
    q["t_ca_wo"] = params["t_ca_wo"]
    q["t_ca_bo"] = params["t_ca_bo"].reshape(1, D)
    for pre in ("v_mlp", "t_mlp"):
        q[f"{pre}_w1"] = params[f"{pre}_w1"]
        q[f"{pre}_b1"] = params[f"{pre}_b1"].reshape(1, MLP_DIM)
        q[f"{pre}_w2"] = params[f"{pre}_w2"]
        q[f"{pre}_b2"] = params[f"{pre}_b2"].reshape(1, D)
    q["tok_embed"] = jnp.pad(params["tok_embed"], ((0, VOCAB_PAD - VOCAB), (0, 0)))
    q["txt_pos"] = params["txt_pos"].reshape(S_TXT, D)
    q["itm_w"] = params["itm_w"]
    q["itm_b"] = params["itm_b"].reshape(1, 2)
    return q


# ---------------- wrapper: single pallas_call, everything VMEM-resident ----------------
def forward(params, images, base_text_ids):
    """images: (BATCH, NUM_PICS, C, H, W) float32 NCHW; base_text_ids: (BATCH, S_TXT) int32."""
    # Single host-side transpose: NCHW images -> pic-major unfolded patches
    # (row r = pic*BATCH + batch, feature order (c, ph, pw) matching the conv-as-matmul weight).
    patches = (images.reshape(BATCH, NUM_PICS, C, NH_P, PATCH, NW_P, PATCH)
               .transpose(1, 0, 3, 5, 2, 4, 6)
               .reshape(NUM_PICS * BATCH * N_PATCHES, PATCH_DIM))

    # Same text for every pic of a sample: pic-major row p*BATCH + b pairs image (b, p) with
    # text b — identical pairing to the torch reference's interleaved repeat of the text list.
    ids = jnp.tile(base_text_ids, (NUM_PICS, 1))
    ids = ids.at[:, 0].set(ENC_TOKEN_ID)          # encoder_input_ids[:, 0] = enc_token_id
    ids = ids.reshape(NUM_PICS * BATCH * S_TXT, 1).astype(jnp.int32)

    kparams = _prep_kernel_params(params)
    keys = tuple(sorted(kparams.keys()))
    flat = [kparams[k] for k in keys]

    vmem = pl.BlockSpec(memory_space=pltpu.MemorySpace.VMEM)
    # TODO(synk): on v7x (2 TensorCores) a leading "parallel" grid axis over batch could split
    # work across cores; omitted here — the fully fused kernel is tiny and launch-bound.
    return pl.pallas_call(
        _make_fused_kernel(keys),
        out_shape=jax.ShapeDtypeStruct((BATCH, NUM_PICS), jnp.float32),
        in_specs=[vmem] * (2 + len(flat)),
        out_specs=vmem,
        scratch_shapes=[
            pltpu.VMEM((BP, S_VIS_PAD, D), jnp.float32),   # visual token assembly buffer
            pltpu.VMEM((BP, D), jnp.float32),              # text CLS gather buffer
            pltpu.VMEM((BATCH, NUM_PICS), jnp.float32),    # itm score assembly buffer
        ],
    )(patches, ids, *flat)


# ---------------- deterministic parameter init (same structure as before) ----------------
def init_params(key):
    keys = iter(jax.random.split(key, 128))
    f32 = jnp.float32

    def nrm(shape, scale=0.02):
        return scale * jax.random.normal(next(keys), shape, f32)

    p = {}
    n_patches = (H // PATCH) * (W // PATCH)
    p["patch_w"] = nrm((C * PATCH * PATCH, D))
    p["patch_b"] = jnp.zeros((D,), f32)
    p["cls_token"] = nrm((1, 1, D))
    p["vis_pos"] = nrm((1, n_patches + 1, D))

    def add_ln(name):
        p[name + "_g"] = jnp.ones((D,), f32)
        p[name + "_b"] = jnp.zeros((D,), f32)

    def add_attn(prefix):
        for nm in ("q", "k", "v", "o"):
            p[f"{prefix}_w{nm}"] = nrm((D, D))
            p[f"{prefix}_b{nm}"] = jnp.zeros((D,), f32)

    def add_mlp(prefix):
        p[prefix + "_w1"] = nrm((D, MLP_DIM))
        p[prefix + "_b1"] = jnp.zeros((MLP_DIM,), f32)
        p[prefix + "_w2"] = nrm((MLP_DIM, D))
        p[prefix + "_b2"] = jnp.zeros((D,), f32)

    # visual encoder block
    add_ln("v_ln1"); add_attn("v_sa"); add_ln("v_ln2"); add_mlp("v_mlp"); add_ln("v_lnf")
    # text encoder
    p["tok_embed"] = nrm((VOCAB, D))
    p["txt_pos"] = nrm((1, S_TXT, D))
    add_ln("t_lne")
    add_attn("t_sa"); add_ln("t_ln1")
    add_attn("t_ca"); add_ln("t_ln2")
    add_mlp("t_mlp"); add_ln("t_ln3")
    # itm head
    p["itm_w"] = nrm((D, 2))
    p["itm_b"] = jnp.zeros((2,), f32)
    return p


if __name__ == "__main__":
    key = jax.random.PRNGKey(0)
    kp, ki, kt = jax.random.split(key, 3)
    params = init_params(kp)
    images = jax.random.normal(ki, (BATCH, NUM_PICS, C, H, W), jnp.float32)
    base_text_ids = jax.random.randint(kt, (BATCH, S_TXT), 3, VOCAB, dtype=jnp.int32)

    probas = jax.jit(forward)(params, images, base_text_ids)
    probas = jax.block_until_ready(probas)

    assert probas.shape == (BATCH, NUM_PICS)
    assert bool(jnp.all(jnp.isfinite(probas)))
    assert bool(jnp.allclose(probas.sum(axis=1), 1.0, atol=1e-5))
    print("KERNEL_OK")
</pallas_src>

<mosaic_0001>
module attributes {stable_mosaic.version = 11 : i64} {
  func.func @kernel(%arg0: memref<16x192xf32, #tpu.memory_space<vmem>>, %arg1: memref<32x1xi32, #tpu.memory_space<vmem>>, %arg2: memref<1x32xf32, #tpu.memory_space<vmem>>, %arg3: memref<1x2xf32, #tpu.memory_space<vmem>>, %arg4: memref<32x2xf32, #tpu.memory_space<vmem>>, %arg5: memref<1x32xf32, #tpu.memory_space<vmem>>, %arg6: memref<192x32xf32, #tpu.memory_space<vmem>>, %arg7: memref<1x64xf32, #tpu.memory_space<vmem>>, %arg8: memref<1x32xf32, #tpu.memory_space<vmem>>, %arg9: memref<1x32xf32, #tpu.memory_space<vmem>>, %arg10: memref<32x64xf32, #tpu.memory_space<vmem>>, %arg11: memref<32x32xf32, #tpu.memory_space<vmem>>, %arg12: memref<32x32xf32, #tpu.memory_space<vmem>>, %arg13: memref<1x32xf32, #tpu.memory_space<vmem>>, %arg14: memref<1x32xf32, #tpu.memory_space<vmem>>, %arg15: memref<1x32xf32, #tpu.memory_space<vmem>>, %arg16: memref<1x32xf32, #tpu.memory_space<vmem>>, %arg17: memref<1x32xf32, #tpu.memory_space<vmem>>, %arg18: memref<1x32xf32, #tpu.memory_space<vmem>>, %arg19: memref<1x32xf32, #tpu.memory_space<vmem>>, %arg20: memref<1x32xf32, #tpu.memory_space<vmem>>, %arg21: memref<1x128xf32, #tpu.memory_space<vmem>>, %arg22: memref<1x32xf32, #tpu.memory_space<vmem>>, %arg23: memref<32x128xf32, #tpu.memory_space<vmem>>, %arg24: memref<128x32xf32, #tpu.memory_space<vmem>>, %arg25: memref<1x32xf32, #tpu.memory_space<vmem>>, %arg26: memref<1x96xf32, #tpu.memory_space<vmem>>, %arg27: memref<32x32xf32, #tpu.memory_space<vmem>>, %arg28: memref<32x96xf32, #tpu.memory_space<vmem>>, %arg29: memref<128x32xf32, #tpu.memory_space<vmem>>, %arg30: memref<8x32xf32, #tpu.memory_space<vmem>>, %arg31: memref<1x32xf32, #tpu.memory_space<vmem>>, %arg32: memref<1x32xf32, #tpu.memory_space<vmem>>, %arg33: memref<1x32xf32, #tpu.memory_space<vmem>>, %arg34: memref<1x32xf32, #tpu.memory_space<vmem>>, %arg35: memref<1x32xf32, #tpu.memory_space<vmem>>, %arg36: memref<1x32xf32, #tpu.memory_space<vmem>>, %arg37: memref<1x128xf32, #tpu.memory_space<vmem>>, %arg38: memref<1x32xf32, #tpu.memory_space<vmem>>, %arg39: memref<32x128xf32, #tpu.memory_space<vmem>>, %arg40: memref<128x32xf32, #tpu.memory_space<vmem>>, %arg41: memref<1x32xf32, #tpu.memory_space<vmem>>, %arg42: memref<1x96xf32, #tpu.memory_space<vmem>>, %arg43: memref<32x32xf32, #tpu.memory_space<vmem>>, %arg44: memref<32x96xf32, #tpu.memory_space<vmem>>, %arg45: memref<1x8xf32, #tpu.memory_space<vmem>>, %arg46: memref<8x32xf32, #tpu.memory_space<vmem>>, %arg47: memref<2x2xf32, #tpu.memory_space<vmem>>, %arg48: memref<4x8x32xf32, #tpu.memory_space<vmem>>, %arg49: memref<4x32xf32, #tpu.memory_space<vmem>>, %arg50: memref<2x2xf32, #tpu.memory_space<vmem>>) attributes {dimension_semantics = [], scalar_prefetch = 0 : i64, scratch_operands = 3 : i64, tpu.core_type = #tpu.core_type<tc>} {
    %c0 = arith.constant 0 : index
    %c0_0 = arith.constant 0 : index
    %0 = vector.load %arg45[%c0, %c0_0] : memref<1x8xf32, #tpu.memory_space<vmem>>, vector<1x8xf32>
    %c0_1 = arith.constant 0 : index
    %c0_2 = arith.constant 0 : index
    %1 = vector.load %arg0[%c0_1, %c0_2] : memref<16x192xf32, #tpu.memory_space<vmem>>, vector<16x192xf32>
    %c0_3 = arith.constant 0 : index
    %c0_4 = arith.constant 0 : index
    %2 = vector.load %arg6[%c0_3, %c0_4] : memref<192x32xf32, #tpu.memory_space<vmem>>, vector<192x32xf32>
    %cst = arith.constant dense<0.000000e+00> : vector<16x32xf32>
    %3 = tpu.matmul %1, %2, %cst {dimension_numbers = #tpu.dot_dimension_numbers<[1], [0], [0], [1], [0, 0, 1, 1], [], []>} : vector<16x192xf32>, vector<192x32xf32>, vector<16x32xf32> -> vector<16x32xf32>
    %c0_5 = arith.constant 0 : index
    %c0_6 = arith.constant 0 : index
    %4 = vector.load %arg5[%c0_5, %c0_6] : memref<1x32xf32, #tpu.memory_space<vmem>>, vector<1x32xf32>
    %5 = vector.broadcast %4 : vector<1x32xf32> to vector<16x32xf32>
    %6 = arith.addf %3, %5 : vector<16x32xf32>
    %c0_7 = arith.constant 0 : index
    %c0_8 = arith.constant 0 : index
    %7 = vector.load %arg2[%c0_7, %c0_8] : memref<1x32xf32, #tpu.memory_space<vmem>>, vector<1x32xf32>
    %8 = vector.shape_cast %7 : vector<1x32xf32> to vector<1x1x32xf32>
    %9 = vector.broadcast %8 : vector<1x1x32xf32> to vector<4x1x32xf32>
    %c0_9 = arith.constant 0 : index
    %c0_10 = arith.constant 0 : index
    %c0_11 = arith.constant 0 : index
    %10 = vector.load %arg48[%c0_9, %c0_10, %c0_11] : memref<4x8x32xf32, #tpu.memory_space<vmem>>, vector<4x1x32xf32>
    tpu.vector_store %arg48[%c0_9, %c0_10, %c0_11], %9 {strides = array<i32>} : memref<4x8x32xf32, #tpu.memory_space<vmem>>, vector<4x1x32xf32>,
    %11 = vector.extract_strided_slice %6 {offsets = [0, 0], sizes = [4, 32], strides = [1, 1]} : vector<16x32xf32> to vector<4x32xf32>
    %c0_12 = arith.constant 0 : index
    %c1 = arith.constant 1 : index
    %c0_13 = arith.constant 0 : index
    %12 = vector.load %arg48[%c0_12, %c1, %c0_13] : memref<4x8x32xf32, #tpu.memory_space<vmem>>, vector<1x4x32xf32>
    %13 = vector.shape_cast %12 : vector<1x4x32xf32> to vector<4x32xf32>
    %14 = vector.shape_cast %11 : vector<4x32xf32> to vector<1x4x32xf32>
    tpu.vector_store %arg48[%c0_12, %c1, %c0_13], %14 {strides = array<i32>} : memref<4x8x32xf32, #tpu.memory_space<vmem>>, vector<1x4x32xf32>,
    %15 = vector.extract_strided_slice %6 {offsets = [4, 0], sizes = [4, 32], strides = [1, 1]} : vector<16x32xf32> to vector<4x32xf32>
    %c1_14 = arith.constant 1 : index
    %c1_15 = arith.constant 1 : index
    %c0_16 = arith.constant 0 : index
    %16 = vector.load %arg48[%c1_14, %c1_15, %c0_16] : memref<4x8x32xf32, #tpu.memory_space<vmem>>, vector<1x4x32xf32>
    %17 = vector.shape_cast %16 : vector<1x4x32xf32> to vector<4x32xf32>
    %18 = vector.shape_cast %15 : vector<4x32xf32> to vector<1x4x32xf32>
    tpu.vector_store %arg48[%c1_14, %c1_15, %c0_16], %18 {strides = array<i32>} : memref<4x8x32xf32, #tpu.memory_space<vmem>>, vector<1x4x32xf32>,
    %19 = vector.extract_strided_slice %6 {offsets = [8, 0], sizes = [4, 32], strides = [1, 1]} : vector<16x32xf32> to vector<4x32xf32>
    %c2 = arith.constant 2 : index
    %c1_17 = arith.constant 1 : index
    %c0_18 = arith.constant 0 : index
    %20 = vector.load %arg48[%c2, %c1_17, %c0_18] : memref<4x8x32xf32, #tpu.memory_space<vmem>>, vector<1x4x32xf32>
    %21 = vector.shape_cast %20 : vector<1x4x32xf32> to vector<4x32xf32>
    %22 = vector.shape_cast %19 : vector<4x32xf32> to vector<1x4x32xf32>
    tpu.vector_store %arg48[%c2, %c1_17, %c0_18], %22 {strides = array<i32>} : memref<4x8x32xf32, #tpu.memory_space<vmem>>, vector<1x4x32xf32>,
    %23 = vector.extract_strided_slice %6 {offsets = [12, 0], sizes = [4, 32], strides = [1, 1]} : vector<16x32xf32> to vector<4x32xf32>
    %c3 = arith.constant 3 : index
    %c1_19 = arith.constant 1 : index
    %c0_20 = arith.constant 0 : index
    %24 = vector.load %arg48[%c3, %c1_19, %c0_20] : memref<4x8x32xf32, #tpu.memory_space<vmem>>, vector<1x4x32xf32>
    %25 = vector.shape_cast %24 : vector<1x4x32xf32> to vector<4x32xf32>
    %26 = vector.shape_cast %23 : vector<4x32xf32> to vector<1x4x32xf32>
    tpu.vector_store %arg48[%c3, %c1_19, %c0_20], %26 {strides = array<i32>} : memref<4x8x32xf32, #tpu.memory_space<vmem>>, vector<1x4x32xf32>,
    %cst_21 = arith.constant 0.000000e+00 : f32
    %27 = vector.broadcast %cst_21 : f32 to vector<4x3x32xf32>
    %c0_22 = arith.constant 0 : index
    %c5 = arith.constant 5 : index
    %c0_23 = arith.constant 0 : index
    %28 = vector.load %arg48[%c0_22, %c5, %c0_23] : memref<4x8x32xf32, #tpu.memory_space<vmem>>, vector<4x3x32xf32>
    tpu.vector_store %arg48[%c0_22, %c5, %c0_23], %27 {strides = array<i32>} : memref<4x8x32xf32, #tpu.memory_space<vmem>>, vector<4x3x32xf32>,
    %c0_24 = arith.constant 0 : index
    %c0_25 = arith.constant 0 : index
    %c0_26 = arith.constant 0 : index
    %29 = vector.load %arg48[%c0_24, %c0_25, %c0_26] : memref<4x8x32xf32, #tpu.memory_space<vmem>>, vector<4x8x32xf32>
    %c0_27 = arith.constant 0 : index
    %c0_28 = arith.constant 0 : index
    %30 = vector.load %arg46[%c0_27, %c0_28] : memref<8x32xf32, #tpu.memory_space<vmem>>, vector<8x32xf32>
    %31 = vector.shape_cast %30 : vector<8x32xf32> to vector<1x8x32xf32>
    %32 = vector.broadcast %31 : vector<1x8x32xf32> to vector<4x8x32xf32>
    %33 = arith.addf %29, %32 : vector<4x8x32xf32>
    %c0_29 = arith.constant 0 : index
    %c0_30 = arith.constant 0 : index
    %34 = vector.load %arg32[%c0_29, %c0_30] : memref<1x32xf32, #tpu.memory_space<vmem>>, vector<1x32xf32>
    %c0_31 = arith.constant 0 : index
    %c0_32 = arith.constant 0 : index
    %35 = vector.load %arg31[%c0_31, %c0_32] : memref<1x32xf32, #tpu.memory_space<vmem>>, vector<1x32xf32>
    %cst_33 = arith.constant dense<0.000000e+00> : vector<4x8xf32>
    %36 = vector.multi_reduction <add>, %33, %cst_33 [2] : vector<4x8x32xf32> to vector<4x8xf32>
    %37 = vector.shape_cast %36 : vector<4x8xf32> to vector<4x8x1xf32>
    %cst_34 = arith.constant 3.200000e+01 : f32
    %38 = vector.broadcast %cst_34 : f32 to vector<4x8x1xf32>
    %39 = arith.divf %37, %38 : vector<4x8x1xf32>
    %40 = vector.broadcast %39 : vector<4x8x1xf32> to vector<4x8x32xf32>
    %41 = arith.subf %33, %40 : vector<4x8x32xf32>
    %42 = arith.mulf %41, %41 : vector<4x8x32xf32>
    %cst_35 = arith.constant dense<0.000000e+00> : vector<4x8xf32>
    %43 = vector.multi_reduction <add>, %42, %cst_35 [2] : vector<4x8x32xf32> to vector<4x8xf32>
    %44 = vector.shape_cast %43 : vector<4x8xf32> to vector<4x8x1xf32>
    %cst_36 = arith.constant 3.200000e+01 : f32
    %45 = vector.broadcast %cst_36 : f32 to vector<4x8x1xf32>
    %46 = arith.divf %44, %45 : vector<4x8x1xf32>
    %47 = vector.broadcast %39 : vector<4x8x1xf32> to vector<4x8x32xf32>
    %48 = arith.subf %33, %47 : vector<4x8x32xf32>
    %cst_37 = arith.constant 9.99999997E-7 : f32
    %49 = vector.broadcast %cst_37 : f32 to vector<4x8x1xf32>
    %50 = arith.addf %46, %49 : vector<4x8x1xf32>
    %51 = math.rsqrt %50 : vector<4x8x1xf32>
    %52 = vector.broadcast %51 : vector<4x8x1xf32> to vector<4x8x32xf32>
    %53 = arith.mulf %48, %52 : vector<4x8x32xf32>
    %54 = vector.shape_cast %34 : vector<1x32xf32> to vector<1x1x32xf32>
    %55 = vector.broadcast %54 : vector<1x1x32xf32> to vector<4x8x32xf32>
    %56 = arith.mulf %53, %55 : vector<4x8x32xf32>
    %57 = vector.shape_cast %35 : vector<1x32xf32> to vector<1x1x32xf32>
    %58 = vector.broadcast %57 : vector<1x1x32xf32> to vector<4x8x32xf32>
    %59 = arith.addf %56, %58 : vector<4x8x32xf32>
    %c0_38 = arith.constant 0 : index
    %c0_39 = arith.constant 0 : index
    %60 = vector.load %arg44[%c0_38, %c0_39] : memref<32x96xf32, #tpu.memory_space<vmem>>, vector<32x96xf32>
    %c0_40 = arith.constant 0 : index
    %c0_41 = arith.constant 0 : index
    %61 = vector.load %arg42[%c0_40, %c0_41] : memref<1x96xf32, #tpu.memory_space<vmem>>, vector<1x96xf32>
    %c0_42 = arith.constant 0 : index
    %c0_43 = arith.constant 0 : index
    %62 = vector.load %arg43[%c0_42, %c0_43] : memref<32x32xf32, #tpu.memory_space<vmem>>, vector<32x32xf32>
    %c0_44 = arith.constant 0 : index
    %c0_45 = arith.constant 0 : index
    %63 = vector.load %arg41[%c0_44, %c0_45] : memref<1x32xf32, #tpu.memory_space<vmem>>, vector<1x32xf32>
    %64 = vector.shape_cast %59 : vector<4x8x32xf32> to vector<32x32xf32>
    %cst_46 = arith.constant dense<0.000000e+00> : vector<32x96xf32>
    %65 = tpu.matmul %64, %60, %cst_46 {dimension_numbers = #tpu.dot_dimension_numbers<[1], [0], [0], [1], [0, 0, 1, 1], [], []>} : vector<32x32xf32>, vector<32x96xf32>, vector<32x96xf32> -> vector<32x96xf32>
    %66 = vector.broadcast %61 : vector<1x96xf32> to vector<32x96xf32>
    %67 = arith.addf %65, %66 : vector<32x96xf32>
    %68 = vector.extract_strided_slice %67 {offsets = [0, 0], sizes = [32, 32], strides = [1, 1]} : vector<32x96xf32> to vector<32x32xf32>
    %69 = vector.shape_cast %68 : vector<32x32xf32> to vector<4x8x32xf32>
    %70 = vector.extract_strided_slice %67 {offsets = [0, 32], sizes = [32, 32], strides = [1, 1]} : vector<32x96xf32> to vector<32x32xf32>
    %71 = vector.shape_cast %70 : vector<32x32xf32> to vector<4x8x32xf32>
    %72 = vector.extract_strided_slice %67 {offsets = [0, 64], sizes = [32, 32], strides = [1, 1]} : vector<32x96xf32> to vector<32x32xf32>
    %73 = vector.shape_cast %72 : vector<32x32xf32> to vector<4x8x32xf32>
    %cst_47 = arith.constant 0.000000e+00 : f32
    %74 = vector.broadcast %cst_47 : f32 to vector<32x32xf32>
    %75 = vector.extract_strided_slice %69 {offsets = [0, 0, 0], sizes = [4, 8, 8], strides = [1, 1, 1]} : vector<4x8x32xf32> to vector<4x8x8xf32>
    %76 = vector.extract_strided_slice %71 {offsets = [0, 0, 0], sizes = [4, 8, 8], strides = [1, 1, 1]} : vector<4x8x32xf32> to vector<4x8x8xf32>
    %77 = vector.extract_strided_slice %73 {offsets = [0, 0, 0], sizes = [4, 8, 8], strides = [1, 1, 1]} : vector<4x8x32xf32> to vector<4x8x8xf32>
    "tpu.trace_start"() <{level = 10 : i32, message = "bqd,bkd->bqk"}> : () -> ()
    %cst_48 = arith.constant dense<0.000000e+00> : vector<4x8x8xf32>
    %78 = tpu.matmul %75, %76, %cst_48 {dimension_numbers = #tpu.dot_dimension_numbers<[2], [2], [1], [1], [0, 0, 0, 1, 1, 1], [0], [0]>} : vector<4x8x8xf32>, vector<4x8x8xf32>, vector<4x8x8xf32> -> vector<4x8x8xf32>
    "tpu.trace_stop"() : () -> ()
    %cst_49 = arith.constant 0.353553385 : f32
    %79 = vector.broadcast %cst_49 : f32 to vector<4x8x8xf32>
    %80 = arith.mulf %78, %79 : vector<4x8x8xf32>
    %81 = vector.shape_cast %0 : vector<1x8xf32> to vector<1x1x8xf32>
    %82 = vector.broadcast %81 : vector<1x1x8xf32> to vector<4x8x8xf32>
    %83 = arith.addf %80, %82 : vector<4x8x8xf32>
    %cst_50 = arith.constant dense<0xFF800000> : vector<4x8xf32>
    %84 = vector.multi_reduction <maximumf>, %83, %cst_50 [2] : vector<4x8x8xf32> to vector<4x8xf32>
    %85 = vector.shape_cast %84 : vector<4x8xf32> to vector<4x8x1xf32>
    %86 = vector.broadcast %85 : vector<4x8x1xf32> to vector<4x8x8xf32>
    %87 = arith.subf %83, %86 : vector<4x8x8xf32>
    %88 = math.exp %87 : vector<4x8x8xf32>
    %cst_51 = arith.constant dense<0.000000e+00> : vector<4x8xf32>
    %89 = vector.multi_reduction <add>, %88, %cst_51 [2] : vector<4x8x8xf32> to vector<4x8xf32>
    %90 = vector.shape_cast %89 : vector<4x8xf32> to vector<4x8x1xf32>
    %91 = tpu.reciprocal %90 {approx = true} : vector<4x8x1xf32> -> vector<4x8x1xf32>
    %92 = vector.broadcast %91 : vector<4x8x1xf32> to vector<4x8x8xf32>
    %93 = arith.mulf %88, %92 : vector<4x8x8xf32>
    "tpu.trace_start"() <{level = 10 : i32, message = "bqk,bkd->bqd"}> : () -> ()
    %cst_52 = arith.constant dense<0.000000e+00> : vector<4x8x8xf32>
    %94 = tpu.matmul %93, %77, %cst_52 {dimension_numbers = #tpu.dot_dimension_numbers<[2], [1], [1], [2], [0, 0, 0, 1, 1, 2], [0], [0]>} : vector<4x8x8xf32>, vector<4x8x8xf32>, vector<4x8x8xf32> -> vector<4x8x8xf32>
    "tpu.trace_stop"() : () -> ()
    %95 = vector.shape_cast %94 : vector<4x8x8xf32> to vector<32x8xf32>
    %96 = vector.extract_strided_slice %62 {offsets = [0, 0], sizes = [8, 32], strides = [1, 1]} : vector<32x32xf32> to vector<8x32xf32>
    %cst_53 = arith.constant dense<0.000000e+00> : vector<32x32xf32>
    %97 = tpu.matmul %95, %96, %cst_53 {dimension_numbers = #tpu.dot_dimension_numbers<[1], [0], [0], [1], [0, 0, 1, 1], [], []>} : vector<32x8xf32>, vector<8x32xf32>, vector<32x32xf32> -> vector<32x32xf32>
    %98 = arith.addf %74, %97 : vector<32x32xf32>
    %99 = vector.extract_strided_slice %69 {offsets = [0, 0, 8], sizes = [4, 8, 8], strides = [1, 1, 1]} : vector<4x8x32xf32> to vector<4x8x8xf32>
    %100 = vector.extract_strided_slice %71 {offsets = [0, 0, 8], sizes = [4, 8, 8], strides = [1, 1, 1]} : vector<4x8x32xf32> to vector<4x8x8xf32>
    %101 = vector.extract_strided_slice %73 {offsets = [0, 0, 8], sizes = [4, 8, 8], strides = [1, 1, 1]} : vector<4x8x32xf32> to vector<4x8x8xf32>
    "tpu.trace_start"() <{level = 10 : i32, message = "bqd,bkd->bqk"}> : () -> ()
    %cst_54 = arith.constant dense<0.000000e+00> : vector<4x8x8xf32>
    %102 = tpu.matmul %99, %100, %cst_54 {dimension_numbers = #tpu.dot_dimension_numbers<[2], [2], [1], [1], [0, 0, 0, 1, 1, 1], [0], [0]>} : vector<4x8x8xf32>, vector<4x8x8xf32>, vector<4x8x8xf32> -> vector<4x8x8xf32>
    "tpu.trace_stop"() : () -> ()
    %cst_55 = arith.constant 0.353553385 : f32
    %103 = vector.broadcast %cst_55 : f32 to vector<4x8x8xf32>
    %104 = arith.mulf %102, %103 : vector<4x8x8xf32>
    %105 = vector.shape_cast %0 : vector<1x8xf32> to vector<1x1x8xf32>
    %106 = vector.broadcast %105 : vector<1x1x8xf32> to vector<4x8x8xf32>
    %107 = arith.addf %104, %106 : vector<4x8x8xf32>
    %cst_56 = arith.constant dense<0xFF800000> : vector<4x8xf32>
    %108 = vector.multi_reduction <maximumf>, %107, %cst_56 [2] : vector<4x8x8xf32> to vector<4x8xf32>
    %109 = vector.shape_cast %108 : vector<4x8xf32> to vector<4x8x1xf32>
    %110 = vector.broadcast %109 : vector<4x8x1xf32> to vector<4x8x8xf32>
    %111 = arith.subf %107, %110 : vector<4x8x8xf32>
    %112 = math.exp %111 : vector<4x8x8xf32>
    %cst_57 = arith.constant dense<0.000000e+00> : vector<4x8xf32>
    %113 = vector.multi_reduction <add>, %112, %cst_57 [2] : vector<4x8x8xf32> to vector<4x8xf32>
    %114 = vector.shape_cast %113 : vector<4x8xf32> to vector<4x8x1xf32>
    %115 = tpu.reciprocal %114 {approx = true} : vector<4x8x1xf32> -> vector<4x8x1xf32>
    %116 = vector.broadcast %115 : vector<4x8x1xf32> to vector<4x8x8xf32>
    %117 = arith.mulf %112, %116 : vector<4x8x8xf32>
    "tpu.trace_start"() <{level = 10 : i32, message = "bqk,bkd->bqd"}> : () -> ()
    %cst_58 = arith.constant dense<0.000000e+00> : vector<4x8x8xf32>
    %118 = tpu.matmul %117, %101, %cst_58 {dimension_numbers = #tpu.dot_dimension_numbers<[2], [1], [1], [2], [0, 0, 0, 1, 1, 2], [0], [0]>} : vector<4x8x8xf32>, vector<4x8x8xf32>, vector<4x8x8xf32> -> vector<4x8x8xf32>
    "tpu.trace_stop"() : () -> ()
    %119 = vector.shape_cast %118 : vector<4x8x8xf32> to vector<32x8xf32>
    %120 = vector.extract_strided_slice %62 {offsets = [8, 0], sizes = [8, 32], strides = [1, 1]} : vector<32x32xf32> to vector<8x32xf32>
    %cst_59 = arith.constant dense<0.000000e+00> : vector<32x32xf32>
    %121 = tpu.matmul %119, %120, %cst_59 {dimension_numbers = #tpu.dot_dimension_numbers<[1], [0], [0], [1], [0, 0, 1, 1], [], []>} : vector<32x8xf32>, vector<8x32xf32>, vector<32x32xf32> -> vector<32x32xf32>
    %122 = arith.addf %98, %121 : vector<32x32xf32>
    %123 = vector.extract_strided_slice %69 {offsets = [0, 0, 16], sizes = [4, 8, 8], strides = [1, 1, 1]} : vector<4x8x32xf32> to vector<4x8x8xf32>
    %124 = vector.extract_strided_slice %71 {offsets = [0, 0, 16], sizes = [4, 8, 8], strides = [1, 1, 1]} : vector<4x8x32xf32> to vector<4x8x8xf32>
    %125 = vector.extract_strided_slice %73 {offsets = [0, 0, 16], sizes = [4, 8, 8], strides = [1, 1, 1]} : vector<4x8x32xf32> to vector<4x8x8xf32>
    "tpu.trace_start"() <{level = 10 : i32, message = "bqd,bkd->bqk"}> : () -> ()
    %cst_60 = arith.constant dense<0.000000e+00> : vector<4x8x8xf32>
    %126 = tpu.matmul %123, %124, %cst_60 {dimension_numbers = #tpu.dot_dimension_numbers<[2], [2], [1], [1], [0, 0, 0, 1, 1, 1], [0], [0]>} : vector<4x8x8xf32>, vector<4x8x8xf32>, vector<4x8x8xf32> -> vector<4x8x8xf32>
    "tpu.trace_stop"() : () -> ()
    %cst_61 = arith.constant 0.353553385 : f32
    %127 = vector.broadcast %cst_61 : f32 to vector<4x8x8xf32>
    %128 = arith.mulf %126, %127 : vector<4x8x8xf32>
    %129 = vector.shape_cast %0 : vector<1x8xf32> to vector<1x1x8xf32>
    %130 = vector.broadcast %129 : vector<1x1x8xf32> to vector<4x8x8xf32>
    %131 = arith.addf %128, %130 : vector<4x8x8xf32>
    %cst_62 = arith.constant dense<0xFF800000> : vector<4x8xf32>
    %132 = vector.multi_reduction <maximumf>, %131, %cst_62 [2] : vector<4x8x8xf32> to vector<4x8xf32>
    %133 = vector.shape_cast %132 : vector<4x8xf32> to vector<4x8x1xf32>
    %134 = vector.broadcast %133 : vector<4x8x1xf32> to vector<4x8x8xf32>
    %135 = arith.subf %131, %134 : vector<4x8x8xf32>
    %136 = math.exp %135 : vector<4x8x8xf32>
    %cst_63 = arith.constant dense<0.000000e+00> : vector<4x8xf32>
    %137 = vector.multi_reduction <add>, %136, %cst_63 [2] : vector<4x8x8xf32> to vector<4x8xf32>
    %138 = vector.shape_cast %137 : vector<4x8xf32> to vector<4x8x1xf32>
    %139 = tpu.reciprocal %138 {approx = true} : vector<4x8x1xf32> -> vector<4x8x1xf32>
    %140 = vector.broadcast %139 : vector<4x8x1xf32> to vector<4x8x8xf32>
    %141 = arith.mulf %136, %140 : vector<4x8x8xf32>
    "tpu.trace_start"() <{level = 10 : i32, message = "bqk,bkd->bqd"}> : () -> ()
    %cst_64 = arith.constant dense<0.000000e+00> : vector<4x8x8xf32>
    %142 = tpu.matmul %141, %125, %cst_64 {dimension_numbers = #tpu.dot_dimension_numbers<[2], [1], [1], [2], [0, 0, 0, 1, 1, 2], [0], [0]>} : vector<4x8x8xf32>, vector<4x8x8xf32>, vector<4x8x8xf32> -> vector<4x8x8xf32>
    "tpu.trace_stop"() : () -> ()
    %143 = vector.shape_cast %142 : vector<4x8x8xf32> to vector<32x8xf32>
    %144 = vector.extract_strided_slice %62 {offsets = [16, 0], sizes = [8, 32], strides = [1, 1]} : vector<32x32xf32> to vector<8x32xf32>
    %cst_65 = arith.constant dense<0.000000e+00> : vector<32x32xf32>
    %145 = tpu.matmul %143, %144, %cst_65 {dimension_numbers = #tpu.dot_dimension_numbers<[1], [0], [0], [1], [0, 0, 1, 1], [], []>} : vector<32x8xf32>, vector<8x32xf32>, vector<32x32xf32> -> vector<32x32xf32>
    %146 = arith.addf %122, %145 : vector<32x32xf32>
    %147 = vector.extract_strided_slice %69 {offsets = [0, 0, 24], sizes = [4, 8, 8], strides = [1, 1, 1]} : vector<4x8x32xf32> to vector<4x8x8xf32>
    %148 = vector.extract_strided_slice %71 {offsets = [0, 0, 24], sizes = [4, 8, 8], strides = [1, 1, 1]} : vector<4x8x32xf32> to vector<4x8x8xf32>
    %149 = vector.extract_strided_slice %73 {offsets = [0, 0, 24], sizes = [4, 8, 8], strides = [1, 1, 1]} : vector<4x8x32xf32> to vector<4x8x8xf32>
    "tpu.trace_start"() <{level = 10 : i32, message = "bqd,bkd->bqk"}> : () -> ()
    %cst_66 = arith.constant dense<0.000000e+00> : vector<4x8x8xf32>
    %150 = tpu.matmul %147, %148, %cst_66 {dimension_numbers = #tpu.dot_dimension_numbers<[2], [2], [1], [1], [0, 0, 0, 1, 1, 1], [0], [0]>} : vector<4x8x8xf32>, vector<4x8x8xf32>, vector<4x8x8xf32> -> vector<4x8x8xf32>
    "tpu.trace_stop"() : () -> ()
    %cst_67 = arith.constant 0.353553385 : f32
    %151 = vector.broadcast %cst_67 : f32 to vector<4x8x8xf32>
    %152 = arith.mulf %150, %151 : vector<4x8x8xf32>
    %153 = vector.shape_cast %0 : vector<1x8xf32> to vector<1x1x8xf32>
    %154 = vector.broadcast %153 : vector<1x1x8xf32> to vector<4x8x8xf32>
    %155 = arith.addf %152, %154 : vector<4x8x8xf32>
    %cst_68 = arith.constant dense<0xFF800000> : vector<4x8xf32>
    %156 = vector.multi_reduction <maximumf>, %155, %cst_68 [2] : vector<4x8x8xf32> to vector<4x8xf32>
    %157 = vector.shape_cast %156 : vector<4x8xf32> to vector<4x8x1xf32>
    %158 = vector.broadcast %157 : vector<4x8x1xf32> to vector<4x8x8xf32>
    %159 = arith.subf %155, %158 : vector<4x8x8xf32>
    %160 = math.exp %159 : vector<4x8x8xf32>
    %cst_69 = arith.constant dense<0.000000e+00> : vector<4x8xf32>
    %161 = vector.multi_reduction <add>, %160, %cst_69 [2] : vector<4x8x8xf32> to vector<4x8xf32>
    %162 = vector.shape_cast %161 : vector<4x8xf32> to vector<4x8x1xf32>
    %163 = tpu.reciprocal %162 {approx = true} : vector<4x8x1xf32> -> vector<4x8x1xf32>
    %164 = vector.broadcast %163 : vector<4x8x1xf32> to vector<4x8x8xf32>
    %165 = arith.mulf %160, %164 : vector<4x8x8xf32>
    "tpu.trace_start"() <{level = 10 : i32, message = "bqk,bkd->bqd"}> : () -> ()
    %cst_70 = arith.constant dense<0.000000e+00> : vector<4x8x8xf32>
    %166 = tpu.matmul %165, %149, %cst_70 {dimension_numbers = #tpu.dot_dimension_numbers<[2], [1], [1], [2], [0, 0, 0, 1, 1, 2], [0], [0]>} : vector<4x8x8xf32>, vector<4x8x8xf32>, vector<4x8x8xf32> -> vector<4x8x8xf32>
    "tpu.trace_stop"() : () -> ()
    %167 = vector.shape_cast %166 : vector<4x8x8xf32> to vector<32x8xf32>
    %168 = vector.extract_strided_slice %62 {offsets = [24, 0], sizes = [8, 32], strides = [1, 1]} : vector<32x32xf32> to vector<8x32xf32>
    %cst_71 = arith.constant dense<0.000000e+00> : vector<32x32xf32>
    %169 = tpu.matmul %167, %168, %cst_71 {dimension_numbers = #tpu.dot_dimension_numbers<[1], [0], [0], [1], [0, 0, 1, 1], [], []>} : vector<32x8xf32>, vector<8x32xf32>, vector<32x32xf32> -> vector<32x32xf32>
    %170 = arith.addf %146, %169 : vector<32x32xf32>
    %171 = vector.broadcast %63 : vector<1x32xf32> to vector<32x32xf32>
    %172 = arith.addf %170, %171 : vector<32x32xf32>
    %173 = vector.shape_cast %172 : vector<32x32xf32> to vector<4x8x32xf32>
    %174 = arith.addf %33, %173 : vector<4x8x32xf32>
    %c0_72 = arith.constant 0 : index
    %c0_73 = arith.constant 0 : index
    %175 = vector.load %arg34[%c0_72, %c0_73] : memref<1x32xf32, #tpu.memory_space<vmem>>, vector<1x32xf32>
    %c0_74 = arith.constant 0 : index
    %c0_75 = arith.constant 0 : index
    %176 = vector.load %arg33[%c0_74, %c0_75] : memref<1x32xf32, #tpu.memory_space<vmem>>, vector<1x32xf32>
    %cst_76 = arith.constant dense<0.000000e+00> : vector<4x8xf32>
    %177 = vector.multi_reduction <add>, %174, %cst_76 [2] : vector<4x8x32xf32> to vector<4x8xf32>
    %178 = vector.shape_cast %177 : vector<4x8xf32> to vector<4x8x1xf32>
    %cst_77 = arith.constant 3.200000e+01 : f32
    %179 = vector.broadcast %cst_77 : f32 to vector<4x8x1xf32>
    %180 = arith.divf %178, %179 : vector<4x8x1xf32>
    %181 = vector.broadcast %180 : vector<4x8x1xf32> to vector<4x8x32xf32>
    %182 = arith.subf %174, %181 : vector<4x8x32xf32>
    %183 = arith.mulf %182, %182 : vector<4x8x32xf32>
    %cst_78 = arith.constant dense<0.000000e+00> : vector<4x8xf32>
    %184 = vector.multi_reduction <add>, %183, %cst_78 [2] : vector<4x8x32xf32> to vector<4x8xf32>
    %185 = vector.shape_cast %184 : vector<4x8xf32> to vector<4x8x1xf32>
    %cst_79 = arith.constant 3.200000e+01 : f32
    %186 = vector.broadcast %cst_79 : f32 to vector<4x8x1xf32>
    %187 = arith.divf %185, %186 : vector<4x8x1xf32>
    %188 = vector.broadcast %180 : vector<4x8x1xf32> to vector<4x8x32xf32>
    %189 = arith.subf %174, %188 : vector<4x8x32xf32>
    %cst_80 = arith.constant 9.99999997E-7 : f32
    %190 = vector.broadcast %cst_80 : f32 to vector<4x8x1xf32>
    %191 = arith.addf %187, %190 : vector<4x8x1xf32>
    %192 = math.rsqrt %191 : vector<4x8x1xf32>
    %193 = vector.broadcast %192 : vector<4x8x1xf32> to vector<4x8x32xf32>
    %194 = arith.mulf %189, %193 : vector<4x8x32xf32>
    %195 = vector.shape_cast %175 : vector<1x32xf32> to vector<1x1x32xf32>
    %196 = vector.broadcast %195 : vector<1x1x32xf32> to vector<4x8x32xf32>
    %197 = arith.mulf %194, %196 : vector<4x8x32xf32>
    %198 = vector.shape_cast %176 : vector<1x32xf32> to vector<1x1x32xf32>
    %199 = vector.broadcast %198 : vector<1x1x32xf32> to vector<4x8x32xf32>
    %200 = arith.addf %197, %199 : vector<4x8x32xf32>
    %c0_81 = arith.constant 0 : index
    %c0_82 = arith.constant 0 : index
    %201 = vector.load %arg39[%c0_81, %c0_82] : memref<32x128xf32, #tpu.memory_space<vmem>>, vector<32x128xf32>
    %c0_83 = arith.constant 0 : index
    %c0_84 = arith.constant 0 : index
    %202 = vector.load %arg37[%c0_83, %c0_84] : memref<1x128xf32, #tpu.memory_space<vmem>>, vector<1x128xf32>
    %c0_85 = arith.constant 0 : index
    %c0_86 = arith.constant 0 : index
    %203 = vector.load %arg40[%c0_85, %c0_86] : memref<128x32xf32, #tpu.memory_space<vmem>>, vector<128x32xf32>
    %c0_87 = arith.constant 0 : index
    %c0_88 = arith.constant 0 : index
    %204 = vector.load %arg38[%c0_87, %c0_88] : memref<1x32xf32, #tpu.memory_space<vmem>>, vector<1x32xf32>
    %205 = vector.shape_cast %200 : vector<4x8x32xf32> to vector<32x32xf32>
    %cst_89 = arith.constant dense<0.000000e+00> : vector<32x128xf32>
    %206 = tpu.matmul %205, %201, %cst_89 {dimension_numbers = #tpu.dot_dimension_numbers<[1], [0], [0], [1], [0, 0, 1, 1], [], []>} : vector<32x32xf32>, vector<32x128xf32>, vector<32x128xf32> -> vector<32x128xf32>
    %207 = vector.broadcast %202 : vector<1x128xf32> to vector<32x128xf32>
    %208 = arith.addf %206, %207 : vector<32x128xf32>
    %209 = arith.mulf %208, %208 : vector<32x128xf32>
    %210 = arith.mulf %208, %209 : vector<32x128xf32>
    %cst_90 = arith.constant 4.471500e-02 : f32
    %211 = vector.broadcast %cst_90 : f32 to vector<32x128xf32>
    %212 = arith.mulf %211, %210 : vector<32x128xf32>
    %213 = arith.addf %208, %212 : vector<32x128xf32>
    %cst_91 = arith.constant 0.797884583 : f32
    %214 = vector.broadcast %cst_91 : f32 to vector<32x128xf32>
    %215 = arith.mulf %214, %213 : vector<32x128xf32>
    %216 = math.tanh %215 : vector<32x128xf32>
    %cst_92 = arith.constant 1.000000e+00 : f32
    %217 = vector.broadcast %cst_92 : f32 to vector<32x128xf32>
    %218 = arith.addf %217, %216 : vector<32x128xf32>
    %cst_93 = arith.constant 5.000000e-01 : f32
    %219 = vector.broadcast %cst_93 : f32 to vector<32x128xf32>
    %220 = arith.mulf %219, %218 : vector<32x128xf32>
    %221 = arith.mulf %208, %220 : vector<32x128xf32>
    %cst_94 = arith.constant dense<0.000000e+00> : vector<32x32xf32>
    %222 = tpu.matmul %221, %203, %cst_94 {dimension_numbers = #tpu.dot_dimension_numbers<[1], [0], [0], [1], [0, 0, 1, 1], [], []>} : vector<32x128xf32>, vector<128x32xf32>, vector<32x32xf32> -> vector<32x32xf32>
    %223 = vector.broadcast %204 : vector<1x32xf32> to vector<32x32xf32>
    %224 = arith.addf %222, %223 : vector<32x32xf32>
    %225 = vector.shape_cast %224 : vector<32x32xf32> to vector<4x8x32xf32>
    %226 = arith.addf %174, %225 : vector<4x8x32xf32>
    %c0_95 = arith.constant 0 : index
    %c0_96 = arith.constant 0 : index
    %227 = vector.load %arg36[%c0_95, %c0_96] : memref<1x32xf32, #tpu.memory_space<vmem>>, vector<1x32xf32>
    %c0_97 = arith.constant 0 : index
    %c0_98 = arith.constant 0 : index
    %228 = vector.load %arg35[%c0_97, %c0_98] : memref<1x32xf32, #tpu.memory_space<vmem>>, vector<1x32xf32>
    %cst_99 = arith.constant dense<0.000000e+00> : vector<4x8xf32>
    %229 = vector.multi_reduction <add>, %226, %cst_99 [2] : vector<4x8x32xf32> to vector<4x8xf32>
    %230 = vector.shape_cast %229 : vector<4x8xf32> to vector<4x8x1xf32>
    %cst_100 = arith.constant 3.200000e+01 : f32
    %231 = vector.broadcast %cst_100 : f32 to vector<4x8x1xf32>
    %232 = arith.divf %230, %231 : vector<4x8x1xf32>
    %233 = vector.broadcast %232 : vector<4x8x1xf32> to vector<4x8x32xf32>
    %234 = arith.subf %226, %233 : vector<4x8x32xf32>
    %235 = arith.mulf %234, %234 : vector<4x8x32xf32>
    %cst_101 = arith.constant dense<0.000000e+00> : vector<4x8xf32>
    %236 = vector.multi_reduction <add>, %235, %cst_101 [2] : vector<4x8x32xf32> to vector<4x8xf32>
    %237 = vector.shape_cast %236 : vector<4x8xf32> to vector<4x8x1xf32>
    %cst_102 = arith.constant 3.200000e+01 : f32
    %238 = vector.broadcast %cst_102 : f32 to vector<4x8x1xf32>
    %239 = arith.divf %237, %238 : vector<4x8x1xf32>
    %240 = vector.broadcast %232 : vector<4x8x1xf32> to vector<4x8x32xf32>
    %241 = arith.subf %226, %240 : vector<4x8x32xf32>
    %cst_103 = arith.constant 9.99999997E-7 : f32
    %242 = vector.broadcast %cst_103 : f32 to vector<4x8x1xf32>
    %243 = arith.addf %239, %242 : vector<4x8x1xf32>
    %244 = math.rsqrt %243 : vector<4x8x1xf32>
    %245 = vector.broadcast %244 : vector<4x8x1xf32> to vector<4x8x32xf32>
    %246 = arith.mulf %241, %245 : vector<4x8x32xf32>
    %247 = vector.shape_cast %227 : vector<1x32xf32> to vector<1x1x32xf32>
    %248 = vector.broadcast %247 : vector<1x1x32xf32> to vector<4x8x32xf32>
    %249 = arith.mulf %246, %248 : vector<4x8x32xf32>
    %250 = vector.shape_cast %228 : vector<1x32xf32> to vector<1x1x32xf32>
    %251 = vector.broadcast %250 : vector<1x1x32xf32> to vector<4x8x32xf32>
    %252 = arith.addf %249, %251 : vector<4x8x32xf32>
    %c0_104 = arith.constant 0 : index
    %c0_105 = arith.constant 0 : index
    %253 = vector.load %arg1[%c0_104, %c0_105] : memref<32x1xi32, #tpu.memory_space<vmem>>, vector<32x1xi32>
    %254 = tpu.iota {dimensions = array<i32: 1>} : vector<32x128xi32>
    %255 = vector.broadcast %253 : vector<32x1xi32> to vector<32x128xi32>
    %256 = arith.cmpi eq, %254, %255 : vector<32x128xi32>
    %257 = arith.extui %256 : vector<32x128xi1> to vector<32x128xi32>
    %258 = arith.sitofp %257 : vector<32x128xi32> to vector<32x128xf32>
    %c0_106 = arith.constant 0 : index
    %c0_107 = arith.constant 0 : index
    %259 = vector.load %arg29[%c0_106, %c0_107] : memref<128x32xf32, #tpu.memory_space<vmem>>, vector<128x32xf32>
    %cst_108 = arith.constant dense<0.000000e+00> : vector<32x32xf32>
    %260 = tpu.matmul %258, %259, %cst_108 {dimension_numbers = #tpu.dot_dimension_numbers<[1], [0], [0], [1], [0, 0, 1, 1], [], []>} : vector<32x128xf32>, vector<128x32xf32>, vector<32x32xf32> -> vector<32x32xf32>
    %261 = vector.shape_cast %260 : vector<32x32xf32> to vector<4x8x32xf32>
    %c0_109 = arith.constant 0 : index
    %c0_110 = arith.constant 0 : index
    %262 = vector.load %arg30[%c0_109, %c0_110] : memref<8x32xf32, #tpu.memory_space<vmem>>, vector<8x32xf32>
    %263 = vector.shape_cast %262 : vector<8x32xf32> to vector<1x8x32xf32>
    %264 = vector.broadcast %263 : vector<1x8x32xf32> to vector<4x8x32xf32>
    %265 = arith.addf %261, %264 : vector<4x8x32xf32>
    %c0_111 = arith.constant 0 : index
    %c0_112 = arith.constant 0 : index
    %266 = vector.load %arg20[%c0_111, %c0_112] : memref<1x32xf32, #tpu.memory_space<vmem>>, vector<1x32xf32>
    %c0_113 = arith.constant 0 : index
    %c0_114 = arith.constant 0 : index
    %267 = vector.load %arg19[%c0_113, %c0_114] : memref<1x32xf32, #tpu.memory_space<vmem>>, vector<1x32xf32>
    %cst_115 = arith.constant dense<0.000000e+00> : vector<4x8xf32>
    %268 = vector.multi_reduction <add>, %265, %cst_115 [2] : vector<4x8x32xf32> to vector<4x8xf32>
    %269 = vector.shape_cast %268 : vector<4x8xf32> to vector<4x8x1xf32>
    %cst_116 = arith.constant 3.200000e+01 : f32
    %270 = vector.broadcast %cst_116 : f32 to vector<4x8x1xf32>
    %271 = arith.divf %269, %270 : vector<4x8x1xf32>
    %272 = vector.broadcast %271 : vector<4x8x1xf32> to vector<4x8x32xf32>
    %273 = arith.subf %265, %272 : vector<4x8x32xf32>
    %274 = arith.mulf %273, %273 : vector<4x8x32xf32>
    %cst_117 = arith.constant dense<0.000000e+00> : vector<4x8xf32>
    %275 = vector.multi_reduction <add>, %274, %cst_117 [2] : vector<4x8x32xf32> to vector<4x8xf32>
    %276 = vector.shape_cast %275 : vector<4x8xf32> to vector<4x8x1xf32>
    %cst_118 = arith.constant 3.200000e+01 : f32
    %277 = vector.broadcast %cst_118 : f32 to vector<4x8x1xf32>
    %278 = arith.divf %276, %277 : vector<4x8x1xf32>
    %279 = vector.broadcast %271 : vector<4x8x1xf32> to vector<4x8x32xf32>
    %280 = arith.subf %265, %279 : vector<4x8x32xf32>
    %cst_119 = arith.constant 9.99999997E-7 : f32
    %281 = vector.broadcast %cst_119 : f32 to vector<4x8x1xf32>
    %282 = arith.addf %278, %281 : vector<4x8x1xf32>
    %283 = math.rsqrt %282 : vector<4x8x1xf32>
    %284 = vector.broadcast %283 : vector<4x8x1xf32> to vector<4x8x32xf32>
    %285 = arith.mulf %280, %284 : vector<4x8x32xf32>
    %286 = vector.shape_cast %266 : vector<1x32xf32> to vector<1x1x32xf32>
    %287 = vector.broadcast %286 : vector<1x1x32xf32> to vector<4x8x32xf32>
    %288 = arith.mulf %285, %287 : vector<4x8x32xf32>
    %289 = vector.shape_cast %267 : vector<1x32xf32> to vector<1x1x32xf32>
    %290 = vector.broadcast %289 : vector<1x1x32xf32> to vector<4x8x32xf32>
    %291 = arith.addf %288, %290 : vector<4x8x32xf32>
    %c0_120 = arith.constant 0 : index
    %c0_121 = arith.constant 0 : index
    %292 = vector.load %arg28[%c0_120, %c0_121] : memref<32x96xf32, #tpu.memory_space<vmem>>, vector<32x96xf32>
    %c0_122 = arith.constant 0 : index
    %c0_123 = arith.constant 0 : index
    %293 = vector.load %arg26[%c0_122, %c0_123] : memref<1x96xf32, #tpu.memory_space<vmem>>, vector<1x96xf32>
    %c0_124 = arith.constant 0 : index
    %c0_125 = arith.constant 0 : index
    %294 = vector.load %arg27[%c0_124, %c0_125] : memref<32x32xf32, #tpu.memory_space<vmem>>, vector<32x32xf32>
    %c0_126 = arith.constant 0 : index
    %c0_127 = arith.constant 0 : index
    %295 = vector.load %arg25[%c0_126, %c0_127] : memref<1x32xf32, #tpu.memory_space<vmem>>, vector<1x32xf32>
    %296 = vector.shape_cast %291 : vector<4x8x32xf32> to vector<32x32xf32>
    %cst_128 = arith.constant dense<0.000000e+00> : vector<32x96xf32>
    %297 = tpu.matmul %296, %292, %cst_128 {dimension_numbers = #tpu.dot_dimension_numbers<[1], [0], [0], [1], [0, 0, 1, 1], [], []>} : vector<32x32xf32>, vector<32x96xf32>, vector<32x96xf32> -> vector<32x96xf32>
    %298 = vector.broadcast %293 : vector<1x96xf32> to vector<32x96xf32>
    %299 = arith.addf %297, %298 : vector<32x96xf32>
    %300 = vector.extract_strided_slice %299 {offsets = [0, 0], sizes = [32, 32], strides = [1, 1]} : vector<32x96xf32> to vector<32x32xf32>
    %301 = vector.shape_cast %300 : vector<32x32xf32> to vector<4x8x32xf32>
    %302 = vector.extract_strided_slice %299 {offsets = [0, 32], sizes = [32, 32], strides = [1, 1]} : vector<32x96xf32> to vector<32x32xf32>
    %303 = vector.shape_cast %302 : vector<32x32xf32> to vector<4x8x32xf32>
    %304 = vector.extract_strided_slice %299 {offsets = [0, 64], sizes = [32, 32], strides = [1, 1]} : vector<32x96xf32> to vector<32x32xf32>
    %305 = vector.shape_cast %304 : vector<32x32xf32> to vector<4x8x32xf32>
    %cst_129 = arith.constant 0.000000e+00 : f32
    %306 = vector.broadcast %cst_129 : f32 to vector<32x32xf32>
    %307 = vector.extract_strided_slice %301 {offsets = [0, 0, 0], sizes = [4, 8, 8], strides = [1, 1, 1]} : vector<4x8x32xf32> to vector<4x8x8xf32>
    %308 = vector.extract_strided_slice %303 {offsets = [0, 0, 0], sizes = [4, 8, 8], strides = [1, 1, 1]} : vector<4x8x32xf32> to vector<4x8x8xf32>
    %309 = vector.extract_strided_slice %305 {offsets = [0, 0, 0], sizes = [4, 8, 8], strides = [1, 1, 1]} : vector<4x8x32xf32> to vector<4x8x8xf32>
    "tpu.trace_start"() <{level = 10 : i32, message = "bqd,bkd->bqk"}> : () -> ()
    %cst_130 = arith.constant dense<0.000000e+00> : vector<4x8x8xf32>
    %310 = tpu.matmul %307, %308, %cst_130 {dimension_numbers = #tpu.dot_dimension_numbers<[2], [2], [1], [1], [0, 0, 0, 1, 1, 1], [0], [0]>} : vector<4x8x8xf32>, vector<4x8x8xf32>, vector<4x8x8xf32> -> vector<4x8x8xf32>
    "tpu.trace_stop"() : () -> ()
    %cst_131 = arith.constant 0.353553385 : f32
    %311 = vector.broadcast %cst_131 : f32 to vector<4x8x8xf32>
    %312 = arith.mulf %310, %311 : vector<4x8x8xf32>
    %cst_132 = arith.constant dense<0xFF800000> : vector<4x8xf32>
    %313 = vector.multi_reduction <maximumf>, %312, %cst_132 [2] : vector<4x8x8xf32> to vector<4x8xf32>
    %314 = vector.shape_cast %313 : vector<4x8xf32> to vector<4x8x1xf32>
    %315 = vector.broadcast %314 : vector<4x8x1xf32> to vector<4x8x8xf32>
    %316 = arith.subf %312, %315 : vector<4x8x8xf32>
    %317 = math.exp %316 : vector<4x8x8xf32>
    %cst_133 = arith.constant dense<0.000000e+00> : vector<4x8xf32>
    %318 = vector.multi_reduction <add>, %317, %cst_133 [2] : vector<4x8x8xf32> to vector<4x8xf32>
    %319 = vector.shape_cast %318 : vector<4x8xf32> to vector<4x8x1xf32>
    %320 = tpu.reciprocal %319 {approx = true} : vector<4x8x1xf32> -> vector<4x8x1xf32>
    %321 = vector.broadcast %320 : vector<4x8x1xf32> to vector<4x8x8xf32>
    %322 = arith.mulf %317, %321 : vector<4x8x8xf32>
    "tpu.trace_start"() <{level = 10 : i32, message = "bqk,bkd->bqd"}> : () -> ()
    %cst_134 = arith.constant dense<0.000000e+00> : vector<4x8x8xf32>
    %323 = tpu.matmul %322, %309, %cst_134 {dimension_numbers = #tpu.dot_dimension_numbers<[2], [1], [1], [2], [0, 0, 0, 1, 1, 2], [0], [0]>} : vector<4x8x8xf32>, vector<4x8x8xf32>, vector<4x8x8xf32> -> vector<4x8x8xf32>
    "tpu.trace_stop"() : () -> ()
    %324 = vector.shape_cast %323 : vector<4x8x8xf32> to vector<32x8xf32>
    %325 = vector.extract_strided_slice %294 {offsets = [0, 0], sizes = [8, 32], strides = [1, 1]} : vector<32x32xf32> to vector<8x32xf32>
    %cst_135 = arith.constant dense<0.000000e+00> : vector<32x32xf32>
    %326 = tpu.matmul %324, %325, %cst_135 {dimension_numbers = #tpu.dot_dimension_numbers<[1], [0], [0], [1], [0, 0, 1, 1], [], []>} : vector<32x8xf32>, vector<8x32xf32>, vector<32x32xf32> -> vector<32x32xf32>
    %327 = arith.addf %306, %326 : vector<32x32xf32>
    %328 = vector.extract_strided_slice %301 {offsets = [0, 0, 8], sizes = [4, 8, 8], strides = [1, 1, 1]} : vector<4x8x32xf32> to vector<4x8x8xf32>
    %329 = vector.extract_strided_slice %303 {offsets = [0, 0, 8], sizes = [4, 8, 8], strides = [1, 1, 1]} : vector<4x8x32xf32> to vector<4x8x8xf32>
    %330 = vector.extract_strided_slice %305 {offsets = [0, 0, 8], sizes = [4, 8, 8], strides = [1, 1, 1]} : vector<4x8x32xf32> to vector<4x8x8xf32>
    "tpu.trace_start"() <{level = 10 : i32, message = "bqd,bkd->bqk"}> : () -> ()
    %cst_136 = arith.constant dense<0.000000e+00> : vector<4x8x8xf32>
    %331 = tpu.matmul %328, %329, %cst_136 {dimension_numbers = #tpu.dot_dimension_numbers<[2], [2], [1], [1], [0, 0, 0, 1, 1, 1], [0], [0]>} : vector<4x8x8xf32>, vector<4x8x8xf32>, vector<4x8x8xf32> -> vector<4x8x8xf32>
    "tpu.trace_stop"() : () -> ()
    %cst_137 = arith.constant 0.353553385 : f32
    %332 = vector.broadcast %cst_137 : f32 to vector<4x8x8xf32>
    %333 = arith.mulf %331, %332 : vector<4x8x8xf32>
    %cst_138 = arith.constant dense<0xFF800000> : vector<4x8xf32>
    %334 = vector.multi_reduction <maximumf>, %333, %cst_138 [2] : vector<4x8x8xf32> to vector<4x8xf32>
    %335 = vector.shape_cast %334 : vector<4x8xf32> to vector<4x8x1xf32>
    %336 = vector.broadcast %335 : vector<4x8x1xf32> to vector<4x8x8xf32>
    %337 = arith.subf %333, %336 : vector<4x8x8xf32>
    %338 = math.exp %337 : vector<4x8x8xf32>
    %cst_139 = arith.constant dense<0.000000e+00> : vector<4x8xf32>
    %339 = vector.multi_reduction <add>, %338, %cst_139 [2] : vector<4x8x8xf32> to vector<4x8xf32>
    %340 = vector.shape_cast %339 : vector<4x8xf32> to vector<4x8x1xf32>
    %341 = tpu.reciprocal %340 {approx = true} : vector<4x8x1xf32> -> vector<4x8x1xf32>
    %342 = vector.broadcast %341 : vector<4x8x1xf32> to vector<4x8x8xf32>
    %343 = arith.mulf %338, %342 : vector<4x8x8xf32>
    "tpu.trace_start"() <{level = 10 : i32, message = "bqk,bkd->bqd"}> : () -> ()
    %cst_140 = arith.constant dense<0.000000e+00> : vector<4x8x8xf32>
    %344 = tpu.matmul %343, %330, %cst_140 {dimension_numbers = #tpu.dot_dimension_numbers<[2], [1], [1], [2], [0, 0, 0, 1, 1, 2], [0], [0]>} : vector<4x8x8xf32>, vector<4x8x8xf32>, vector<4x8x8xf32> -> vector<4x8x8xf32>
    "tpu.trace_stop"() : () -> ()
    %345 = vector.shape_cast %344 : vector<4x8x8xf32> to vector<32x8xf32>
    %346 = vector.extract_strided_slice %294 {offsets = [8, 0], sizes = [8, 32], strides = [1, 1]} : vector<32x32xf32> to vector<8x32xf32>
    %cst_141 = arith.constant dense<0.000000e+00> : vector<32x32xf32>
    %347 = tpu.matmul %345, %346, %cst_141 {dimension_numbers = #tpu.dot_dimension_numbers<[1], [0], [0], [1], [0, 0, 1, 1], [], []>} : vector<32x8xf32>, vector<8x32xf32>, vector<32x32xf32> -> vector<32x32xf32>
    %348 = arith.addf %327, %347 : vector<32x32xf32>
    %349 = vector.extract_strided_slice %301 {offsets = [0, 0, 16], sizes = [4, 8, 8], strides = [1, 1, 1]} : vector<4x8x32xf32> to vector<4x8x8xf32>
    %350 = vector.extract_strided_slice %303 {offsets = [0, 0, 16], sizes = [4, 8, 8], strides = [1, 1, 1]} : vector<4x8x32xf32> to vector<4x8x8xf32>
    %351 = vector.extract_strided_slice %305 {offsets = [0, 0, 16], sizes = [4, 8, 8], strides = [1, 1, 1]} : vector<4x8x32xf32> to vector<4x8x8xf32>
    "tpu.trace_start"() <{level = 10 : i32, message = "bqd,bkd->bqk"}> : () -> ()
    %cst_142 = arith.constant dense<0.000000e+00> : vector<4x8x8xf32>
    %352 = tpu.matmul %349, %350, %cst_142 {dimension_numbers = #tpu.dot_dimension_numbers<[2], [2], [1], [1], [0, 0, 0, 1, 1, 1], [0], [0]>} : vector<4x8x8xf32>, vector<4x8x8xf32>, vector<4x8x8xf32> -> vector<4x8x8xf32>
    "tpu.trace_stop"() : () -> ()
    %cst_143 = arith.constant 0.353553385 : f32
    %353 = vector.broadcast %cst_143 : f32 to vector<4x8x8xf32>
    %354 = arith.mulf %352, %353 : vector<4x8x8xf32>
    %cst_144 = arith.constant dense<0xFF800000> : vector<4x8xf32>
    %355 = vector.multi_reduction <maximumf>, %354, %cst_144 [2] : vector<4x8x8xf32> to vector<4x8xf32>
    %356 = vector.shape_cast %355 : vector<4x8xf32> to vector<4x8x1xf32>
    %357 = vector.broadcast %356 : vector<4x8x1xf32> to vector<4x8x8xf32>
    %358 = arith.subf %354, %357 : vector<4x8x8xf32>
    %359 = math.exp %358 : vector<4x8x8xf32>
    %cst_145 = arith.constant dense<0.000000e+00> : vector<4x8xf32>
    %360 = vector.multi_reduction <add>, %359, %cst_145 [2] : vector<4x8x8xf32> to vector<4x8xf32>
    %361 = vector.shape_cast %360 : vector<4x8xf32> to vector<4x8x1xf32>
    %362 = tpu.reciprocal %361 {approx = true} : vector<4x8x1xf32> -> vector<4x8x1xf32>
    %363 = vector.broadcast %362 : vector<4x8x1xf32> to vector<4x8x8xf32>
    %364 = arith.mulf %359, %363 : vector<4x8x8xf32>
    "tpu.trace_start"() <{level = 10 : i32, message = "bqk,bkd->bqd"}> : () -> ()
    %cst_146 = arith.constant dense<0.000000e+00> : vector<4x8x8xf32>
    %365 = tpu.matmul %364, %351, %cst_146 {dimension_numbers = #tpu.dot_dimension_numbers<[2], [1], [1], [2], [0, 0, 0, 1, 1, 2], [0], [0]>} : vector<4x8x8xf32>, vector<4x8x8xf32>, vector<4x8x8xf32> -> vector<4x8x8xf32>
    "tpu.trace_stop"() : () -> ()
    %366 = vector.shape_cast %365 : vector<4x8x8xf32> to vector<32x8xf32>
    %367 = vector.extract_strided_slice %294 {offsets = [16, 0], sizes = [8, 32], strides = [1, 1]} : vector<32x32xf32> to vector<8x32xf32>
    %cst_147 = arith.constant dense<0.000000e+00> : vector<32x32xf32>
    %368 = tpu.matmul %366, %367, %cst_147 {dimension_numbers = #tpu.dot_dimension_numbers<[1], [0], [0], [1], [0, 0, 1, 1], [], []>} : vector<32x8xf32>, vector<8x32xf32>, vector<32x32xf32> -> vector<32x32xf32>
    %369 = arith.addf %348, %368 : vector<32x32xf32>
    %370 = vector.extract_strided_slice %301 {offsets = [0, 0, 24], sizes = [4, 8, 8], strides = [1, 1, 1]} : vector<4x8x32xf32> to vector<4x8x8xf32>
    %371 = vector.extract_strided_slice %303 {offsets = [0, 0, 24], sizes = [4, 8, 8], strides = [1, 1, 1]} : vector<4x8x32xf32> to vector<4x8x8xf32>
    %372 = vector.extract_strided_slice %305 {offsets = [0, 0, 24], sizes = [4, 8, 8], strides = [1, 1, 1]} : vector<4x8x32xf32> to vector<4x8x8xf32>
    "tpu.trace_start"() <{level = 10 : i32, message = "bqd,bkd->bqk"}> : () -> ()
    %cst_148 = arith.constant dense<0.000000e+00> : vector<4x8x8xf32>
    %373 = tpu.matmul %370, %371, %cst_148 {dimension_numbers = #tpu.dot_dimension_numbers<[2], [2], [1], [1], [0, 0, 0, 1, 1, 1], [0], [0]>} : vector<4x8x8xf32>, vector<4x8x8xf32>, vector<4x8x8xf32> -> vector<4x8x8xf32>
    "tpu.trace_stop"() : () -> ()
    %cst_149 = arith.constant 0.353553385 : f32
    %374 = vector.broadcast %cst_149 : f32 to vector<4x8x8xf32>
    %375 = arith.mulf %373, %374 : vector<4x8x8xf32>
    %cst_150 = arith.constant dense<0xFF800000> : vector<4x8xf32>
    %376 = vector.multi_reduction <maximumf>, %375, %cst_150 [2] : vector<4x8x8xf32> to vector<4x8xf32>
    %377 = vector.shape_cast %376 : vector<4x8xf32> to vector<4x8x1xf32>
    %378 = vector.broadcast %377 : vector<4x8x1xf32> to vector<4x8x8xf32>
    %379 = arith.subf %375, %378 : vector<4x8x8xf32>
    %380 = math.exp %379 : vector<4x8x8xf32>
    %cst_151 = arith.constant dense<0.000000e+00> : vector<4x8xf32>
    %381 = vector.multi_reduction <add>, %380, %cst_151 [2] : vector<4x8x8xf32> to vector<4x8xf32>
    %382 = vector.shape_cast %381 : vector<4x8xf32> to vector<4x8x1xf32>
    %383 = tpu.reciprocal %382 {approx = true} : vector<4x8x1xf32> -> vector<4x8x1xf32>
    %384 = vector.broadcast %383 : vector<4x8x1xf32> to vector<4x8x8xf32>
    %385 = arith.mulf %380, %384 : vector<4x8x8xf32>
    "tpu.trace_start"() <{level = 10 : i32, message = "bqk,bkd->bqd"}> : () -> ()
    %cst_152 = arith.constant dense<0.000000e+00> : vector<4x8x8xf32>
    %386 = tpu.matmul %385, %372, %cst_152 {dimension_numbers = #tpu.dot_dimension_numbers<[2], [1], [1], [2], [0, 0, 0, 1, 1, 2], [0], [0]>} : vector<4x8x8xf32>, vector<4x8x8xf32>, vector<4x8x8xf32> -> vector<4x8x8xf32>
    "tpu.trace_stop"() : () -> ()
    %387 = vector.shape_cast %386 : vector<4x8x8xf32> to vector<32x8xf32>
    %388 = vector.extract_strided_slice %294 {offsets = [24, 0], sizes = [8, 32], strides = [1, 1]} : vector<32x32xf32> to vector<8x32xf32>
    %cst_153 = arith.constant dense<0.000000e+00> : vector<32x32xf32>
    %389 = tpu.matmul %387, %388, %cst_153 {dimension_numbers = #tpu.dot_dimension_numbers<[1], [0], [0], [1], [0, 0, 1, 1], [], []>} : vector<32x8xf32>, vector<8x32xf32>, vector<32x32xf32> -> vector<32x32xf32>
    %390 = arith.addf %369, %389 : vector<32x32xf32>
    %391 = vector.broadcast %295 : vector<1x32xf32> to vector<32x32xf32>
    %392 = arith.addf %390, %391 : vector<32x32xf32>
    %393 = vector.shape_cast %392 : vector<32x32xf32> to vector<4x8x32xf32>
    %394 = arith.addf %291, %393 : vector<4x8x32xf32>
    %c0_154 = arith.constant 0 : index
    %c0_155 = arith.constant 0 : index
    %395 = vector.load %arg14[%c0_154, %c0_155] : memref<1x32xf32, #tpu.memory_space<vmem>>, vector<1x32xf32>
    %c0_156 = arith.constant 0 : index
    %c0_157 = arith.constant 0 : index
    %396 = vector.load %arg13[%c0_156, %c0_157] : memref<1x32xf32, #tpu.memory_space<vmem>>, vector<1x32xf32>
    %cst_158 = arith.constant dense<0.000000e+00> : vector<4x8xf32>
    %397 = vector.multi_reduction <add>, %394, %cst_158 [2] : vector<4x8x32xf32> to vector<4x8xf32>
    %398 = vector.shape_cast %397 : vector<4x8xf32> to vector<4x8x1xf32>
    %cst_159 = arith.constant 3.200000e+01 : f32
    %399 = vector.broadcast %cst_159 : f32 to vector<4x8x1xf32>
    %400 = arith.divf %398, %399 : vector<4x8x1xf32>
    %401 = vector.broadcast %400 : vector<4x8x1xf32> to vector<4x8x32xf32>
    %402 = arith.subf %394, %401 : vector<4x8x32xf32>
    %403 = arith.mulf %402, %402 : vector<4x8x32xf32>
    %cst_160 = arith.constant dense<0.000000e+00> : vector<4x8xf32>
    %404 = vector.multi_reduction <add>, %403, %cst_160 [2] : vector<4x8x32xf32> to vector<4x8xf32>
    %405 = vector.shape_cast %404 : vector<4x8xf32> to vector<4x8x1xf32>
    %cst_161 = arith.constant 3.200000e+01 : f32
    %406 = vector.broadcast %cst_161 : f32 to vector<4x8x1xf32>
    %407 = arith.divf %405, %406 : vector<4x8x1xf32>
    %408 = vector.broadcast %400 : vector<4x8x1xf32> to vector<4x8x32xf32>
    %409 = arith.subf %394, %408 : vector<4x8x32xf32>
    %cst_162 = arith.constant 9.99999997E-7 : f32
    %410 = vector.broadcast %cst_162 : f32 to vector<4x8x1xf32>
    %411 = arith.addf %407, %410 : vector<4x8x1xf32>
    %412 = math.rsqrt %411 : vector<4x8x1xf32>
    %413 = vector.broadcast %412 : vector<4x8x1xf32> to vector<4x8x32xf32>
    %414 = arith.mulf %409, %413 : vector<4x8x32xf32>
    %415 = vector.shape_cast %395 : vector<1x32xf32> to vector<1x1x32xf32>
    %416 = vector.broadcast %415 : vector<1x1x32xf32> to vector<4x8x32xf32>
    %417 = arith.mulf %414, %416 : vector<4x8x32xf32>
    %418 = vector.shape_cast %396 : vector<1x32xf32> to vector<1x1x32xf32>
    %419 = vector.broadcast %418 : vector<1x1x32xf32> to vector<4x8x32xf32>
    %420 = arith.addf %417, %419 : vector<4x8x32xf32>
    %c0_163 = arith.constant 0 : index
    %c0_164 = arith.constant 0 : index
    %421 = vector.load %arg12[%c0_163, %c0_164] : memref<32x32xf32, #tpu.memory_space<vmem>>, vector<32x32xf32>
    %c0_165 = arith.constant 0 : index
    %c0_166 = arith.constant 0 : index
    %422 = vector.load %arg9[%c0_165, %c0_166] : memref<1x32xf32, #tpu.memory_space<vmem>>, vector<1x32xf32>
    %c0_167 = arith.constant 0 : index
    %c0_168 = arith.constant 0 : index
    %423 = vector.load %arg10[%c0_167, %c0_168] : memref<32x64xf32, #tpu.memory_space<vmem>>, vector<32x64xf32>
    %c0_169 = arith.constant 0 : index
    %c0_170 = arith.constant 0 : index
    %424 = vector.load %arg7[%c0_169, %c0_170] : memref<1x64xf32, #tpu.memory_space<vmem>>, vector<1x64xf32>
    %c0_171 = arith.constant 0 : index
    %c0_172 = arith.constant 0 : index
    %425 = vector.load %arg11[%c0_171, %c0_172] : memref<32x32xf32, #tpu.memory_space<vmem>>, vector<32x32xf32>
    %c0_173 = arith.constant 0 : index
    %c0_174 = arith.constant 0 : index
    %426 = vector.load %arg8[%c0_173, %c0_174] : memref<1x32xf32, #tpu.memory_space<vmem>>, vector<1x32xf32>
    %427 = vector.shape_cast %420 : vector<4x8x32xf32> to vector<32x32xf32>
    %cst_175 = arith.constant dense<0.000000e+00> : vector<32x32xf32>
    %428 = tpu.matmul %427, %421, %cst_175 {dimension_numbers = #tpu.dot_dimension_numbers<[1], [0], [0], [1], [0, 0, 1, 1], [], []>} : vector<32x32xf32>, vector<32x32xf32>, vector<32x32xf32> -> vector<32x32xf32>
    %429 = vector.broadcast %422 : vector<1x32xf32> to vector<32x32xf32>
    %430 = arith.addf %428, %429 : vector<32x32xf32>
    %431 = vector.shape_cast %430 : vector<32x32xf32> to vector<4x8x32xf32>
    %432 = vector.shape_cast %252 : vector<4x8x32xf32> to vector<32x32xf32>
    %cst_176 = arith.constant dense<0.000000e+00> : vector<32x64xf32>
    %433 = tpu.matmul %432, %423, %cst_176 {dimension_numbers = #tpu.dot_dimension_numbers<[1], [0], [0], [1], [0, 0, 1, 1], [], []>} : vector<32x32xf32>, vector<32x64xf32>, vector<32x64xf32> -> vector<32x64xf32>
    %434 = vector.broadcast %424 : vector<1x64xf32> to vector<32x64xf32>
    %435 = arith.addf %433, %434 : vector<32x64xf32>
    %436 = vector.extract_strided_slice %435 {offsets = [0, 0], sizes = [32, 32], strides = [1, 1]} : vector<32x64xf32> to vector<32x32xf32>
    %437 = vector.shape_cast %436 : vector<32x32xf32> to vector<4x8x32xf32>
    %438 = vector.extract_strided_slice %435 {offsets = [0, 32], sizes = [32, 32], strides = [1, 1]} : vector<32x64xf32> to vector<32x32xf32>
    %439 = vector.shape_cast %438 : vector<32x32xf32> to vector<4x8x32xf32>
    %cst_177 = arith.constant 0.000000e+00 : f32
    %440 = vector.broadcast %cst_177 : f32 to vector<32x32xf32>
    %441 = vector.extract_strided_slice %431 {offsets = [0, 0, 0], sizes = [4, 8, 8], strides = [1, 1, 1]} : vector<4x8x32xf32> to vector<4x8x8xf32>
    %442 = vector.extract_strided_slice %437 {offsets = [0, 0, 0], sizes = [4, 8, 8], strides = [1, 1, 1]} : vector<4x8x32xf32> to vector<4x8x8xf32>
    %443 = vector.extract_strided_slice %439 {offsets = [0, 0, 0], sizes = [4, 8, 8], strides = [1, 1, 1]} : vector<4x8x32xf32> to vector<4x8x8xf32>
    "tpu.trace_start"() <{level = 10 : i32, message = "bqd,bkd->bqk"}> : () -> ()
    %cst_178 = arith.constant dense<0.000000e+00> : vector<4x8x8xf32>
    %444 = tpu.matmul %441, %442, %cst_178 {dimension_numbers = #tpu.dot_dimension_numbers<[2], [2], [1], [1], [0, 0, 0, 1, 1, 1], [0], [0]>} : vector<4x8x8xf32>, vector<4x8x8xf32>, vector<4x8x8xf32> -> vector<4x8x8xf32>
    "tpu.trace_stop"() : () -> ()
    %cst_179 = arith.constant 0.353553385 : f32
    %445 = vector.broadcast %cst_179 : f32 to vector<4x8x8xf32>
    %446 = arith.mulf %444, %445 : vector<4x8x8xf32>
    %447 = vector.shape_cast %0 : vector<1x8xf32> to vector<1x1x8xf32>
    %448 = vector.broadcast %447 : vector<1x1x8xf32> to vector<4x8x8xf32>
    %449 = arith.addf %446, %448 : vector<4x8x8xf32>
    %cst_180 = arith.constant dense<0xFF800000> : vector<4x8xf32>
    %450 = vector.multi_reduction <maximumf>, %449, %cst_180 [2] : vector<4x8x8xf32> to vector<4x8xf32>
    %451 = vector.shape_cast %450 : vector<4x8xf32> to vector<4x8x1xf32>
    %452 = vector.broadcast %451 : vector<4x8x1xf32> to vector<4x8x8xf32>
    %453 = arith.subf %449, %452 : vector<4x8x8xf32>
    %454 = math.exp %453 : vector<4x8x8xf32>
    %cst_181 = arith.constant dense<0.000000e+00> : vector<4x8xf32>
    %455 = vector.multi_reduction <add>, %454, %cst_181 [2] : vector<4x8x8xf32> to vector<4x8xf32>
    %456 = vector.shape_cast %455 : vector<4x8xf32> to vector<4x8x1xf32>
    %457 = tpu.reciprocal %456 {approx = true} : vector<4x8x1xf32> -> vector<4x8x1xf32>
    %458 = vector.broadcast %457 : vector<4x8x1xf32> to vector<4x8x8xf32>
    %459 = arith.mulf %454, %458 : vector<4x8x8xf32>
    "tpu.trace_start"() <{level = 10 : i32, message = "bqk,bkd->bqd"}> : () -> ()
    %cst_182 = arith.constant dense<0.000000e+00> : vector<4x8x8xf32>
    %460 = tpu.matmul %459, %443, %cst_182 {dimension_numbers = #tpu.dot_dimension_numbers<[2], [1], [1], [2], [0, 0, 0, 1, 1, 2], [0], [0]>} : vector<4x8x8xf32>, vector<4x8x8xf32>, vector<4x8x8xf32> -> vector<4x8x8xf32>
    "tpu.trace_stop"() : () -> ()
    %461 = vector.shape_cast %460 : vector<4x8x8xf32> to vector<32x8xf32>
    %462 = vector.extract_strided_slice %425 {offsets = [0, 0], sizes = [8, 32], strides = [1, 1]} : vector<32x32xf32> to vector<8x32xf32>
    %cst_183 = arith.constant dense<0.000000e+00> : vector<32x32xf32>
    %463 = tpu.matmul %461, %462, %cst_183 {dimension_numbers = #tpu.dot_dimension_numbers<[1], [0], [0], [1], [0, 0, 1, 1], [], []>} : vector<32x8xf32>, vector<8x32xf32>, vector<32x32xf32> -> vector<32x32xf32>
    %464 = arith.addf %440, %463 : vector<32x32xf32>
    %465 = vector.extract_strided_slice %431 {offsets = [0, 0, 8], sizes = [4, 8, 8], strides = [1, 1, 1]} : vector<4x8x32xf32> to vector<4x8x8xf32>
    %466 = vector.extract_strided_slice %437 {offsets = [0, 0, 8], sizes = [4, 8, 8], strides = [1, 1, 1]} : vector<4x8x32xf32> to vector<4x8x8xf32>
    %467 = vector.extract_strided_slice %439 {offsets = [0, 0, 8], sizes = [4, 8, 8], strides = [1, 1, 1]} : vector<4x8x32xf32> to vector<4x8x8xf32>
    "tpu.trace_start"() <{level = 10 : i32, message = "bqd,bkd->bqk"}> : () -> ()
    %cst_184 = arith.constant dense<0.000000e+00> : vector<4x8x8xf32>
    %468 = tpu.matmul %465, %466, %cst_184 {dimension_numbers = #tpu.dot_dimension_numbers<[2], [2], [1], [1], [0, 0, 0, 1, 1, 1], [0], [0]>} : vector<4x8x8xf32>, vector<4x8x8xf32>, vector<4x8x8xf32> -> vector<4x8x8xf32>
    "tpu.trace_stop"() : () -> ()
    %cst_185 = arith.constant 0.353553385 : f32
    %469 = vector.broadcast %cst_185 : f32 to vector<4x8x8xf32>
    %470 = arith.mulf %468, %469 : vector<4x8x8xf32>
    %471 = vector.shape_cast %0 : vector<1x8xf32> to vector<1x1x8xf32>
    %472 = vector.broadcast %471 : vector<1x1x8xf32> to vector<4x8x8xf32>
    %473 = arith.addf %470, %472 : vector<4x8x8xf32>
    %cst_186 = arith.constant dense<0xFF800000> : vector<4x8xf32>
    %474 = vector.multi_reduction <maximumf>, %473, %cst_186 [2] : vector<4x8x8xf32> to vector<4x8xf32>
    %475 = vector.shape_cast %474 : vector<4x8xf32> to vector<4x8x1xf32>
    %476 = vector.broadcast %475 : vector<4x8x1xf32> to vector<4x8x8xf32>
    %477 = arith.subf %473, %476 : vector<4x8x8xf32>
    %478 = math.exp %477 : vector<4x8x8xf32>
    %cst_187 = arith.constant dense<0.000000e+00> : vector<4x8xf32>
    %479 = vector.multi_reduction <add>, %478, %cst_187 [2] : vector<4x8x8xf32> to vector<4x8xf32>
    %480 = vector.shape_cast %479 : vector<4x8xf32> to vector<4x8x1xf32>
    %481 = tpu.reciprocal %480 {approx = true} : vector<4x8x1xf32> -> vector<4x8x1xf32>
    %482 = vector.broadcast %481 : vector<4x8x1xf32> to vector<4x8x8xf32>
    %483 = arith.mulf %478, %482 : vector<4x8x8xf32>
    "tpu.trace_start"() <{level = 10 : i32, message = "bqk,bkd->bqd"}> : () -> ()
    %cst_188 = arith.constant dense<0.000000e+00> : vector<4x8x8xf32>
    %484 = tpu.matmul %483, %467, %cst_188 {dimension_numbers = #tpu.dot_dimension_numbers<[2], [1], [1], [2], [0, 0, 0, 1, 1, 2], [0], [0]>} : vector<4x8x8xf32>, vector<4x8x8xf32>, vector<4x8x8xf32> -> vector<4x8x8xf32>
    "tpu.trace_stop"() : () -> ()
    %485 = vector.shape_cast %484 : vector<4x8x8xf32> to vector<32x8xf32>
    %486 = vector.extract_strided_slice %425 {offsets = [8, 0], sizes = [8, 32], strides = [1, 1]} : vector<32x32xf32> to vector<8x32xf32>
    %cst_189 = arith.constant dense<0.000000e+00> : vector<32x32xf32>
    %487 = tpu.matmul %485, %486, %cst_189 {dimension_numbers = #tpu.dot_dimension_numbers<[1], [0], [0], [1], [0, 0, 1, 1], [], []>} : vector<32x8xf32>, vector<8x32xf32>, vector<32x32xf32> -> vector<32x32xf32>
    %488 = arith.addf %464, %487 : vector<32x32xf32>
    %489 = vector.extract_strided_slice %431 {offsets = [0, 0, 16], sizes = [4, 8, 8], strides = [1, 1, 1]} : vector<4x8x32xf32> to vector<4x8x8xf32>
    %490 = vector.extract_strided_slice %437 {offsets = [0, 0, 16], sizes = [4, 8, 8], strides = [1, 1, 1]} : vector<4x8x32xf32> to vector<4x8x8xf32>
    %491 = vector.extract_strided_slice %439 {offsets = [0, 0, 16], sizes = [4, 8, 8], strides = [1, 1, 1]} : vector<4x8x32xf32> to vector<4x8x8xf32>
    "tpu.trace_start"() <{level = 10 : i32, message = "bqd,bkd->bqk"}> : () -> ()
    %cst_190 = arith.constant dense<0.000000e+00> : vector<4x8x8xf32>
    %492 = tpu.matmul %489, %490, %cst_190 {dimension_numbers = #tpu.dot_dimension_numbers<[2], [2], [1], [1], [0, 0, 0, 1, 1, 1], [0], [0]>} : vector<4x8x8xf32>, vector<4x8x8xf32>, vector<4x8x8xf32> -> vector<4x8x8xf32>
    "tpu.trace_stop"() : () -> ()
    %cst_191 = arith.constant 0.353553385 : f32
    %493 = vector.broadcast %cst_191 : f32 to vector<4x8x8xf32>
    %494 = arith.mulf %492, %493 : vector<4x8x8xf32>
    %495 = vector.shape_cast %0 : vector<1x8xf32> to vector<1x1x8xf32>
    %496 = vector.broadcast %495 : vector<1x1x8xf32> to vector<4x8x8xf32>
    %497 = arith.addf %494, %496 : vector<4x8x8xf32>
    %cst_192 = arith.constant dense<0xFF800000> : vector<4x8xf32>
    %498 = vector.multi_reduction <maximumf>, %497, %cst_192 [2] : vector<4x8x8xf32> to vector<4x8xf32>
    %499 = vector.shape_cast %498 : vector<4x8xf32> to vector<4x8x1xf32>
    %500 = vector.broadcast %499 : vector<4x8x1xf32> to vector<4x8x8xf32>
    %501 = arith.subf %497, %500 : vector<4x8x8xf32>
    %502 = math.exp %501 : vector<4x8x8xf32>
    %cst_193 = arith.constant dense<0.000000e+00> : vector<4x8xf32>
    %503 = vector.multi_reduction <add>, %502, %cst_193 [2] : vector<4x8x8xf32> to vector<4x8xf32>
    %504 = vector.shape_cast %503 : vector<4x8xf32> to vector<4x8x1xf32>
    %505 = tpu.reciprocal %504 {approx = true} : vector<4x8x1xf32> -> vector<4x8x1xf32>
    %506 = vector.broadcast %505 : vector<4x8x1xf32> to vector<4x8x8xf32>
    %507 = arith.mulf %502, %506 : vector<4x8x8xf32>
    "tpu.trace_start"() <{level = 10 : i32, message = "bqk,bkd->bqd"}> : () -> ()
    %cst_194 = arith.constant dense<0.000000e+00> : vector<4x8x8xf32>
    %508 = tpu.matmul %507, %491, %cst_194 {dimension_numbers = #tpu.dot_dimension_numbers<[2], [1], [1], [2], [0, 0, 0, 1, 1, 2], [0], [0]>} : vector<4x8x8xf32>, vector<4x8x8xf32>, vector<4x8x8xf32> -> vector<4x8x8xf32>
    "tpu.trace_stop"() : () -> ()
    %509 = vector.shape_cast %508 : vector<4x8x8xf32> to vector<32x8xf32>
    %510 = vector.extract_strided_slice %425 {offsets = [16, 0], sizes = [8, 32], strides = [1, 1]} : vector<32x32xf32> to vector<8x32xf32>
    %cst_195 = arith.constant dense<0.000000e+00> : vector<32x32xf32>
    %511 = tpu.matmul %509, %510, %cst_195 {dimension_numbers = #tpu.dot_dimension_numbers<[1], [0], [0], [1], [0, 0, 1, 1], [], []>} : vector<32x8xf32>, vector<8x32xf32>, vector<32x32xf32> -> vector<32x32xf32>
    %512 = arith.addf %488, %511 : vector<32x32xf32>
    %513 = vector.extract_strided_slice %431 {offsets = [0, 0, 24], sizes = [4, 8, 8], strides = [1, 1, 1]} : vector<4x8x32xf32> to vector<4x8x8xf32>
    %514 = vector.extract_strided_slice %437 {offsets = [0, 0, 24], sizes = [4, 8, 8], strides = [1, 1, 1]} : vector<4x8x32xf32> to vector<4x8x8xf32>
    %515 = vector.extract_strided_slice %439 {offsets = [0, 0, 24], sizes = [4, 8, 8], strides = [1, 1, 1]} : vector<4x8x32xf32> to vector<4x8x8xf32>
    "tpu.trace_start"() <{level = 10 : i32, message = "bqd,bkd->bqk"}> : () -> ()
    %cst_196 = arith.constant dense<0.000000e+00> : vector<4x8x8xf32>
    %516 = tpu.matmul %513, %514, %cst_196 {dimension_numbers = #tpu.dot_dimension_numbers<[2], [2], [1], [1], [0, 0, 0, 1, 1, 1], [0], [0]>} : vector<4x8x8xf32>, vector<4x8x8xf32>, vector<4x8x8xf32> -> vector<4x8x8xf32>
    "tpu.trace_stop"() : () -> ()
    %cst_197 = arith.constant 0.353553385 : f32
    %517 = vector.broadcast %cst_197 : f32 to vector<4x8x8xf32>
    %518 = arith.mulf %516, %517 : vector<4x8x8xf32>
    %519 = vector.shape_cast %0 : vector<1x8xf32> to vector<1x1x8xf32>
    %520 = vector.broadcast %519 : vector<1x1x8xf32> to vector<4x8x8xf32>
    %521 = arith.addf %518, %520 : vector<4x8x8xf32>
    %cst_198 = arith.constant dense<0xFF800000> : vector<4x8xf32>
    %522 = vector.multi_reduction <maximumf>, %521, %cst_198 [2] : vector<4x8x8xf32> to vector<4x8xf32>
    %523 = vector.shape_cast %522 : vector<4x8xf32> to vector<4x8x1xf32>
    %524 = vector.broadcast %523 : vector<4x8x1xf32> to vector<4x8x8xf32>
    %525 = arith.subf %521, %524 : vector<4x8x8xf32>
    %526 = math.exp %525 : vector<4x8x8xf32>
    %cst_199 = arith.constant dense<0.000000e+00> : vector<4x8xf32>
    %527 = vector.multi_reduction <add>, %526, %cst_199 [2] : vector<4x8x8xf32> to vector<4x8xf32>
    %528 = vector.shape_cast %527 : vector<4x8xf32> to vector<4x8x1xf32>
    %529 = tpu.reciprocal %528 {approx = true} : vector<4x8x1xf32> -> vector<4x8x1xf32>
    %530 = vector.broadcast %529 : vector<4x8x1xf32> to vector<4x8x8xf32>
    %531 = arith.mulf %526, %530 : vector<4x8x8xf32>
    "tpu.trace_start"() <{level = 10 : i32, message = "bqk,bkd->bqd"}> : () -> ()
    %cst_200 = arith.constant dense<0.000000e+00> : vector<4x8x8xf32>
    %532 = tpu.matmul %531, %515, %cst_200 {dimension_numbers = #tpu.dot_dimension_numbers<[2], [1], [1], [2], [0, 0, 0, 1, 1, 2], [0], [0]>} : vector<4x8x8xf32>, vector<4x8x8xf32>, vector<4x8x8xf32> -> vector<4x8x8xf32>
    "tpu.trace_stop"() : () -> ()
    %533 = vector.shape_cast %532 : vector<4x8x8xf32> to vector<32x8xf32>
    %534 = vector.extract_strided_slice %425 {offsets = [24, 0], sizes = [8, 32], strides = [1, 1]} : vector<32x32xf32> to vector<8x32xf32>
    %cst_201 = arith.constant dense<0.000000e+00> : vector<32x32xf32>
    %535 = tpu.matmul %533, %534, %cst_201 {dimension_numbers = #tpu.dot_dimension_numbers<[1], [0], [0], [1], [0, 0, 1, 1], [], []>} : vector<32x8xf32>, vector<8x32xf32>, vector<32x32xf32> -> vector<32x32xf32>
    %536 = arith.addf %512, %535 : vector<32x32xf32>
    %537 = vector.broadcast %426 : vector<1x32xf32> to vector<32x32xf32>
    %538 = arith.addf %536, %537 : vector<32x32xf32>
    %539 = vector.shape_cast %538 : vector<32x32xf32> to vector<4x8x32xf32>
    %540 = arith.addf %420, %539 : vector<4x8x32xf32>
    %c0_202 = arith.constant 0 : index
    %c0_203 = arith.constant 0 : index
    %541 = vector.load %arg16[%c0_202, %c0_203] : memref<1x32xf32, #tpu.memory_space<vmem>>, vector<1x32xf32>
    %c0_204 = arith.constant 0 : index
    %c0_205 = arith.constant 0 : index
    %542 = vector.load %arg15[%c0_204, %c0_205] : memref<1x32xf32, #tpu.memory_space<vmem>>, vector<1x32xf32>
    %cst_206 = arith.constant dense<0.000000e+00> : vector<4x8xf32>
    %543 = vector.multi_reduction <add>, %540, %cst_206 [2] : vector<4x8x32xf32> to vector<4x8xf32>
    %544 = vector.shape_cast %543 : vector<4x8xf32> to vector<4x8x1xf32>
    %cst_207 = arith.constant 3.200000e+01 : f32
    %545 = vector.broadcast %cst_207 : f32 to vector<4x8x1xf32>
    %546 = arith.divf %544, %545 : vector<4x8x1xf32>
    %547 = vector.broadcast %546 : vector<4x8x1xf32> to vector<4x8x32xf32>
    %548 = arith.subf %540, %547 : vector<4x8x32xf32>
    %549 = arith.mulf %548, %548 : vector<4x8x32xf32>
    %cst_208 = arith.constant dense<0.000000e+00> : vector<4x8xf32>
    %550 = vector.multi_reduction <add>, %549, %cst_208 [2] : vector<4x8x32xf32> to vector<4x8xf32>
    %551 = vector.shape_cast %550 : vector<4x8xf32> to vector<4x8x1xf32>
    %cst_209 = arith.constant 3.200000e+01 : f32
    %552 = vector.broadcast %cst_209 : f32 to vector<4x8x1xf32>
    %553 = arith.divf %551, %552 : vector<4x8x1xf32>
    %554 = vector.broadcast %546 : vector<4x8x1xf32> to vector<4x8x32xf32>
    %555 = arith.subf %540, %554 : vector<4x8x32xf32>
    %cst_210 = arith.constant 9.99999997E-7 : f32
    %556 = vector.broadcast %cst_210 : f32 to vector<4x8x1xf32>
    %557 = arith.addf %553, %556 : vector<4x8x1xf32>
    %558 = math.rsqrt %557 : vector<4x8x1xf32>
    %559 = vector.broadcast %558 : vector<4x8x1xf32> to vector<4x8x32xf32>
    %560 = arith.mulf %555, %559 : vector<4x8x32xf32>
    %561 = vector.shape_cast %541 : vector<1x32xf32> to vector<1x1x32xf32>
    %562 = vector.broadcast %561 : vector<1x1x32xf32> to vector<4x8x32xf32>
    %563 = arith.mulf %560, %562 : vector<4x8x32xf32>
    %564 = vector.shape_cast %542 : vector<1x32xf32> to vector<1x1x32xf32>
    %565 = vector.broadcast %564 : vector<1x1x32xf32> to vector<4x8x32xf32>
    %566 = arith.addf %563, %565 : vector<4x8x32xf32>
    %c0_211 = arith.constant 0 : index
    %c0_212 = arith.constant 0 : index
    %567 = vector.load %arg23[%c0_211, %c0_212] : memref<32x128xf32, #tpu.memory_space<vmem>>, vector<32x128xf32>
    %c0_213 = arith.constant 0 : index
    %c0_214 = arith.constant 0 : index
    %568 = vector.load %arg21[%c0_213, %c0_214] : memref<1x128xf32, #tpu.memory_space<vmem>>, vector<1x128xf32>
    %c0_215 = arith.constant 0 : index
    %c0_216 = arith.constant 0 : index
    %569 = vector.load %arg24[%c0_215, %c0_216] : memref<128x32xf32, #tpu.memory_space<vmem>>, vector<128x32xf32>
    %c0_217 = arith.constant 0 : index
    %c0_218 = arith.constant 0 : index
    %570 = vector.load %arg22[%c0_217, %c0_218] : memref<1x32xf32, #tpu.memory_space<vmem>>, vector<1x32xf32>
    %571 = vector.shape_cast %566 : vector<4x8x32xf32> to vector<32x32xf32>
    %cst_219 = arith.constant dense<0.000000e+00> : vector<32x128xf32>
    %572 = tpu.matmul %571, %567, %cst_219 {dimension_numbers = #tpu.dot_dimension_numbers<[1], [0], [0], [1], [0, 0, 1, 1], [], []>} : vector<32x32xf32>, vector<32x128xf32>, vector<32x128xf32> -> vector<32x128xf32>
    %573 = vector.broadcast %568 : vector<1x128xf32> to vector<32x128xf32>
    %574 = arith.addf %572, %573 : vector<32x128xf32>
    %575 = arith.mulf %574, %574 : vector<32x128xf32>
    %576 = arith.mulf %574, %575 : vector<32x128xf32>
    %cst_220 = arith.constant 4.471500e-02 : f32
    %577 = vector.broadcast %cst_220 : f32 to vector<32x128xf32>
    %578 = arith.mulf %577, %576 : vector<32x128xf32>
    %579 = arith.addf %574, %578 : vector<32x128xf32>
    %cst_221 = arith.constant 0.797884583 : f32
    %580 = vector.broadcast %cst_221 : f32 to vector<32x128xf32>
    %581 = arith.mulf %580, %579 : vector<32x128xf32>
    %582 = math.tanh %581 : vector<32x128xf32>
    %cst_222 = arith.constant 1.000000e+00 : f32
    %583 = vector.broadcast %cst_222 : f32 to vector<32x128xf32>
    %584 = arith.addf %583, %582 : vector<32x128xf32>
    %cst_223 = arith.constant 5.000000e-01 : f32
    %585 = vector.broadcast %cst_223 : f32 to vector<32x128xf32>
    %586 = arith.mulf %585, %584 : vector<32x128xf32>
    %587 = arith.mulf %574, %586 : vector<32x128xf32>
    %cst_224 = arith.constant dense<0.000000e+00> : vector<32x32xf32>
    %588 = tpu.matmul %587, %569, %cst_224 {dimension_numbers = #tpu.dot_dimension_numbers<[1], [0], [0], [1], [0, 0, 1, 1], [], []>} : vector<32x128xf32>, vector<128x32xf32>, vector<32x32xf32> -> vector<32x32xf32>
    %589 = vector.broadcast %570 : vector<1x32xf32> to vector<32x32xf32>
    %590 = arith.addf %588, %589 : vector<32x32xf32>
    %591 = vector.shape_cast %590 : vector<32x32xf32> to vector<4x8x32xf32>
    %592 = arith.addf %566, %591 : vector<4x8x32xf32>
    %c0_225 = arith.constant 0 : index
    %c0_226 = arith.constant 0 : index
    %593 = vector.load %arg18[%c0_225, %c0_226] : memref<1x32xf32, #tpu.memory_space<vmem>>, vector<1x32xf32>
    %c0_227 = arith.constant 0 : index
    %c0_228 = arith.constant 0 : index
    %594 = vector.load %arg17[%c0_227, %c0_228] : memref<1x32xf32, #tpu.memory_space<vmem>>, vector<1x32xf32>
    %cst_229 = arith.constant dense<0.000000e+00> : vector<4x8xf32>
    %595 = vector.multi_reduction <add>, %592, %cst_229 [2] : vector<4x8x32xf32> to vector<4x8xf32>
    %596 = vector.shape_cast %595 : vector<4x8xf32> to vector<4x8x1xf32>
    %cst_230 = arith.constant 3.200000e+01 : f32
    %597 = vector.broadcast %cst_230 : f32 to vector<4x8x1xf32>
    %598 = arith.divf %596, %597 : vector<4x8x1xf32>
    %599 = vector.broadcast %598 : vector<4x8x1xf32> to vector<4x8x32xf32>
    %600 = arith.subf %592, %599 : vector<4x8x32xf32>
    %601 = arith.mulf %600, %600 : vector<4x8x32xf32>
    %cst_231 = arith.constant dense<0.000000e+00> : vector<4x8xf32>
    %602 = vector.multi_reduction <add>, %601, %cst_231 [2] : vector<4x8x32xf32> to vector<4x8xf32>
    %603 = vector.shape_cast %602 : vector<4x8xf32> to vector<4x8x1xf32>
    %cst_232 = arith.constant 3.200000e+01 : f32
    %604 = vector.broadcast %cst_232 : f32 to vector<4x8x1xf32>
    %605 = arith.divf %603, %604 : vector<4x8x1xf32>
    %606 = vector.broadcast %598 : vector<4x8x1xf32> to vector<4x8x32xf32>
    %607 = arith.subf %592, %606 : vector<4x8x32xf32>
    %cst_233 = arith.constant 9.99999997E-7 : f32
    %608 = vector.broadcast %cst_233 : f32 to vector<4x8x1xf32>
    %609 = arith.addf %605, %608 : vector<4x8x1xf32>
    %610 = math.rsqrt %609 : vector<4x8x1xf32>
    %611 = vector.broadcast %610 : vector<4x8x1xf32> to vector<4x8x32xf32>
    %612 = arith.mulf %607, %611 : vector<4x8x32xf32>
    %613 = vector.shape_cast %593 : vector<1x32xf32> to vector<1x1x32xf32>
    %614 = vector.broadcast %613 : vector<1x1x32xf32> to vector<4x8x32xf32>
    %615 = arith.mulf %612, %614 : vector<4x8x32xf32>
    %616 = vector.shape_cast %594 : vector<1x32xf32> to vector<1x1x32xf32>
    %617 = vector.broadcast %616 : vector<1x1x32xf32> to vector<4x8x32xf32>
    %618 = arith.addf %615, %617 : vector<4x8x32xf32>
    %619 = vector.extract_strided_slice %618 {offsets = [0, 0, 0], sizes = [1, 1, 32], strides = [1, 1, 1]} : vector<4x8x32xf32> to vector<1x1x32xf32>
    %620 = vector.shape_cast %619 : vector<1x1x32xf32> to vector<1x32xf32>
    %c0_234 = arith.constant 0 : index
    %c0_235 = arith.constant 0 : index
    %621 = vector.load %arg49[%c0_234, %c0_235] : memref<4x32xf32, #tpu.memory_space<vmem>>, vector<1x32xf32>
    tpu.vector_store %arg49[%c0_234, %c0_235], %620 {strides = array<i32>} : memref<4x32xf32, #tpu.memory_space<vmem>>, vector<1x32xf32>,
    %622 = vector.extract_strided_slice %618 {offsets = [1, 0, 0], sizes = [1, 1, 32], strides = [1, 1, 1]} : vector<4x8x32xf32> to vector<1x1x32xf32>
    %623 = vector.shape_cast %622 : vector<1x1x32xf32> to vector<1x32xf32>
    %c1_236 = arith.constant 1 : index
    %c0_237 = arith.constant 0 : index
    %624 = vector.load %arg49[%c1_236, %c0_237] : memref<4x32xf32, #tpu.memory_space<vmem>>, vector<1x32xf32>
    tpu.vector_store %arg49[%c1_236, %c0_237], %623 {strides = array<i32>} : memref<4x32xf32, #tpu.memory_space<vmem>>, vector<1x32xf32>,
    %625 = vector.extract_strided_slice %618 {offsets = [2, 0, 0], sizes = [1, 1, 32], strides = [1, 1, 1]} : vector<4x8x32xf32> to vector<1x1x32xf32>
    %626 = vector.shape_cast %625 : vector<1x1x32xf32> to vector<1x32xf32>
    %c2_238 = arith.constant 2 : index
    %c0_239 = arith.constant 0 : index
    %627 = vector.load %arg49[%c2_238, %c0_239] : memref<4x32xf32, #tpu.memory_space<vmem>>, vector<1x32xf32>
    tpu.vector_store %arg49[%c2_238, %c0_239], %626 {strides = array<i32>} : memref<4x32xf32, #tpu.memory_space<vmem>>, vector<1x32xf32>,
    %628 = vector.extract_strided_slice %618 {offsets = [3, 0, 0], sizes = [1, 1, 32], strides = [1, 1, 1]} : vector<4x8x32xf32> to vector<1x1x32xf32>
    %629 = vector.shape_cast %628 : vector<1x1x32xf32> to vector<1x32xf32>
    %c3_240 = arith.constant 3 : index
    %c0_241 = arith.constant 0 : index
    %630 = vector.load %arg49[%c3_240, %c0_241] : memref<4x32xf32, #tpu.memory_space<vmem>>, vector<1x32xf32>
    tpu.vector_store %arg49[%c3_240, %c0_241], %629 {strides = array<i32>} : memref<4x32xf32, #tpu.memory_space<vmem>>, vector<1x32xf32>,
    %c0_242 = arith.constant 0 : index
    %c0_243 = arith.constant 0 : index
    %631 = vector.load %arg49[%c0_242, %c0_243] : memref<4x32xf32, #tpu.memory_space<vmem>>, vector<4x32xf32>
    %c0_244 = arith.constant 0 : index
    %c0_245 = arith.constant 0 : index
    %632 = vector.load %arg4[%c0_244, %c0_245] : memref<32x2xf32, #tpu.memory_space<vmem>>, vector<32x2xf32>
    %cst_246 = arith.constant dense<0.000000e+00> : vector<4x2xf32>
    %633 = tpu.matmul %631, %632, %cst_246 {dimension_numbers = #tpu.dot_dimension_numbers<[1], [0], [0], [1], [0, 0, 1, 1], [], []>} : vector<4x32xf32>, vector<32x2xf32>, vector<4x2xf32> -> vector<4x2xf32>
    %c0_247 = arith.constant 0 : index
    %c0_248 = arith.constant 0 : index
    %634 = vector.load %arg3[%c0_247, %c0_248] : memref<1x2xf32, #tpu.memory_space<vmem>>, vector<1x2xf32>
    %635 = vector.broadcast %634 : vector<1x2xf32> to vector<4x2xf32>
    %636 = arith.addf %633, %635 : vector<4x2xf32>
    %637 = vector.extract_strided_slice %636 {offsets = [0, 1], sizes = [4, 1], strides = [1, 1]} : vector<4x2xf32> to vector<4x1xf32>
    %638 = vector.extract_strided_slice %637 {offsets = [0, 0], sizes = [2, 1], strides = [1, 1]} : vector<4x1xf32> to vector<2x1xf32>
    %c0_249 = arith.constant 0 : index
    %c0_250 = arith.constant 0 : index
    %639 = vector.load %arg50[%c0_249, %c0_250] : memref<2x2xf32, #tpu.memory_space<vmem>>, vector<2x1xf32>
    tpu.vector_store %arg50[%c0_249, %c0_250], %638 {strides = array<i32>} : memref<2x2xf32, #tpu.memory_space<vmem>>, vector<2x1xf32>,
    %640 = vector.extract_strided_slice %637 {offsets = [2, 0], sizes = [2, 1], strides = [1, 1]} : vector<4x1xf32> to vector<2x1xf32>
    %c0_251 = arith.constant 0 : index
    %c1_252 = arith.constant 1 : index
    %641 = vector.load %arg50[%c0_251, %c1_252] : memref<2x2xf32, #tpu.memory_space<vmem>>, vector<2x1xf32>
    tpu.vector_store %arg50[%c0_251, %c1_252], %640 {strides = array<i32>} : memref<2x2xf32, #tpu.memory_space<vmem>>, vector<2x1xf32>,
    %c0_253 = arith.constant 0 : index
    %c0_254 = arith.constant 0 : index
    %642 = vector.load %arg50[%c0_253, %c0_254] : memref<2x2xf32, #tpu.memory_space<vmem>>, vector<2x2xf32>
    %cst_255 = arith.constant dense<0xFF800000> : vector<2xf32>
    %643 = vector.multi_reduction <maximumf>, %642, %cst_255 [1] : vector<2x2xf32> to vector<2xf32>
    %644 = vector.shape_cast %643 : vector<2xf32> to vector<2x1xf32>
    %645 = vector.broadcast %644 : vector<2x1xf32> to vector<2x2xf32>
    %646 = arith.subf %642, %645 : vector<2x2xf32>
    %647 = math.exp %646 : vector<2x2xf32>
    %cst_256 = arith.constant dense<0.000000e+00> : vector<2xf32>
    %648 = vector.multi_reduction <add>, %647, %cst_256 [1] : vector<2x2xf32> to vector<2xf32>
    %649 = vector.shape_cast %648 : vector<2xf32> to vector<2x1xf32>
    %650 = vector.broadcast %649 : vector<2x1xf32> to vector<2x2xf32>
    %651 = arith.divf %647, %650 : vector<2x2xf32>
    %c0_257 = arith.constant 0 : index
    %c0_258 = arith.constant 0 : index
    %652 = vector.load %arg47[%c0_257, %c0_258] : memref<2x2xf32, #tpu.memory_space<vmem>>, vector<2x2xf32>
    tpu.vector_store %arg47[%c0_257, %c0_258], %651 {strides = array<i32>} : memref<2x2xf32, #tpu.memory_space<vmem>>, vector<2x2xf32>,
    return
  }
}

</mosaic_0001>

<llo_original>
// kernel: forward.1
$region0: #{forward.1}
  #allocation0 [shape = 'u32[]', space=smem, size = 0x4, offset = 0x4, fixed_abs, tag = 'smem constant byte address 0x4 - core index']
  #allocation1 [shape = 'u32[72,128]{1,0:T(1,128)}', space=vmem, size = 0x9000, scoped, tag = 'internal scratch']
  #allocation2 [shape = 'f32[4,8,32]{2,1,0:T(8,128)}', space=vmem, size = 0x4000, scoped, tag = 'scratch operand']
  #allocation3 [shape = 'f32[4,32]{1,0:T(4,128)}', space=vmem, size = 0x800, scoped, tag = 'scratch operand']
  #allocation4 [shape = 'f32[2,2]{1,0:T(2,128)}', space=vmem, size = 0x400, scoped, tag = 'scratch operand']
  %s0 = inlined_call_operand.smem [shape: u32[48], index: -1, kind: input, shape index: {}]
  %s1 = sld [smem:[%s0]]
  %s2 = scalar_lea.smem %s0, 1
  %s3 = sld [smem:[%s2]]
  %s4 = scalar_lea.smem %s0, 2
  %s5 = sld [smem:[%s4]]
  %s6 = scalar_lea.smem %s0, 3
  %s7 = sld [smem:[%s6]]
  %s8 = scalar_lea.smem %s0, 4
  %s9 = sld [smem:[%s8]]
  %s10 = scalar_lea.smem %s0, 5
  %s11 = sld [smem:[%s10]]
  %s12 = scalar_lea.smem %s0, 6
  %s13 = sld [smem:[%s12]]
  %s14 = scalar_lea.smem %s0, 7
  %s15 = sld [smem:[%s14]]
  %s16 = scalar_lea.smem %s0, 8
  %s17 = sld [smem:[%s16]]
  %s18 = scalar_lea.smem %s0, 9
  %s19 = sld [smem:[%s18]]
  %s20 = scalar_lea.smem %s0, 10
  %s21 = sld [smem:[%s20]]
  %s22 = scalar_lea.smem %s0, 11
  %s23 = sld [smem:[%s22]]
  %s24 = scalar_lea.smem %s0, 12
  %s25 = sld [smem:[%s24]]
  %s26 = scalar_lea.smem %s0, 13
  %s27 = sld [smem:[%s26]]
  %s28 = scalar_lea.smem %s0, 14
  %s29 = sld [smem:[%s28]]
  %s30 = scalar_lea.smem %s0, 15
  %s31 = sld [smem:[%s30]]
  %s32 = scalar_lea.smem %s0, 16
  %s33 = sld [smem:[%s32]]
  %s34 = scalar_lea.smem %s0, 17
  %s35 = sld [smem:[%s34]]
  %s36 = scalar_lea.smem %s0, 18
  %s37 = sld [smem:[%s36]]
  %s38 = scalar_lea.smem %s0, 19
  %s39 = sld [smem:[%s38]]
  %s40 = scalar_lea.smem %s0, 20
  %s41 = sld [smem:[%s40]]
  %s42 = scalar_lea.smem %s0, 21
  %s43 = sld [smem:[%s42]]
  %s44 = scalar_lea.smem %s0, 22
  %s45 = sld [smem:[%s44]]
  %s46 = scalar_lea.smem %s0, 23
  %s47 = sld [smem:[%s46]]
  %s48 = scalar_lea.smem %s0, 24
  %s49 = sld [smem:[%s48]]
  %s50 = scalar_lea.smem %s0, 25
  %s51 = sld [smem:[%s50]]
  %s52 = scalar_lea.smem %s0, 26
  %s53 = sld [smem:[%s52]]
  %s54 = scalar_lea.smem %s0, 27
  %s55 = sld [smem:[%s54]]
  %s56 = scalar_lea.smem %s0, 28
  %s57 = sld [smem:[%s56]]
  %s58 = scalar_lea.smem %s0, 29
  %s59 = sld [smem:[%s58]]
  %s60 = scalar_lea.smem %s0, 30
  %s61 = sld [smem:[%s60]]
  %s62 = scalar_lea.smem %s0, 31
  %s63 = sld [smem:[%s62]]
  %s64 = scalar_lea.smem %s0, 32
  %s65 = sld [smem:[%s64]]
  %s66 = scalar_lea.smem %s0, 33
  %s67 = sld [smem:[%s66]]
  %s68 = scalar_lea.smem %s0, 34
  %s69 = sld [smem:[%s68]]
  %s70 = scalar_lea.smem %s0, 35
  %s71 = sld [smem:[%s70]]
  %s72 = scalar_lea.smem %s0, 36
  %s73 = sld [smem:[%s72]]
  %s74 = scalar_lea.smem %s0, 37
  %s75 = sld [smem:[%s74]]
  %s76 = scalar_lea.smem %s0, 38
  %s77 = sld [smem:[%s76]]
  %s78 = scalar_lea.smem %s0, 39
  %s79 = sld [smem:[%s78]]
  %s80 = scalar_lea.smem %s0, 40
  %s81 = sld [smem:[%s80]]
  %s82 = scalar_lea.smem %s0, 41
  %s83 = sld [smem:[%s82]]
  %s84 = scalar_lea.smem %s0, 42
  %s85 = sld [smem:[%s84]]
  %s86 = scalar_lea.smem %s0, 43
  %s87 = sld [smem:[%s86]]
  %s88 = scalar_lea.smem %s0, 44
  %s89 = sld [smem:[%s88]]
  %s90 = scalar_lea.smem %s0, 45
  %s91 = sld [smem:[%s90]]
  %s92 = scalar_lea.smem %s0, 46
  %s93 = sld [smem:[%s92]]
  %s94 = scalar_lea.smem %s0, 47
  %s95 = sld [smem:[%s94]]
  %s96 = sld [smem:[#allocation0]]
  $region202: #{forward.1} parent=0
    _
  %s98 = ssub.s32 1, %s96
  %s99 = scalar_select 0, %s98, %s96
  $region1: #{forward.1} parent=0
    #allocation5 [shape = 'u8[512]{0}', space=vmem, size = 0x400, scoped, tag = 'input window, operand 41, single buffered']
    #allocation6 [shape = 's32[1]{0}', space=sflag, size = 0x4, scoped, tag = 'scoped memory for forward.1']
    #allocation7 [shape = 's32[1]{0}', space=sflag, size = 0x4, scoped, tag = 'scoped memory for forward.1']
    #allocation8 [shape = 'u8[1024]{0}', space=vmem, size = 0x400, scoped, tag = 'output window, operand 0, single buffered']
    %100 = vsyncpa [#allocation6], 0
    %101 = vsyncpa [#allocation7], 0
    // Predicated region
    $region2: #{forward.1} parent=1 // pred_check
      _
    $region3: #{forward.1} parent=1 // pred_check_branch
      %103 = sbr.rel (0) target = $region5
    $region4: #{forward.1} parent=1 // pred_region
      _
    $region5: #{forward.1} parent=1 // pred_fallthru
      _
    // Predicated region
    $region6: #{forward.1} parent=1 // pred_check
      _
    $region7: #{forward.1} parent=1 // pred_check_branch
      %105 = sbr.rel (0) target = $region9
    $region8: #{forward.1} parent=1 // pred_region
      _
    $region9: #{forward.1} parent=1 // pred_fallthru
      _
    // Predicated region
    $region10: #{forward.1} parent=1 // pred_check
      _
    $region11: #{forward.1} parent=1 // pred_check_branch
      %107 = sbr.rel (0) target = $region13
    $region12: #{forward.1} parent=1 // pred_region
      _
    $region13: #{forward.1} parent=1 // pred_fallthru
      _
    // Predicated region
    $region14: #{forward.1} parent=1 // pred_check
      _
    $region15: #{forward.1} parent=1 // pred_check_branch
      %109 = sbr.rel (0) target = $region17
    $region16: #{forward.1} parent=1 // pred_region
      _
    $region17: #{forward.1} parent=1 // pred_fallthru
      _
    // Predicated region
    $region18: #{forward.1} parent=1 // pred_check
      _
    $region19: #{forward.1} parent=1 // pred_check_branch
      %111 = sbr.rel (0) target = $region21
    $region20: #{forward.1} parent=1 // pred_region
      _
    $region21: #{forward.1} parent=1 // pred_fallthru
      _
    // Predicated region
    $region22: #{forward.1} parent=1 // pred_check
      _
    $region23: #{forward.1} parent=1 // pred_check_branch
      %113 = sbr.rel (0) target = $region25
    $region24: #{forward.1} parent=1 // pred_region
      _
    $region25: #{forward.1} parent=1 // pred_fallthru
      _
    // Predicated region
    $region26: #{forward.1} parent=1 // pred_check
      _
    $region27: #{forward.1} parent=1 // pred_check_branch
      %115 = sbr.rel (0) target = $region29
    $region28: #{forward.1} parent=1 // pred_region
      _
    $region29: #{forward.1} parent=1 // pred_fallthru
      _
    // Predicated region
    $region30: #{forward.1} parent=1 // pred_check
      _
    $region31: #{forward.1} parent=1 // pred_check_branch
      %117 = sbr.rel (0) target = $region33
    $region32: #{forward.1} parent=1 // pred_region
      _
    $region33: #{forward.1} parent=1 // pred_fallthru
      _
    // Predicated region
    $region34: #{forward.1} parent=1 // pred_check
      _
    $region35: #{forward.1} parent=1 // pred_check_branch
      %119 = sbr.rel (0) target = $region37
    $region36: #{forward.1} parent=1 // pred_region
      _
    $region37: #{forward.1} parent=1 // pred_fallthru
      _
    // Predicated region
    $region38: #{forward.1} parent=1 // pred_check
      _
    $region39: #{forward.1} parent=1 // pred_check_branch
      %121 = sbr.rel (0) target = $region41
    $region40: #{forward.1} parent=1 // pred_region
      _
    $region41: #{forward.1} parent=1 // pred_fallthru
      _
    // Predicated region
    $region42: #{forward.1} parent=1 // pred_check
      _
    $region43: #{forward.1} parent=1 // pred_check_branch
      %123 = sbr.rel (0) target = $region45
    $region44: #{forward.1} parent=1 // pred_region
      _
    $region45: #{forward.1} parent=1 // pred_fallthru
      _
    // Predicated region
    $region46: #{forward.1} parent=1 // pred_check
      _
    $region47: #{forward.1} parent=1 // pred_check_branch
      %125 = sbr.rel (0) target = $region49
    $region48: #{forward.1} parent=1 // pred_region
      _
    $region49: #{forward.1} parent=1 // pred_fallthru
      _
    // Predicated region
    $region50: #{forward.1} parent=1 // pred_check
      _
    $region51: #{forward.1} parent=1 // pred_check_branch
      %127 = sbr.rel (0) target = $region53
    $region52: #{forward.1} parent=1 // pred_region
      _
    $region53: #{forward.1} parent=1 // pred_fallthru
      _
    // Predicated region
    $region54: #{forward.1} parent=1 // pred_check
      _
    $region55: #{forward.1} parent=1 // pred_check_branch
      %129 = sbr.rel (0) target = $region57
    $region56: #{forward.1} parent=1 // pred_region
      _
    $region57: #{forward.1} parent=1 // pred_fallthru
      _
    // Predicated region
    $region58: #{forward.1} parent=1 // pred_check
      _
    $region59: #{forward.1} parent=1 // pred_check_branch
      %131 = sbr.rel (0) target = $region61
    $region60: #{forward.1} parent=1 // pred_region
      _
    $region61: #{forward.1} parent=1 // pred_fallthru
      _
    // Predicated region
    $region62: #{forward.1} parent=1 // pred_check
      _
    $region63: #{forward.1} parent=1 // pred_check_branch
      %133 = sbr.rel (0) target = $region65
    $region64: #{forward.1} parent=1 // pred_region
      _
    $region65: #{forward.1} parent=1 // pred_fallthru
      _
    // Predicated region
    $region66: #{forward.1} parent=1 // pred_check
      _
    $region67: #{forward.1} parent=1 // pred_check_branch
      %135 = sbr.rel (0) target = $region69
    $region68: #{forward.1} parent=1 // pred_region
      _
    $region69: #{forward.1} parent=1 // pred_fallthru
      _
    // Predicated region
    $region70: #{forward.1} parent=1 // pred_check
      _
    $region71: #{forward.1} parent=1 // pred_check_branch
      %137 = sbr.rel (0) target = $region73
    $region72: #{forward.1} parent=1 // pred_region
      _
    $region73: #{forward.1} parent=1 // pred_fallthru
      _
    // Predicated region
    $region74: #{forward.1} parent=1 // pred_check
      _
    $region75: #{forward.1} parent=1 // pred_check_branch
      %139 = sbr.rel (0) target = $region77
    $region76: #{forward.1} parent=1 // pred_region
      _
    $region77: #{forward.1} parent=1 // pred_fallthru
      _
    // Predicated region
    $region78: #{forward.1} parent=1 // pred_check
      _
    $region79: #{forward.1} parent=1 // pred_check_branch
      %141 = sbr.rel (0) target = $region81
    $region80: #{forward.1} parent=1 // pred_region
      _
    $region81: #{forward.1} parent=1 // pred_fallthru
      _
    // Predicated region
    $region82: #{forward.1} parent=1 // pred_check
      _
    $region83: #{forward.1} parent=1 // pred_check_branch
      %143 = sbr.rel (0) target = $region85
    $region84: #{forward.1} parent=1 // pred_region
      _
    $region85: #{forward.1} parent=1 // pred_fallthru
      _
    // Predicated region
    $region86: #{forward.1} parent=1 // pred_check
      _
    $region87: #{forward.1} parent=1 // pred_check_branch
      %145 = sbr.rel (0) target = $region89
    $region88: #{forward.1} parent=1 // pred_region
      _
    $region89: #{forward.1} parent=1 // pred_fallthru
      _
    // Predicated region
    $region90: #{forward.1} parent=1 // pred_check
      _
    $region91: #{forward.1} parent=1 // pred_check_branch
      %147 = sbr.rel (0) target = $region93
    $region92: #{forward.1} parent=1 // pred_region
      _
    $region93: #{forward.1} parent=1 // pred_fallthru
      _
    // Predicated region
    $region94: #{forward.1} parent=1 // pred_check
      _
    $region95: #{forward.1} parent=1 // pred_check_branch
      %149 = sbr.rel (0) target = $region97
    $region96: #{forward.1} parent=1 // pred_region
      _
    $region97: #{forward.1} parent=1 // pred_fallthru
      _
    // Predicated region
    $region98: #{forward.1} parent=1 // pred_check
      _
    $region99: #{forward.1} parent=1 // pred_check_branch
      %151 = sbr.rel (0) target = $region101
    $region100: #{forward.1} parent=1 // pred_region
      _
    $region101: #{forward.1} parent=1 // pred_fallthru
      _
    // Predicated region
    $region102: #{forward.1} parent=1 // pred_check
      _
    $region103: #{forward.1} parent=1 // pred_check_branch
      %153 = sbr.rel (0) target = $region105
    $region104: #{forward.1} parent=1 // pred_region
      _
    $region105: #{forward.1} parent=1 // pred_fallthru
      _
    // Predicated region
    $region106: #{forward.1} parent=1 // pred_check
      _
    $region107: #{forward.1} parent=1 // pred_check_branch
      %155 = sbr.rel (0) target = $region109
    $region108: #{forward.1} parent=1 // pred_region
      _
    $region109: #{forward.1} parent=1 // pred_fallthru
      _
    // Predicated region
    $region110: #{forward.1} parent=1 // pred_check
      _
    $region111: #{forward.1} parent=1 // pred_check_branch
      %157 = sbr.rel (0) target = $region113
    $region112: #{forward.1} parent=1 // pred_region
      _
    $region113: #{forward.1} parent=1 // pred_fallthru
      _
    // Predicated region
    $region114: #{forward.1} parent=1 // pred_check
      _
    $region115: #{forward.1} parent=1 // pred_check_branch
      %159 = sbr.rel (0) target = $region117
    $region116: #{forward.1} parent=1 // pred_region
      _
    $region117: #{forward.1} parent=1 // pred_fallthru
      _
    // Predicated region
    $region118: #{forward.1} parent=1 // pred_check
      _
    $region119: #{forward.1} parent=1 // pred_check_branch
      %161 = sbr.rel (0) target = $region121
    $region120: #{forward.1} parent=1 // pred_region
      _
    $region121: #{forward.1} parent=1 // pred_fallthru
      _
    // Predicated region
    $region122: #{forward.1} parent=1 // pred_check
      _
    $region123: #{forward.1} parent=1 // pred_check_branch
      %163 = sbr.rel (0) target = $region125
    $region124: #{forward.1} parent=1 // pred_region
      _
    $region125: #{forward.1} parent=1 // pred_fallthru
      _
    // Predicated region
    $region126: #{forward.1} parent=1 // pred_check
      _
    $region127: #{forward.1} parent=1 // pred_check_branch
      %165 = sbr.rel (0) target = $region129
    $region128: #{forward.1} parent=1 // pred_region
      _
    $region129: #{forward.1} parent=1 // pred_fallthru
      _
    // Predicated region
    $region130: #{forward.1} parent=1 // pred_check
      _
    $region131: #{forward.1} parent=1 // pred_check_branch
      %167 = sbr.rel (0) target = $region133
    $region132: #{forward.1} parent=1 // pred_region
      _
    $region133: #{forward.1} parent=1 // pred_fallthru
      _
    // Predicated region
    $region134: #{forward.1} parent=1 // pred_check
      _
    $region135: #{forward.1} parent=1 // pred_check_branch
      %169 = sbr.rel (0) target = $region137
    $region136: #{forward.1} parent=1 // pred_region
      _
    $region137: #{forward.1} parent=1 // pred_fallthru
      _
    // Predicated region
    $region138: #{forward.1} parent=1 // pred_check
      _
    $region139: #{forward.1} parent=1 // pred_check_branch
      %171 = sbr.rel (0) target = $region141
    $region140: #{forward.1} parent=1 // pred_region
      _
    $region141: #{forward.1} parent=1 // pred_fallthru
      _
    // Predicated region
    $region142: #{forward.1} parent=1 // pred_check
      _
    $region143: #{forward.1} parent=1 // pred_check_branch
      %173 = sbr.rel (0) target = $region145
    $region144: #{forward.1} parent=1 // pred_region
      _
    $region145: #{forward.1} parent=1 // pred_fallthru
      _
    // Predicated region
    $region146: #{forward.1} parent=1 // pred_check
      _
    $region147: #{forward.1} parent=1 // pred_check_branch
      %175 = sbr.rel (0) target = $region149
    $region148: #{forward.1} parent=1 // pred_region
      _
    $region149: #{forward.1} parent=1 // pred_fallthru
      _
    // Predicated region
    $region150: #{forward.1} parent=1 // pred_check
      _
    $region151: #{forward.1} parent=1 // pred_check_branch
      %177 = sbr.rel (0) target = $region153
    $region152: #{forward.1} parent=1 // pred_region
      _
    $region153: #{forward.1} parent=1 // pred_fallthru
      _
    // Predicated region
    $region154: #{forward.1} parent=1 // pred_check
      _
    $region155: #{forward.1} parent=1 // pred_check_branch
      %179 = sbr.rel (0) target = $region157
    $region156: #{forward.1} parent=1 // pred_region
      _
    $region157: #{forward.1} parent=1 // pred_fallthru
      _
    // Predicated region
    $region158: #{forward.1} parent=1 // pred_check
      _
    $region159: #{forward.1} parent=1 // pred_check_branch
      %181 = sbr.rel (0) target = $region161
    $region160: #{forward.1} parent=1 // pred_region
      _
    $region161: #{forward.1} parent=1 // pred_fallthru
      _
    // Predicated region
    $region162: #{forward.1} parent=1 // pred_check
      _
    $region163: #{forward.1} parent=1 // pred_check_branch
      %183 = sbr.rel (0) target = $region165
    $region164: #{forward.1} parent=1 // pred_region
      _
    $region165: #{forward.1} parent=1 // pred_fallthru
      _
    // Predicated region
    $region166: #{forward.1} parent=1 // pred_check
      _
    $region167: #{forward.1} parent=1 // pred_check_branch
      %185 = sbr.rel (0) target = $region169
    $region168: #{forward.1} parent=1 // pred_region
      %187 = vsyncadd [#allocation6], 0
      %s189 = sshll.u32 %s83, 4
      %s190 = int_to_ptr.hbm [resolvable:$true] %s189
      %s191 = sshll.u32 [#allocation5], 4
      %s192 = int_to_ptr.vmem [resolvable:$true] %s191
      %194 = dma.hbm_to_vmem [thread:$0]  %s190, 16, %s192, [#allocation6]
    $region169: #{forward.1} parent=1 // pred_fallthru
      _
    // Predicated region
    $region170: #{forward.1} parent=1 // pred_check
      _
    $region171: #{forward.1} parent=1 // pred_check_branch
      %196 = sbr.rel (0) target = $region173
    $region172: #{forward.1} parent=1 // pred_region
      _
    $region173: #{forward.1} parent=1 // pred_fallthru
      _
    // Predicated region
    $region174: #{forward.1} parent=1 // pred_check
      _
    $region175: #{forward.1} parent=1 // pred_check_branch
      %198 = sbr.rel (0) target = $region177
    $region176: #{forward.1} parent=1 // pred_region
      _
    $region177: #{forward.1} parent=1 // pred_fallthru
      _
    // Predicated region
    $region178: #{forward.1} parent=1 // pred_check
      _
    $region179: #{forward.1} parent=1 // pred_check_branch
      %200 = sbr.rel (0) target = $region181
    $region180: #{forward.1} parent=1 // pred_region
      _
    $region181: #{forward.1} parent=1 // pred_fallthru
      _
    // Predicated region
    $region182: #{forward.1} parent=1 // pred_check
      _
    $region183: #{forward.1} parent=1 // pred_check_branch
      %202 = sbr.rel (0) target = $region185
    $region184: #{forward.1} parent=1 // pred_region
      _
    $region185: #{forward.1} parent=1 // pred_fallthru
      _
    // Predicated region
    $region186: #{forward.1} parent=1 // pred_check
      _
    $region187: #{forward.1} parent=1 // pred_check_branch
      %204 = sbr.rel (0) target = $region189
    $region188: #{forward.1} parent=1 // pred_region
      _
    $region189: #{forward.1} parent=1 // pred_fallthru
      _
    // Predicated region
    $region190: #{forward.1} parent=1 // pred_check
      _
    $region191: #{forward.1} parent=1 // pred_check_branch
      %206 = sbr.rel (0) target = $region193
    $region192: #{forward.1} parent=1 // pred_region
      %208 = dma.done [#allocation6], 16
    $region193: #{forward.1} parent=1 // pred_fallthru
      _
    %v209 = vld [vmem:[%s91] sm:$0x1]
    %v210 = vld [vmem:[%s1] sm:$0xff]
    %v211 = vld [vmem:[%s1 + $0x8] sm:$0xff]
    %v212 = vld [vmem:[%s1 + $0x10] sm:$0xff]
    %v213 = vld [vmem:[%s1 + $0x18] sm:$0xff]
    %v214 = vld [vmem:[%s13] sm:$0xff]
    %v215 = vld [vmem:[%s13 + $0x8] sm:$0xff]
    %v216 = vld [vmem:[%s13 + $0x10] sm:$0xff]
    %v217 = vld [vmem:[%s13 + $0x18] sm:$0xff]
    %v218 = vld [vmem:[%s13 + $0x20] sm:$0xff]
    %v219 = vld [vmem:[%s13 + $0x28] sm:$0xff]
    %v220 = vld [vmem:[%s13 + $0x30] sm:$0xff]
    %v221 = vld [vmem:[%s13 + $0x38] sm:$0xff]
    %v222 = vld [vmem:[%s13 + $0x40] sm:$0xff]
    %v223 = vld [vmem:[%s13 + $0x48] sm:$0xff]
    %v224 = vld [vmem:[%s13 + $0x50] sm:$0xff]
    %v225 = vld [vmem:[%s13 + $0x58] sm:$0xff]
    %v226 = vld [vmem:[%s13 + $0x60] sm:$0xff]
    %v227 = vld [vmem:[%s13 + $0x68] sm:$0xff]
    %v228 = vld [vmem:[%s13 + $0x70] sm:$0xff]
    %v229 = vld [vmem:[%s13 + $0x78] sm:$0xff]
    %v230 = vld [vmem:[%s13 + $0x80] sm:$0xff]
    %v231 = vld [vmem:[%s13 + $0x88] sm:$0xff]
    %v232 = vld [vmem:[%s13 + $0x90] sm:$0xff]
    %v233 = vld [vmem:[%s13 + $0x98] sm:$0xff]
    %v234 = vld [vmem:[%s13 + $0xa0] sm:$0xff]
    %v235 = vld [vmem:[%s13 + $0xa8] sm:$0xff]
    %v236 = vld [vmem:[%s13 + $0xb0] sm:$0xff]
    %v237 = vld [vmem:[%s13 + $0xb8] sm:$0xff]
    %v238 = vld [vmem:[%s11] sm:$0x1]
    %v240 = vperm.slane %v238, 0
    %vm242 = vcmask 523264
    %v244 = vsel %vm242, %v211, 0
    %v247 = vsel %vm242, %v213, 0
    %249 = vmatpush.msra.mxu0 %v229
    %250 = vmatpush.msra.mxu0 %v228
    %251 = vmatpush.msra.mxu0 %v227
    %252 = vmatpush.msra.mxu0 %v226
    %253 = vmatpush.msra.mxu0 %v225
    %254 = vmatpush.msra.mxu0 %v224
    %255 = vmatpush.msra.mxu0 %v223
    %256 = vmatpush.msra.mxu0 %v222
    %257 = vmatpush.msra.mxu0 %v221
    %258 = vmatpush.msra.mxu0 %v220
    %259 = vmatpush.msra.mxu0 %v219
    %260 = vmatpush.msra.mxu0 %v218
    %261 = vmatpush.msra.mxu0 %v217
    %262 = vmatpush.msra.mxu0 %v216
    %263 = vmatpush.msra.mxu0 %v215
    %264 = vmatpush.msra.mxu0 %v214
    %265 = vmatmul.f32.gmra.mxu0 %v210
    %v266 = vpop.f32.mrf.mxu0
    %v267 = vadd.f32 %v240, %v266
    %268 = vmatmul.f32.gmra.mxu0 %v212
    %v269 = vpop.f32.mrf.mxu0
    %v270 = vadd.f32 %v240, %v269
    %271 = vdwg.mxu0
    %272 = vmatpush.msra.mxu0 0.0
    %273 = vmatpush.msra.mxu0 0.0
    %274 = vmatpush.msra.mxu0 0.0
    %275 = vmatpush.msra.mxu0 0.0
    %276 = vmatpush.msra.mxu0 0.0
    %277 = vmatpush.msra.mxu0 0.0
    %278 = vmatpush.msra.mxu0 0.0
    %279 = vmatpush.msra.mxu0 0.0
    %280 = vmatpush.msra.mxu0 %v237
    %281 = vmatpush.msra.mxu0 %v236
    %282 = vmatpush.msra.mxu0 %v235
    %283 = vmatpush.msra.mxu0 %v234
    %284 = vmatpush.msra.mxu0 %v233
    %285 = vmatpush.msra.mxu0 %v232
    %286 = vmatpush.msra.mxu0 %v231
    %287 = vmatpush.msra.mxu0 %v230
    %288 = vmatmul.f32.gmra.mxu0 %v244
    %v289 = vpop.f32.mrf.mxu0
    %v290 = vadd.f32 %v267, %v289
    %291 = vmatmul.f32.gmra.mxu0 %v247
    %v292 = vpop.f32.mrf.mxu0
    %v293 = vadd.f32 %v270, %v292
    %294 = vdwg.mxu0
    %v295 = vld [vmem:[%s5] sm:$0x1]
    %vm296 = vcmask 253952
    %297 = vst.msk [vmem:[#allocation2] sm:$0x1] %vm296, %v295
    %298 = vst.msk [vmem:[#allocation2 + $0x8] sm:$0x1] %vm296, %v295
    %299 = vst.msk [vmem:[#allocation2 + $0x10] sm:$0x1] %vm296, %v295
    %300 = vst.msk [vmem:[#allocation2 + $0x18] sm:$0x1] %vm296, %v295
    %vm301 = vcmask 257024
    %302 = vst.msk [vmem:[#allocation2 + $0x1] sm:$0xf] %vm301, %v290
    %s303 = scalar_lea.vmem [#allocation2], 8
    %vm304 = vcmask 261124
    %305 = vst.msk [vmem:[%s303 - $0x3] sm:$0xf0] %vm304, %v290
    %s306 = scalar_lea.vmem [#allocation2], 16
    %307 = vst.msk [vmem:[%s306 + $0x1] sm:$0xf] %vm301, %v293
    %s308 = scalar_lea.vmem [#allocation2], 24
    %309 = vst.msk [vmem:[%s308 - $0x3] sm:$0xf0] %vm304, %v293
    %vm310 = vcmask 256000
    %311 = vst.msk [vmem:[#allocation2 + $0x5] sm:$0x7] %vm310, 0.0
    %312 = vst.msk [vmem:[#allocation2 + $0xd] sm:$0x7] %vm310, 0.0
    %313 = vst.msk [vmem:[#allocation2 + $0x15] sm:$0x7] %vm310, 0.0
    %314 = vst.msk [vmem:[#allocation2 + $0x1d] sm:$0x7] %vm310, 0.0
    %v315 = vld [vmem:[#allocation2] sm:$0xff]
    %v316 = vld [vmem:[#allocation2 + $0x8] sm:$0xff]
    %v317 = vld [vmem:[#allocation2 + $0x10] sm:$0xff]
    %v318 = vld [vmem:[#allocation2 + $0x18] sm:$0xff]
    %v319 = vld [vmem:[%s93] sm:$0xff]
    %v320 = vadd.f32 %v315, %v319
    %v321 = vadd.f32 %v316, %v319
    %v322 = vadd.f32 %v317, %v319
    %v323 = vadd.f32 %v318, %v319
    %v324 = vld [vmem:[%s65] sm:$0x1]
    %v325 = vld [vmem:[%s63] sm:$0x1]
    %vm326 = vcmask 261120
    %v327 = vsel %vm326, %v320, 0.0
    %328 = vadd.xlane.f32.xlu0 %v327
    %v329 = vpop.xlane.xlu0 %328
    %v330 = vsel %vm326, %v321, 0.0
    %331 = vadd.xlane.f32.xlu0 %v330
    %v332 = vpop.xlane.xlu0 %331
    %v333 = vsel %vm326, %v322, 0.0
    %334 = vadd.xlane.f32.xlu0 %v333
    %v335 = vpop.xlane.xlu0 %334
    %v336 = vsel %vm326, %v323, 0.0
    %337 = vadd.xlane.f32.xlu0 %v336
    %v338 = vpop.xlane.xlu0 %337
    %v339 = vrcp.pop 32.0
    %v340 = vmul.f32 32.0, %v339
    %v341 = vsub.f32 1.0, %v340
    %v342 = vmul.f32 %v339, %v341
    %v343 = vadd.f32 %v339, %v342
    %vm344 = vweird.f32 %v339
    %v345 = vsel %vm344, %v339, %v343
    %v346 = vmul.f32 %v329, %v345
    %v347 = vmul.f32 %v332, %v345
    %v348 = vmul.f32 %v335, %v345
    %v349 = vmul.f32 %v338, %v345
    %v350 = vsub.f32 %v320, %v346
    %v351 = vsub.f32 %v321, %v347
    %v352 = vsub.f32 %v322, %v348
    %v353 = vsub.f32 %v323, %v349
    %v354 = vmul.f32 %v350, %v350
    %v355 = vmul.f32 %v351, %v351
    %v356 = vmul.f32 %v352, %v352
    %v357 = vmul.f32 %v353, %v353
    %v358 = vsel %vm326, %v354, 0.0
    %359 = vadd.xlane.f32.xlu0 %v358
    %v360 = vpop.xlane.xlu0 %359
    %v361 = vsel %vm326, %v355, 0.0
    %362 = vadd.xlane.f32.xlu0 %v361
    %v363 = vpop.xlane.xlu0 %362
    %v364 = vsel %vm326, %v356, 0.0
    %365 = vadd.xlane.f32.xlu0 %v364
    %v366 = vpop.xlane.xlu0 %365
    %v367 = vsel %vm326, %v357, 0.0
    %368 = vadd.xlane.f32.xlu0 %v367
    %v369 = vpop.xlane.xlu0 %368
    %v370 = vmul.f32 %v360, %v345
    %v371 = vmul.f32 %v363, %v345
    %v372 = vmul.f32 %v366, %v345
    %v373 = vmul.f32 %v369, %v345
    %v374 = vadd.f32 %v370, 1e-06
    %v375 = vadd.f32 %v371, 1e-06
    %v376 = vadd.f32 %v372, 1e-06
    %v377 = vadd.f32 %v373, 1e-06
    %v378 = vrsqrt.pop %v374
    %v379 = vmul.f32 %v378, %v374
    %v380 = vmul.f32 %v379, %v378
    %v381 = vmul.f32 0.5, %v380
    %v382 = vsub.f32 1.5, %v381
    %v383 = vmul.f32 %v378, %v382
    %vm384 = vweird.f32 %v374
    %vm385 = vweird.f32 %v378
    %vm386 = vmor %vm384, %vm385
    %v387 = vsel %vm386, %v378, %v383
    %v388 = vrsqrt.pop %v375
    %v389 = vmul.f32 %v388, %v375
    %v390 = vmul.f32 %v389, %v388
    %v391 = vmul.f32 0.5, %v390
    %v392 = vsub.f32 1.5, %v391
    %v393 = vmul.f32 %v388, %v392
    %vm394 = vweird.f32 %v375
    %vm395 = vweird.f32 %v388
    %vm396 = vmor %vm394, %vm395
    %v397 = vsel %vm396, %v388, %v393
    %v398 = vrsqrt.pop %v376
    %v399 = vmul.f32 %v398, %v376
    %v400 = vmul.f32 %v399, %v398
    %v401 = vmul.f32 0.5, %v400
    %v402 = vsub.f32 1.5, %v401
    %v403 = vmul.f32 %v398, %v402
    %vm404 = vweird.f32 %v376
    %vm405 = vweird.f32 %v398
    %vm406 = vmor %vm404, %vm405
    %v407 = vsel %vm406, %v398, %v403
    %v408 = vrsqrt.pop %v377
    %v409 = vmul.f32 %v408, %v377
    %v410 = vmul.f32 %v409, %v408
    %v411 = vmul.f32 0.5, %v410
    %v412 = vsub.f32 1.5, %v411
    %v413 = vmul.f32 %v408, %v412
    %vm414 = vweird.f32 %v377
    %vm415 = vweird.f32 %v408
    %vm416 = vmor %vm414, %vm415
    %v417 = vsel %vm416, %v408, %v413
    %v418 = vmul.f32 %v350, %v387
    %v419 = vmul.f32 %v351, %v397
    %v420 = vmul.f32 %v352, %v407
    %v421 = vmul.f32 %v353, %v417
    %v423 = vperm.slane %v324, 0
    %v425 = vmul.f32 %v418, %v423
    %v426 = vmul.f32 %v419, %v423
    %v427 = vmul.f32 %v420, %v423
    %v428 = vmul.f32 %v421, %v423
    %v430 = vperm.slane %v325, 0
    %v432 = vadd.f32 %v425, %v430
    %v433 = vadd.f32 %v426, %v430
    %v434 = vadd.f32 %v427, %v430
    %v435 = vadd.f32 %v428, %v430
    %v436 = vld [vmem:[%s89] sm:$0xff]
    %v437 = vld [vmem:[%s89 + $0x8] sm:$0xff]
    %v438 = vld [vmem:[%s89 + $0x10] sm:$0xff]
    %v439 = vld [vmem:[%s89 + $0x18] sm:$0xff]
    %v440 = vld [vmem:[%s85] sm:$0x1]
    %v441 = vld [vmem:[%s87] sm:$0xff]
    %v442 = vld [vmem:[%s87 + $0x8] sm:$0xff]
    %v443 = vld [vmem:[%s87 + $0x10] sm:$0xff]
    %v444 = vld [vmem:[%s87 + $0x18] sm:$0xff]
    %v445 = vld [vmem:[#allocation5] sm:$0x1]
    %v447 = vperm.slane %v440, 0
    %v450 = vsel %vm326, %v432, 0
    %v453 = vsel %vm326, %v433, 0
    %v456 = vsel %vm326, %v434, 0
    %v459 = vsel %vm326, %v435, 0
    %461 = vmatpush.msra.mxu0 0.0
    %462 = vmatpush.msra.mxu0 0.0
    %463 = vmatpush.msra.mxu0 0.0
    %464 = vmatpush.msra.mxu0 0.0
    %465 = vmatpush.msra.mxu0 0.0
    %466 = vmatpush.msra.mxu0 0.0
    %467 = vmatpush.msra.mxu0 0.0
    %468 = vmatpush.msra.mxu0 0.0
    %469 = vmatpush.msra.mxu0 0.0
    %470 = vmatpush.msra.mxu0 0.0
    %471 = vmatpush.msra.mxu0 0.0
    %472 = vmatpush.msra.mxu0 0.0
    %473 = vmatpush.msra.mxu0 %v439
    %474 = vmatpush.msra.mxu0 %v438
    %475 = vmatpush.msra.mxu0 %v437
    %476 = vmatpush.msra.mxu0 %v436
    %477 = vmatmul.f32.gmra.mxu0 %v450
    %v478 = vpop.f32.mrf.mxu0
    %v479 = vadd.f32 %v447, %v478
    %480 = vmatmul.f32.gmra.mxu0 %v453
    %v481 = vpop.f32.mrf.mxu0
    %v482 = vadd.f32 %v447, %v481
    %483 = vmatmul.f32.gmra.mxu0 %v456
    %v484 = vpop.f32.mrf.mxu0
    %v485 = vadd.f32 %v447, %v484
    %486 = vmatmul.f32.gmra.mxu0 %v459
    %v487 = vpop.f32.mrf.mxu0
    %v488 = vadd.f32 %v447, %v487
    %489 = vdwg.mxu0
    %491 = vrot.lane.b32.xlu0 %v479, 96
    %v492 = vpop.permute.xlu0 %491
    %vm493 = vcmask 64512
    %v494 = vsel %vm493, %v479, 0
    %v496 = vsel %vm493, %v492, 0
    %498 = vmatpush.xpose.msra.mxu0 0.0
    %499 = vmatpush.xpose.msra.mxu0 0.0
    %500 = vmatpush.xpose.msra.mxu0 0.0
    %501 = vmatpush.xpose.msra.mxu0 0.0
    %502 = vmatpush.xpose.msra.mxu0 0.0
    %503 = vmatpush.xpose.msra.mxu0 0.0
    %504 = vmatpush.xpose.msra.mxu0 0.0
    %505 = vmatpush.xpose.msra.mxu0 0.0
    %506 = vmatpush.xpose.msra.mxu0 0.0
    %507 = vmatpush.xpose.msra.mxu0 0.0
    %508 = vmatpush.xpose.msra.mxu0 0.0
    %509 = vmatpush.xpose.msra.mxu0 0.0
    %510 = vmatpush.xpose.msra.mxu0 0.0
    %511 = vmatpush.xpose.msra.mxu0 0.0
    %512 = vmatpush.xpose.msra.mxu0 0.0
    %513 = vmatpush.xpose.msra.mxu0 %v496
    %514 = vmatmul.f32.gmra.mxu0 %v494
    %v515 = vpop.f32.mrf.mxu0
    %v516 = vadd.f32 0.0, %v515
    %517 = vdwg.mxu0
    %519 = vrot.lane.b32.xlu0 %v482, 96
    %v520 = vpop.permute.xlu0 %519
    %v521 = vsel %vm493, %v482, 0
    %v523 = vsel %vm493, %v520, 0
    %525 = vmatpush.xpose.msra.mxu0 0.0
    %526 = vmatpush.xpose.msra.mxu0 0.0
    %527 = vmatpush.xpose.msra.mxu0 0.0
    %528 = vmatpush.xpose.msra.mxu0 0.0
    %529 = vmatpush.xpose.msra.mxu0 0.0
    %530 = vmatpush.xpose.msra.mxu0 0.0
    %531 = vmatpush.xpose.msra.mxu0 0.0
    %532 = vmatpush.xpose.msra.mxu0 0.0
    %533 = vmatpush.xpose.msra.mxu0 0.0
    %534 = vmatpush.xpose.msra.mxu0 0.0
    %535 = vmatpush.xpose.msra.mxu0 0.0
    %536 = vmatpush.xpose.msra.mxu0 0.0
    %537 = vmatpush.xpose.msra.mxu0 0.0
    %538 = vmatpush.xpose.msra.mxu0 0.0
    %539 = vmatpush.xpose.msra.mxu0 0.0
    %540 = vmatpush.xpose.msra.mxu0 %v523
    %541 = vmatmul.f32.gmra.mxu0 %v521
    %v542 = vpop.f32.mrf.mxu0
    %v543 = vadd.f32 0.0, %v542
    %544 = vdwg.mxu0
    %546 = vrot.lane.b32.xlu0 %v485, 96
    %v547 = vpop.permute.xlu0 %546
    %v548 = vsel %vm493, %v485, 0
    %v550 = vsel %vm493, %v547, 0
    %552 = vmatpush.xpose.msra.mxu0 0.0
    %553 = vmatpush.xpose.msra.mxu0 0.0
    %554 = vmatpush.xpose.msra.mxu0 0.0
    %555 = vmatpush.xpose.msra.mxu0 0.0
    %556 = vmatpush.xpose.msra.mxu0 0.0
    %557 = vmatpush.xpose.msra.mxu0 0.0
    %558 = vmatpush.xpose.msra.mxu0 0.0
    %559 = vmatpush.xpose.msra.mxu0 0.0
    %560 = vmatpush.xpose.msra.mxu0 0.0
    %561 = vmatpush.xpose.msra.mxu0 0.0
    %562 = vmatpush.xpose.msra.mxu0 0.0
    %563 = vmatpush.xpose.msra.mxu0 0.0
    %564 = vmatpush.xpose.msra.mxu0 0.0
    %565 = vmatpush.xpose.msra.mxu0 0.0
    %566 = vmatpush.xpose.msra.mxu0 0.0
    %567 = vmatpush.xpose.msra.mxu0 %v550
    %568 = vmatmul.f32.gmra.mxu0 %v548
    %v569 = vpop.f32.mrf.mxu0
    %v570 = vadd.f32 0.0, %v569
    %571 = vdwg.mxu0
    %573 = vrot.lane.b32.xlu0 %v488, 96
    %v574 = vpop.permute.xlu0 %573
    %v575 = vsel %vm493, %v488, 0
    %v577 = vsel %vm493, %v574, 0
    %579 = vmatpush.xpose.msra.mxu0 0.0
    %580 = vmatpush.xpose.msra.mxu0 0.0
    %581 = vmatpush.xpose.msra.mxu0 0.0
    %582 = vmatpush.xpose.msra.mxu0 0.0
    %583 = vmatpush.xpose.msra.mxu0 0.0
    %584 = vmatpush.xpose.msra.mxu0 0.0
    %585 = vmatpush.xpose.msra.mxu0 0.0
    %586 = vmatpush.xpose.msra.mxu0 0.0
    %587 = vmatpush.xpose.msra.mxu0 0.0
    %588 = vmatpush.xpose.msra.mxu0 0.0
    %589 = vmatpush.xpose.msra.mxu0 0.0
    %590 = vmatpush.xpose.msra.mxu0 0.0
    %591 = vmatpush.xpose.msra.mxu0 0.0
    %592 = vmatpush.xpose.msra.mxu0 0.0
    %593 = vmatpush.xpose.msra.mxu0 0.0
    %594 = vmatpush.xpose.msra.mxu0 %v577
    %595 = vmatmul.f32.gmra.mxu0 %v575
    %v596 = vpop.f32.mrf.mxu0
    %v597 = vadd.f32 0.0, %v596
    %598 = vdwg.mxu0
    %v599 = vmul.f32 %v516, 0.35355338
    %v600 = vmul.f32 %v543, 0.35355338
    %v601 = vmul.f32 %v570, 0.35355338
    %v602 = vmul.f32 %v597, 0.35355338
    %v604 = vperm.slane %v209, 0
    %v606 = vadd.f32 %v599, %v604
    %v607 = vadd.f32 %v600, %v604
    %v608 = vadd.f32 %v601, %v604
    %v609 = vadd.f32 %v602, %v604
    %v610 = vsel %vm493, %v606, -inf
    %611 = vmax.xlane.f32.xlu0 %v610
    %v612 = vpop.xlane.xlu0 %611
    %v613 = vsel %vm493, %v607, -inf
    %614 = vmax.xlane.f32.xlu0 %v613
    %v615 = vpop.xlane.xlu0 %614
    %v616 = vsel %vm493, %v608, -inf
    %617 = vmax.xlane.f32.xlu0 %v616
    %v618 = vpop.xlane.xlu0 %617
    %v619 = vsel %vm493, %v609, -inf
    %620 = vmax.xlane.f32.xlu0 %v619
    %v621 = vpop.xlane.xlu0 %620
    %v622 = vsub.f32 %v606, %v612
    %v623 = vsub.f32 %v607, %v615
    %v624 = vsub.f32 %v608, %v618
    %v625 = vsub.f32 %v609, %v621
    %v626 = vmul.f32 %v622, 1.442695
    %v627 = vpow.pop %v626
    %v628 = vmul.f32 %v623, 1.442695
    %v629 = vpow.pop %v628
    %v630 = vmul.f32 %v624, 1.442695
    %v631 = vpow.pop %v630
    %v632 = vmul.f32 %v625, 1.442695
    %v633 = vpow.pop %v632
    %v634 = vsel %vm493, %v627, 0.0
    %635 = vadd.xlane.f32.xlu0 %v634
    %v636 = vpop.xlane.xlu0 %635
    %v637 = vsel %vm493, %v629, 0.0
    %638 = vadd.xlane.f32.xlu0 %v637
    %v639 = vpop.xlane.xlu0 %638
    %v640 = vsel %vm493, %v631, 0.0
    %641 = vadd.xlane.f32.xlu0 %v640
    %v642 = vpop.xlane.xlu0 %641
    %v643 = vsel %vm493, %v633, 0.0
    %644 = vadd.xlane.f32.xlu0 %v643
    %v645 = vpop.xlane.xlu0 %644
    %v646 = vrcp.pop %v636
    %v647 = vrcp.pop %v639
    %v648 = vrcp.pop %v642
    %v649 = vrcp.pop %v645
    %v650 = vmul.f32 %v627, %v646
    %v651 = vmul.f32 %v629, %v647
    %v652 = vmul.f32 %v631, %v648
    %v653 = vmul.f32 %v633, %v649
    %654 = vrot.lane.b32.xlu0 %v479, 64
    %v655 = vpop.permute.xlu0 %654
    %v658 = vsel %vm493, %v650, 0
    %660 = vmatpush.msra.mxu0 0.0
    %661 = vmatpush.msra.mxu0 0.0
    %662 = vmatpush.msra.mxu0 0.0
    %663 = vmatpush.msra.mxu0 0.0
    %664 = vmatpush.msra.mxu0 0.0
    %665 = vmatpush.msra.mxu0 0.0
    %666 = vmatpush.msra.mxu0 0.0
    %667 = vmatpush.msra.mxu0 0.0
    %668 = vmatpush.msra.mxu0 0.0
    %669 = vmatpush.msra.mxu0 0.0
    %670 = vmatpush.msra.mxu0 0.0
    %671 = vmatpush.msra.mxu0 0.0
    %672 = vmatpush.msra.mxu0 0.0
    %673 = vmatpush.msra.mxu0 0.0
    %674 = vmatpush.msra.mxu0 0.0
    %675 = vmatpush.msra.mxu0 %v655
    %676 = vmatmul.f32.gmra.mxu0 %v658
    %v677 = vpop.f32.mrf.mxu0
    %v678 = vadd.f32 0.0, %v677
    %679 = vdwg.mxu0
    %680 = vrot.lane.b32.xlu0 %v482, 64
    %v681 = vpop.permute.xlu0 %680
    %v684 = vsel %vm493, %v651, 0
    %686 = vmatpush.msra.mxu0 0.0
    %687 = vmatpush.msra.mxu0 0.0
    %688 = vmatpush.msra.mxu0 0.0
    %689 = vmatpush.msra.mxu0 0.0
    %690 = vmatpush.msra.mxu0 0.0
    %691 = vmatpush.msra.mxu0 0.0
    %692 = vmatpush.msra.mxu0 0.0
    %693 = vmatpush.msra.mxu0 0.0
    %694 = vmatpush.msra.mxu0 0.0
    %695 = vmatpush.msra.mxu0 0.0
    %696 = vmatpush.msra.mxu0 0.0
    %697 = vmatpush.msra.mxu0 0.0
    %698 = vmatpush.msra.mxu0 0.0
    %699 = vmatpush.msra.mxu0 0.0
    %700 = vmatpush.msra.mxu0 0.0
    %701 = vmatpush.msra.mxu0 %v681
    %702 = vmatmul.f32.gmra.mxu0 %v684
    %v703 = vpop.f32.mrf.mxu0
    %v704 = vadd.f32 0.0, %v703
    %705 = vdwg.mxu0
    %706 = vrot.lane.b32.xlu0 %v485, 64
    %v707 = vpop.permute.xlu0 %706
    %v710 = vsel %vm493, %v652, 0
    %712 = vmatpush.msra.mxu0 0.0
    %713 = vmatpush.msra.mxu0 0.0
    %714 = vmatpush.msra.mxu0 0.0
    %715 = vmatpush.msra.mxu0 0.0
    %716 = vmatpush.msra.mxu0 0.0
    %717 = vmatpush.msra.mxu0 0.0
    %718 = vmatpush.msra.mxu0 0.0
    %719 = vmatpush.msra.mxu0 0.0
    %720 = vmatpush.msra.mxu0 0.0
    %721 = vmatpush.msra.mxu0 0.0
    %722 = vmatpush.msra.mxu0 0.0
    %723 = vmatpush.msra.mxu0 0.0
    %724 = vmatpush.msra.mxu0 0.0
    %725 = vmatpush.msra.mxu0 0.0
    %726 = vmatpush.msra.mxu0 0.0
    %727 = vmatpush.msra.mxu0 %v707
    %728 = vmatmul.f32.gmra.mxu0 %v710
    %v729 = vpop.f32.mrf.mxu0
    %v730 = vadd.f32 0.0, %v729
    %731 = vdwg.mxu0
    %732 = vrot.lane.b32.xlu0 %v488, 64
    %v733 = vpop.permute.xlu0 %732
    %v736 = vsel %vm493, %v653, 0
    %738 = vmatpush.msra.mxu0 0.0
    %739 = vmatpush.msra.mxu0 0.0
    %740 = vmatpush.msra.mxu0 0.0
    %741 = vmatpush.msra.mxu0 0.0
    %742 = vmatpush.msra.mxu0 0.0
    %743 = vmatpush.msra.mxu0 0.0
    %744 = vmatpush.msra.mxu0 0.0
    %745 = vmatpush.msra.mxu0 0.0
    %746 = vmatpush.msra.mxu0 0.0
    %747 = vmatpush.msra.mxu0 0.0
    %748 = vmatpush.msra.mxu0 0.0
    %749 = vmatpush.msra.mxu0 0.0
    %750 = vmatpush.msra.mxu0 0.0
    %751 = vmatpush.msra.mxu0 0.0
    %752 = vmatpush.msra.mxu0 0.0
    %753 = vmatpush.msra.mxu0 %v733
    %754 = vmatmul.f32.gmra.mxu0 %v736
    %v755 = vpop.f32.mrf.mxu0
    %v756 = vadd.f32 0.0, %v755
    %757 = vdwg.mxu0
    %758 = vrot.lane.b32.xlu0 %v479, 120
    %v759 = vpop.permute.xlu0 %758
    %760 = vrot.lane.b32.xlu0 %v479, 88
    %v761 = vpop.permute.xlu0 %760
    %v762 = vsel %vm493, %v759, 0
    %v764 = vsel %vm493, %v761, 0
    %766 = vmatpush.xpose.msra.mxu0 0.0
    %767 = vmatpush.xpose.msra.mxu0 0.0
    %768 = vmatpush.xpose.msra.mxu0 0.0
    %769 = vmatpush.xpose.msra.mxu0 0.0
    %770 = vmatpush.xpose.msra.mxu0 0.0
    %771 = vmatpush.xpose.msra.mxu0 0.0
    %772 = vmatpush.xpose.msra.mxu0 0.0
    %773 = vmatpush.xpose.msra.mxu0 0.0
    %774 = vmatpush.xpose.msra.mxu0 0.0
    %775 = vmatpush.xpose.msra.mxu0 0.0
    %776 = vmatpush.xpose.msra.mxu0 0.0
    %777 = vmatpush.xpose.msra.mxu0 0.0
    %778 = vmatpush.xpose.msra.mxu0 0.0
    %779 = vmatpush.xpose.msra.mxu0 0.0
    %780 = vmatpush.xpose.msra.mxu0 0.0
    %781 = vmatpush.xpose.msra.mxu0 %v764
    %782 = vmatmul.f32.gmra.mxu0 %v762
    %v783 = vpop.f32.mrf.mxu0
    %v784 = vadd.f32 0.0, %v783
    %785 = vdwg.mxu0
    %786 = vrot.lane.b32.xlu0 %v482, 120
    %v787 = vpop.permute.xlu0 %786
    %788 = vrot.lane.b32.xlu0 %v482, 88
    %v789 = vpop.permute.xlu0 %788
    %v790 = vsel %vm493, %v787, 0
    %v792 = vsel %vm493, %v789, 0
    %794 = vmatpush.xpose.msra.mxu0 0.0
    %795 = vmatpush.xpose.msra.mxu0 0.0
    %796 = vmatpush.xpose.msra.mxu0 0.0
    %797 = vmatpush.xpose.msra.mxu0 0.0
    %798 = vmatpush.xpose.msra.mxu0 0.0
    %799 = vmatpush.xpose.msra.mxu0 0.0
    %800 = vmatpush.xpose.msra.mxu0 0.0
    %801 = vmatpush.xpose.msra.mxu0 0.0
    %802 = vmatpush.xpose.msra.mxu0 0.0
    %803 = vmatpush.xpose.msra.mxu0 0.0
    %804 = vmatpush.xpose.msra.mxu0 0.0
    %805 = vmatpush.xpose.msra.mxu0 0.0
    %806 = vmatpush.xpose.msra.mxu0 0.0
    %807 = vmatpush.xpose.msra.mxu0 0.0
    %808 = vmatpush.xpose.msra.mxu0 0.0
    %809 = vmatpush.xpose.msra.mxu0 %v792
    %810 = vmatmul.f32.gmra.mxu0 %v790
    %v811 = vpop.f32.mrf.mxu0
    %v812 = vadd.f32 0.0, %v811
    %813 = vdwg.mxu0
    %814 = vrot.lane.b32.xlu0 %v485, 120
    %v815 = vpop.permute.xlu0 %814
    %816 = vrot.lane.b32.xlu0 %v485, 88
    %v817 = vpop.permute.xlu0 %816
    %v818 = vsel %vm493, %v815, 0
    %v820 = vsel %vm493, %v817, 0
    %822 = vmatpush.xpose.msra.mxu0 0.0
    %823 = vmatpush.xpose.msra.mxu0 0.0
    %824 = vmatpush.xpose.msra.mxu0 0.0
    %825 = vmatpush.xpose.msra.mxu0 0.0
    %826 = vmatpush.xpose.msra.mxu0 0.0
    %827 = vmatpush.xpose.msra.mxu0 0.0
    %828 = vmatpush.xpose.msra.mxu0 0.0
    %829 = vmatpush.xpose.msra.mxu0 0.0
    %830 = vmatpush.xpose.msra.mxu0 0.0
    %831 = vmatpush.xpose.msra.mxu0 0.0
    %832 = vmatpush.xpose.msra.mxu0 0.0
    %833 = vmatpush.xpose.msra.mxu0 0.0
    %834 = vmatpush.xpose.msra.mxu0 0.0
    %835 = vmatpush.xpose.msra.mxu0 0.0
    %836 = vmatpush.xpose.msra.mxu0 0.0
    %837 = vmatpush.xpose.msra.mxu0 %v820
    %838 = vmatmul.f32.gmra.mxu0 %v818
    %v839 = vpop.f32.mrf.mxu0
    %v840 = vadd.f32 0.0, %v839
    %841 = vdwg.mxu0
    %842 = vrot.lane.b32.xlu0 %v488, 120
    %v843 = vpop.permute.xlu0 %842
    %844 = vrot.lane.b32.xlu0 %v488, 88
    %v845 = vpop.permute.xlu0 %844
    %v846 = vsel %vm493, %v843, 0
    %v848 = vsel %vm493, %v845, 0
    %850 = vmatpush.xpose.msra.mxu0 0.0
    %851 = vmatpush.xpose.msra.mxu0 0.0
    %852 = vmatpush.xpose.msra.mxu0 0.0
    %853 = vmatpush.xpose.msra.mxu0 0.0
    %854 = vmatpush.xpose.msra.mxu0 0.0
    %855 = vmatpush.xpose.msra.mxu0 0.0
    %856 = vmatpush.xpose.msra.mxu0 0.0
    %857 = vmatpush.xpose.msra.mxu0 0.0
    %858 = vmatpush.xpose.msra.mxu0 0.0
    %859 = vmatpush.xpose.msra.mxu0 0.0
    %860 = vmatpush.xpose.msra.mxu0 0.0
    %861 = vmatpush.xpose.msra.mxu0 0.0
    %862 = vmatpush.xpose.msra.mxu0 0.0
    %863 = vmatpush.xpose.msra.mxu0 0.0
    %864 = vmatpush.xpose.msra.mxu0 0.0
    %865 = vmatpush.xpose.msra.mxu0 %v848
    %866 = vmatmul.f32.gmra.mxu0 %v846
    %v867 = vpop.f32.mrf.mxu0
    %v868 = vadd.f32 0.0, %v867
    %869 = vdwg.mxu0
    %v870 = vmul.f32 %v784, 0.35355338
    %v871 = vmul.f32 %v812, 0.35355338
    %v872 = vmul.f32 %v840, 0.35355338
    %v873 = vmul.f32 %v868, 0.35355338
    %v874 = vadd.f32 %v870, %v604
    %v875 = vadd.f32 %v871, %v604
    %v876 = vadd.f32 %v872, %v604
    %v877 = vadd.f32 %v873, %v604
    %v878 = vsel %vm493, %v874, -inf
    %879 = vmax.xlane.f32.xlu0 %v878
    %v880 = vpop.xlane.xlu0 %879
    %v881 = vsel %vm493, %v875, -inf
    %882 = vmax.xlane.f32.xlu0 %v881
    %v883 = vpop.xlane.xlu0 %882
    %v884 = vsel %vm493, %v876, -inf
    %885 = vmax.xlane.f32.xlu0 %v884
    %v886 = vpop.xlane.xlu0 %885
    %v887 = vsel %vm493, %v877, -inf
    %888 = vmax.xlane.f32.xlu0 %v887
    %v889 = vpop.xlane.xlu0 %888
    %v890 = vsub.f32 %v874, %v880
    %v891 = vsub.f32 %v875, %v883
    %v892 = vsub.f32 %v876, %v886
    %v893 = vsub.f32 %v877, %v889
    %v894 = vmul.f32 %v890, 1.442695
    %v895 = vpow.pop %v894
    %v896 = vmul.f32 %v891, 1.442695
    %v897 = vpow.pop %v896
    %v898 = vmul.f32 %v892, 1.442695
    %v899 = vpow.pop %v898
    %v900 = vmul.f32 %v893, 1.442695
    %v901 = vpow.pop %v900
    %v902 = vsel %vm493, %v895, 0.0
    %903 = vadd.xlane.f32.xlu0 %v902
    %v904 = vpop.xlane.xlu0 %903
    %v905 = vsel %vm493, %v897, 0.0
    %906 = vadd.xlane.f32.xlu0 %v905
    %v907 = vpop.xlane.xlu0 %906
    %v908 = vsel %vm493, %v899, 0.0
    %909 = vadd.xlane.f32.xlu0 %v908
    %v910 = vpop.xlane.xlu0 %909
    %v911 = vsel %vm493, %v901, 0.0
    %912 = vadd.xlane.f32.xlu0 %v911
    %v913 = vpop.xlane.xlu0 %912
    %v914 = vrcp.pop %v904
    %v915 = vrcp.pop %v907
    %v916 = vrcp.pop %v910
    %v917 = vrcp.pop %v913
    %v918 = vmul.f32 %v895, %v914
    %v919 = vmul.f32 %v897, %v915
    %v920 = vmul.f32 %v899, %v916
    %v921 = vmul.f32 %v901, %v917
    %922 = vrot.lane.b32.xlu0 %v479, 56
    %v923 = vpop.permute.xlu0 %922
    %v926 = vsel %vm493, %v918, 0
    %928 = vmatpush.msra.mxu0 0.0
    %929 = vmatpush.msra.mxu0 0.0
    %930 = vmatpush.msra.mxu0 0.0
    %931 = vmatpush.msra.mxu0 0.0
    %932 = vmatpush.msra.mxu0 0.0
    %933 = vmatpush.msra.mxu0 0.0
    %934 = vmatpush.msra.mxu0 0.0
    %935 = vmatpush.msra.mxu0 0.0
    %936 = vmatpush.msra.mxu0 0.0
    %937 = vmatpush.msra.mxu0 0.0
    %938 = vmatpush.msra.mxu0 0.0
    %939 = vmatpush.msra.mxu0 0.0
    %940 = vmatpush.msra.mxu0 0.0
    %941 = vmatpush.msra.mxu0 0.0
    %942 = vmatpush.msra.mxu0 0.0
    %943 = vmatpush.msra.mxu0 %v923
    %944 = vmatmul.f32.gmra.mxu0 %v926
    %v945 = vpop.f32.mrf.mxu0
    %v946 = vadd.f32 0.0, %v945
    %947 = vdwg.mxu0
    %948 = vrot.lane.b32.xlu0 %v482, 56
    %v949 = vpop.permute.xlu0 %948
    %v952 = vsel %vm493, %v919, 0
    %954 = vmatpush.msra.mxu0 0.0
    %955 = vmatpush.msra.mxu0 0.0
    %956 = vmatpush.msra.mxu0 0.0
    %957 = vmatpush.msra.mxu0 0.0
    %958 = vmatpush.msra.mxu0 0.0
    %959 = vmatpush.msra.mxu0 0.0
    %960 = vmatpush.msra.mxu0 0.0
    %961 = vmatpush.msra.mxu0 0.0
    %962 = vmatpush.msra.mxu0 0.0
    %963 = vmatpush.msra.mxu0 0.0
    %964 = vmatpush.msra.mxu0 0.0
    %965 = vmatpush.msra.mxu0 0.0
    %966 = vmatpush.msra.mxu0 0.0
    %967 = vmatpush.msra.mxu0 0.0
    %968 = vmatpush.msra.mxu0 0.0
    %969 = vmatpush.msra.mxu0 %v949
    %970 = vmatmul.f32.gmra.mxu0 %v952
    %v971 = vpop.f32.mrf.mxu0
    %v972 = vadd.f32 0.0, %v971
    %973 = vdwg.mxu0
    %974 = vrot.lane.b32.xlu0 %v485, 56
    %v975 = vpop.permute.xlu0 %974
    %v978 = vsel %vm493, %v920, 0
    %980 = vmatpush.msra.mxu0 0.0
    %981 = vmatpush.msra.mxu0 0.0
    %982 = vmatpush.msra.mxu0 0.0
    %983 = vmatpush.msra.mxu0 0.0
    %984 = vmatpush.msra.mxu0 0.0
    %985 = vmatpush.msra.mxu0 0.0
    %986 = vmatpush.msra.mxu0 0.0
    %987 = vmatpush.msra.mxu0 0.0
    %988 = vmatpush.msra.mxu0 0.0
    %989 = vmatpush.msra.mxu0 0.0
    %990 = vmatpush.msra.mxu0 0.0
    %991 = vmatpush.msra.mxu0 0.0
    %992 = vmatpush.msra.mxu0 0.0
    %993 = vmatpush.msra.mxu0 0.0
    %994 = vmatpush.msra.mxu0 0.0
    %995 = vmatpush.msra.mxu0 %v975
    %996 = vmatmul.f32.gmra.mxu0 %v978
    %v997 = vpop.f32.mrf.mxu0
    %v998 = vadd.f32 0.0, %v997
    %999 = vdwg.mxu0
    %1000 = vrot.lane.b32.xlu0 %v488, 56
    %v1001 = vpop.permute.xlu0 %1000
    %v1004 = vsel %vm493, %v921, 0
    %1006 = vmatpush.msra.mxu0 0.0
    %1007 = vmatpush.msra.mxu0 0.0
    %1008 = vmatpush.msra.mxu0 0.0
    %1009 = vmatpush.msra.mxu0 0.0
    %1010 = vmatpush.msra.mxu0 0.0
    %1011 = vmatpush.msra.mxu0 0.0
    %1012 = vmatpush.msra.mxu0 0.0
    %1013 = vmatpush.msra.mxu0 0.0
    %1014 = vmatpush.msra.mxu0 0.0
    %1015 = vmatpush.msra.mxu0 0.0
    %1016 = vmatpush.msra.mxu0 0.0
    %1017 = vmatpush.msra.mxu0 0.0
    %1018 = vmatpush.msra.mxu0 0.0
    %1019 = vmatpush.msra.mxu0 0.0
    %1020 = vmatpush.msra.mxu0 0.0
    %1021 = vmatpush.msra.mxu0 %v1001
    %1022 = vmatmul.f32.gmra.mxu0 %v1004
    %v1023 = vpop.f32.mrf.mxu0
    %v1024 = vadd.f32 0.0, %v1023
    %1025 = vdwg.mxu0
    %v1027 = vsel %vm493, %v946, 0
    %v1030 = vsel %vm493, %v972, 0
    %v1033 = vsel %vm493, %v998, 0
    %v1036 = vsel %vm493, %v1024, 0
    %1038 = vmatpush.msra.mxu0 0.0
    %1039 = vmatpush.msra.mxu0 0.0
    %1040 = vmatpush.msra.mxu0 0.0
    %1041 = vmatpush.msra.mxu0 0.0
    %1042 = vmatpush.msra.mxu0 0.0
    %1043 = vmatpush.msra.mxu0 0.0
    %1044 = vmatpush.msra.mxu0 0.0
    %1045 = vmatpush.msra.mxu0 0.0
    %1046 = vmatpush.msra.mxu0 0.0
    %1047 = vmatpush.msra.mxu0 0.0
    %1048 = vmatpush.msra.mxu0 0.0
    %1049 = vmatpush.msra.mxu0 0.0
    %1050 = vmatpush.msra.mxu0 0.0
    %1051 = vmatpush.msra.mxu0 0.0
    %1052 = vmatpush.msra.mxu0 0.0
    %1053 = vmatpush.msra.mxu0 %v442
    %1054 = vmatmul.f32.gmra.mxu0 %v1027
    %v1055 = vpop.f32.mrf.mxu0
    %v1056 = vadd.f32 0.0, %v1055
    %1057 = vmatmul.f32.gmra.mxu0 %v1030
    %v1058 = vpop.f32.mrf.mxu0
    %v1059 = vadd.f32 0.0, %v1058
    %1060 = vmatmul.f32.gmra.mxu0 %v1033
    %v1061 = vpop.f32.mrf.mxu0
    %v1062 = vadd.f32 0.0, %v1061
    %1063 = vmatmul.f32.gmra.mxu0 %v1036
    %v1064 = vpop.f32.mrf.mxu0
    %v1065 = vadd.f32 0.0, %v1064
    %1066 = vdwg.mxu0
    %v1068 = vsel %vm493, %v678, 0
    %v1071 = vsel %vm493, %v704, 0
    %v1074 = vsel %vm493, %v730, 0
    %v1077 = vsel %vm493, %v756, 0
    %1079 = vmatpush.msra.mxu0 0.0
    %1080 = vmatpush.msra.mxu0 0.0
    %1081 = vmatpush.msra.mxu0 0.0
    %1082 = vmatpush.msra.mxu0 0.0
    %1083 = vmatpush.msra.mxu0 0.0
    %1084 = vmatpush.msra.mxu0 0.0
    %1085 = vmatpush.msra.mxu0 0.0
    %1086 = vmatpush.msra.mxu0 0.0
    %1087 = vmatpush.msra.mxu0 0.0
    %1088 = vmatpush.msra.mxu0 0.0
    %1089 = vmatpush.msra.mxu0 0.0
    %1090 = vmatpush.msra.mxu0 0.0
    %1091 = vmatpush.msra.mxu0 0.0
    %1092 = vmatpush.msra.mxu0 0.0
    %1093 = vmatpush.msra.mxu0 0.0
    %1094 = vmatpush.msra.mxu0 %v441
    %1095 = vmatmul.f32.gmra.mxu0 %v1068
    %v1096 = vpop.f32.mrf.mxu0
    %v1097 = vadd.f32 %v1056, %v1096
    %1098 = vmatmul.f32.gmra.mxu0 %v1071
    %v1099 = vpop.f32.mrf.mxu0
    %v1100 = vadd.f32 %v1059, %v1099
    %1101 = vmatmul.f32.gmra.mxu0 %v1074
    %v1102 = vpop.f32.mrf.mxu0
    %v1103 = vadd.f32 %v1062, %v1102
    %1104 = vmatmul.f32.gmra.mxu0 %v1077
    %v1105 = vpop.f32.mrf.mxu0
    %v1106 = vadd.f32 %v1065, %v1105
    %1107 = vdwg.mxu0
    %1108 = vrot.lane.b32.xlu0 %v479, 112
    %v1109 = vpop.permute.xlu0 %1108
    %1110 = vrot.lane.b32.xlu0 %v479, 80
    %v1111 = vpop.permute.xlu0 %1110
    %v1112 = vsel %vm493, %v1109, 0
    %v1114 = vsel %vm493, %v1111, 0
    %1116 = vmatpush.xpose.msra.mxu0 0.0
    %1117 = vmatpush.xpose.msra.mxu0 0.0
    %1118 = vmatpush.xpose.msra.mxu0 0.0
    %1119 = vmatpush.xpose.msra.mxu0 0.0
    %1120 = vmatpush.xpose.msra.mxu0 0.0
    %1121 = vmatpush.xpose.msra.mxu0 0.0
    %1122 = vmatpush.xpose.msra.mxu0 0.0
    %1123 = vmatpush.xpose.msra.mxu0 0.0
    %1124 = vmatpush.xpose.msra.mxu0 0.0
    %1125 = vmatpush.xpose.msra.mxu0 0.0
    %1126 = vmatpush.xpose.msra.mxu0 0.0
    %1127 = vmatpush.xpose.msra.mxu0 0.0
    %1128 = vmatpush.xpose.msra.mxu0 0.0
    %1129 = vmatpush.xpose.msra.mxu0 0.0
    %1130 = vmatpush.xpose.msra.mxu0 0.0
    %1131 = vmatpush.xpose.msra.mxu0 %v1114
    %1132 = vmatmul.f32.gmra.mxu0 %v1112
    %v1133 = vpop.f32.mrf.mxu0
    %v1134 = vadd.f32 0.0, %v1133
    %1135 = vdwg.mxu0
    %1136 = vrot.lane.b32.xlu0 %v482, 112
    %v1137 = vpop.permute.xlu0 %1136
    %1138 = vrot.lane.b32.xlu0 %v482, 80
    %v1139 = vpop.permute.xlu0 %1138
    %v1140 = vsel %vm493, %v1137, 0
    %v1142 = vsel %vm493, %v1139, 0
    %1144 = vmatpush.xpose.msra.mxu0 0.0
    %1145 = vmatpush.xpose.msra.mxu0 0.0
    %1146 = vmatpush.xpose.msra.mxu0 0.0
    %1147 = vmatpush.xpose.msra.mxu0 0.0
    %1148 = vmatpush.xpose.msra.mxu0 0.0
    %1149 = vmatpush.xpose.msra.mxu0 0.0
    %1150 = vmatpush.xpose.msra.mxu0 0.0
    %1151 = vmatpush.xpose.msra.mxu0 0.0
    %1152 = vmatpush.xpose.msra.mxu0 0.0
    %1153 = vmatpush.xpose.msra.mxu0 0.0
    %1154 = vmatpush.xpose.msra.mxu0 0.0
    %1155 = vmatpush.xpose.msra.mxu0 0.0
    %1156 = vmatpush.xpose.msra.mxu0 0.0
    %1157 = vmatpush.xpose.msra.mxu0 0.0
    %1158 = vmatpush.xpose.msra.mxu0 0.0
    %1159 = vmatpush.xpose.msra.mxu0 %v1142
    %1160 = vmatmul.f32.gmra.mxu0 %v1140
    %v1161 = vpop.f32.mrf.mxu0
    %v1162 = vadd.f32 0.0, %v1161
    %1163 = vdwg.mxu0
    %1164 = vrot.lane.b32.xlu0 %v485, 112
    %v1165 = vpop.permute.xlu0 %1164
    %1166 = vrot.lane.b32.xlu0 %v485, 80
    %v1167 = vpop.permute.xlu0 %1166
    %v1168 = vsel %vm493, %v1165, 0
    %v1170 = vsel %vm493, %v1167, 0
    %1172 = vmatpush.xpose.msra.mxu0 0.0
    %1173 = vmatpush.xpose.msra.mxu0 0.0
    %1174 = vmatpush.xpose.msra.mxu0 0.0
    %1175 = vmatpush.xpose.msra.mxu0 0.0
    %1176 = vmatpush.xpose.msra.mxu0 0.0
    %1177 = vmatpush.xpose.msra.mxu0 0.0
    %1178 = vmatpush.xpose.msra.mxu0 0.0
    %1179 = vmatpush.xpose.msra.mxu0 0.0
    %1180 = vmatpush.xpose.msra.mxu0 0.0
    %1181 = vmatpush.xpose.msra.mxu0 0.0
    %1182 = vmatpush.xpose.msra.mxu0 0.0
    %1183 = vmatpush.xpose.msra.mxu0 0.0
    %1184 = vmatpush.xpose.msra.mxu0 0.0
    %1185 = vmatpush.xpose.msra.mxu0 0.0
    %1186 = vmatpush.xpose.msra.mxu0 0.0
    %1187 = vmatpush.xpose.msra.mxu0 %v1170
    %1188 = vmatmul.f32.gmra.mxu0 %v1168
    %v1189 = vpop.f32.mrf.mxu0
    %v1190 = vadd.f32 0.0, %v1189
    %1191 = vdwg.mxu0
    %1192 = vrot.lane.b32.xlu0 %v488, 112
    %v1193 = vpop.permute.xlu0 %1192
    %1194 = vrot.lane.b32.xlu0 %v488, 80
    %v1195 = vpop.permute.xlu0 %1194
    %v1196 = vsel %vm493, %v1193, 0
    %v1198 = vsel %vm493, %v1195, 0
    %1200 = vmatpush.xpose.msra.mxu0 0.0
    %1201 = vmatpush.xpose.msra.mxu0 0.0
    %1202 = vmatpush.xpose.msra.mxu0 0.0
    %1203 = vmatpush.xpose.msra.mxu0 0.0
    %1204 = vmatpush.xpose.msra.mxu0 0.0
    %1205 = vmatpush.xpose.msra.mxu0 0.0
    %1206 = vmatpush.xpose.msra.mxu0 0.0
    %1207 = vmatpush.xpose.msra.mxu0 0.0
    %1208 = vmatpush.xpose.msra.mxu0 0.0
    %1209 = vmatpush.xpose.msra.mxu0 0.0
    %1210 = vmatpush.xpose.msra.mxu0 0.0
    %1211 = vmatpush.xpose.msra.mxu0 0.0
    %1212 = vmatpush.xpose.msra.mxu0 0.0
    %1213 = vmatpush.xpose.msra.mxu0 0.0
    %1214 = vmatpush.xpose.msra.mxu0 0.0
    %1215 = vmatpush.xpose.msra.mxu0 %v1198
    %1216 = vmatmul.f32.gmra.mxu0 %v1196
    %v1217 = vpop.f32.mrf.mxu0
    %v1218 = vadd.f32 0.0, %v1217
    %1219 = vdwg.mxu0
    %v1220 = vmul.f32 %v1134, 0.35355338
    %v1221 = vmul.f32 %v1162, 0.35355338
    %v1222 = vmul.f32 %v1190, 0.35355338
    %v1223 = vmul.f32 %v1218, 0.35355338
    %v1224 = vadd.f32 %v1220, %v604
    %v1225 = vadd.f32 %v1221, %v604
    %v1226 = vadd.f32 %v1222, %v604
    %v1227 = vadd.f32 %v1223, %v604
    %v1228 = vsel %vm493, %v1224, -inf
    %1229 = vmax.xlane.f32.xlu0 %v1228
    %v1230 = vpop.xlane.xlu0 %1229
    %v1231 = vsel %vm493, %v1225, -inf
    %1232 = vmax.xlane.f32.xlu0 %v1231
    %v1233 = vpop.xlane.xlu0 %1232
    %v1234 = vsel %vm493, %v1226, -inf
    %1235 = vmax.xlane.f32.xlu0 %v1234
    %v1236 = vpop.xlane.xlu0 %1235
    %v1237 = vsel %vm493, %v1227, -inf
    %1238 = vmax.xlane.f32.xlu0 %v1237
    %v1239 = vpop.xlane.xlu0 %1238
    %v1240 = vsub.f32 %v1224, %v1230
    %v1241 = vsub.f32 %v1225, %v1233
    %v1242 = vsub.f32 %v1226, %v1236
    %v1243 = vsub.f32 %v1227, %v1239
    %v1244 = vmul.f32 %v1240, 1.442695
    %v1245 = vpow.pop %v1244
    %v1246 = vmul.f32 %v1241, 1.442695
    %v1247 = vpow.pop %v1246
    %v1248 = vmul.f32 %v1242, 1.442695
    %v1249 = vpow.pop %v1248
    %v1250 = vmul.f32 %v1243, 1.442695
    %v1251 = vpow.pop %v1250
    %v1252 = vsel %vm493, %v1245, 0.0
    %1253 = vadd.xlane.f32.xlu0 %v1252
    %v1254 = vpop.xlane.xlu0 %1253
    %v1255 = vsel %vm493, %v1247, 0.0
    %1256 = vadd.xlane.f32.xlu0 %v1255
    %v1257 = vpop.xlane.xlu0 %1256
    %v1258 = vsel %vm493, %v1249, 0.0
    %1259 = vadd.xlane.f32.xlu0 %v1258
    %v1260 = vpop.xlane.xlu0 %1259
    %v1261 = vsel %vm493, %v1251, 0.0
    %1262 = vadd.xlane.f32.xlu0 %v1261
    %v1263 = vpop.xlane.xlu0 %1262
    %v1264 = vrcp.pop %v1254
    %v1265 = vrcp.pop %v1257
    %v1266 = vrcp.pop %v1260
    %v1267 = vrcp.pop %v1263
    %v1268 = vmul.f32 %v1245, %v1264
    %v1269 = vmul.f32 %v1247, %v1265
    %v1270 = vmul.f32 %v1249, %v1266
    %v1271 = vmul.f32 %v1251, %v1267
    %1272 = vrot.lane.b32.xlu0 %v479, 48
    %v1273 = vpop.permute.xlu0 %1272
    %v1276 = vsel %vm493, %v1268, 0
    %1278 = vmatpush.msra.mxu0 0.0
    %1279 = vmatpush.msra.mxu0 0.0
    %1280 = vmatpush.msra.mxu0 0.0
    %1281 = vmatpush.msra.mxu0 0.0
    %1282 = vmatpush.msra.mxu0 0.0
    %1283 = vmatpush.msra.mxu0 0.0
    %1284 = vmatpush.msra.mxu0 0.0
    %1285 = vmatpush.msra.mxu0 0.0
    %1286 = vmatpush.msra.mxu0 0.0
    %1287 = vmatpush.msra.mxu0 0.0
    %1288 = vmatpush.msra.mxu0 0.0
    %1289 = vmatpush.msra.mxu0 0.0
    %1290 = vmatpush.msra.mxu0 0.0
    %1291 = vmatpush.msra.mxu0 0.0
    %1292 = vmatpush.msra.mxu0 0.0
    %1293 = vmatpush.msra.mxu0 %v1273
    %1294 = vmatmul.f32.gmra.mxu0 %v1276
    %v1295 = vpop.f32.mrf.mxu0
    %v1296 = vadd.f32 0.0, %v1295
    %1297 = vdwg.mxu0
    %1298 = vrot.lane.b32.xlu0 %v482, 48
    %v1299 = vpop.permute.xlu0 %1298
    %v1302 = vsel %vm493, %v1269, 0
    %1304 = vmatpush.msra.mxu0 0.0
    %1305 = vmatpush.msra.mxu0 0.0
    %1306 = vmatpush.msra.mxu0 0.0
    %1307 = vmatpush.msra.mxu0 0.0
    %1308 = vmatpush.msra.mxu0 0.0
    %1309 = vmatpush.msra.mxu0 0.0
    %1310 = vmatpush.msra.mxu0 0.0
    %1311 = vmatpush.msra.mxu0 0.0
    %1312 = vmatpush.msra.mxu0 0.0
    %1313 = vmatpush.msra.mxu0 0.0
    %1314 = vmatpush.msra.mxu0 0.0
    %1315 = vmatpush.msra.mxu0 0.0
    %1316 = vmatpush.msra.mxu0 0.0
    %1317 = vmatpush.msra.mxu0 0.0
    %1318 = vmatpush.msra.mxu0 0.0
    %1319 = vmatpush.msra.mxu0 %v1299
    %1320 = vmatmul.f32.gmra.mxu0 %v1302
    %v1321 = vpop.f32.mrf.mxu0
    %v1322 = vadd.f32 0.0, %v1321
    %1323 = vdwg.mxu0
    %1324 = vrot.lane.b32.xlu0 %v485, 48
    %v1325 = vpop.permute.xlu0 %1324
    %v1328 = vsel %vm493, %v1270, 0
    %1330 = vmatpush.msra.mxu0 0.0
    %1331 = vmatpush.msra.mxu0 0.0
    %1332 = vmatpush.msra.mxu0 0.0
    %1333 = vmatpush.msra.mxu0 0.0
    %1334 = vmatpush.msra.mxu0 0.0
    %1335 = vmatpush.msra.mxu0 0.0
    %1336 = vmatpush.msra.mxu0 0.0
    %1337 = vmatpush.msra.mxu0 0.0
    %1338 = vmatpush.msra.mxu0 0.0
    %1339 = vmatpush.msra.mxu0 0.0
    %1340 = vmatpush.msra.mxu0 0.0
    %1341 = vmatpush.msra.mxu0 0.0
    %1342 = vmatpush.msra.mxu0 0.0
    %1343 = vmatpush.msra.mxu0 0.0
    %1344 = vmatpush.msra.mxu0 0.0
    %1345 = vmatpush.msra.mxu0 %v1325
    %1346 = vmatmul.f32.gmra.mxu0 %v1328
    %v1347 = vpop.f32.mrf.mxu0
    %v1348 = vadd.f32 0.0, %v1347
    %1349 = vdwg.mxu0
    %1350 = vrot.lane.b32.xlu0 %v488, 48
    %v1351 = vpop.permute.xlu0 %1350
    %v1354 = vsel %vm493, %v1271, 0
    %1356 = vmatpush.msra.mxu0 0.0
    %1357 = vmatpush.msra.mxu0 0.0
    %1358 = vmatpush.msra.mxu0 0.0
    %1359 = vmatpush.msra.mxu0 0.0
    %1360 = vmatpush.msra.mxu0 0.0
    %1361 = vmatpush.msra.mxu0 0.0
    %1362 = vmatpush.msra.mxu0 0.0
    %1363 = vmatpush.msra.mxu0 0.0
    %1364 = vmatpush.msra.mxu0 0.0
    %1365 = vmatpush.msra.mxu0 0.0
    %1366 = vmatpush.msra.mxu0 0.0
    %1367 = vmatpush.msra.mxu0 0.0
    %1368 = vmatpush.msra.mxu0 0.0
    %1369 = vmatpush.msra.mxu0 0.0
    %1370 = vmatpush.msra.mxu0 0.0
    %1371 = vmatpush.msra.mxu0 %v1351
    %1372 = vmatmul.f32.gmra.mxu0 %v1354
    %v1373 = vpop.f32.mrf.mxu0
    %v1374 = vadd.f32 0.0, %v1373
    %1375 = vdwg.mxu0
    %v1377 = vsel %vm493, %v1296, 0
    %v1380 = vsel %vm493, %v1322, 0
    %v1383 = vsel %vm493, %v1348, 0
    %v1386 = vsel %vm493, %v1374, 0
    %1388 = vmatpush.msra.mxu0 0.0
    %1389 = vmatpush.msra.mxu0 0.0
    %1390 = vmatpush.msra.mxu0 0.0
    %1391 = vmatpush.msra.mxu0 0.0
    %1392 = vmatpush.msra.mxu0 0.0
    %1393 = vmatpush.msra.mxu0 0.0
    %1394 = vmatpush.msra.mxu0 0.0
    %1395 = vmatpush.msra.mxu0 0.0
    %1396 = vmatpush.msra.mxu0 0.0
    %1397 = vmatpush.msra.mxu0 0.0
    %1398 = vmatpush.msra.mxu0 0.0
    %1399 = vmatpush.msra.mxu0 0.0
    %1400 = vmatpush.msra.mxu0 0.0
    %1401 = vmatpush.msra.mxu0 0.0
    %1402 = vmatpush.msra.mxu0 0.0
    %1403 = vmatpush.msra.mxu0 %v443
    %1404 = vmatmul.f32.gmra.mxu0 %v1377
    %v1405 = vpop.f32.mrf.mxu0
    %v1406 = vadd.f32 0.0, %v1405
    %1407 = vmatmul.f32.gmra.mxu0 %v1380
    %v1408 = vpop.f32.mrf.mxu0
    %v1409 = vadd.f32 0.0, %v1408
    %1410 = vmatmul.f32.gmra.mxu0 %v1383
    %v1411 = vpop.f32.mrf.mxu0
    %v1412 = vadd.f32 0.0, %v1411
    %1413 = vmatmul.f32.gmra.mxu0 %v1386
    %v1414 = vpop.f32.mrf.mxu0
    %v1415 = vadd.f32 0.0, %v1414
    %1416 = vdwg.mxu0
    %v1417 = vadd.f32 %v1097, %v1406
    %v1418 = vadd.f32 %v1100, %v1409
    %v1419 = vadd.f32 %v1103, %v1412
    %v1420 = vadd.f32 %v1106, %v1415
    %1421 = vrot.lane.b32.xlu0 %v479, 104
    %v1422 = vpop.permute.xlu0 %1421
    %1423 = vrot.lane.b32.xlu0 %v479, 72
    %v1424 = vpop.permute.xlu0 %1423
    %v1425 = vsel %vm493, %v1422, 0
    %v1427 = vsel %vm493, %v1424, 0
    %1429 = vmatpush.xpose.msra.mxu0 0.0
    %1430 = vmatpush.xpose.msra.mxu0 0.0
    %1431 = vmatpush.xpose.msra.mxu0 0.0
    %1432 = vmatpush.xpose.msra.mxu0 0.0
    %1433 = vmatpush.xpose.msra.mxu0 0.0
    %1434 = vmatpush.xpose.msra.mxu0 0.0
    %1435 = vmatpush.xpose.msra.mxu0 0.0
    %1436 = vmatpush.xpose.msra.mxu0 0.0
    %1437 = vmatpush.xpose.msra.mxu0 0.0
    %1438 = vmatpush.xpose.msra.mxu0 0.0
    %1439 = vmatpush.xpose.msra.mxu0 0.0
    %1440 = vmatpush.xpose.msra.mxu0 0.0
    %1441 = vmatpush.xpose.msra.mxu0 0.0
    %1442 = vmatpush.xpose.msra.mxu0 0.0
    %1443 = vmatpush.xpose.msra.mxu0 0.0
    %1444 = vmatpush.xpose.msra.mxu0 %v1427
    %1445 = vmatmul.f32.gmra.mxu0 %v1425
    %v1446 = vpop.f32.mrf.mxu0
    %v1447 = vadd.f32 0.0, %v1446
    %1448 = vdwg.mxu0
    %1449 = vrot.lane.b32.xlu0 %v482, 104
    %v1450 = vpop.permute.xlu0 %1449
    %1451 = vrot.lane.b32.xlu0 %v482, 72
    %v1452 = vpop.permute.xlu0 %1451
    %v1453 = vsel %vm493, %v1450, 0
    %v1455 = vsel %vm493, %v1452, 0
    %1457 = vmatpush.xpose.msra.mxu0 0.0
    %1458 = vmatpush.xpose.msra.mxu0 0.0
    %1459 = vmatpush.xpose.msra.mxu0 0.0
    %1460 = vmatpush.xpose.msra.mxu0 0.0
    %1461 = vmatpush.xpose.msra.mxu0 0.0
    %1462 = vmatpush.xpose.msra.mxu0 0.0
    %1463 = vmatpush.xpose.msra.mxu0 0.0
    %1464 = vmatpush.xpose.msra.mxu0 0.0
    %1465 = vmatpush.xpose.msra.mxu0 0.0
    %1466 = vmatpush.xpose.msra.mxu0 0.0
    %1467 = vmatpush.xpose.msra.mxu0 0.0
    %1468 = vmatpush.xpose.msra.mxu0 0.0
    %1469 = vmatpush.xpose.msra.mxu0 0.0
    %1470 = vmatpush.xpose.msra.mxu0 0.0
    %1471 = vmatpush.xpose.msra.mxu0 0.0
    %1472 = vmatpush.xpose.msra.mxu0 %v1455
    %1473 = vmatmul.f32.gmra.mxu0 %v1453
    %v1474 = vpop.f32.mrf.mxu0
    %v1475 = vadd.f32 0.0, %v1474
    %1476 = vdwg.mxu0
    %1477 = vrot.lane.b32.xlu0 %v485, 104
    %v1478 = vpop.permute.xlu0 %1477
    %1479 = vrot.lane.b32.xlu0 %v485, 72
    %v1480 = vpop.permute.xlu0 %1479
    %v1481 = vsel %vm493, %v1478, 0
    %v1483 = vsel %vm493, %v1480, 0
    %1485 = vmatpush.xpose.msra.mxu0 0.0
    %1486 = vmatpush.xpose.msra.mxu0 0.0
    %1487 = vmatpush.xpose.msra.mxu0 0.0
    %1488 = vmatpush.xpose.msra.mxu0 0.0
    %1489 = vmatpush.xpose.msra.mxu0 0.0
    %1490 = vmatpush.xpose.msra.mxu0 0.0
    %1491 = vmatpush.xpose.msra.mxu0 0.0
    %1492 = vmatpush.xpose.msra.mxu0 0.0
    %1493 = vmatpush.xpose.msra.mxu0 0.0
    %1494 = vmatpush.xpose.msra.mxu0 0.0
    %1495 = vmatpush.xpose.msra.mxu0 0.0
    %1496 = vmatpush.xpose.msra.mxu0 0.0
    %1497 = vmatpush.xpose.msra.mxu0 0.0
    %1498 = vmatpush.xpose.msra.mxu0 0.0
    %1499 = vmatpush.xpose.msra.mxu0 0.0
    %1500 = vmatpush.xpose.msra.mxu0 %v1483
    %1501 = vmatmul.f32.gmra.mxu0 %v1481
    %v1502 = vpop.f32.mrf.mxu0
    %v1503 = vadd.f32 0.0, %v1502
    %1504 = vdwg.mxu0
    %1505 = vrot.lane.b32.xlu0 %v488, 104
    %v1506 = vpop.permute.xlu0 %1505
    %1507 = vrot.lane.b32.xlu0 %v488, 72
    %v1508 = vpop.permute.xlu0 %1507
    %v1509 = vsel %vm493, %v1506, 0
    %v1511 = vsel %vm493, %v1508, 0
    %1513 = vmatpush.xpose.msra.mxu0 0.0
    %1514 = vmatpush.xpose.msra.mxu0 0.0
    %1515 = vmatpush.xpose.msra.mxu0 0.0
    %1516 = vmatpush.xpose.msra.mxu0 0.0
    %1517 = vmatpush.xpose.msra.mxu0 0.0
    %1518 = vmatpush.xpose.msra.mxu0 0.0
    %1519 = vmatpush.xpose.msra.mxu0 0.0
    %1520 = vmatpush.xpose.msra.mxu0 0.0
    %1521 = vmatpush.xpose.msra.mxu0 0.0
    %1522 = vmatpush.xpose.msra.mxu0 0.0
    %1523 = vmatpush.xpose.msra.mxu0 0.0
    %1524 = vmatpush.xpose.msra.mxu0 0.0
    %1525 = vmatpush.xpose.msra.mxu0 0.0
    %1526 = vmatpush.xpose.msra.mxu0 0.0
    %1527 = vmatpush.xpose.msra.mxu0 0.0
    %1528 = vmatpush.xpose.msra.mxu0 %v1511
    %1529 = vmatmul.f32.gmra.mxu0 %v1509
    %v1530 = vpop.f32.mrf.mxu0
    %v1531 = vadd.f32 0.0, %v1530
    %1532 = vdwg.mxu0
    %v1533 = vmul.f32 %v1447, 0.35355338
    %v1534 = vmul.f32 %v1475, 0.35355338
    %v1535 = vmul.f32 %v1503, 0.35355338
    %v1536 = vmul.f32 %v1531, 0.35355338
    %v1537 = vadd.f32 %v1533, %v604
    %v1538 = vadd.f32 %v1534, %v604
    %v1539 = vadd.f32 %v1535, %v604
    %v1540 = vadd.f32 %v1536, %v604
    %v1541 = vsel %vm493, %v1537, -inf
    %1542 = vmax.xlane.f32.xlu0 %v1541
    %v1543 = vpop.xlane.xlu0 %1542
    %v1544 = vsel %vm493, %v1538, -inf
    %1545 = vmax.xlane.f32.xlu0 %v1544
    %v1546 = vpop.xlane.xlu0 %1545
    %v1547 = vsel %vm493, %v1539, -inf
    %1548 = vmax.xlane.f32.xlu0 %v1547
    %v1549 = vpop.xlane.xlu0 %1548
    %v1550 = vsel %vm493, %v1540, -inf
    %1551 = vmax.xlane.f32.xlu0 %v1550
    %v1552 = vpop.xlane.xlu0 %1551
    %v1553 = vsub.f32 %v1537, %v1543
    %v1554 = vsub.f32 %v1538, %v1546
    %v1555 = vsub.f32 %v1539, %v1549
    %v1556 = vsub.f32 %v1540, %v1552
    %v1557 = vmul.f32 %v1553, 1.442695
    %v1558 = vpow.pop %v1557
    %v1559 = vmul.f32 %v1554, 1.442695
    %v1560 = vpow.pop %v1559
    %v1561 = vmul.f32 %v1555, 1.442695
    %v1562 = vpow.pop %v1561
    %v1563 = vmul.f32 %v1556, 1.442695
    %v1564 = vpow.pop %v1563
    %v1565 = vsel %vm493, %v1558, 0.0
    %1566 = vadd.xlane.f32.xlu0 %v1565
    %v1567 = vpop.xlane.xlu0 %1566
    %v1568 = vsel %vm493, %v1560, 0.0
    %1569 = vadd.xlane.f32.xlu0 %v1568
    %v1570 = vpop.xlane.xlu0 %1569
    %v1571 = vsel %vm493, %v1562, 0.0
    %1572 = vadd.xlane.f32.xlu0 %v1571
    %v1573 = vpop.xlane.xlu0 %1572
    %v1574 = vsel %vm493, %v1564, 0.0
    %1575 = vadd.xlane.f32.xlu0 %v1574
    %v1576 = vpop.xlane.xlu0 %1575
    %v1577 = vrcp.pop %v1567
    %v1578 = vrcp.pop %v1570
    %v1579 = vrcp.pop %v1573
    %v1580 = vrcp.pop %v1576
    %v1581 = vmul.f32 %v1558, %v1577
    %v1582 = vmul.f32 %v1560, %v1578
    %v1583 = vmul.f32 %v1562, %v1579
    %v1584 = vmul.f32 %v1564, %v1580
    %1585 = vrot.lane.b32.xlu0 %v479, 40
    %v1586 = vpop.permute.xlu0 %1585
    %v1589 = vsel %vm493, %v1581, 0
    %1591 = vmatpush.msra.mxu0 0.0
    %1592 = vmatpush.msra.mxu0 0.0
    %1593 = vmatpush.msra.mxu0 0.0
    %1594 = vmatpush.msra.mxu0 0.0
    %1595 = vmatpush.msra.mxu0 0.0
    %1596 = vmatpush.msra.mxu0 0.0
    %1597 = vmatpush.msra.mxu0 0.0
    %1598 = vmatpush.msra.mxu0 0.0
    %1599 = vmatpush.msra.mxu0 0.0
    %1600 = vmatpush.msra.mxu0 0.0
    %1601 = vmatpush.msra.mxu0 0.0
    %1602 = vmatpush.msra.mxu0 0.0
    %1603 = vmatpush.msra.mxu0 0.0
    %1604 = vmatpush.msra.mxu0 0.0
    %1605 = vmatpush.msra.mxu0 0.0
    %1606 = vmatpush.msra.mxu0 %v1586
    %1607 = vmatmul.f32.gmra.mxu0 %v1589
    %v1608 = vpop.f32.mrf.mxu0
    %v1609 = vadd.f32 0.0, %v1608
    %1610 = vdwg.mxu0
    %1611 = vrot.lane.b32.xlu0 %v482, 40
    %v1612 = vpop.permute.xlu0 %1611
    %v1615 = vsel %vm493, %v1582, 0
    %1617 = vmatpush.msra.mxu0 0.0
    %1618 = vmatpush.msra.mxu0 0.0
    %1619 = vmatpush.msra.mxu0 0.0
    %1620 = vmatpush.msra.mxu0 0.0
    %1621 = vmatpush.msra.mxu0 0.0
    %1622 = vmatpush.msra.mxu0 0.0
    %1623 = vmatpush.msra.mxu0 0.0
    %1624 = vmatpush.msra.mxu0 0.0
    %1625 = vmatpush.msra.mxu0 0.0
    %1626 = vmatpush.msra.mxu0 0.0
    %1627 = vmatpush.msra.mxu0 0.0
    %1628 = vmatpush.msra.mxu0 0.0
    %1629 = vmatpush.msra.mxu0 0.0
    %1630 = vmatpush.msra.mxu0 0.0
    %1631 = vmatpush.msra.mxu0 0.0
    %1632 = vmatpush.msra.mxu0 %v1612
    %1633 = vmatmul.f32.gmra.mxu0 %v1615
    %v1634 = vpop.f32.mrf.mxu0
    %v1635 = vadd.f32 0.0, %v1634
    %1636 = vdwg.mxu0
    %1637 = vrot.lane.b32.xlu0 %v485, 40
    %v1638 = vpop.permute.xlu0 %1637
    %v1641 = vsel %vm493, %v1583, 0
    %1643 = vmatpush.msra.mxu0 0.0
    %1644 = vmatpush.msra.mxu0 0.0
    %1645 = vmatpush.msra.mxu0 0.0
    %1646 = vmatpush.msra.mxu0 0.0
    %1647 = vmatpush.msra.mxu0 0.0
    %1648 = vmatpush.msra.mxu0 0.0
    %1649 = vmatpush.msra.mxu0 0.0
    %1650 = vmatpush.msra.mxu0 0.0
    %1651 = vmatpush.msra.mxu0 0.0
    %1652 = vmatpush.msra.mxu0 0.0
    %1653 = vmatpush.msra.mxu0 0.0
    %1654 = vmatpush.msra.mxu0 0.0
    %1655 = vmatpush.msra.mxu0 0.0
    %1656 = vmatpush.msra.mxu0 0.0
    %1657 = vmatpush.msra.mxu0 0.0
    %1658 = vmatpush.msra.mxu0 %v1638
    %1659 = vmatmul.f32.gmra.mxu0 %v1641
    %v1660 = vpop.f32.mrf.mxu0
    %v1661 = vadd.f32 0.0, %v1660
    %1662 = vdwg.mxu0
    %1663 = vrot.lane.b32.xlu0 %v488, 40
    %v1664 = vpop.permute.xlu0 %1663
    %v1667 = vsel %vm493, %v1584, 0
    %1669 = vmatpush.msra.mxu0 0.0
    %1670 = vmatpush.msra.mxu0 0.0
    %1671 = vmatpush.msra.mxu0 0.0
    %1672 = vmatpush.msra.mxu0 0.0
    %1673 = vmatpush.msra.mxu0 0.0
    %1674 = vmatpush.msra.mxu0 0.0
    %1675 = vmatpush.msra.mxu0 0.0
    %1676 = vmatpush.msra.mxu0 0.0
    %1677 = vmatpush.msra.mxu0 0.0
    %1678 = vmatpush.msra.mxu0 0.0
    %1679 = vmatpush.msra.mxu0 0.0
    %1680 = vmatpush.msra.mxu0 0.0
    %1681 = vmatpush.msra.mxu0 0.0
    %1682 = vmatpush.msra.mxu0 0.0
    %1683 = vmatpush.msra.mxu0 0.0
    %1684 = vmatpush.msra.mxu0 %v1664
    %1685 = vmatmul.f32.gmra.mxu0 %v1667
    %v1686 = vpop.f32.mrf.mxu0
    %v1687 = vadd.f32 0.0, %v1686
    %1688 = vdwg.mxu0
    %v1690 = vsel %vm493, %v1609, 0
    %v1693 = vsel %vm493, %v1635, 0
    %v1696 = vsel %vm493, %v1661, 0
    %v1699 = vsel %vm493, %v1687, 0
    %1701 = vmatpush.msra.mxu0 0.0
    %1702 = vmatpush.msra.mxu0 0.0
    %1703 = vmatpush.msra.mxu0 0.0
    %1704 = vmatpush.msra.mxu0 0.0
    %1705 = vmatpush.msra.mxu0 0.0
    %1706 = vmatpush.msra.mxu0 0.0
    %1707 = vmatpush.msra.mxu0 0.0
    %1708 = vmatpush.msra.mxu0 0.0
    %1709 = vmatpush.msra.mxu0 0.0
    %1710 = vmatpush.msra.mxu0 0.0
    %1711 = vmatpush.msra.mxu0 0.0
    %1712 = vmatpush.msra.mxu0 0.0
    %1713 = vmatpush.msra.mxu0 0.0
    %1714 = vmatpush.msra.mxu0 0.0
    %1715 = vmatpush.msra.mxu0 0.0
    %1716 = vmatpush.msra.mxu0 %v444
    %1717 = vmatmul.f32.gmra.mxu0 %v1690
    %v1718 = vpop.f32.mrf.mxu0
    %v1719 = vadd.f32 0.0, %v1718
    %1720 = vmatmul.f32.gmra.mxu0 %v1693
    %v1721 = vpop.f32.mrf.mxu0
    %v1722 = vadd.f32 0.0, %v1721
    %1723 = vmatmul.f32.gmra.mxu0 %v1696
    %v1724 = vpop.f32.mrf.mxu0
    %v1725 = vadd.f32 0.0, %v1724
    %1726 = vmatmul.f32.gmra.mxu0 %v1699
    %v1727 = vpop.f32.mrf.mxu0
    %v1728 = vadd.f32 0.0, %v1727
    %1729 = vdwg.mxu0
    %v1730 = vadd.f32 %v1417, %v1719
    %v1731 = vadd.f32 %v1418, %v1722
    %v1732 = vadd.f32 %v1419, %v1725
    %v1733 = vadd.f32 %v1420, %v1728
    %v1735 = vperm.slane %v445, 0
    %v1737 = vadd.f32 %v1730, %v1735
    %v1738 = vadd.f32 %v1731, %v1735
    %v1739 = vadd.f32 %v1732, %v1735
    %v1740 = vadd.f32 %v1733, %v1735
    %v1741 = vadd.f32 %v320, %v1737
    %v1742 = vadd.f32 %v321, %v1738
    %v1743 = vadd.f32 %v322, %v1739
    %v1744 = vadd.f32 %v323, %v1740
    %v1745 = vld [vmem:[%s69] sm:$0x1]
    %v1746 = vld [vmem:[%s67] sm:$0x1]
    %v1747 = vsel %vm326, %v1741, 0.0
    %1748 = vadd.xlane.f32.xlu0 %v1747
    %v1749 = vpop.xlane.xlu0 %1748
    %v1750 = vsel %vm326, %v1742, 0.0
    %1751 = vadd.xlane.f32.xlu0 %v1750
    %v1752 = vpop.xlane.xlu0 %1751
    %v1753 = vsel %vm326, %v1743, 0.0
    %1754 = vadd.xlane.f32.xlu0 %v1753
    %v1755 = vpop.xlane.xlu0 %1754
    %v1756 = vsel %vm326, %v1744, 0.0
    %1757 = vadd.xlane.f32.xlu0 %v1756
    %v1758 = vpop.xlane.xlu0 %1757
    %v1759 = vmul.f32 %v1749, %v345
    %v1760 = vmul.f32 %v1752, %v345
    %v1761 = vmul.f32 %v1755, %v345
    %v1762 = vmul.f32 %v1758, %v345
    %v1763 = vsub.f32 %v1741, %v1759
    %v1764 = vsub.f32 %v1742, %v1760
    %v1765 = vsub.f32 %v1743, %v1761
    %v1766 = vsub.f32 %v1744, %v1762
    %v1767 = vmul.f32 %v1763, %v1763
    %v1768 = vmul.f32 %v1764, %v1764
    %v1769 = vmul.f32 %v1765, %v1765
    %v1770 = vmul.f32 %v1766, %v1766
    %v1771 = vsel %vm326, %v1767, 0.0
    %1772 = vadd.xlane.f32.xlu0 %v1771
    %v1773 = vpop.xlane.xlu0 %1772
    %v1774 = vsel %vm326, %v1768, 0.0
    %1775 = vadd.xlane.f32.xlu0 %v1774
    %v1776 = vpop.xlane.xlu0 %1775
    %v1777 = vsel %vm326, %v1769, 0.0
    %1778 = vadd.xlane.f32.xlu0 %v1777
    %v1779 = vpop.xlane.xlu0 %1778
    %v1780 = vsel %vm326, %v1770, 0.0
    %1781 = vadd.xlane.f32.xlu0 %v1780
    %v1782 = vpop.xlane.xlu0 %1781
    %v1783 = vmul.f32 %v1773, %v345
    %v1784 = vmul.f32 %v1776, %v345
    %v1785 = vmul.f32 %v1779, %v345
    %v1786 = vmul.f32 %v1782, %v345
    %v1787 = vadd.f32 %v1783, 1e-06
    %v1788 = vadd.f32 %v1784, 1e-06
    %v1789 = vadd.f32 %v1785, 1e-06
    %v1790 = vadd.f32 %v1786, 1e-06
    %v1791 = vrsqrt.pop %v1787
    %v1792 = vmul.f32 %v1791, %v1787
    %v1793 = vmul.f32 %v1792, %v1791
    %v1794 = vmul.f32 0.5, %v1793
    %v1795 = vsub.f32 1.5, %v1794
    %v1796 = vmul.f32 %v1791, %v1795
    %vm1797 = vweird.f32 %v1787
    %vm1798 = vweird.f32 %v1791
    %vm1799 = vmor %vm1797, %vm1798
    %v1800 = vsel %vm1799, %v1791, %v1796
    %v1801 = vrsqrt.pop %v1788
    %v1802 = vmul.f32 %v1801, %v1788
    %v1803 = vmul.f32 %v1802, %v1801
    %v1804 = vmul.f32 0.5, %v1803
    %v1805 = vsub.f32 1.5, %v1804
    %v1806 = vmul.f32 %v1801, %v1805
    %vm1807 = vweird.f32 %v1788
    %vm1808 = vweird.f32 %v1801
    %vm1809 = vmor %vm1807, %vm1808
    %v1810 = vsel %vm1809, %v1801, %v1806
    %v1811 = vrsqrt.pop %v1789
    %v1812 = vmul.f32 %v1811, %v1789
    %v1813 = vmul.f32 %v1812, %v1811
    %v1814 = vmul.f32 0.5, %v1813
    %v1815 = vsub.f32 1.5, %v1814
    %v1816 = vmul.f32 %v1811, %v1815
    %vm1817 = vweird.f32 %v1789
    %vm1818 = vweird.f32 %v1811
    %vm1819 = vmor %vm1817, %vm1818
    %v1820 = vsel %vm1819, %v1811, %v1816
    %v1821 = vrsqrt.pop %v1790
    %v1822 = vmul.f32 %v1821, %v1790
    %v1823 = vmul.f32 %v1822, %v1821
    %v1824 = vmul.f32 0.5, %v1823
    %v1825 = vsub.f32 1.5, %v1824
    %v1826 = vmul.f32 %v1821, %v1825
    %vm1827 = vweird.f32 %v1790
    %vm1828 = vweird.f32 %v1821
    %vm1829 = vmor %vm1827, %vm1828
    %v1830 = vsel %vm1829, %v1821, %v1826
    %v1831 = vmul.f32 %v1763, %v1800
    %v1832 = vmul.f32 %v1764, %v1810
    %v1833 = vmul.f32 %v1765, %v1820
    %v1834 = vmul.f32 %v1766, %v1830
    %v1836 = vperm.slane %v1745, 0
    %v1838 = vmul.f32 %v1831, %v1836
    %v1839 = vmul.f32 %v1832, %v1836
    %v1840 = vmul.f32 %v1833, %v1836
    %v1841 = vmul.f32 %v1834, %v1836
    %v1843 = vperm.slane %v1746, 0
    %v1845 = vadd.f32 %v1838, %v1843
    %v1846 = vadd.f32 %v1839, %v1843
    %v1847 = vadd.f32 %v1840, %v1843
    %v1848 = vadd.f32 %v1841, %v1843
    %v1849 = vld [vmem:[%s79] sm:$0xff]
    %v1850 = vld [vmem:[%s79 + $0x8] sm:$0xff]
    %v1851 = vld [vmem:[%s79 + $0x10] sm:$0xff]
    %v1852 = vld [vmem:[%s79 + $0x18] sm:$0xff]
    %v1853 = vld [vmem:[%s75] sm:$0x1]
    %v1854 = vld [vmem:[%s81] sm:$0xff]
    %v1855 = vld [vmem:[%s81 + $0x8] sm:$0xff]
    %v1856 = vld [vmem:[%s81 + $0x10] sm:$0xff]
    %v1857 = vld [vmem:[%s81 + $0x18] sm:$0xff]
    %v1858 = vld [vmem:[%s81 + $0x20] sm:$0xff]
    %v1859 = vld [vmem:[%s81 + $0x28] sm:$0xff]
    %v1860 = vld [vmem:[%s81 + $0x30] sm:$0xff]
    %v1861 = vld [vmem:[%s81 + $0x38] sm:$0xff]
    %v1862 = vld [vmem:[%s81 + $0x40] sm:$0xff]
    %v1863 = vld [vmem:[%s81 + $0x48] sm:$0xff]
    %v1864 = vld [vmem:[%s81 + $0x50] sm:$0xff]
    %v1865 = vld [vmem:[%s81 + $0x58] sm:$0xff]
    %v1866 = vld [vmem:[%s81 + $0x60] sm:$0xff]
    %v1867 = vld [vmem:[%s81 + $0x68] sm:$0xff]
    %v1868 = vld [vmem:[%s81 + $0x70] sm:$0xff]
    %v1869 = vld [vmem:[%s81 + $0x78] sm:$0xff]
    %v1870 = vld [vmem:[%s77] sm:$0x1]
    %v1872 = vperm.slane %v1853, 0
    %v1875 = vsel %vm326, %v1845, 0
    %v1878 = vsel %vm326, %v1846, 0
    %v1881 = vsel %vm326, %v1847, 0
    %v1884 = vsel %vm326, %v1848, 0
    %1886 = vmatpush.msra.mxu0 0.0
    %1887 = vmatpush.msra.mxu0 0.0
    %1888 = vmatpush.msra.mxu0 0.0
    %1889 = vmatpush.msra.mxu0 0.0
    %1890 = vmatpush.msra.mxu0 0.0
    %1891 = vmatpush.msra.mxu0 0.0
    %1892 = vmatpush.msra.mxu0 0.0
    %1893 = vmatpush.msra.mxu0 0.0
    %1894 = vmatpush.msra.mxu0 0.0
    %1895 = vmatpush.msra.mxu0 0.0
    %1896 = vmatpush.msra.mxu0 0.0
    %1897 = vmatpush.msra.mxu0 0.0
    %1898 = vmatpush.msra.mxu0 %v1852
    %1899 = vmatpush.msra.mxu0 %v1851
    %1900 = vmatpush.msra.mxu0 %v1850
    %1901 = vmatpush.msra.mxu0 %v1849
    %1902 = vmatmul.f32.gmra.mxu0 %v1875
    %v1903 = vpop.f32.mrf.mxu0
    %v1904 = vadd.f32 %v1872, %v1903
    %1905 = vmatmul.f32.gmra.mxu0 %v1878
    %v1906 = vpop.f32.mrf.mxu0
    %v1907 = vadd.f32 %v1872, %v1906
    %1908 = vmatmul.f32.gmra.mxu0 %v1881
    %v1909 = vpop.f32.mrf.mxu0
    %v1910 = vadd.f32 %v1872, %v1909
    %1911 = vmatmul.f32.gmra.mxu0 %v1884
    %v1912 = vpop.f32.mrf.mxu0
    %v1913 = vadd.f32 %v1872, %v1912
    %1914 = vdwg.mxu0
    %v1915 = vmul.f32 %v1904, %v1904
    %v1916 = vmul.f32 %v1907, %v1907
    %v1917 = vmul.f32 %v1910, %v1910
    %v1918 = vmul.f32 %v1913, %v1913
    %v1919 = vmul.f32 %v1904, %v1915
    %v1920 = vmul.f32 %v1907, %v1916
    %v1921 = vmul.f32 %v1910, %v1917
    %v1922 = vmul.f32 %v1913, %v1918
    %v1923 = vmul.f32 %v1919, 0.044715
    %v1924 = vmul.f32 %v1920, 0.044715
    %v1925 = vmul.f32 %v1921, 0.044715
    %v1926 = vmul.f32 %v1922, 0.044715
    %v1927 = vadd.f32 %v1904, %v1923
    %v1928 = vadd.f32 %v1907, %v1924
    %v1929 = vadd.f32 %v1910, %v1925
    %v1930 = vadd.f32 %v1913, %v1926
    %v1931 = vmul.f32 %v1927, 0.7978846
    %v1932 = vmul.f32 %v1928, 0.7978846
    %v1933 = vmul.f32 %v1929, 0.7978846
    %v1934 = vmul.f32 %v1930, 0.7978846
    %v1935 = vtanh.pop %v1931
    %v1936 = vtanh.pop %v1932
    %v1937 = vtanh.pop %v1933
    %v1938 = vtanh.pop %v1934
    %v1939 = vadd.f32 %v1935, 1.0
    %v1940 = vadd.f32 %v1936, 1.0
    %v1941 = vadd.f32 %v1937, 1.0
    %v1942 = vadd.f32 %v1938, 1.0
    %v1943 = vmul.f32 %v1939, 0.5
    %v1944 = vmul.f32 %v1940, 0.5
    %v1945 = vmul.f32 %v1941, 0.5
    %v1946 = vmul.f32 %v1942, 0.5
    %v1947 = vmul.f32 %v1904, %v1943
    %v1948 = vmul.f32 %v1907, %v1944
    %v1949 = vmul.f32 %v1910, %v1945
    %v1950 = vmul.f32 %v1913, %v1946
    %v1952 = vperm.slane %v1870, 0
    %1954 = vmatpush.msra.mxu0 %v1869
    %1955 = vmatpush.msra.mxu0 %v1868
    %1956 = vmatpush.msra.mxu0 %v1867
    %1957 = vmatpush.msra.mxu0 %v1866
    %1958 = vmatpush.msra.mxu0 %v1865
    %1959 = vmatpush.msra.mxu0 %v1864
    %1960 = vmatpush.msra.mxu0 %v1863
    %1961 = vmatpush.msra.mxu0 %v1862
    %1962 = vmatpush.msra.mxu0 %v1861
    %1963 = vmatpush.msra.mxu0 %v1860
    %1964 = vmatpush.msra.mxu0 %v1859
    %1965 = vmatpush.msra.mxu0 %v1858
    %1966 = vmatpush.msra.mxu0 %v1857
    %1967 = vmatpush.msra.mxu0 %v1856
    %1968 = vmatpush.msra.mxu0 %v1855
    %1969 = vmatpush.msra.mxu0 %v1854
    %1970 = vmatmul.f32.gmra.mxu0 %v1947
    %v1971 = vpop.f32.mrf.mxu0
    %v1972 = vadd.f32 %v1952, %v1971
    %1973 = vmatmul.f32.gmra.mxu0 %v1948
    %v1974 = vpop.f32.mrf.mxu0
    %v1975 = vadd.f32 %v1952, %v1974
    %1976 = vmatmul.f32.gmra.mxu0 %v1949
    %v1977 = vpop.f32.mrf.mxu0
    %v1978 = vadd.f32 %v1952, %v1977
    %1979 = vmatmul.f32.gmra.mxu0 %v1950
    %v1980 = vpop.f32.mrf.mxu0
    %v1981 = vadd.f32 %v1952, %v1980
    %1982 = vdwg.mxu0
    %v1983 = vadd.f32 %v1741, %v1972
    %v1984 = vadd.f32 %v1742, %v1975
    %v1985 = vadd.f32 %v1743, %v1978
    %v1986 = vadd.f32 %v1744, %v1981
    %v1987 = vld [vmem:[%s73] sm:$0x1]
    %v1988 = vld [vmem:[%s71] sm:$0x1]
    %v1989 = vsel %vm326, %v1983, 0.0
    %1990 = vadd.xlane.f32.xlu0 %v1989
    %v1991 = vpop.xlane.xlu0 %1990
    %v1992 = vsel %vm326, %v1984, 0.0
    %1993 = vadd.xlane.f32.xlu0 %v1992
    %v1994 = vpop.xlane.xlu0 %1993
    %v1995 = vsel %vm326, %v1985, 0.0
    %1996 = vadd.xlane.f32.xlu0 %v1995
    %v1997 = vpop.xlane.xlu0 %1996
    %v1998 = vsel %vm326, %v1986, 0.0
    %1999 = vadd.xlane.f32.xlu0 %v1998
    %v2000 = vpop.xlane.xlu0 %1999
    %v2001 = vmul.f32 %v1991, %v345
    %v2002 = vmul.f32 %v1994, %v345
    %v2003 = vmul.f32 %v1997, %v345
    %v2004 = vmul.f32 %v2000, %v345
    %v2005 = vsub.f32 %v1983, %v2001
    %v2006 = vsub.f32 %v1984, %v2002
    %v2007 = vsub.f32 %v1985, %v2003
    %v2008 = vsub.f32 %v1986, %v2004
    %v2009 = vmul.f32 %v2005, %v2005
    %v2010 = vmul.f32 %v2006, %v2006
    %v2011 = vmul.f32 %v2007, %v2007
    %v2012 = vmul.f32 %v2008, %v2008
    %v2013 = vsel %vm326, %v2009, 0.0
    %2014 = vadd.xlane.f32.xlu0 %v2013
    %v2015 = vpop.xlane.xlu0 %2014
    %v2016 = vsel %vm326, %v2010, 0.0
    %2017 = vadd.xlane.f32.xlu0 %v2016
    %v2018 = vpop.xlane.xlu0 %2017
    %v2019 = vsel %vm326, %v2011, 0.0
    %2020 = vadd.xlane.f32.xlu0 %v2019
    %v2021 = vpop.xlane.xlu0 %2020
    %v2022 = vsel %vm326, %v2012, 0.0
    %2023 = vadd.xlane.f32.xlu0 %v2022
    %v2024 = vpop.xlane.xlu0 %2023
    %v2025 = vmul.f32 %v2015, %v345
    %v2026 = vmul.f32 %v2018, %v345
    %v2027 = vmul.f32 %v2021, %v345
    %v2028 = vmul.f32 %v2024, %v345
    %v2029 = vadd.f32 %v2025, 1e-06
    %v2030 = vadd.f32 %v2026, 1e-06
    %v2031 = vadd.f32 %v2027, 1e-06
    %v2032 = vadd.f32 %v2028, 1e-06
    %v2033 = vrsqrt.pop %v2029
    %v2034 = vmul.f32 %v2033, %v2029
    %v2035 = vmul.f32 %v2034, %v2033
    %v2036 = vmul.f32 0.5, %v2035
    %v2037 = vsub.f32 1.5, %v2036
    %v2038 = vmul.f32 %v2033, %v2037
    %vm2039 = vweird.f32 %v2029
    %vm2040 = vweird.f32 %v2033
    %vm2041 = vmor %vm2039, %vm2040
    %v2042 = vsel %vm2041, %v2033, %v2038
    %v2043 = vrsqrt.pop %v2030
    %v2044 = vmul.f32 %v2043, %v2030
    %v2045 = vmul.f32 %v2044, %v2043
    %v2046 = vmul.f32 0.5, %v2045
    %v2047 = vsub.f32 1.5, %v2046
    %v2048 = vmul.f32 %v2043, %v2047
    %vm2049 = vweird.f32 %v2030
    %vm2050 = vweird.f32 %v2043
    %vm2051 = vmor %vm2049, %vm2050
    %v2052 = vsel %vm2051, %v2043, %v2048
    %v2053 = vrsqrt.pop %v2031
    %v2054 = vmul.f32 %v2053, %v2031
    %v2055 = vmul.f32 %v2054, %v2053
    %v2056 = vmul.f32 0.5, %v2055
    %v2057 = vsub.f32 1.5, %v2056
    %v2058 = vmul.f32 %v2053, %v2057
    %vm2059 = vweird.f32 %v2031
    %vm2060 = vweird.f32 %v2053
    %vm2061 = vmor %vm2059, %vm2060
    %v2062 = vsel %vm2061, %v2053, %v2058
    %v2063 = vrsqrt.pop %v2032
    %v2064 = vmul.f32 %v2063, %v2032
    %v2065 = vmul.f32 %v2064, %v2063
    %v2066 = vmul.f32 0.5, %v2065
    %v2067 = vsub.f32 1.5, %v2066
    %v2068 = vmul.f32 %v2063, %v2067
    %vm2069 = vweird.f32 %v2032
    %vm2070 = vweird.f32 %v2063
    %vm2071 = vmor %vm2069, %vm2070
    %v2072 = vsel %vm2071, %v2063, %v2068
    %v2073 = vmul.f32 %v2005, %v2042
    %v2074 = vmul.f32 %v2006, %v2052
    %v2075 = vmul.f32 %v2007, %v2062
    %v2076 = vmul.f32 %v2008, %v2072
    %v2078 = vperm.slane %v1987, 0
    %v2080 = vmul.f32 %v2073, %v2078
    %v2081 = vmul.f32 %v2074, %v2078
    %v2082 = vmul.f32 %v2075, %v2078
    %v2083 = vmul.f32 %v2076, %v2078
    %v2085 = vperm.slane %v1988, 0
    %v2087 = vadd.f32 %v2080, %v2085
    %v2088 = vadd.f32 %v2081, %v2085
    %v2089 = vadd.f32 %v2082, %v2085
    %v2090 = vadd.f32 %v2083, %v2085
    %v2091 = vld [vmem:[%s3] sm:$0xff]
    %v2092 = vld [vmem:[%s3 + $0x8] sm:$0xff]
    %v2093 = vld [vmem:[%s3 + $0x10] sm:$0xff]
    %v2094 = vld [vmem:[%s3 + $0x18] sm:$0xff]
    %v2095 = vlaneseq
    %v2096 = vand.u32 %v2095, 127
    %2097 = vset.pattern.permute.xlu0 0
    %2098 = vperm.xlu0 %2097, %v2091
    %v2099 = vpop.permute.xlu0 %2098
    %2100 = vset.pattern.permute.xlu0 0
    %2101 = vperm.xlu0 %2100, %v2092
    %v2102 = vpop.permute.xlu0 %2101
    %2103 = vset.pattern.permute.xlu0 0
    %2104 = vperm.xlu0 %2103, %v2093
    %v2105 = vpop.permute.xlu0 %2104
    %2106 = vset.pattern.permute.xlu0 0
    %2107 = vperm.xlu0 %2106, %v2094
    %v2108 = vpop.permute.xlu0 %2107
    %vm2109 = vcmp.eq.s32.totalorder %v2096, %v2099
    %vm2110 = vcmp.eq.s32.totalorder %v2096, %v2102
    %vm2111 = vcmp.eq.s32.totalorder %v2096, %v2105
    %vm2112 = vcmp.eq.s32.totalorder %v2096, %v2108
    %v2113 = vsel %vm2109, 1, 0
    %v2114 = vsel %vm2110, 1, 0
    %v2115 = vsel %vm2111, 1, 0
    %v2116 = vsel %vm2112, 1, 0
    %v2117 = vcvt.s32.f32 %v2113
    %v2118 = vcvt.s32.f32 %v2114
    %v2119 = vcvt.s32.f32 %v2115
    %v2120 = vcvt.s32.f32 %v2116
    %v2121 = vld [vmem:[%s59] sm:$0xff]
    %v2122 = vld [vmem:[%s59 + $0x8] sm:$0xff]
    %v2123 = vld [vmem:[%s59 + $0x10] sm:$0xff]
    %v2124 = vld [vmem:[%s59 + $0x18] sm:$0xff]
    %v2125 = vld [vmem:[%s59 + $0x20] sm:$0xff]
    %v2126 = vld [vmem:[%s59 + $0x28] sm:$0xff]
    %v2127 = vld [vmem:[%s59 + $0x30] sm:$0xff]
    %v2128 = vld [vmem:[%s59 + $0x38] sm:$0xff]
    %v2129 = vld [vmem:[%s59 + $0x40] sm:$0xff]
    %v2130 = vld [vmem:[%s59 + $0x48] sm:$0xff]
    %v2131 = vld [vmem:[%s59 + $0x50] sm:$0xff]
    %v2132 = vld [vmem:[%s59 + $0x58] sm:$0xff]
    %v2133 = vld [vmem:[%s59 + $0x60] sm:$0xff]
    %v2134 = vld [vmem:[%s59 + $0x68] sm:$0xff]
    %v2135 = vld [vmem:[%s59 + $0x70] sm:$0xff]
    %v2136 = vld [vmem:[%s59 + $0x78] sm:$0xff]
    %2137 = vmatpush.msra.mxu0 %v2136
    %2138 = vmatpush.msra.mxu0 %v2135
    %2139 = vmatpush.msra.mxu0 %v2134
    %2140 = vmatpush.msra.mxu0 %v2133
    %2141 = vmatpush.msra.mxu0 %v2132
    %2142 = vmatpush.msra.mxu0 %v2131
    %2143 = vmatpush.msra.mxu0 %v2130
    %2144 = vmatpush.msra.mxu0 %v2129
    %2145 = vmatpush.msra.mxu0 %v2128
    %2146 = vmatpush.msra.mxu0 %v2127
    %2147 = vmatpush.msra.mxu0 %v2126
    %2148 = vmatpush.msra.mxu0 %v2125
    %2149 = vmatpush.msra.mxu0 %v2124
    %2150 = vmatpush.msra.mxu0 %v2123
    %2151 = vmatpush.msra.mxu0 %v2122
    %2152 = vmatpush.msra.mxu0 %v2121
    %2153 = vmatmul.f32.gmra.mxu0 %v2117
    %v2154 = vpop.f32.mrf.mxu0
    %v2155 = vadd.f32 0.0, %v2154
    %2156 = vmatmul.f32.gmra.mxu0 %v2118
    %v2157 = vpop.f32.mrf.mxu0
    %v2158 = vadd.f32 0.0, %v2157
    %2159 = vmatmul.f32.gmra.mxu0 %v2119
    %v2160 = vpop.f32.mrf.mxu0
    %v2161 = vadd.f32 0.0, %v2160
    %2162 = vmatmul.f32.gmra.mxu0 %v2120
    %v2163 = vpop.f32.mrf.mxu0
    %v2164 = vadd.f32 0.0, %v2163
    %2165 = vdwg.mxu0
    %v2166 = vld [vmem:[%s61] sm:$0xff]
    %v2167 = vadd.f32 %v2155, %v2166
    %v2168 = vadd.f32 %v2158, %v2166
    %v2169 = vadd.f32 %v2161, %v2166
    %v2170 = vadd.f32 %v2164, %v2166
    %v2171 = vld [vmem:[%s41] sm:$0x1]
    %v2172 = vld [vmem:[%s39] sm:$0x1]
    %v2173 = vsel %vm326, %v2167, 0.0
    %2174 = vadd.xlane.f32.xlu0 %v2173
    %v2175 = vpop.xlane.xlu0 %2174
    %v2176 = vsel %vm326, %v2168, 0.0
    %2177 = vadd.xlane.f32.xlu0 %v2176
    %v2178 = vpop.xlane.xlu0 %2177
    %v2179 = vsel %vm326, %v2169, 0.0
    %2180 = vadd.xlane.f32.xlu0 %v2179
    %v2181 = vpop.xlane.xlu0 %2180
    %v2182 = vsel %vm326, %v2170, 0.0
    %2183 = vadd.xlane.f32.xlu0 %v2182
    %v2184 = vpop.xlane.xlu0 %2183
    %v2185 = vmul.f32 %v2175, %v345
    %v2186 = vmul.f32 %v2178, %v345
    %v2187 = vmul.f32 %v2181, %v345
    %v2188 = vmul.f32 %v2184, %v345
    %v2189 = vsub.f32 %v2167, %v2185
    %v2190 = vsub.f32 %v2168, %v2186
    %v2191 = vsub.f32 %v2169, %v2187
    %v2192 = vsub.f32 %v2170, %v2188
    %v2193 = vmul.f32 %v2189, %v2189
    %v2194 = vmul.f32 %v2190, %v2190
    %v2195 = vmul.f32 %v2191, %v2191
    %v2196 = vmul.f32 %v2192, %v2192
    %v2197 = vsel %vm326, %v2193, 0.0
    %2198 = vadd.xlane.f32.xlu0 %v2197
    %v2199 = vpop.xlane.xlu0 %2198
    %v2200 = vsel %vm326, %v2194, 0.0
    %2201 = vadd.xlane.f32.xlu0 %v2200
    %v2202 = vpop.xlane.xlu0 %2201
    %v2203 = vsel %vm326, %v2195, 0.0
    %2204 = vadd.xlane.f32.xlu0 %v2203
    %v2205 = vpop.xlane.xlu0 %2204
    %v2206 = vsel %vm326, %v2196, 0.0
    %2207 = vadd.xlane.f32.xlu0 %v2206
    %v2208 = vpop.xlane.xlu0 %2207
    %v2209 = vmul.f32 %v2199, %v345
    %v2210 = vmul.f32 %v2202, %v345
    %v2211 = vmul.f32 %v2205, %v345
    %v2212 = vmul.f32 %v2208, %v345
    %v2213 = vadd.f32 %v2209, 1e-06
    %v2214 = vadd.f32 %v2210, 1e-06
    %v2215 = vadd.f32 %v2211, 1e-06
    %v2216 = vadd.f32 %v2212, 1e-06
    %v2217 = vrsqrt.pop %v2213
    %v2218 = vmul.f32 %v2217, %v2213
    %v2219 = vmul.f32 %v2218, %v2217
    %v2220 = vmul.f32 0.5, %v2219
    %v2221 = vsub.f32 1.5, %v2220
    %v2222 = vmul.f32 %v2217, %v2221
    %vm2223 = vweird.f32 %v2213
    %vm2224 = vweird.f32 %v2217
    %vm2225 = vmor %vm2223, %vm2224
    %v2226 = vsel %vm2225, %v2217, %v2222
    %v2227 = vrsqrt.pop %v2214
    %v2228 = vmul.f32 %v2227, %v2214
    %v2229 = vmul.f32 %v2228, %v2227
    %v2230 = vmul.f32 0.5, %v2229
    %v2231 = vsub.f32 1.5, %v2230
    %v2232 = vmul.f32 %v2227, %v2231
    %vm2233 = vweird.f32 %v2214
    %vm2234 = vweird.f32 %v2227
    %vm2235 = vmor %vm2233, %vm2234
    %v2236 = vsel %vm2235, %v2227, %v2232
    %v2237 = vrsqrt.pop %v2215
    %v2238 = vmul.f32 %v2237, %v2215
    %v2239 = vmul.f32 %v2238, %v2237
    %v2240 = vmul.f32 0.5, %v2239
    %v2241 = vsub.f32 1.5, %v2240
    %v2242 = vmul.f32 %v2237, %v2241
    %vm2243 = vweird.f32 %v2215
    %vm2244 = vweird.f32 %v2237
    %vm2245 = vmor %vm2243, %vm2244
    %v2246 = vsel %vm2245, %v2237, %v2242
    %v2247 = vrsqrt.pop %v2216
    %v2248 = vmul.f32 %v2247, %v2216
    %v2249 = vmul.f32 %v2248, %v2247
    %v2250 = vmul.f32 0.5, %v2249
    %v2251 = vsub.f32 1.5, %v2250
    %v2252 = vmul.f32 %v2247, %v2251
    %vm2253 = vweird.f32 %v2216
    %vm2254 = vweird.f32 %v2247
    %vm2255 = vmor %vm2253, %vm2254
    %v2256 = vsel %vm2255, %v2247, %v2252
    %v2257 = vmul.f32 %v2189, %v2226
    %v2258 = vmul.f32 %v2190, %v2236
    %v2259 = vmul.f32 %v2191, %v2246
    %v2260 = vmul.f32 %v2192, %v2256
    %v2262 = vperm.slane %v2171, 0
    %v2264 = vmul.f32 %v2257, %v2262
    %v2265 = vmul.f32 %v2258, %v2262
    %v2266 = vmul.f32 %v2259, %v2262
    %v2267 = vmul.f32 %v2260, %v2262
    %v2269 = vperm.slane %v2172, 0
    %v2271 = vadd.f32 %v2264, %v2269
    %v2272 = vadd.f32 %v2265, %v2269
    %v2273 = vadd.f32 %v2266, %v2269
    %v2274 = vadd.f32 %v2267, %v2269
    %v2275 = vld [vmem:[%s57] sm:$0xff]
    %v2276 = vld [vmem:[%s57 + $0x8] sm:$0xff]
    %v2277 = vld [vmem:[%s57 + $0x10] sm:$0xff]
    %v2278 = vld [vmem:[%s57 + $0x18] sm:$0xff]
    %v2279 = vld [vmem:[%s53] sm:$0x1]
    %v2280 = vld [vmem:[%s55] sm:$0xff]
    %v2281 = vld [vmem:[%s55 + $0x8] sm:$0xff]
    %v2282 = vld [vmem:[%s55 + $0x10] sm:$0xff]
    %v2283 = vld [vmem:[%s55 + $0x18] sm:$0xff]
    %v2284 = vld [vmem:[%s51] sm:$0x1]
    %v2286 = vperm.slane %v2279, 0
    %v2289 = vsel %vm326, %v2271, 0
    %v2292 = vsel %vm326, %v2272, 0
    %v2295 = vsel %vm326, %v2273, 0
    %v2298 = vsel %vm326, %v2274, 0
    %2300 = vmatpush.msra.mxu0 0.0
    %2301 = vmatpush.msra.mxu0 0.0
    %2302 = vmatpush.msra.mxu0 0.0
    %2303 = vmatpush.msra.mxu0 0.0
    %2304 = vmatpush.msra.mxu0 0.0
    %2305 = vmatpush.msra.mxu0 0.0
    %2306 = vmatpush.msra.mxu0 0.0
    %2307 = vmatpush.msra.mxu0 0.0
    %2308 = vmatpush.msra.mxu0 0.0
    %2309 = vmatpush.msra.mxu0 0.0
    %2310 = vmatpush.msra.mxu0 0.0
    %2311 = vmatpush.msra.mxu0 0.0
    %2312 = vmatpush.msra.mxu0 %v2278
    %2313 = vmatpush.msra.mxu0 %v2277
    %2314 = vmatpush.msra.mxu0 %v2276
    %2315 = vmatpush.msra.mxu0 %v2275
    %2316 = vmatmul.f32.gmra.mxu0 %v2289
    %v2317 = vpop.f32.mrf.mxu0
    %v2318 = vadd.f32 %v2286, %v2317
    %2319 = vmatmul.f32.gmra.mxu0 %v2292
    %v2320 = vpop.f32.mrf.mxu0
    %v2321 = vadd.f32 %v2286, %v2320
    %2322 = vmatmul.f32.gmra.mxu0 %v2295
    %v2323 = vpop.f32.mrf.mxu0
    %v2324 = vadd.f32 %v2286, %v2323
    %2325 = vmatmul.f32.gmra.mxu0 %v2298
    %v2326 = vpop.f32.mrf.mxu0
    %v2327 = vadd.f32 %v2286, %v2326
    %2328 = vdwg.mxu0
    %2330 = vrot.lane.b32.xlu0 %v2318, 96
    %v2331 = vpop.permute.xlu0 %2330
    %v2332 = vsel %vm493, %v2318, 0
    %v2334 = vsel %vm493, %v2331, 0
    %2336 = vmatpush.xpose.msra.mxu0 0.0
    %2337 = vmatpush.xpose.msra.mxu0 0.0
    %2338 = vmatpush.xpose.msra.mxu0 0.0
    %2339 = vmatpush.xpose.msra.mxu0 0.0
    %2340 = vmatpush.xpose.msra.mxu0 0.0
    %2341 = vmatpush.xpose.msra.mxu0 0.0
    %2342 = vmatpush.xpose.msra.mxu0 0.0
    %2343 = vmatpush.xpose.msra.mxu0 0.0
    %2344 = vmatpush.xpose.msra.mxu0 0.0
    %2345 = vmatpush.xpose.msra.mxu0 0.0
    %2346 = vmatpush.xpose.msra.mxu0 0.0
    %2347 = vmatpush.xpose.msra.mxu0 0.0
    %2348 = vmatpush.xpose.msra.mxu0 0.0
    %2349 = vmatpush.xpose.msra.mxu0 0.0
    %2350 = vmatpush.xpose.msra.mxu0 0.0
    %2351 = vmatpush.xpose.msra.mxu0 %v2334
    %2352 = vmatmul.f32.gmra.mxu0 %v2332
    %v2353 = vpop.f32.mrf.mxu0
    %v2354 = vadd.f32 0.0, %v2353
    %2355 = vdwg.mxu0
    %2357 = vrot.lane.b32.xlu0 %v2321, 96
    %v2358 = vpop.permute.xlu0 %2357
    %v2359 = vsel %vm493, %v2321, 0
    %v2361 = vsel %vm493, %v2358, 0
    %2363 = vmatpush.xpose.msra.mxu0 0.0
    %2364 = vmatpush.xpose.msra.mxu0 0.0
    %2365 = vmatpush.xpose.msra.mxu0 0.0
    %2366 = vmatpush.xpose.msra.mxu0 0.0
    %2367 = vmatpush.xpose.msra.mxu0 0.0
    %2368 = vmatpush.xpose.msra.mxu0 0.0
    %2369 = vmatpush.xpose.msra.mxu0 0.0
    %2370 = vmatpush.xpose.msra.mxu0 0.0
    %2371 = vmatpush.xpose.msra.mxu0 0.0
    %2372 = vmatpush.xpose.msra.mxu0 0.0
    %2373 = vmatpush.xpose.msra.mxu0 0.0
    %2374 = vmatpush.xpose.msra.mxu0 0.0
    %2375 = vmatpush.xpose.msra.mxu0 0.0
    %2376 = vmatpush.xpose.msra.mxu0 0.0
    %2377 = vmatpush.xpose.msra.mxu0 0.0
    %2378 = vmatpush.xpose.msra.mxu0 %v2361
    %2379 = vmatmul.f32.gmra.mxu0 %v2359
    %v2380 = vpop.f32.mrf.mxu0
    %v2381 = vadd.f32 0.0, %v2380
    %2382 = vdwg.mxu0
    %2384 = vrot.lane.b32.xlu0 %v2324, 96
    %v2385 = vpop.permute.xlu0 %2384
    %v2386 = vsel %vm493, %v2324, 0
    %v2388 = vsel %vm493, %v2385, 0
    %2390 = vmatpush.xpose.msra.mxu0 0.0
    %2391 = vmatpush.xpose.msra.mxu0 0.0
    %2392 = vmatpush.xpose.msra.mxu0 0.0
    %2393 = vmatpush.xpose.msra.mxu0 0.0
    %2394 = vmatpush.xpose.msra.mxu0 0.0
    %2395 = vmatpush.xpose.msra.mxu0 0.0
    %2396 = vmatpush.xpose.msra.mxu0 0.0
    %2397 = vmatpush.xpose.msra.mxu0 0.0
    %2398 = vmatpush.xpose.msra.mxu0 0.0
    %2399 = vmatpush.xpose.msra.mxu0 0.0
    %2400 = vmatpush.xpose.msra.mxu0 0.0
    %2401 = vmatpush.xpose.msra.mxu0 0.0
    %2402 = vmatpush.xpose.msra.mxu0 0.0
    %2403 = vmatpush.xpose.msra.mxu0 0.0
    %2404 = vmatpush.xpose.msra.mxu0 0.0
    %2405 = vmatpush.xpose.msra.mxu0 %v2388
    %2406 = vmatmul.f32.gmra.mxu0 %v2386
    %v2407 = vpop.f32.mrf.mxu0
    %v2408 = vadd.f32 0.0, %v2407
    %2409 = vdwg.mxu0
    %2411 = vrot.lane.b32.xlu0 %v2327, 96
    %v2412 = vpop.permute.xlu0 %2411
    %v2413 = vsel %vm493, %v2327, 0
    %v2415 = vsel %vm493, %v2412, 0
    %2417 = vmatpush.xpose.msra.mxu0 0.0
    %2418 = vmatpush.xpose.msra.mxu0 0.0
    %2419 = vmatpush.xpose.msra.mxu0 0.0
    %2420 = vmatpush.xpose.msra.mxu0 0.0
    %2421 = vmatpush.xpose.msra.mxu0 0.0
    %2422 = vmatpush.xpose.msra.mxu0 0.0
    %2423 = vmatpush.xpose.msra.mxu0 0.0
    %2424 = vmatpush.xpose.msra.mxu0 0.0
    %2425 = vmatpush.xpose.msra.mxu0 0.0
    %2426 = vmatpush.xpose.msra.mxu0 0.0
    %2427 = vmatpush.xpose.msra.mxu0 0.0
    %2428 = vmatpush.xpose.msra.mxu0 0.0
    %2429 = vmatpush.xpose.msra.mxu0 0.0
    %2430 = vmatpush.xpose.msra.mxu0 0.0
    %2431 = vmatpush.xpose.msra.mxu0 0.0
    %2432 = vmatpush.xpose.msra.mxu0 %v2415
    %2433 = vmatmul.f32.gmra.mxu0 %v2413
    %v2434 = vpop.f32.mrf.mxu0
    %v2435 = vadd.f32 0.0, %v2434
    %2436 = vdwg.mxu0
    %v2437 = vmul.f32 %v2354, 0.35355338
    %v2438 = vmul.f32 %v2381, 0.35355338
    %v2439 = vmul.f32 %v2408, 0.35355338
    %v2440 = vmul.f32 %v2435, 0.35355338
    %v2441 = vsel %vm493, %v2437, -inf
    %2442 = vmax.xlane.f32.xlu0 %v2441
    %v2443 = vpop.xlane.xlu0 %2442
    %v2444 = vsel %vm493, %v2438, -inf
    %2445 = vmax.xlane.f32.xlu0 %v2444
    %v2446 = vpop.xlane.xlu0 %2445
    %v2447 = vsel %vm493, %v2439, -inf
    %2448 = vmax.xlane.f32.xlu0 %v2447
    %v2449 = vpop.xlane.xlu0 %2448
    %v2450 = vsel %vm493, %v2440, -inf
    %2451 = vmax.xlane.f32.xlu0 %v2450
    %v2452 = vpop.xlane.xlu0 %2451
    %v2453 = vsub.f32 %v2437, %v2443
    %v2454 = vsub.f32 %v2438, %v2446
    %v2455 = vsub.f32 %v2439, %v2449
    %v2456 = vsub.f32 %v2440, %v2452
    %v2457 = vmul.f32 %v2453, 1.442695
    %v2458 = vpow.pop %v2457
    %v2459 = vmul.f32 %v2454, 1.442695
    %v2460 = vpow.pop %v2459
    %v2461 = vmul.f32 %v2455, 1.442695
    %v2462 = vpow.pop %v2461
    %v2463 = vmul.f32 %v2456, 1.442695
    %v2464 = vpow.pop %v2463
    %v2465 = vsel %vm493, %v2458, 0.0
    %2466 = vadd.xlane.f32.xlu0 %v2465
    %v2467 = vpop.xlane.xlu0 %2466
    %v2468 = vsel %vm493, %v2460, 0.0
    %2469 = vadd.xlane.f32.xlu0 %v2468
    %v2470 = vpop.xlane.xlu0 %2469
    %v2471 = vsel %vm493, %v2462, 0.0
    %2472 = vadd.xlane.f32.xlu0 %v2471
    %v2473 = vpop.xlane.xlu0 %2472
    %v2474 = vsel %vm493, %v2464, 0.0
    %2475 = vadd.xlane.f32.xlu0 %v2474
    %v2476 = vpop.xlane.xlu0 %2475
    %v2477 = vrcp.pop %v2467
    %v2478 = vrcp.pop %v2470
    %v2479 = vrcp.pop %v2473
    %v2480 = vrcp.pop %v2476
    %v2481 = vmul.f32 %v2458, %v2477
    %v2482 = vmul.f32 %v2460, %v2478
    %v2483 = vmul.f32 %v2462, %v2479
    %v2484 = vmul.f32 %v2464, %v2480
    %2485 = vrot.lane.b32.xlu0 %v2318, 64
    %v2486 = vpop.permute.xlu0 %2485
    %v2489 = vsel %vm493, %v2481, 0
    %2491 = vmatpush.msra.mxu0 0.0
    %2492 = vmatpush.msra.mxu0 0.0
    %2493 = vmatpush.msra.mxu0 0.0
    %2494 = vmatpush.msra.mxu0 0.0
    %2495 = vmatpush.msra.mxu0 0.0
    %2496 = vmatpush.msra.mxu0 0.0
    %2497 = vmatpush.msra.mxu0 0.0
    %2498 = vmatpush.msra.mxu0 0.0
    %2499 = vmatpush.msra.mxu0 0.0
    %2500 = vmatpush.msra.mxu0 0.0
    %2501 = vmatpush.msra.mxu0 0.0
    %2502 = vmatpush.msra.mxu0 0.0
    %2503 = vmatpush.msra.mxu0 0.0
    %2504 = vmatpush.msra.mxu0 0.0
    %2505 = vmatpush.msra.mxu0 0.0
    %2506 = vmatpush.msra.mxu0 %v2486
    %2507 = vmatmul.f32.gmra.mxu0 %v2489
    %v2508 = vpop.f32.mrf.mxu0
    %v2509 = vadd.f32 0.0, %v2508
    %2510 = vdwg.mxu0
    %2511 = vrot.lane.b32.xlu0 %v2321, 64
    %v2512 = vpop.permute.xlu0 %2511
    %v2515 = vsel %vm493, %v2482, 0
    %2517 = vmatpush.msra.mxu0 0.0
    %2518 = vmatpush.msra.mxu0 0.0
    %2519 = vmatpush.msra.mxu0 0.0
    %2520 = vmatpush.msra.mxu0 0.0
    %2521 = vmatpush.msra.mxu0 0.0
    %2522 = vmatpush.msra.mxu0 0.0
    %2523 = vmatpush.msra.mxu0 0.0
    %2524 = vmatpush.msra.mxu0 0.0
    %2525 = vmatpush.msra.mxu0 0.0
    %2526 = vmatpush.msra.mxu0 0.0
    %2527 = vmatpush.msra.mxu0 0.0
    %2528 = vmatpush.msra.mxu0 0.0
    %2529 = vmatpush.msra.mxu0 0.0
    %2530 = vmatpush.msra.mxu0 0.0
    %2531 = vmatpush.msra.mxu0 0.0
    %2532 = vmatpush.msra.mxu0 %v2512
    %2533 = vmatmul.f32.gmra.mxu0 %v2515
    %v2534 = vpop.f32.mrf.mxu0
    %v2535 = vadd.f32 0.0, %v2534
    %2536 = vdwg.mxu0
    %2537 = vrot.lane.b32.xlu0 %v2324, 64
    %v2538 = vpop.permute.xlu0 %2537
    %v2541 = vsel %vm493, %v2483, 0
    %2543 = vmatpush.msra.mxu0 0.0
    %2544 = vmatpush.msra.mxu0 0.0
    %2545 = vmatpush.msra.mxu0 0.0
    %2546 = vmatpush.msra.mxu0 0.0
    %2547 = vmatpush.msra.mxu0 0.0
    %2548 = vmatpush.msra.mxu0 0.0
    %2549 = vmatpush.msra.mxu0 0.0
    %2550 = vmatpush.msra.mxu0 0.0
    %2551 = vmatpush.msra.mxu0 0.0
    %2552 = vmatpush.msra.mxu0 0.0
    %2553 = vmatpush.msra.mxu0 0.0
    %2554 = vmatpush.msra.mxu0 0.0
    %2555 = vmatpush.msra.mxu0 0.0
    %2556 = vmatpush.msra.mxu0 0.0
    %2557 = vmatpush.msra.mxu0 0.0
    %2558 = vmatpush.msra.mxu0 %v2538
    %2559 = vmatmul.f32.gmra.mxu0 %v2541
    %v2560 = vpop.f32.mrf.mxu0
    %v2561 = vadd.f32 0.0, %v2560
    %2562 = vdwg.mxu0
    %2563 = vrot.lane.b32.xlu0 %v2327, 64
    %v2564 = vpop.permute.xlu0 %2563
    %v2567 = vsel %vm493, %v2484, 0
    %2569 = vmatpush.msra.mxu0 0.0
    %2570 = vmatpush.msra.mxu0 0.0
    %2571 = vmatpush.msra.mxu0 0.0
    %2572 = vmatpush.msra.mxu0 0.0
    %2573 = vmatpush.msra.mxu0 0.0
    %2574 = vmatpush.msra.mxu0 0.0
    %2575 = vmatpush.msra.mxu0 0.0
    %2576 = vmatpush.msra.mxu0 0.0
    %2577 = vmatpush.msra.mxu0 0.0
    %2578 = vmatpush.msra.mxu0 0.0
    %2579 = vmatpush.msra.mxu0 0.0
    %2580 = vmatpush.msra.mxu0 0.0
    %2581 = vmatpush.msra.mxu0 0.0
    %2582 = vmatpush.msra.mxu0 0.0
    %2583 = vmatpush.msra.mxu0 0.0
    %2584 = vmatpush.msra.mxu0 %v2564
    %2585 = vmatmul.f32.gmra.mxu0 %v2567
    %v2586 = vpop.f32.mrf.mxu0
    %v2587 = vadd.f32 0.0, %v2586
    %2588 = vdwg.mxu0
    %2589 = vrot.lane.b32.xlu0 %v2318, 120
    %v2590 = vpop.permute.xlu0 %2589
    %2591 = vrot.lane.b32.xlu0 %v2318, 88
    %v2592 = vpop.permute.xlu0 %2591
    %v2593 = vsel %vm493, %v2590, 0
    %v2595 = vsel %vm493, %v2592, 0
    %2597 = vmatpush.xpose.msra.mxu0 0.0
    %2598 = vmatpush.xpose.msra.mxu0 0.0
    %2599 = vmatpush.xpose.msra.mxu0 0.0
    %2600 = vmatpush.xpose.msra.mxu0 0.0
    %2601 = vmatpush.xpose.msra.mxu0 0.0
    %2602 = vmatpush.xpose.msra.mxu0 0.0
    %2603 = vmatpush.xpose.msra.mxu0 0.0
    %2604 = vmatpush.xpose.msra.mxu0 0.0
    %2605 = vmatpush.xpose.msra.mxu0 0.0
    %2606 = vmatpush.xpose.msra.mxu0 0.0
    %2607 = vmatpush.xpose.msra.mxu0 0.0
    %2608 = vmatpush.xpose.msra.mxu0 0.0
    %2609 = vmatpush.xpose.msra.mxu0 0.0
    %2610 = vmatpush.xpose.msra.mxu0 0.0
    %2611 = vmatpush.xpose.msra.mxu0 0.0
    %2612 = vmatpush.xpose.msra.mxu0 %v2595
    %2613 = vmatmul.f32.gmra.mxu0 %v2593
    %v2614 = vpop.f32.mrf.mxu0
    %v2615 = vadd.f32 0.0, %v2614
    %2616 = vdwg.mxu0
    %2617 = vrot.lane.b32.xlu0 %v2321, 120
    %v2618 = vpop.permute.xlu0 %2617
    %2619 = vrot.lane.b32.xlu0 %v2321, 88
    %v2620 = vpop.permute.xlu0 %2619
    %v2621 = vsel %vm493, %v2618, 0
    %v2623 = vsel %vm493, %v2620, 0
    %2625 = vmatpush.xpose.msra.mxu0 0.0
    %2626 = vmatpush.xpose.msra.mxu0 0.0
    %2627 = vmatpush.xpose.msra.mxu0 0.0
    %2628 = vmatpush.xpose.msra.mxu0 0.0
    %2629 = vmatpush.xpose.msra.mxu0 0.0
    %2630 = vmatpush.xpose.msra.mxu0 0.0
    %2631 = vmatpush.xpose.msra.mxu0 0.0
    %2632 = vmatpush.xpose.msra.mxu0 0.0
    %2633 = vmatpush.xpose.msra.mxu0 0.0
    %2634 = vmatpush.xpose.msra.mxu0 0.0
    %2635 = vmatpush.xpose.msra.mxu0 0.0
    %2636 = vmatpush.xpose.msra.mxu0 0.0
    %2637 = vmatpush.xpose.msra.mxu0 0.0
    %2638 = vmatpush.xpose.msra.mxu0 0.0
    %2639 = vmatpush.xpose.msra.mxu0 0.0
    %2640 = vmatpush.xpose.msra.mxu0 %v2623
    %2641 = vmatmul.f32.gmra.mxu0 %v2621
    %v2642 = vpop.f32.mrf.mxu0
    %v2643 = vadd.f32 0.0, %v2642
    %2644 = vdwg.mxu0
    %2645 = vrot.lane.b32.xlu0 %v2324, 120
    %v2646 = vpop.permute.xlu0 %2645
    %2647 = vrot.lane.b32.xlu0 %v2324, 88
    %v2648 = vpop.permute.xlu0 %2647
    %v2649 = vsel %vm493, %v2646, 0
    %v2651 = vsel %vm493, %v2648, 0
    %2653 = vmatpush.xpose.msra.mxu0 0.0
    %2654 = vmatpush.xpose.msra.mxu0 0.0
    %2655 = vmatpush.xpose.msra.mxu0 0.0
    %2656 = vmatpush.xpose.msra.mxu0 0.0
    %2657 = vmatpush.xpose.msra.mxu0 0.0
    %2658 = vmatpush.xpose.msra.mxu0 0.0
    %2659 = vmatpush.xpose.msra.mxu0 0.0
    %2660 = vmatpush.xpose.msra.mxu0 0.0
    %2661 = vmatpush.xpose.msra.mxu0 0.0
    %2662 = vmatpush.xpose.msra.mxu0 0.0
    %2663 = vmatpush.xpose.msra.mxu0 0.0
    %2664 = vmatpush.xpose.msra.mxu0 0.0
    %2665 = vmatpush.xpose.msra.mxu0 0.0
    %2666 = vmatpush.xpose.msra.mxu0 0.0
    %2667 = vmatpush.xpose.msra.mxu0 0.0
    %2668 = vmatpush.xpose.msra.mxu0 %v2651
    %2669 = vmatmul.f32.gmra.mxu0 %v2649
    %v2670 = vpop.f32.mrf.mxu0
    %v2671 = vadd.f32 0.0, %v2670
    %2672 = vdwg.mxu0
    %2673 = vrot.lane.b32.xlu0 %v2327, 120
    %v2674 = vpop.permute.xlu0 %2673
    %2675 = vrot.lane.b32.xlu0 %v2327, 88
    %v2676 = vpop.permute.xlu0 %2675
    %v2677 = vsel %vm493, %v2674, 0
    %v2679 = vsel %vm493, %v2676, 0
    %2681 = vmatpush.xpose.msra.mxu0 0.0
    %2682 = vmatpush.xpose.msra.mxu0 0.0
    %2683 = vmatpush.xpose.msra.mxu0 0.0
    %2684 = vmatpush.xpose.msra.mxu0 0.0
    %2685 = vmatpush.xpose.msra.mxu0 0.0
    %2686 = vmatpush.xpose.msra.mxu0 0.0
    %2687 = vmatpush.xpose.msra.mxu0 0.0
    %2688 = vmatpush.xpose.msra.mxu0 0.0
    %2689 = vmatpush.xpose.msra.mxu0 0.0
    %2690 = vmatpush.xpose.msra.mxu0 0.0
    %2691 = vmatpush.xpose.msra.mxu0 0.0
    %2692 = vmatpush.xpose.msra.mxu0 0.0
    %2693 = vmatpush.xpose.msra.mxu0 0.0
    %2694 = vmatpush.xpose.msra.mxu0 0.0
    %2695 = vmatpush.xpose.msra.mxu0 0.0
    %2696 = vmatpush.xpose.msra.mxu0 %v2679
    %2697 = vmatmul.f32.gmra.mxu0 %v2677
    %v2698 = vpop.f32.mrf.mxu0
    %v2699 = vadd.f32 0.0, %v2698
    %2700 = vdwg.mxu0
    %v2701 = vmul.f32 %v2615, 0.35355338
    %v2702 = vmul.f32 %v2643, 0.35355338
    %v2703 = vmul.f32 %v2671, 0.35355338
    %v2704 = vmul.f32 %v2699, 0.35355338
    %v2705 = vsel %vm493, %v2701, -inf
    %2706 = vmax.xlane.f32.xlu0 %v2705
    %v2707 = vpop.xlane.xlu0 %2706
    %v2708 = vsel %vm493, %v2702, -inf
    %2709 = vmax.xlane.f32.xlu0 %v2708
    %v2710 = vpop.xlane.xlu0 %2709
    %v2711 = vsel %vm493, %v2703, -inf
    %2712 = vmax.xlane.f32.xlu0 %v2711
    %v2713 = vpop.xlane.xlu0 %2712
    %v2714 = vsel %vm493, %v2704, -inf
    %2715 = vmax.xlane.f32.xlu0 %v2714
    %v2716 = vpop.xlane.xlu0 %2715
    %v2717 = vsub.f32 %v2701, %v2707
    %v2718 = vsub.f32 %v2702, %v2710
    %v2719 = vsub.f32 %v2703, %v2713
    %v2720 = vsub.f32 %v2704, %v2716
    %v2721 = vmul.f32 %v2717, 1.442695
    %v2722 = vpow.pop %v2721
    %v2723 = vmul.f32 %v2718, 1.442695
    %v2724 = vpow.pop %v2723
    %v2725 = vmul.f32 %v2719, 1.442695
    %v2726 = vpow.pop %v2725
    %v2727 = vmul.f32 %v2720, 1.442695
    %v2728 = vpow.pop %v2727
    %v2729 = vsel %vm493, %v2722, 0.0
    %2730 = vadd.xlane.f32.xlu0 %v2729
    %v2731 = vpop.xlane.xlu0 %2730
    %v2732 = vsel %vm493, %v2724, 0.0
    %2733 = vadd.xlane.f32.xlu0 %v2732
    %v2734 = vpop.xlane.xlu0 %2733
    %v2735 = vsel %vm493, %v2726, 0.0
    %2736 = vadd.xlane.f32.xlu0 %v2735
    %v2737 = vpop.xlane.xlu0 %2736
    %v2738 = vsel %vm493, %v2728, 0.0
    %2739 = vadd.xlane.f32.xlu0 %v2738
    %v2740 = vpop.xlane.xlu0 %2739
    %v2741 = vrcp.pop %v2731
    %v2742 = vrcp.pop %v2734
    %v2743 = vrcp.pop %v2737
    %v2744 = vrcp.pop %v2740
    %v2745 = vmul.f32 %v2722, %v2741
    %v2746 = vmul.f32 %v2724, %v2742
    %v2747 = vmul.f32 %v2726, %v2743
    %v2748 = vmul.f32 %v2728, %v2744
    %2749 = vrot.lane.b32.xlu0 %v2318, 56
    %v2750 = vpop.permute.xlu0 %2749
    %v2753 = vsel %vm493, %v2745, 0
    %2755 = vmatpush.msra.mxu0 0.0
    %2756 = vmatpush.msra.mxu0 0.0
    %2757 = vmatpush.msra.mxu0 0.0
    %2758 = vmatpush.msra.mxu0 0.0
    %2759 = vmatpush.msra.mxu0 0.0
    %2760 = vmatpush.msra.mxu0 0.0
    %2761 = vmatpush.msra.mxu0 0.0
    %2762 = vmatpush.msra.mxu0 0.0
    %2763 = vmatpush.msra.mxu0 0.0
    %2764 = vmatpush.msra.mxu0 0.0
    %2765 = vmatpush.msra.mxu0 0.0
    %2766 = vmatpush.msra.mxu0 0.0
    %2767 = vmatpush.msra.mxu0 0.0
    %2768 = vmatpush.msra.mxu0 0.0
    %2769 = vmatpush.msra.mxu0 0.0
    %2770 = vmatpush.msra.mxu0 %v2750
    %2771 = vmatmul.f32.gmra.mxu0 %v2753
    %v2772 = vpop.f32.mrf.mxu0
    %v2773 = vadd.f32 0.0, %v2772
    %2774 = vdwg.mxu0
    %2775 = vrot.lane.b32.xlu0 %v2321, 56
    %v2776 = vpop.permute.xlu0 %2775
    %v2779 = vsel %vm493, %v2746, 0
    %2781 = vmatpush.msra.mxu0 0.0
    %2782 = vmatpush.msra.mxu0 0.0
    %2783 = vmatpush.msra.mxu0 0.0
    %2784 = vmatpush.msra.mxu0 0.0
    %2785 = vmatpush.msra.mxu0 0.0
    %2786 = vmatpush.msra.mxu0 0.0
    %2787 = vmatpush.msra.mxu0 0.0
    %2788 = vmatpush.msra.mxu0 0.0
    %2789 = vmatpush.msra.mxu0 0.0
    %2790 = vmatpush.msra.mxu0 0.0
    %2791 = vmatpush.msra.mxu0 0.0
    %2792 = vmatpush.msra.mxu0 0.0
    %2793 = vmatpush.msra.mxu0 0.0
    %2794 = vmatpush.msra.mxu0 0.0
    %2795 = vmatpush.msra.mxu0 0.0
    %2796 = vmatpush.msra.mxu0 %v2776
    %2797 = vmatmul.f32.gmra.mxu0 %v2779
    %v2798 = vpop.f32.mrf.mxu0
    %v2799 = vadd.f32 0.0, %v2798
    %2800 = vdwg.mxu0
    %2801 = vrot.lane.b32.xlu0 %v2324, 56
    %v2802 = vpop.permute.xlu0 %2801
    %v2805 = vsel %vm493, %v2747, 0
    %2807 = vmatpush.msra.mxu0 0.0
    %2808 = vmatpush.msra.mxu0 0.0
    %2809 = vmatpush.msra.mxu0 0.0
    %2810 = vmatpush.msra.mxu0 0.0
    %2811 = vmatpush.msra.mxu0 0.0
    %2812 = vmatpush.msra.mxu0 0.0
    %2813 = vmatpush.msra.mxu0 0.0
    %2814 = vmatpush.msra.mxu0 0.0
    %2815 = vmatpush.msra.mxu0 0.0
    %2816 = vmatpush.msra.mxu0 0.0
    %2817 = vmatpush.msra.mxu0 0.0
    %2818 = vmatpush.msra.mxu0 0.0
    %2819 = vmatpush.msra.mxu0 0.0
    %2820 = vmatpush.msra.mxu0 0.0
    %2821 = vmatpush.msra.mxu0 0.0
    %2822 = vmatpush.msra.mxu0 %v2802
    %2823 = vmatmul.f32.gmra.mxu0 %v2805
    %v2824 = vpop.f32.mrf.mxu0
    %v2825 = vadd.f32 0.0, %v2824
    %2826 = vdwg.mxu0
    %2827 = vrot.lane.b32.xlu0 %v2327, 56
    %v2828 = vpop.permute.xlu0 %2827
    %v2831 = vsel %vm493, %v2748, 0
    %2833 = vmatpush.msra.mxu0 0.0
    %2834 = vmatpush.msra.mxu0 0.0
    %2835 = vmatpush.msra.mxu0 0.0
    %2836 = vmatpush.msra.mxu0 0.0
    %2837 = vmatpush.msra.mxu0 0.0
    %2838 = vmatpush.msra.mxu0 0.0
    %2839 = vmatpush.msra.mxu0 0.0
    %2840 = vmatpush.msra.mxu0 0.0
    %2841 = vmatpush.msra.mxu0 0.0
    %2842 = vmatpush.msra.mxu0 0.0
    %2843 = vmatpush.msra.mxu0 0.0
    %2844 = vmatpush.msra.mxu0 0.0
    %2845 = vmatpush.msra.mxu0 0.0
    %2846 = vmatpush.msra.mxu0 0.0
    %2847 = vmatpush.msra.mxu0 0.0
    %2848 = vmatpush.msra.mxu0 %v2828
    %2849 = vmatmul.f32.gmra.mxu0 %v2831
    %v2850 = vpop.f32.mrf.mxu0
    %v2851 = vadd.f32 0.0, %v2850
    %2852 = vdwg.mxu0
    %v2854 = vsel %vm493, %v2773, 0
    %v2857 = vsel %vm493, %v2799, 0
    %v2860 = vsel %vm493, %v2825, 0
    %v2863 = vsel %vm493, %v2851, 0
    %2865 = vmatpush.msra.mxu0 0.0
    %2866 = vmatpush.msra.mxu0 0.0
    %2867 = vmatpush.msra.mxu0 0.0
    %2868 = vmatpush.msra.mxu0 0.0
    %2869 = vmatpush.msra.mxu0 0.0
    %2870 = vmatpush.msra.mxu0 0.0
    %2871 = vmatpush.msra.mxu0 0.0
    %2872 = vmatpush.msra.mxu0 0.0
    %2873 = vmatpush.msra.mxu0 0.0
    %2874 = vmatpush.msra.mxu0 0.0
    %2875 = vmatpush.msra.mxu0 0.0
    %2876 = vmatpush.msra.mxu0 0.0
    %2877 = vmatpush.msra.mxu0 0.0
    %2878 = vmatpush.msra.mxu0 0.0
    %2879 = vmatpush.msra.mxu0 0.0
    %2880 = vmatpush.msra.mxu0 %v2281
    %2881 = vmatmul.f32.gmra.mxu0 %v2854
    %v2882 = vpop.f32.mrf.mxu0
    %v2883 = vadd.f32 0.0, %v2882
    %2884 = vmatmul.f32.gmra.mxu0 %v2857
    %v2885 = vpop.f32.mrf.mxu0
    %v2886 = vadd.f32 0.0, %v2885
    %2887 = vmatmul.f32.gmra.mxu0 %v2860
    %v2888 = vpop.f32.mrf.mxu0
    %v2889 = vadd.f32 0.0, %v2888
    %2890 = vmatmul.f32.gmra.mxu0 %v2863
    %v2891 = vpop.f32.mrf.mxu0
    %v2892 = vadd.f32 0.0, %v2891
    %2893 = vdwg.mxu0
    %v2895 = vsel %vm493, %v2509, 0
    %v2898 = vsel %vm493, %v2535, 0
    %v2901 = vsel %vm493, %v2561, 0
    %v2904 = vsel %vm493, %v2587, 0
    %2906 = vmatpush.msra.mxu0 0.0
    %2907 = vmatpush.msra.mxu0 0.0
    %2908 = vmatpush.msra.mxu0 0.0
    %2909 = vmatpush.msra.mxu0 0.0
    %2910 = vmatpush.msra.mxu0 0.0
    %2911 = vmatpush.msra.mxu0 0.0
    %2912 = vmatpush.msra.mxu0 0.0
    %2913 = vmatpush.msra.mxu0 0.0
    %2914 = vmatpush.msra.mxu0 0.0
    %2915 = vmatpush.msra.mxu0 0.0
    %2916 = vmatpush.msra.mxu0 0.0
    %2917 = vmatpush.msra.mxu0 0.0
    %2918 = vmatpush.msra.mxu0 0.0
    %2919 = vmatpush.msra.mxu0 0.0
    %2920 = vmatpush.msra.mxu0 0.0
    %2921 = vmatpush.msra.mxu0 %v2280
    %2922 = vmatmul.f32.gmra.mxu0 %v2895
    %v2923 = vpop.f32.mrf.mxu0
    %v2924 = vadd.f32 %v2883, %v2923
    %2925 = vmatmul.f32.gmra.mxu0 %v2898
    %v2926 = vpop.f32.mrf.mxu0
    %v2927 = vadd.f32 %v2886, %v2926
    %2928 = vmatmul.f32.gmra.mxu0 %v2901
    %v2929 = vpop.f32.mrf.mxu0
    %v2930 = vadd.f32 %v2889, %v2929
    %2931 = vmatmul.f32.gmra.mxu0 %v2904
    %v2932 = vpop.f32.mrf.mxu0
    %v2933 = vadd.f32 %v2892, %v2932
    %2934 = vdwg.mxu0
    %2935 = vrot.lane.b32.xlu0 %v2318, 112
    %v2936 = vpop.permute.xlu0 %2935
    %2937 = vrot.lane.b32.xlu0 %v2318, 80
    %v2938 = vpop.permute.xlu0 %2937
    %v2939 = vsel %vm493, %v2936, 0
    %v2941 = vsel %vm493, %v2938, 0
    %2943 = vmatpush.xpose.msra.mxu0 0.0
    %2944 = vmatpush.xpose.msra.mxu0 0.0
    %2945 = vmatpush.xpose.msra.mxu0 0.0
    %2946 = vmatpush.xpose.msra.mxu0 0.0
    %2947 = vmatpush.xpose.msra.mxu0 0.0
    %2948 = vmatpush.xpose.msra.mxu0 0.0
    %2949 = vmatpush.xpose.msra.mxu0 0.0
    %2950 = vmatpush.xpose.msra.mxu0 0.0
    %2951 = vmatpush.xpose.msra.mxu0 0.0
    %2952 = vmatpush.xpose.msra.mxu0 0.0
    %2953 = vmatpush.xpose.msra.mxu0 0.0
    %2954 = vmatpush.xpose.msra.mxu0 0.0
    %2955 = vmatpush.xpose.msra.mxu0 0.0
    %2956 = vmatpush.xpose.msra.mxu0 0.0
    %2957 = vmatpush.xpose.msra.mxu0 0.0
    %2958 = vmatpush.xpose.msra.mxu0 %v2941
    %2959 = vmatmul.f32.gmra.mxu0 %v2939
    %v2960 = vpop.f32.mrf.mxu0
    %v2961 = vadd.f32 0.0, %v2960
    %2962 = vdwg.mxu0
    %2963 = vrot.lane.b32.xlu0 %v2321, 112
    %v2964 = vpop.permute.xlu0 %2963
    %2965 = vrot.lane.b32.xlu0 %v2321, 80
    %v2966 = vpop.permute.xlu0 %2965
    %v2967 = vsel %vm493, %v2964, 0
    %v2969 = vsel %vm493, %v2966, 0
    %2971 = vmatpush.xpose.msra.mxu0 0.0
    %2972 = vmatpush.xpose.msra.mxu0 0.0
    %2973 = vmatpush.xpose.msra.mxu0 0.0
    %2974 = vmatpush.xpose.msra.mxu0 0.0
    %2975 = vmatpush.xpose.msra.mxu0 0.0
    %2976 = vmatpush.xpose.msra.mxu0 0.0
    %2977 = vmatpush.xpose.msra.mxu0 0.0
    %2978 = vmatpush.xpose.msra.mxu0 0.0
    %2979 = vmatpush.xpose.msra.mxu0 0.0
    %2980 = vmatpush.xpose.msra.mxu0 0.0
    %2981 = vmatpush.xpose.msra.mxu0 0.0
    %2982 = vmatpush.xpose.msra.mxu0 0.0
    %2983 = vmatpush.xpose.msra.mxu0 0.0
    %2984 = vmatpush.xpose.msra.mxu0 0.0
    %2985 = vmatpush.xpose.msra.mxu0 0.0
    %2986 = vmatpush.xpose.msra.mxu0 %v2969
    %2987 = vmatmul.f32.gmra.mxu0 %v2967
    %v2988 = vpop.f32.mrf.mxu0
    %v2989 = vadd.f32 0.0, %v2988
    %2990 = vdwg.mxu0
    %2991 = vrot.lane.b32.xlu0 %v2324, 112
    %v2992 = vpop.permute.xlu0 %2991
    %2993 = vrot.lane.b32.xlu0 %v2324, 80
    %v2994 = vpop.permute.xlu0 %2993
    %v2995 = vsel %vm493, %v2992, 0
    %v2997 = vsel %vm493, %v2994, 0
    %2999 = vmatpush.xpose.msra.mxu0 0.0
    %3000 = vmatpush.xpose.msra.mxu0 0.0
    %3001 = vmatpush.xpose.msra.mxu0 0.0
    %3002 = vmatpush.xpose.msra.mxu0 0.0
    %3003 = vmatpush.xpose.msra.mxu0 0.0
    %3004 = vmatpush.xpose.msra.mxu0 0.0
    %3005 = vmatpush.xpose.msra.mxu0 0.0
    %3006 = vmatpush.xpose.msra.mxu0 0.0
    %3007 = vmatpush.xpose.msra.mxu0 0.0
    %3008 = vmatpush.xpose.msra.mxu0 0.0
    %3009 = vmatpush.xpose.msra.mxu0 0.0
    %3010 = vmatpush.xpose.msra.mxu0 0.0
    %3011 = vmatpush.xpose.msra.mxu0 0.0
    %3012 = vmatpush.xpose.msra.mxu0 0.0
    %3013 = vmatpush.xpose.msra.mxu0 0.0
    %3014 = vmatpush.xpose.msra.mxu0 %v2997
    %3015 = vmatmul.f32.gmra.mxu0 %v2995
    %v3016 = vpop.f32.mrf.mxu0
    %v3017 = vadd.f32 0.0, %v3016
    %3018 = vdwg.mxu0
    %3019 = vrot.lane.b32.xlu0 %v2327, 112
    %v3020 = vpop.permute.xlu0 %3019
    %3021 = vrot.lane.b32.xlu0 %v2327, 80
    %v3022 = vpop.permute.xlu0 %3021
    %v3023 = vsel %vm493, %v3020, 0
    %v3025 = vsel %vm493, %v3022, 0
    %3027 = vmatpush.xpose.msra.mxu0 0.0
    %3028 = vmatpush.xpose.msra.mxu0 0.0
    %3029 = vmatpush.xpose.msra.mxu0 0.0
    %3030 = vmatpush.xpose.msra.mxu0 0.0
    %3031 = vmatpush.xpose.msra.mxu0 0.0
    %3032 = vmatpush.xpose.msra.mxu0 0.0
    %3033 = vmatpush.xpose.msra.mxu0 0.0
    %3034 = vmatpush.xpose.msra.mxu0 0.0
    %3035 = vmatpush.xpose.msra.mxu0 0.0
    %3036 = vmatpush.xpose.msra.mxu0 0.0
    %3037 = vmatpush.xpose.msra.mxu0 0.0
    %3038 = vmatpush.xpose.msra.mxu0 0.0
    %3039 = vmatpush.xpose.msra.mxu0 0.0
    %3040 = vmatpush.xpose.msra.mxu0 0.0
    %3041 = vmatpush.xpose.msra.mxu0 0.0
    %3042 = vmatpush.xpose.msra.mxu0 %v3025
    %3043 = vmatmul.f32.gmra.mxu0 %v3023
    %v3044 = vpop.f32.mrf.mxu0
    %v3045 = vadd.f32 0.0, %v3044
    %3046 = vdwg.mxu0
    %v3047 = vmul.f32 %v2961, 0.35355338
    %v3048 = vmul.f32 %v2989, 0.35355338
    %v3049 = vmul.f32 %v3017, 0.35355338
    %v3050 = vmul.f32 %v3045, 0.35355338
    %v3051 = vsel %vm493, %v3047, -inf
    %3052 = vmax.xlane.f32.xlu0 %v3051
    %v3053 = vpop.xlane.xlu0 %3052
    %v3054 = vsel %vm493, %v3048, -inf
    %3055 = vmax.xlane.f32.xlu0 %v3054
    %v3056 = vpop.xlane.xlu0 %3055
    %v3057 = vsel %vm493, %v3049, -inf
    %3058 = vmax.xlane.f32.xlu0 %v3057
    %v3059 = vpop.xlane.xlu0 %3058
    %v3060 = vsel %vm493, %v3050, -inf
    %3061 = vmax.xlane.f32.xlu0 %v3060
    %v3062 = vpop.xlane.xlu0 %3061
    %v3063 = vsub.f32 %v3047, %v3053
    %v3064 = vsub.f32 %v3048, %v3056
    %v3065 = vsub.f32 %v3049, %v3059
    %v3066 = vsub.f32 %v3050, %v3062
    %v3067 = vmul.f32 %v3063, 1.442695
    %v3068 = vpow.pop %v3067
    %v3069 = vmul.f32 %v3064, 1.442695
    %v3070 = vpow.pop %v3069
    %v3071 = vmul.f32 %v3065, 1.442695
    %v3072 = vpow.pop %v3071
    %v3073 = vmul.f32 %v3066, 1.442695
    %v3074 = vpow.pop %v3073
    %v3075 = vsel %vm493, %v3068, 0.0
    %3076 = vadd.xlane.f32.xlu0 %v3075
    %v3077 = vpop.xlane.xlu0 %3076
    %v3078 = vsel %vm493, %v3070, 0.0
    %3079 = vadd.xlane.f32.xlu0 %v3078
    %v3080 = vpop.xlane.xlu0 %3079
    %v3081 = vsel %vm493, %v3072, 0.0
    %3082 = vadd.xlane.f32.xlu0 %v3081
    %v3083 = vpop.xlane.xlu0 %3082
    %v3084 = vsel %vm493, %v3074, 0.0
    %3085 = vadd.xlane.f32.xlu0 %v3084
    %v3086 = vpop.xlane.xlu0 %3085
    %v3087 = vrcp.pop %v3077
    %v3088 = vrcp.pop %v3080
    %v3089 = vrcp.pop %v3083
    %v3090 = vrcp.pop %v3086
    %v3091 = vmul.f32 %v3068, %v3087
    %v3092 = vmul.f32 %v3070, %v3088
    %v3093 = vmul.f32 %v3072, %v3089
    %v3094 = vmul.f32 %v3074, %v3090
    %3095 = vrot.lane.b32.xlu0 %v2318, 48
    %v3096 = vpop.permute.xlu0 %3095
    %v3099 = vsel %vm493, %v3091, 0
    %3101 = vmatpush.msra.mxu0 0.0
    %3102 = vmatpush.msra.mxu0 0.0
    %3103 = vmatpush.msra.mxu0 0.0
    %3104 = vmatpush.msra.mxu0 0.0
    %3105 = vmatpush.msra.mxu0 0.0
    %3106 = vmatpush.msra.mxu0 0.0
    %3107 = vmatpush.msra.mxu0 0.0
    %3108 = vmatpush.msra.mxu0 0.0
    %3109 = vmatpush.msra.mxu0 0.0
    %3110 = vmatpush.msra.mxu0 0.0
    %3111 = vmatpush.msra.mxu0 0.0
    %3112 = vmatpush.msra.mxu0 0.0
    %3113 = vmatpush.msra.mxu0 0.0
    %3114 = vmatpush.msra.mxu0 0.0
    %3115 = vmatpush.msra.mxu0 0.0
    %3116 = vmatpush.msra.mxu0 %v3096
    %3117 = vmatmul.f32.gmra.mxu0 %v3099
    %v3118 = vpop.f32.mrf.mxu0
    %v3119 = vadd.f32 0.0, %v3118
    %3120 = vdwg.mxu0
    %3121 = vrot.lane.b32.xlu0 %v2321, 48
    %v3122 = vpop.permute.xlu0 %3121
    %v3125 = vsel %vm493, %v3092, 0
    %3127 = vmatpush.msra.mxu0 0.0
    %3128 = vmatpush.msra.mxu0 0.0
    %3129 = vmatpush.msra.mxu0 0.0
    %3130 = vmatpush.msra.mxu0 0.0
    %3131 = vmatpush.msra.mxu0 0.0
    %3132 = vmatpush.msra.mxu0 0.0
    %3133 = vmatpush.msra.mxu0 0.0
    %3134 = vmatpush.msra.mxu0 0.0
    %3135 = vmatpush.msra.mxu0 0.0
    %3136 = vmatpush.msra.mxu0 0.0
    %3137 = vmatpush.msra.mxu0 0.0
    %3138 = vmatpush.msra.mxu0 0.0
    %3139 = vmatpush.msra.mxu0 0.0
    %3140 = vmatpush.msra.mxu0 0.0
    %3141 = vmatpush.msra.mxu0 0.0
    %3142 = vmatpush.msra.mxu0 %v3122
    %3143 = vmatmul.f32.gmra.mxu0 %v3125
    %v3144 = vpop.f32.mrf.mxu0
    %v3145 = vadd.f32 0.0, %v3144
    %3146 = vdwg.mxu0
    %3147 = vrot.lane.b32.xlu0 %v2324, 48
    %v3148 = vpop.permute.xlu0 %3147
    %v3151 = vsel %vm493, %v3093, 0
    %3153 = vmatpush.msra.mxu0 0.0
    %3154 = vmatpush.msra.mxu0 0.0
    %3155 = vmatpush.msra.mxu0 0.0
    %3156 = vmatpush.msra.mxu0 0.0
    %3157 = vmatpush.msra.mxu0 0.0
    %3158 = vmatpush.msra.mxu0 0.0
    %3159 = vmatpush.msra.mxu0 0.0
    %3160 = vmatpush.msra.mxu0 0.0
    %3161 = vmatpush.msra.mxu0 0.0
    %3162 = vmatpush.msra.mxu0 0.0
    %3163 = vmatpush.msra.mxu0 0.0
    %3164 = vmatpush.msra.mxu0 0.0
    %3165 = vmatpush.msra.mxu0 0.0
    %3166 = vmatpush.msra.mxu0 0.0
    %3167 = vmatpush.msra.mxu0 0.0
    %3168 = vmatpush.msra.mxu0 %v3148
    %3169 = vmatmul.f32.gmra.mxu0 %v3151
    %v3170 = vpop.f32.mrf.mxu0
    %v3171 = vadd.f32 0.0, %v3170
    %3172 = vdwg.mxu0
    %3173 = vrot.lane.b32.xlu0 %v2327, 48
    %v3174 = vpop.permute.xlu0 %3173
    %v3177 = vsel %vm493, %v3094, 0
    %3179 = vmatpush.msra.mxu0 0.0
    %3180 = vmatpush.msra.mxu0 0.0
    %3181 = vmatpush.msra.mxu0 0.0
    %3182 = vmatpush.msra.mxu0 0.0
    %3183 = vmatpush.msra.mxu0 0.0
    %3184 = vmatpush.msra.mxu0 0.0
    %3185 = vmatpush.msra.mxu0 0.0
    %3186 = vmatpush.msra.mxu0 0.0
    %3187 = vmatpush.msra.mxu0 0.0
    %3188 = vmatpush.msra.mxu0 0.0
    %3189 = vmatpush.msra.mxu0 0.0
    %3190 = vmatpush.msra.mxu0 0.0
    %3191 = vmatpush.msra.mxu0 0.0
    %3192 = vmatpush.msra.mxu0 0.0
    %3193 = vmatpush.msra.mxu0 0.0
    %3194 = vmatpush.msra.mxu0 %v3174
    %3195 = vmatmul.f32.gmra.mxu0 %v3177
    %v3196 = vpop.f32.mrf.mxu0
    %v3197 = vadd.f32 0.0, %v3196
    %3198 = vdwg.mxu0
    %v3200 = vsel %vm493, %v3119, 0
    %v3203 = vsel %vm493, %v3145, 0
    %v3206 = vsel %vm493, %v3171, 0
    %v3209 = vsel %vm493, %v3197, 0
    %3211 = vmatpush.msra.mxu0 0.0
    %3212 = vmatpush.msra.mxu0 0.0
    %3213 = vmatpush.msra.mxu0 0.0
    %3214 = vmatpush.msra.mxu0 0.0
    %3215 = vmatpush.msra.mxu0 0.0
    %3216 = vmatpush.msra.mxu0 0.0
    %3217 = vmatpush.msra.mxu0 0.0
    %3218 = vmatpush.msra.mxu0 0.0
    %3219 = vmatpush.msra.mxu0 0.0
    %3220 = vmatpush.msra.mxu0 0.0
    %3221 = vmatpush.msra.mxu0 0.0
    %3222 = vmatpush.msra.mxu0 0.0
    %3223 = vmatpush.msra.mxu0 0.0
    %3224 = vmatpush.msra.mxu0 0.0
    %3225 = vmatpush.msra.mxu0 0.0
    %3226 = vmatpush.msra.mxu0 %v2282
    %3227 = vmatmul.f32.gmra.mxu0 %v3200
    %v3228 = vpop.f32.mrf.mxu0
    %v3229 = vadd.f32 0.0, %v3228
    %3230 = vmatmul.f32.gmra.mxu0 %v3203
    %v3231 = vpop.f32.mrf.mxu0
    %v3232 = vadd.f32 0.0, %v3231
    %3233 = vmatmul.f32.gmra.mxu0 %v3206
    %v3234 = vpop.f32.mrf.mxu0
    %v3235 = vadd.f32 0.0, %v3234
    %3236 = vmatmul.f32.gmra.mxu0 %v3209
    %v3237 = vpop.f32.mrf.mxu0
    %v3238 = vadd.f32 0.0, %v3237
    %3239 = vdwg.mxu0
    %v3240 = vadd.f32 %v2924, %v3229
    %v3241 = vadd.f32 %v2927, %v3232
    %v3242 = vadd.f32 %v2930, %v3235
    %v3243 = vadd.f32 %v2933, %v3238
    %3244 = vrot.lane.b32.xlu0 %v2318, 104
    %v3245 = vpop.permute.xlu0 %3244
    %3246 = vrot.lane.b32.xlu0 %v2318, 72
    %v3247 = vpop.permute.xlu0 %3246
    %v3248 = vsel %vm493, %v3245, 0
    %v3250 = vsel %vm493, %v3247, 0
    %3252 = vmatpush.xpose.msra.mxu0 0.0
    %3253 = vmatpush.xpose.msra.mxu0 0.0
    %3254 = vmatpush.xpose.msra.mxu0 0.0
    %3255 = vmatpush.xpose.msra.mxu0 0.0
    %3256 = vmatpush.xpose.msra.mxu0 0.0
    %3257 = vmatpush.xpose.msra.mxu0 0.0
    %3258 = vmatpush.xpose.msra.mxu0 0.0
    %3259 = vmatpush.xpose.msra.mxu0 0.0
    %3260 = vmatpush.xpose.msra.mxu0 0.0
    %3261 = vmatpush.xpose.msra.mxu0 0.0
    %3262 = vmatpush.xpose.msra.mxu0 0.0
    %3263 = vmatpush.xpose.msra.mxu0 0.0
    %3264 = vmatpush.xpose.msra.mxu0 0.0
    %3265 = vmatpush.xpose.msra.mxu0 0.0
    %3266 = vmatpush.xpose.msra.mxu0 0.0
    %3267 = vmatpush.xpose.msra.mxu0 %v3250
    %3268 = vmatmul.f32.gmra.mxu0 %v3248
    %v3269 = vpop.f32.mrf.mxu0
    %v3270 = vadd.f32 0.0, %v3269
    %3271 = vdwg.mxu0
    %3272 = vrot.lane.b32.xlu0 %v2321, 104
    %v3273 = vpop.permute.xlu0 %3272
    %3274 = vrot.lane.b32.xlu0 %v2321, 72
    %v3275 = vpop.permute.xlu0 %3274
    %v3276 = vsel %vm493, %v3273, 0
    %v3278 = vsel %vm493, %v3275, 0
    %3280 = vmatpush.xpose.msra.mxu0 0.0
    %3281 = vmatpush.xpose.msra.mxu0 0.0
    %3282 = vmatpush.xpose.msra.mxu0 0.0
    %3283 = vmatpush.xpose.msra.mxu0 0.0
    %3284 = vmatpush.xpose.msra.mxu0 0.0
    %3285 = vmatpush.xpose.msra.mxu0 0.0
    %3286 = vmatpush.xpose.msra.mxu0 0.0
    %3287 = vmatpush.xpose.msra.mxu0 0.0
    %3288 = vmatpush.xpose.msra.mxu0 0.0
    %3289 = vmatpush.xpose.msra.mxu0 0.0
    %3290 = vmatpush.xpose.msra.mxu0 0.0
    %3291 = vmatpush.xpose.msra.mxu0 0.0
    %3292 = vmatpush.xpose.msra.mxu0 0.0
    %3293 = vmatpush.xpose.msra.mxu0 0.0
    %3294 = vmatpush.xpose.msra.mxu0 0.0
    %3295 = vmatpush.xpose.msra.mxu0 %v3278
    %3296 = vmatmul.f32.gmra.mxu0 %v3276
    %v3297 = vpop.f32.mrf.mxu0
    %v3298 = vadd.f32 0.0, %v3297
    %3299 = vdwg.mxu0
    %3300 = vrot.lane.b32.xlu0 %v2324, 104
    %v3301 = vpop.permute.xlu0 %3300
    %3302 = vrot.lane.b32.xlu0 %v2324, 72
    %v3303 = vpop.permute.xlu0 %3302
    %v3304 = vsel %vm493, %v3301, 0
    %v3306 = vsel %vm493, %v3303, 0
    %3308 = vmatpush.xpose.msra.mxu0 0.0
    %3309 = vmatpush.xpose.msra.mxu0 0.0
    %3310 = vmatpush.xpose.msra.mxu0 0.0
    %3311 = vmatpush.xpose.msra.mxu0 0.0
    %3312 = vmatpush.xpose.msra.mxu0 0.0
    %3313 = vmatpush.xpose.msra.mxu0 0.0
    %3314 = vmatpush.xpose.msra.mxu0 0.0
    %3315 = vmatpush.xpose.msra.mxu0 0.0
    %3316 = vmatpush.xpose.msra.mxu0 0.0
    %3317 = vmatpush.xpose.msra.mxu0 0.0
    %3318 = vmatpush.xpose.msra.mxu0 0.0
    %3319 = vmatpush.xpose.msra.mxu0 0.0
    %3320 = vmatpush.xpose.msra.mxu0 0.0
    %3321 = vmatpush.xpose.msra.mxu0 0.0
    %3322 = vmatpush.xpose.msra.mxu0 0.0
    %3323 = vmatpush.xpose.msra.mxu0 %v3306
    %3324 = vmatmul.f32.gmra.mxu0 %v3304
    %v3325 = vpop.f32.mrf.mxu0
    %v3326 = vadd.f32 0.0, %v3325
    %3327 = vdwg.mxu0
    %3328 = vrot.lane.b32.xlu0 %v2327, 104
    %v3329 = vpop.permute.xlu0 %3328
    %3330 = vrot.lane.b32.xlu0 %v2327, 72
    %v3331 = vpop.permute.xlu0 %3330
    %v3332 = vsel %vm493, %v3329, 0
    %v3334 = vsel %vm493, %v3331, 0
    %3336 = vmatpush.xpose.msra.mxu0 0.0
    %3337 = vmatpush.xpose.msra.mxu0 0.0
    %3338 = vmatpush.xpose.msra.mxu0 0.0
    %3339 = vmatpush.xpose.msra.mxu0 0.0
    %3340 = vmatpush.xpose.msra.mxu0 0.0
    %3341 = vmatpush.xpose.msra.mxu0 0.0
    %3342 = vmatpush.xpose.msra.mxu0 0.0
    %3343 = vmatpush.xpose.msra.mxu0 0.0
    %3344 = vmatpush.xpose.msra.mxu0 0.0
    %3345 = vmatpush.xpose.msra.mxu0 0.0
    %3346 = vmatpush.xpose.msra.mxu0 0.0
    %3347 = vmatpush.xpose.msra.mxu0 0.0
    %3348 = vmatpush.xpose.msra.mxu0 0.0
    %3349 = vmatpush.xpose.msra.mxu0 0.0
    %3350 = vmatpush.xpose.msra.mxu0 0.0
    %3351 = vmatpush.xpose.msra.mxu0 %v3334
    %3352 = vmatmul.f32.gmra.mxu0 %v3332
    %v3353 = vpop.f32.mrf.mxu0
    %v3354 = vadd.f32 0.0, %v3353
    %3355 = vdwg.mxu0
    %v3356 = vmul.f32 %v3270, 0.35355338
    %v3357 = vmul.f32 %v3298, 0.35355338
    %v3358 = vmul.f32 %v3326, 0.35355338
    %v3359 = vmul.f32 %v3354, 0.35355338
    %v3360 = vsel %vm493, %v3356, -inf
    %3361 = vmax.xlane.f32.xlu0 %v3360
    %v3362 = vpop.xlane.xlu0 %3361
    %v3363 = vsel %vm493, %v3357, -inf
    %3364 = vmax.xlane.f32.xlu0 %v3363
    %v3365 = vpop.xlane.xlu0 %3364
    %v3366 = vsel %vm493, %v3358, -inf
    %3367 = vmax.xlane.f32.xlu0 %v3366
    %v3368 = vpop.xlane.xlu0 %3367
    %v3369 = vsel %vm493, %v3359, -inf
    %3370 = vmax.xlane.f32.xlu0 %v3369
    %v3371 = vpop.xlane.xlu0 %3370
    %v3372 = vsub.f32 %v3356, %v3362
    %v3373 = vsub.f32 %v3357, %v3365
    %v3374 = vsub.f32 %v3358, %v3368
    %v3375 = vsub.f32 %v3359, %v3371
    %v3376 = vmul.f32 %v3372, 1.442695
    %v3377 = vpow.pop %v3376
    %v3378 = vmul.f32 %v3373, 1.442695
    %v3379 = vpow.pop %v3378
    %v3380 = vmul.f32 %v3374, 1.442695
    %v3381 = vpow.pop %v3380
    %v3382 = vmul.f32 %v3375, 1.442695
    %v3383 = vpow.pop %v3382
    %v3384 = vsel %vm493, %v3377, 0.0
    %3385 = vadd.xlane.f32.xlu0 %v3384
    %v3386 = vpop.xlane.xlu0 %3385
    %v3387 = vsel %vm493, %v3379, 0.0
    %3388 = vadd.xlane.f32.xlu0 %v3387
    %v3389 = vpop.xlane.xlu0 %3388
    %v3390 = vsel %vm493, %v3381, 0.0
    %3391 = vadd.xlane.f32.xlu0 %v3390
    %v3392 = vpop.xlane.xlu0 %3391
    %v3393 = vsel %vm493, %v3383, 0.0
    %3394 = vadd.xlane.f32.xlu0 %v3393
    %v3395 = vpop.xlane.xlu0 %3394
    %v3396 = vrcp.pop %v3386
    %v3397 = vrcp.pop %v3389
    %v3398 = vrcp.pop %v3392
    %v3399 = vrcp.pop %v3395
    %v3400 = vmul.f32 %v3377, %v3396
    %v3401 = vmul.f32 %v3379, %v3397
    %v3402 = vmul.f32 %v3381, %v3398
    %v3403 = vmul.f32 %v3383, %v3399
    %3404 = vrot.lane.b32.xlu0 %v2318, 40
    %v3405 = vpop.permute.xlu0 %3404
    %v3408 = vsel %vm493, %v3400, 0
    %3410 = vmatpush.msra.mxu0 0.0
    %3411 = vmatpush.msra.mxu0 0.0
    %3412 = vmatpush.msra.mxu0 0.0
    %3413 = vmatpush.msra.mxu0 0.0
    %3414 = vmatpush.msra.mxu0 0.0
    %3415 = vmatpush.msra.mxu0 0.0
    %3416 = vmatpush.msra.mxu0 0.0
    %3417 = vmatpush.msra.mxu0 0.0
    %3418 = vmatpush.msra.mxu0 0.0
    %3419 = vmatpush.msra.mxu0 0.0
    %3420 = vmatpush.msra.mxu0 0.0
    %3421 = vmatpush.msra.mxu0 0.0
    %3422 = vmatpush.msra.mxu0 0.0
    %3423 = vmatpush.msra.mxu0 0.0
    %3424 = vmatpush.msra.mxu0 0.0
    %3425 = vmatpush.msra.mxu0 %v3405
    %3426 = vmatmul.f32.gmra.mxu0 %v3408
    %v3427 = vpop.f32.mrf.mxu0
    %v3428 = vadd.f32 0.0, %v3427
    %3429 = vdwg.mxu0
    %3430 = vrot.lane.b32.xlu0 %v2321, 40
    %v3431 = vpop.permute.xlu0 %3430
    %v3434 = vsel %vm493, %v3401, 0
    %3436 = vmatpush.msra.mxu0 0.0
    %3437 = vmatpush.msra.mxu0 0.0
    %3438 = vmatpush.msra.mxu0 0.0
    %3439 = vmatpush.msra.mxu0 0.0
    %3440 = vmatpush.msra.mxu0 0.0
    %3441 = vmatpush.msra.mxu0 0.0
    %3442 = vmatpush.msra.mxu0 0.0
    %3443 = vmatpush.msra.mxu0 0.0
    %3444 = vmatpush.msra.mxu0 0.0
    %3445 = vmatpush.msra.mxu0 0.0
    %3446 = vmatpush.msra.mxu0 0.0
    %3447 = vmatpush.msra.mxu0 0.0
    %3448 = vmatpush.msra.mxu0 0.0
    %3449 = vmatpush.msra.mxu0 0.0
    %3450 = vmatpush.msra.mxu0 0.0
    %3451 = vmatpush.msra.mxu0 %v3431
    %3452 = vmatmul.f32.gmra.mxu0 %v3434
    %v3453 = vpop.f32.mrf.mxu0
    %v3454 = vadd.f32 0.0, %v3453
    %3455 = vdwg.mxu0
    %3456 = vrot.lane.b32.xlu0 %v2324, 40
    %v3457 = vpop.permute.xlu0 %3456
    %v3460 = vsel %vm493, %v3402, 0
    %3462 = vmatpush.msra.mxu0 0.0
    %3463 = vmatpush.msra.mxu0 0.0
    %3464 = vmatpush.msra.mxu0 0.0
    %3465 = vmatpush.msra.mxu0 0.0
    %3466 = vmatpush.msra.mxu0 0.0
    %3467 = vmatpush.msra.mxu0 0.0
    %3468 = vmatpush.msra.mxu0 0.0
    %3469 = vmatpush.msra.mxu0 0.0
    %3470 = vmatpush.msra.mxu0 0.0
    %3471 = vmatpush.msra.mxu0 0.0
    %3472 = vmatpush.msra.mxu0 0.0
    %3473 = vmatpush.msra.mxu0 0.0
    %3474 = vmatpush.msra.mxu0 0.0
    %3475 = vmatpush.msra.mxu0 0.0
    %3476 = vmatpush.msra.mxu0 0.0
    %3477 = vmatpush.msra.mxu0 %v3457
    %3478 = vmatmul.f32.gmra.mxu0 %v3460
    %v3479 = vpop.f32.mrf.mxu0
    %v3480 = vadd.f32 0.0, %v3479
    %3481 = vdwg.mxu0
    %3482 = vrot.lane.b32.xlu0 %v2327, 40
    %v3483 = vpop.permute.xlu0 %3482
    %v3486 = vsel %vm493, %v3403, 0
    %3488 = vmatpush.msra.mxu0 0.0
    %3489 = vmatpush.msra.mxu0 0.0
    %3490 = vmatpush.msra.mxu0 0.0
    %3491 = vmatpush.msra.mxu0 0.0
    %3492 = vmatpush.msra.mxu0 0.0
    %3493 = vmatpush.msra.mxu0 0.0
    %3494 = vmatpush.msra.mxu0 0.0
    %3495 = vmatpush.msra.mxu0 0.0
    %3496 = vmatpush.msra.mxu0 0.0
    %3497 = vmatpush.msra.mxu0 0.0
    %3498 = vmatpush.msra.mxu0 0.0
    %3499 = vmatpush.msra.mxu0 0.0
    %3500 = vmatpush.msra.mxu0 0.0
    %3501 = vmatpush.msra.mxu0 0.0
    %3502 = vmatpush.msra.mxu0 0.0
    %3503 = vmatpush.msra.mxu0 %v3483
    %3504 = vmatmul.f32.gmra.mxu0 %v3486
    %v3505 = vpop.f32.mrf.mxu0
    %v3506 = vadd.f32 0.0, %v3505
    %3507 = vdwg.mxu0
    %v3509 = vsel %vm493, %v3428, 0
    %v3512 = vsel %vm493, %v3454, 0
    %v3515 = vsel %vm493, %v3480, 0
    %v3518 = vsel %vm493, %v3506, 0
    %3520 = vmatpush.msra.mxu0 0.0
    %3521 = vmatpush.msra.mxu0 0.0
    %3522 = vmatpush.msra.mxu0 0.0
    %3523 = vmatpush.msra.mxu0 0.0
    %3524 = vmatpush.msra.mxu0 0.0
    %3525 = vmatpush.msra.mxu0 0.0
    %3526 = vmatpush.msra.mxu0 0.0
    %3527 = vmatpush.msra.mxu0 0.0
    %3528 = vmatpush.msra.mxu0 0.0
    %3529 = vmatpush.msra.mxu0 0.0
    %3530 = vmatpush.msra.mxu0 0.0
    %3531 = vmatpush.msra.mxu0 0.0
    %3532 = vmatpush.msra.mxu0 0.0
    %3533 = vmatpush.msra.mxu0 0.0
    %3534 = vmatpush.msra.mxu0 0.0
    %3535 = vmatpush.msra.mxu0 %v2283
    %3536 = vmatmul.f32.gmra.mxu0 %v3509
    %v3537 = vpop.f32.mrf.mxu0
    %v3538 = vadd.f32 0.0, %v3537
    %3539 = vmatmul.f32.gmra.mxu0 %v3512
    %v3540 = vpop.f32.mrf.mxu0
    %v3541 = vadd.f32 0.0, %v3540
    %3542 = vmatmul.f32.gmra.mxu0 %v3515
    %v3543 = vpop.f32.mrf.mxu0
    %v3544 = vadd.f32 0.0, %v3543
    %3545 = vmatmul.f32.gmra.mxu0 %v3518
    %v3546 = vpop.f32.mrf.mxu0
    %v3547 = vadd.f32 0.0, %v3546
    %3548 = vdwg.mxu0
    %v3549 = vadd.f32 %v3240, %v3538
    %v3550 = vadd.f32 %v3241, %v3541
    %v3551 = vadd.f32 %v3242, %v3544
    %v3552 = vadd.f32 %v3243, %v3547
    %v3554 = vperm.slane %v2284, 0
    %v3556 = vadd.f32 %v3549, %v3554
    %v3557 = vadd.f32 %v3550, %v3554
    %v3558 = vadd.f32 %v3551, %v3554
    %v3559 = vadd.f32 %v3552, %v3554
    %v3560 = vadd.f32 %v2271, %v3556
    %v3561 = vadd.f32 %v2272, %v3557
    %v3562 = vadd.f32 %v2273, %v3558
    %v3563 = vadd.f32 %v2274, %v3559
    %v3564 = vld [vmem:[%s29] sm:$0x1]
    %v3565 = vld [vmem:[%s27] sm:$0x1]
    %v3566 = vsel %vm326, %v3560, 0.0
    %3567 = vadd.xlane.f32.xlu0 %v3566
    %v3568 = vpop.xlane.xlu0 %3567
    %v3569 = vsel %vm326, %v3561, 0.0
    %3570 = vadd.xlane.f32.xlu0 %v3569
    %v3571 = vpop.xlane.xlu0 %3570
    %v3572 = vsel %vm326, %v3562, 0.0
    %3573 = vadd.xlane.f32.xlu0 %v3572
    %v3574 = vpop.xlane.xlu0 %3573
    %v3575 = vsel %vm326, %v3563, 0.0
    %3576 = vadd.xlane.f32.xlu0 %v3575
    %v3577 = vpop.xlane.xlu0 %3576
    %v3578 = vmul.f32 %v3568, %v345
    %v3579 = vmul.f32 %v3571, %v345
    %v3580 = vmul.f32 %v3574, %v345
    %v3581 = vmul.f32 %v3577, %v345
    %v3582 = vsub.f32 %v3560, %v3578
    %v3583 = vsub.f32 %v3561, %v3579
    %v3584 = vsub.f32 %v3562, %v3580
    %v3585 = vsub.f32 %v3563, %v3581
    %v3586 = vmul.f32 %v3582, %v3582
    %v3587 = vmul.f32 %v3583, %v3583
    %v3588 = vmul.f32 %v3584, %v3584
    %v3589 = vmul.f32 %v3585, %v3585
    %v3590 = vsel %vm326, %v3586, 0.0
    %3591 = vadd.xlane.f32.xlu0 %v3590
    %v3592 = vpop.xlane.xlu0 %3591
    %v3593 = vsel %vm326, %v3587, 0.0
    %3594 = vadd.xlane.f32.xlu0 %v3593
    %v3595 = vpop.xlane.xlu0 %3594
    %v3596 = vsel %vm326, %v3588, 0.0
    %3597 = vadd.xlane.f32.xlu0 %v3596
    %v3598 = vpop.xlane.xlu0 %3597
    %v3599 = vsel %vm326, %v3589, 0.0
    %3600 = vadd.xlane.f32.xlu0 %v3599
    %v3601 = vpop.xlane.xlu0 %3600
    %v3602 = vmul.f32 %v3592, %v345
    %v3603 = vmul.f32 %v3595, %v345
    %v3604 = vmul.f32 %v3598, %v345
    %v3605 = vmul.f32 %v3601, %v345
    %v3606 = vadd.f32 %v3602, 1e-06
    %v3607 = vadd.f32 %v3603, 1e-06
    %v3608 = vadd.f32 %v3604, 1e-06
    %v3609 = vadd.f32 %v3605, 1e-06
    %v3610 = vrsqrt.pop %v3606
    %v3611 = vmul.f32 %v3610, %v3606
    %v3612 = vmul.f32 %v3611, %v3610
    %v3613 = vmul.f32 0.5, %v3612
    %v3614 = vsub.f32 1.5, %v3613
    %v3615 = vmul.f32 %v3610, %v3614
    %vm3616 = vweird.f32 %v3606
    %vm3617 = vweird.f32 %v3610
    %vm3618 = vmor %vm3616, %vm3617
    %v3619 = vsel %vm3618, %v3610, %v3615
    %v3620 = vrsqrt.pop %v3607
    %v3621 = vmul.f32 %v3620, %v3607
    %v3622 = vmul.f32 %v3621, %v3620
    %v3623 = vmul.f32 0.5, %v3622
    %v3624 = vsub.f32 1.5, %v3623
    %v3625 = vmul.f32 %v3620, %v3624
    %vm3626 = vweird.f32 %v3607
    %vm3627 = vweird.f32 %v3620
    %vm3628 = vmor %vm3626, %vm3627
    %v3629 = vsel %vm3628, %v3620, %v3625
    %v3630 = vrsqrt.pop %v3608
    %v3631 = vmul.f32 %v3630, %v3608
    %v3632 = vmul.f32 %v3631, %v3630
    %v3633 = vmul.f32 0.5, %v3632
    %v3634 = vsub.f32 1.5, %v3633
    %v3635 = vmul.f32 %v3630, %v3634
    %vm3636 = vweird.f32 %v3608
    %vm3637 = vweird.f32 %v3630
    %vm3638 = vmor %vm3636, %vm3637
    %v3639 = vsel %vm3638, %v3630, %v3635
    %v3640 = vrsqrt.pop %v3609
    %v3641 = vmul.f32 %v3640, %v3609
    %v3642 = vmul.f32 %v3641, %v3640
    %v3643 = vmul.f32 0.5, %v3642
    %v3644 = vsub.f32 1.5, %v3643
    %v3645 = vmul.f32 %v3640, %v3644
    %vm3646 = vweird.f32 %v3609
    %vm3647 = vweird.f32 %v3640
    %vm3648 = vmor %vm3646, %vm3647
    %v3649 = vsel %vm3648, %v3640, %v3645
    %v3650 = vmul.f32 %v3582, %v3619
    %v3651 = vmul.f32 %v3583, %v3629
    %v3652 = vmul.f32 %v3584, %v3639
    %v3653 = vmul.f32 %v3585, %v3649
    %v3655 = vperm.slane %v3564, 0
    %v3657 = vmul.f32 %v3650, %v3655
    %v3658 = vmul.f32 %v3651, %v3655
    %v3659 = vmul.f32 %v3652, %v3655
    %v3660 = vmul.f32 %v3653, %v3655
    %v3662 = vperm.slane %v3565, 0
    %v3664 = vadd.f32 %v3657, %v3662
    %v3665 = vadd.f32 %v3658, %v3662
    %v3666 = vadd.f32 %v3659, %v3662
    %v3667 = vadd.f32 %v3660, %v3662
    %v3668 = vld [vmem:[%s25] sm:$0xff]
    %v3669 = vld [vmem:[%s25 + $0x8] sm:$0xff]
    %v3670 = vld [vmem:[%s25 + $0x10] sm:$0xff]
    %v3671 = vld [vmem:[%s25 + $0x18] sm:$0xff]
    %v3672 = vld [vmem:[%s19] sm:$0x1]
    %v3673 = vld [vmem:[%s21] sm:$0xff]
    %v3674 = vld [vmem:[%s21 + $0x8] sm:$0xff]
    %v3675 = vld [vmem:[%s21 + $0x10] sm:$0xff]
    %v3676 = vld [vmem:[%s21 + $0x18] sm:$0xff]
    %v3677 = vld [vmem:[%s15] sm:$0x1]
    %v3678 = vld [vmem:[%s23] sm:$0xff]
    %v3679 = vld [vmem:[%s23 + $0x8] sm:$0xff]
    %v3680 = vld [vmem:[%s23 + $0x10] sm:$0xff]
    %v3681 = vld [vmem:[%s23 + $0x18] sm:$0xff]
    %v3682 = vld [vmem:[%s17] sm:$0x1]
    %v3684 = vperm.slane %v3672, 0
    %v3687 = vsel %vm326, %v3664, 0
    %v3690 = vsel %vm326, %v3665, 0
    %v3693 = vsel %vm326, %v3666, 0
    %v3696 = vsel %vm326, %v3667, 0
    %3698 = vmatpush.msra.mxu0 0.0
    %3699 = vmatpush.msra.mxu0 0.0
    %3700 = vmatpush.msra.mxu0 0.0
    %3701 = vmatpush.msra.mxu0 0.0
    %3702 = vmatpush.msra.mxu0 0.0
    %3703 = vmatpush.msra.mxu0 0.0
    %3704 = vmatpush.msra.mxu0 0.0
    %3705 = vmatpush.msra.mxu0 0.0
    %3706 = vmatpush.msra.mxu0 0.0
    %3707 = vmatpush.msra.mxu0 0.0
    %3708 = vmatpush.msra.mxu0 0.0
    %3709 = vmatpush.msra.mxu0 0.0
    %3710 = vmatpush.msra.mxu0 %v3671
    %3711 = vmatpush.msra.mxu0 %v3670
    %3712 = vmatpush.msra.mxu0 %v3669
    %3713 = vmatpush.msra.mxu0 %v3668
    %3714 = vmatmul.f32.gmra.mxu0 %v3687
    %v3715 = vpop.f32.mrf.mxu0
    %v3716 = vadd.f32 %v3684, %v3715
    %3717 = vmatmul.f32.gmra.mxu0 %v3690
    %v3718 = vpop.f32.mrf.mxu0
    %v3719 = vadd.f32 %v3684, %v3718
    %3720 = vmatmul.f32.gmra.mxu0 %v3693
    %v3721 = vpop.f32.mrf.mxu0
    %v3722 = vadd.f32 %v3684, %v3721
    %3723 = vmatmul.f32.gmra.mxu0 %v3696
    %v3724 = vpop.f32.mrf.mxu0
    %v3725 = vadd.f32 %v3684, %v3724
    %3726 = vdwg.mxu0
    %v3728 = vperm.slane %v3677, 0
    %v3731 = vsel %vm326, %v2087, 0
    %v3734 = vsel %vm326, %v2088, 0
    %v3737 = vsel %vm326, %v2089, 0
    %v3740 = vsel %vm326, %v2090, 0
    %3742 = vmatpush.msra.mxu0 0.0
    %3743 = vmatpush.msra.mxu0 0.0
    %3744 = vmatpush.msra.mxu0 0.0
    %3745 = vmatpush.msra.mxu0 0.0
    %3746 = vmatpush.msra.mxu0 0.0
    %3747 = vmatpush.msra.mxu0 0.0
    %3748 = vmatpush.msra.mxu0 0.0
    %3749 = vmatpush.msra.mxu0 0.0
    %3750 = vmatpush.msra.mxu0 0.0
    %3751 = vmatpush.msra.mxu0 0.0
    %3752 = vmatpush.msra.mxu0 0.0
    %3753 = vmatpush.msra.mxu0 0.0
    %3754 = vmatpush.msra.mxu0 %v3676
    %3755 = vmatpush.msra.mxu0 %v3675
    %3756 = vmatpush.msra.mxu0 %v3674
    %3757 = vmatpush.msra.mxu0 %v3673
    %3758 = vmatmul.f32.gmra.mxu0 %v3731
    %v3759 = vpop.f32.mrf.mxu0
    %v3760 = vadd.f32 %v3728, %v3759
    %3761 = vmatmul.f32.gmra.mxu0 %v3734
    %v3762 = vpop.f32.mrf.mxu0
    %v3763 = vadd.f32 %v3728, %v3762
    %3764 = vmatmul.f32.gmra.mxu0 %v3737
    %v3765 = vpop.f32.mrf.mxu0
    %v3766 = vadd.f32 %v3728, %v3765
    %3767 = vmatmul.f32.gmra.mxu0 %v3740
    %v3768 = vpop.f32.mrf.mxu0
    %v3769 = vadd.f32 %v3728, %v3768
    %3770 = vdwg.mxu0
    %v3772 = vsel %vm493, %v3716, 0
    %v3775 = vsel %vm493, %v3760, 0
    %3777 = vmatpush.xpose.msra.mxu0 0.0
    %3778 = vmatpush.xpose.msra.mxu0 0.0
    %3779 = vmatpush.xpose.msra.mxu0 0.0
    %3780 = vmatpush.xpose.msra.mxu0 0.0
    %3781 = vmatpush.xpose.msra.mxu0 0.0
    %3782 = vmatpush.xpose.msra.mxu0 0.0
    %3783 = vmatpush.xpose.msra.mxu0 0.0
    %3784 = vmatpush.xpose.msra.mxu0 0.0
    %3785 = vmatpush.xpose.msra.mxu0 0.0
    %3786 = vmatpush.xpose.msra.mxu0 0.0
    %3787 = vmatpush.xpose.msra.mxu0 0.0
    %3788 = vmatpush.xpose.msra.mxu0 0.0
    %3789 = vmatpush.xpose.msra.mxu0 0.0
    %3790 = vmatpush.xpose.msra.mxu0 0.0
    %3791 = vmatpush.xpose.msra.mxu0 0.0
    %3792 = vmatpush.xpose.msra.mxu0 %v3775
    %3793 = vmatmul.f32.gmra.mxu0 %v3772
    %v3794 = vpop.f32.mrf.mxu0
    %v3795 = vadd.f32 0.0, %v3794
    %3796 = vdwg.mxu0
    %v3798 = vsel %vm493, %v3719, 0
    %v3801 = vsel %vm493, %v3763, 0
    %3803 = vmatpush.xpose.msra.mxu0 0.0
    %3804 = vmatpush.xpose.msra.mxu0 0.0
    %3805 = vmatpush.xpose.msra.mxu0 0.0
    %3806 = vmatpush.xpose.msra.mxu0 0.0
    %3807 = vmatpush.xpose.msra.mxu0 0.0
    %3808 = vmatpush.xpose.msra.mxu0 0.0
    %3809 = vmatpush.xpose.msra.mxu0 0.0
    %3810 = vmatpush.xpose.msra.mxu0 0.0
    %3811 = vmatpush.xpose.msra.mxu0 0.0
    %3812 = vmatpush.xpose.msra.mxu0 0.0
    %3813 = vmatpush.xpose.msra.mxu0 0.0
    %3814 = vmatpush.xpose.msra.mxu0 0.0
    %3815 = vmatpush.xpose.msra.mxu0 0.0
    %3816 = vmatpush.xpose.msra.mxu0 0.0
    %3817 = vmatpush.xpose.msra.mxu0 0.0
    %3818 = vmatpush.xpose.msra.mxu0 %v3801
    %3819 = vmatmul.f32.gmra.mxu0 %v3798
    %v3820 = vpop.f32.mrf.mxu0
    %v3821 = vadd.f32 0.0, %v3820
    %3822 = vdwg.mxu0
    %v3824 = vsel %vm493, %v3722, 0
    %v3827 = vsel %vm493, %v3766, 0
    %3829 = vmatpush.xpose.msra.mxu0 0.0
    %3830 = vmatpush.xpose.msra.mxu0 0.0
    %3831 = vmatpush.xpose.msra.mxu0 0.0
    %3832 = vmatpush.xpose.msra.mxu0 0.0
    %3833 = vmatpush.xpose.msra.mxu0 0.0
    %3834 = vmatpush.xpose.msra.mxu0 0.0
    %3835 = vmatpush.xpose.msra.mxu0 0.0
    %3836 = vmatpush.xpose.msra.mxu0 0.0
    %3837 = vmatpush.xpose.msra.mxu0 0.0
    %3838 = vmatpush.xpose.msra.mxu0 0.0
    %3839 = vmatpush.xpose.msra.mxu0 0.0
    %3840 = vmatpush.xpose.msra.mxu0 0.0
    %3841 = vmatpush.xpose.msra.mxu0 0.0
    %3842 = vmatpush.xpose.msra.mxu0 0.0
    %3843 = vmatpush.xpose.msra.mxu0 0.0
    %3844 = vmatpush.xpose.msra.mxu0 %v3827
    %3845 = vmatmul.f32.gmra.mxu0 %v3824
    %v3846 = vpop.f32.mrf.mxu0
    %v3847 = vadd.f32 0.0, %v3846
    %3848 = vdwg.mxu0
    %v3850 = vsel %vm493, %v3725, 0
    %v3853 = vsel %vm493, %v3769, 0
    %3855 = vmatpush.xpose.msra.mxu0 0.0
    %3856 = vmatpush.xpose.msra.mxu0 0.0
    %3857 = vmatpush.xpose.msra.mxu0 0.0
    %3858 = vmatpush.xpose.msra.mxu0 0.0
    %3859 = vmatpush.xpose.msra.mxu0 0.0
    %3860 = vmatpush.xpose.msra.mxu0 0.0
    %3861 = vmatpush.xpose.msra.mxu0 0.0
    %3862 = vmatpush.xpose.msra.mxu0 0.0
    %3863 = vmatpush.xpose.msra.mxu0 0.0
    %3864 = vmatpush.xpose.msra.mxu0 0.0
    %3865 = vmatpush.xpose.msra.mxu0 0.0
    %3866 = vmatpush.xpose.msra.mxu0 0.0
    %3867 = vmatpush.xpose.msra.mxu0 0.0
    %3868 = vmatpush.xpose.msra.mxu0 0.0
    %3869 = vmatpush.xpose.msra.mxu0 0.0
    %3870 = vmatpush.xpose.msra.mxu0 %v3853
    %3871 = vmatmul.f32.gmra.mxu0 %v3850
    %v3872 = vpop.f32.mrf.mxu0
    %v3873 = vadd.f32 0.0, %v3872
    %3874 = vdwg.mxu0
    %v3875 = vmul.f32 %v3795, 0.35355338
    %v3876 = vmul.f32 %v3821, 0.35355338
    %v3877 = vmul.f32 %v3847, 0.35355338
    %v3878 = vmul.f32 %v3873, 0.35355338
    %v3879 = vadd.f32 %v3875, %v604
    %v3880 = vadd.f32 %v3876, %v604
    %v3881 = vadd.f32 %v3877, %v604
    %v3882 = vadd.f32 %v3878, %v604
    %v3883 = vsel %vm493, %v3879, -inf
    %3884 = vmax.xlane.f32.xlu0 %v3883
    %v3885 = vpop.xlane.xlu0 %3884
    %v3886 = vsel %vm493, %v3880, -inf
    %3887 = vmax.xlane.f32.xlu0 %v3886
    %v3888 = vpop.xlane.xlu0 %3887
    %v3889 = vsel %vm493, %v3881, -inf
    %3890 = vmax.xlane.f32.xlu0 %v3889
    %v3891 = vpop.xlane.xlu0 %3890
    %v3892 = vsel %vm493, %v3882, -inf
    %3893 = vmax.xlane.f32.xlu0 %v3892
    %v3894 = vpop.xlane.xlu0 %3893
    %v3895 = vsub.f32 %v3879, %v3885
    %v3896 = vsub.f32 %v3880, %v3888
    %v3897 = vsub.f32 %v3881, %v3891
    %v3898 = vsub.f32 %v3882, %v3894
    %v3899 = vmul.f32 %v3895, 1.442695
    %v3900 = vpow.pop %v3899
    %v3901 = vmul.f32 %v3896, 1.442695
    %v3902 = vpow.pop %v3901
    %v3903 = vmul.f32 %v3897, 1.442695
    %v3904 = vpow.pop %v3903
    %v3905 = vmul.f32 %v3898, 1.442695
    %v3906 = vpow.pop %v3905
    %v3907 = vsel %vm493, %v3900, 0.0
    %3908 = vadd.xlane.f32.xlu0 %v3907
    %v3909 = vpop.xlane.xlu0 %3908
    %v3910 = vsel %vm493, %v3902, 0.0
    %3911 = vadd.xlane.f32.xlu0 %v3910
    %v3912 = vpop.xlane.xlu0 %3911
    %v3913 = vsel %vm493, %v3904, 0.0
    %3914 = vadd.xlane.f32.xlu0 %v3913
    %v3915 = vpop.xlane.xlu0 %3914
    %v3916 = vsel %vm493, %v3906, 0.0
    %3917 = vadd.xlane.f32.xlu0 %v3916
    %v3918 = vpop.xlane.xlu0 %3917
    %v3919 = vrcp.pop %v3909
    %v3920 = vrcp.pop %v3912
    %v3921 = vrcp.pop %v3915
    %v3922 = vrcp.pop %v3918
    %v3923 = vmul.f32 %v3900, %v3919
    %v3924 = vmul.f32 %v3902, %v3920
    %v3925 = vmul.f32 %v3904, %v3921
    %v3926 = vmul.f32 %v3906, %v3922
    %3927 = vrot.lane.b32.xlu0 %v3760, 96
    %v3928 = vpop.permute.xlu0 %3927
    %v3931 = vsel %vm493, %v3923, 0
    %3933 = vmatpush.msra.mxu0 0.0
    %3934 = vmatpush.msra.mxu0 0.0
    %3935 = vmatpush.msra.mxu0 0.0
    %3936 = vmatpush.msra.mxu0 0.0
    %3937 = vmatpush.msra.mxu0 0.0
    %3938 = vmatpush.msra.mxu0 0.0
    %3939 = vmatpush.msra.mxu0 0.0
    %3940 = vmatpush.msra.mxu0 0.0
    %3941 = vmatpush.msra.mxu0 0.0
    %3942 = vmatpush.msra.mxu0 0.0
    %3943 = vmatpush.msra.mxu0 0.0
    %3944 = vmatpush.msra.mxu0 0.0
    %3945 = vmatpush.msra.mxu0 0.0
    %3946 = vmatpush.msra.mxu0 0.0
    %3947 = vmatpush.msra.mxu0 0.0
    %3948 = vmatpush.msra.mxu0 %v3928
    %3949 = vmatmul.f32.gmra.mxu0 %v3931
    %v3950 = vpop.f32.mrf.mxu0
    %v3951 = vadd.f32 0.0, %v3950
    %3952 = vdwg.mxu0
    %3953 = vrot.lane.b32.xlu0 %v3763, 96
    %v3954 = vpop.permute.xlu0 %3953
    %v3957 = vsel %vm493, %v3924, 0
    %3959 = vmatpush.msra.mxu0 0.0
    %3960 = vmatpush.msra.mxu0 0.0
    %3961 = vmatpush.msra.mxu0 0.0
    %3962 = vmatpush.msra.mxu0 0.0
    %3963 = vmatpush.msra.mxu0 0.0
    %3964 = vmatpush.msra.mxu0 0.0
    %3965 = vmatpush.msra.mxu0 0.0
    %3966 = vmatpush.msra.mxu0 0.0
    %3967 = vmatpush.msra.mxu0 0.0
    %3968 = vmatpush.msra.mxu0 0.0
    %3969 = vmatpush.msra.mxu0 0.0
    %3970 = vmatpush.msra.mxu0 0.0
    %3971 = vmatpush.msra.mxu0 0.0
    %3972 = vmatpush.msra.mxu0 0.0
    %3973 = vmatpush.msra.mxu0 0.0
    %3974 = vmatpush.msra.mxu0 %v3954
    %3975 = vmatmul.f32.gmra.mxu0 %v3957
    %v3976 = vpop.f32.mrf.mxu0
    %v3977 = vadd.f32 0.0, %v3976
    %3978 = vdwg.mxu0
    %3979 = vrot.lane.b32.xlu0 %v3766, 96
    %v3980 = vpop.permute.xlu0 %3979
    %v3983 = vsel %vm493, %v3925, 0
    %3985 = vmatpush.msra.mxu0 0.0
    %3986 = vmatpush.msra.mxu0 0.0
    %3987 = vmatpush.msra.mxu0 0.0
    %3988 = vmatpush.msra.mxu0 0.0
    %3989 = vmatpush.msra.mxu0 0.0
    %3990 = vmatpush.msra.mxu0 0.0
    %3991 = vmatpush.msra.mxu0 0.0
    %3992 = vmatpush.msra.mxu0 0.0
    %3993 = vmatpush.msra.mxu0 0.0
    %3994 = vmatpush.msra.mxu0 0.0
    %3995 = vmatpush.msra.mxu0 0.0
    %3996 = vmatpush.msra.mxu0 0.0
    %3997 = vmatpush.msra.mxu0 0.0
    %3998 = vmatpush.msra.mxu0 0.0
    %3999 = vmatpush.msra.mxu0 0.0
    %4000 = vmatpush.msra.mxu0 %v3980
    %4001 = vmatmul.f32.gmra.mxu0 %v3983
    %v4002 = vpop.f32.mrf.mxu0
    %v4003 = vadd.f32 0.0, %v4002
    %4004 = vdwg.mxu0
    %4005 = vrot.lane.b32.xlu0 %v3769, 96
    %v4006 = vpop.permute.xlu0 %4005
    %v4009 = vsel %vm493, %v3926, 0
    %4011 = vmatpush.msra.mxu0 0.0
    %4012 = vmatpush.msra.mxu0 0.0
    %4013 = vmatpush.msra.mxu0 0.0
    %4014 = vmatpush.msra.mxu0 0.0
    %4015 = vmatpush.msra.mxu0 0.0
    %4016 = vmatpush.msra.mxu0 0.0
    %4017 = vmatpush.msra.mxu0 0.0
    %4018 = vmatpush.msra.mxu0 0.0
    %4019 = vmatpush.msra.mxu0 0.0
    %4020 = vmatpush.msra.mxu0 0.0
    %4021 = vmatpush.msra.mxu0 0.0
    %4022 = vmatpush.msra.mxu0 0.0
    %4023 = vmatpush.msra.mxu0 0.0
    %4024 = vmatpush.msra.mxu0 0.0
    %4025 = vmatpush.msra.mxu0 0.0
    %4026 = vmatpush.msra.mxu0 %v4006
    %4027 = vmatmul.f32.gmra.mxu0 %v4009
    %v4028 = vpop.f32.mrf.mxu0
    %v4029 = vadd.f32 0.0, %v4028
    %4030 = vdwg.mxu0
    %4031 = vrot.lane.b32.xlu0 %v3716, 120
    %v4032 = vpop.permute.xlu0 %4031
    %4033 = vrot.lane.b32.xlu0 %v3760, 120
    %v4034 = vpop.permute.xlu0 %4033
    %v4035 = vsel %vm493, %v4032, 0
    %v4037 = vsel %vm493, %v4034, 0
    %4039 = vmatpush.xpose.msra.mxu0 0.0
    %4040 = vmatpush.xpose.msra.mxu0 0.0
    %4041 = vmatpush.xpose.msra.mxu0 0.0
    %4042 = vmatpush.xpose.msra.mxu0 0.0
    %4043 = vmatpush.xpose.msra.mxu0 0.0
    %4044 = vmatpush.xpose.msra.mxu0 0.0
    %4045 = vmatpush.xpose.msra.mxu0 0.0
    %4046 = vmatpush.xpose.msra.mxu0 0.0
    %4047 = vmatpush.xpose.msra.mxu0 0.0
    %4048 = vmatpush.xpose.msra.mxu0 0.0
    %4049 = vmatpush.xpose.msra.mxu0 0.0
    %4050 = vmatpush.xpose.msra.mxu0 0.0
    %4051 = vmatpush.xpose.msra.mxu0 0.0
    %4052 = vmatpush.xpose.msra.mxu0 0.0
    %4053 = vmatpush.xpose.msra.mxu0 0.0
    %4054 = vmatpush.xpose.msra.mxu0 %v4037
    %4055 = vmatmul.f32.gmra.mxu0 %v4035
    %v4056 = vpop.f32.mrf.mxu0
    %v4057 = vadd.f32 0.0, %v4056
    %4058 = vdwg.mxu0
    %4059 = vrot.lane.b32.xlu0 %v3719, 120
    %v4060 = vpop.permute.xlu0 %4059
    %4061 = vrot.lane.b32.xlu0 %v3763, 120
    %v4062 = vpop.permute.xlu0 %4061
    %v4063 = vsel %vm493, %v4060, 0
    %v4065 = vsel %vm493, %v4062, 0
    %4067 = vmatpush.xpose.msra.mxu0 0.0
    %4068 = vmatpush.xpose.msra.mxu0 0.0
    %4069 = vmatpush.xpose.msra.mxu0 0.0
    %4070 = vmatpush.xpose.msra.mxu0 0.0
    %4071 = vmatpush.xpose.msra.mxu0 0.0
    %4072 = vmatpush.xpose.msra.mxu0 0.0
    %4073 = vmatpush.xpose.msra.mxu0 0.0
    %4074 = vmatpush.xpose.msra.mxu0 0.0
    %4075 = vmatpush.xpose.msra.mxu0 0.0
    %4076 = vmatpush.xpose.msra.mxu0 0.0
    %4077 = vmatpush.xpose.msra.mxu0 0.0
    %4078 = vmatpush.xpose.msra.mxu0 0.0
    %4079 = vmatpush.xpose.msra.mxu0 0.0
    %4080 = vmatpush.xpose.msra.mxu0 0.0
    %4081 = vmatpush.xpose.msra.mxu0 0.0
    %4082 = vmatpush.xpose.msra.mxu0 %v4065
    %4083 = vmatmul.f32.gmra.mxu0 %v4063
    %v4084 = vpop.f32.mrf.mxu0
    %v4085 = vadd.f32 0.0, %v4084
    %4086 = vdwg.mxu0
    %4087 = vrot.lane.b32.xlu0 %v3722, 120
    %v4088 = vpop.permute.xlu0 %4087
    %4089 = vrot.lane.b32.xlu0 %v3766, 120
    %v4090 = vpop.permute.xlu0 %4089
    %v4091 = vsel %vm493, %v4088, 0
    %v4093 = vsel %vm493, %v4090, 0
    %4095 = vmatpush.xpose.msra.mxu0 0.0
    %4096 = vmatpush.xpose.msra.mxu0 0.0
    %4097 = vmatpush.xpose.msra.mxu0 0.0
    %4098 = vmatpush.xpose.msra.mxu0 0.0
    %4099 = vmatpush.xpose.msra.mxu0 0.0
    %4100 = vmatpush.xpose.msra.mxu0 0.0
    %4101 = vmatpush.xpose.msra.mxu0 0.0
    %4102 = vmatpush.xpose.msra.mxu0 0.0
    %4103 = vmatpush.xpose.msra.mxu0 0.0
    %4104 = vmatpush.xpose.msra.mxu0 0.0
    %4105 = vmatpush.xpose.msra.mxu0 0.0
    %4106 = vmatpush.xpose.msra.mxu0 0.0
    %4107 = vmatpush.xpose.msra.mxu0 0.0
    %4108 = vmatpush.xpose.msra.mxu0 0.0
    %4109 = vmatpush.xpose.msra.mxu0 0.0
    %4110 = vmatpush.xpose.msra.mxu0 %v4093
    %4111 = vmatmul.f32.gmra.mxu0 %v4091
    %v4112 = vpop.f32.mrf.mxu0
    %v4113 = vadd.f32 0.0, %v4112
    %4114 = vdwg.mxu0
    %4115 = vrot.lane.b32.xlu0 %v3725, 120
    %v4116 = vpop.permute.xlu0 %4115
    %4117 = vrot.lane.b32.xlu0 %v3769, 120
    %v4118 = vpop.permute.xlu0 %4117
    %v4119 = vsel %vm493, %v4116, 0
    %v4121 = vsel %vm493, %v4118, 0
    %4123 = vmatpush.xpose.msra.mxu0 0.0
    %4124 = vmatpush.xpose.msra.mxu0 0.0
    %4125 = vmatpush.xpose.msra.mxu0 0.0
    %4126 = vmatpush.xpose.msra.mxu0 0.0
    %4127 = vmatpush.xpose.msra.mxu0 0.0
    %4128 = vmatpush.xpose.msra.mxu0 0.0
    %4129 = vmatpush.xpose.msra.mxu0 0.0
    %4130 = vmatpush.xpose.msra.mxu0 0.0
    %4131 = vmatpush.xpose.msra.mxu0 0.0
    %4132 = vmatpush.xpose.msra.mxu0 0.0
    %4133 = vmatpush.xpose.msra.mxu0 0.0
    %4134 = vmatpush.xpose.msra.mxu0 0.0
    %4135 = vmatpush.xpose.msra.mxu0 0.0
    %4136 = vmatpush.xpose.msra.mxu0 0.0
    %4137 = vmatpush.xpose.msra.mxu0 0.0
    %4138 = vmatpush.xpose.msra.mxu0 %v4121
    %4139 = vmatmul.f32.gmra.mxu0 %v4119
    %v4140 = vpop.f32.mrf.mxu0
    %v4141 = vadd.f32 0.0, %v4140
    %4142 = vdwg.mxu0
    %v4143 = vmul.f32 %v4057, 0.35355338
    %v4144 = vmul.f32 %v4085, 0.35355338
    %v4145 = vmul.f32 %v4113, 0.35355338
    %v4146 = vmul.f32 %v4141, 0.35355338
    %v4147 = vadd.f32 %v4143, %v604
    %v4148 = vadd.f32 %v4144, %v604
    %v4149 = vadd.f32 %v4145, %v604
    %v4150 = vadd.f32 %v4146, %v604
    %v4151 = vsel %vm493, %v4147, -inf
    %4152 = vmax.xlane.f32.xlu0 %v4151
    %v4153 = vpop.xlane.xlu0 %4152
    %v4154 = vsel %vm493, %v4148, -inf
    %4155 = vmax.xlane.f32.xlu0 %v4154
    %v4156 = vpop.xlane.xlu0 %4155
    %v4157 = vsel %vm493, %v4149, -inf
    %4158 = vmax.xlane.f32.xlu0 %v4157
    %v4159 = vpop.xlane.xlu0 %4158
    %v4160 = vsel %vm493, %v4150, -inf
    %4161 = vmax.xlane.f32.xlu0 %v4160
    %v4162 = vpop.xlane.xlu0 %4161
    %v4163 = vsub.f32 %v4147, %v4153
    %v4164 = vsub.f32 %v4148, %v4156
    %v4165 = vsub.f32 %v4149, %v4159
    %v4166 = vsub.f32 %v4150, %v4162
    %v4167 = vmul.f32 %v4163, 1.442695
    %v4168 = vpow.pop %v4167
    %v4169 = vmul.f32 %v4164, 1.442695
    %v4170 = vpow.pop %v4169
    %v4171 = vmul.f32 %v4165, 1.442695
    %v4172 = vpow.pop %v4171
    %v4173 = vmul.f32 %v4166, 1.442695
    %v4174 = vpow.pop %v4173
    %v4175 = vsel %vm493, %v4168, 0.0
    %4176 = vadd.xlane.f32.xlu0 %v4175
    %v4177 = vpop.xlane.xlu0 %4176
    %v4178 = vsel %vm493, %v4170, 0.0
    %4179 = vadd.xlane.f32.xlu0 %v4178
    %v4180 = vpop.xlane.xlu0 %4179
    %v4181 = vsel %vm493, %v4172, 0.0
    %4182 = vadd.xlane.f32.xlu0 %v4181
    %v4183 = vpop.xlane.xlu0 %4182
    %v4184 = vsel %vm493, %v4174, 0.0
    %4185 = vadd.xlane.f32.xlu0 %v4184
    %v4186 = vpop.xlane.xlu0 %4185
    %v4187 = vrcp.pop %v4177
    %v4188 = vrcp.pop %v4180
    %v4189 = vrcp.pop %v4183
    %v4190 = vrcp.pop %v4186
    %v4191 = vmul.f32 %v4168, %v4187
    %v4192 = vmul.f32 %v4170, %v4188
    %v4193 = vmul.f32 %v4172, %v4189
    %v4194 = vmul.f32 %v4174, %v4190
    %4195 = vrot.lane.b32.xlu0 %v3760, 88
    %v4196 = vpop.permute.xlu0 %4195
    %v4199 = vsel %vm493, %v4191, 0
    %4201 = vmatpush.msra.mxu0 0.0
    %4202 = vmatpush.msra.mxu0 0.0
    %4203 = vmatpush.msra.mxu0 0.0
    %4204 = vmatpush.msra.mxu0 0.0
    %4205 = vmatpush.msra.mxu0 0.0
    %4206 = vmatpush.msra.mxu0 0.0
    %4207 = vmatpush.msra.mxu0 0.0
    %4208 = vmatpush.msra.mxu0 0.0
    %4209 = vmatpush.msra.mxu0 0.0
    %4210 = vmatpush.msra.mxu0 0.0
    %4211 = vmatpush.msra.mxu0 0.0
    %4212 = vmatpush.msra.mxu0 0.0
    %4213 = vmatpush.msra.mxu0 0.0
    %4214 = vmatpush.msra.mxu0 0.0
    %4215 = vmatpush.msra.mxu0 0.0
    %4216 = vmatpush.msra.mxu0 %v4196
    %4217 = vmatmul.f32.gmra.mxu0 %v4199
    %v4218 = vpop.f32.mrf.mxu0
    %v4219 = vadd.f32 0.0, %v4218
    %4220 = vdwg.mxu0
    %4221 = vrot.lane.b32.xlu0 %v3763, 88
    %v4222 = vpop.permute.xlu0 %4221
    %v4225 = vsel %vm493, %v4192, 0
    %4227 = vmatpush.msra.mxu0 0.0
    %4228 = vmatpush.msra.mxu0 0.0
    %4229 = vmatpush.msra.mxu0 0.0
    %4230 = vmatpush.msra.mxu0 0.0
    %4231 = vmatpush.msra.mxu0 0.0
    %4232 = vmatpush.msra.mxu0 0.0
    %4233 = vmatpush.msra.mxu0 0.0
    %4234 = vmatpush.msra.mxu0 0.0
    %4235 = vmatpush.msra.mxu0 0.0
    %4236 = vmatpush.msra.mxu0 0.0
    %4237 = vmatpush.msra.mxu0 0.0
    %4238 = vmatpush.msra.mxu0 0.0
    %4239 = vmatpush.msra.mxu0 0.0
    %4240 = vmatpush.msra.mxu0 0.0
    %4241 = vmatpush.msra.mxu0 0.0
    %4242 = vmatpush.msra.mxu0 %v4222
    %4243 = vmatmul.f32.gmra.mxu0 %v4225
    %v4244 = vpop.f32.mrf.mxu0
    %v4245 = vadd.f32 0.0, %v4244
    %4246 = vdwg.mxu0
    %4247 = vrot.lane.b32.xlu0 %v3766, 88
    %v4248 = vpop.permute.xlu0 %4247
    %v4251 = vsel %vm493, %v4193, 0
    %4253 = vmatpush.msra.mxu0 0.0
    %4254 = vmatpush.msra.mxu0 0.0
    %4255 = vmatpush.msra.mxu0 0.0
    %4256 = vmatpush.msra.mxu0 0.0
    %4257 = vmatpush.msra.mxu0 0.0
    %4258 = vmatpush.msra.mxu0 0.0
    %4259 = vmatpush.msra.mxu0 0.0
    %4260 = vmatpush.msra.mxu0 0.0
    %4261 = vmatpush.msra.mxu0 0.0
    %4262 = vmatpush.msra.mxu0 0.0
    %4263 = vmatpush.msra.mxu0 0.0
    %4264 = vmatpush.msra.mxu0 0.0
    %4265 = vmatpush.msra.mxu0 0.0
    %4266 = vmatpush.msra.mxu0 0.0
    %4267 = vmatpush.msra.mxu0 0.0
    %4268 = vmatpush.msra.mxu0 %v4248
    %4269 = vmatmul.f32.gmra.mxu0 %v4251
    %v4270 = vpop.f32.mrf.mxu0
    %v4271 = vadd.f32 0.0, %v4270
    %4272 = vdwg.mxu0
    %4273 = vrot.lane.b32.xlu0 %v3769, 88
    %v4274 = vpop.permute.xlu0 %4273
    %v4277 = vsel %vm493, %v4194, 0
    %4279 = vmatpush.msra.mxu0 0.0
    %4280 = vmatpush.msra.mxu0 0.0
    %4281 = vmatpush.msra.mxu0 0.0
    %4282 = vmatpush.msra.mxu0 0.0
    %4283 = vmatpush.msra.mxu0 0.0
    %4284 = vmatpush.msra.mxu0 0.0
    %4285 = vmatpush.msra.mxu0 0.0
    %4286 = vmatpush.msra.mxu0 0.0
    %4287 = vmatpush.msra.mxu0 0.0
    %4288 = vmatpush.msra.mxu0 0.0
    %4289 = vmatpush.msra.mxu0 0.0
    %4290 = vmatpush.msra.mxu0 0.0
    %4291 = vmatpush.msra.mxu0 0.0
    %4292 = vmatpush.msra.mxu0 0.0
    %4293 = vmatpush.msra.mxu0 0.0
    %4294 = vmatpush.msra.mxu0 %v4274
    %4295 = vmatmul.f32.gmra.mxu0 %v4277
    %v4296 = vpop.f32.mrf.mxu0
    %v4297 = vadd.f32 0.0, %v4296
    %4298 = vdwg.mxu0
    %v4300 = vsel %vm493, %v4219, 0
    %v4303 = vsel %vm493, %v4245, 0
    %v4306 = vsel %vm493, %v4271, 0
    %v4309 = vsel %vm493, %v4297, 0
    %4311 = vmatpush.msra.mxu0 0.0
    %4312 = vmatpush.msra.mxu0 0.0
    %4313 = vmatpush.msra.mxu0 0.0
    %4314 = vmatpush.msra.mxu0 0.0
    %4315 = vmatpush.msra.mxu0 0.0
    %4316 = vmatpush.msra.mxu0 0.0
    %4317 = vmatpush.msra.mxu0 0.0
    %4318 = vmatpush.msra.mxu0 0.0
    %4319 = vmatpush.msra.mxu0 0.0
    %4320 = vmatpush.msra.mxu0 0.0
    %4321 = vmatpush.msra.mxu0 0.0
    %4322 = vmatpush.msra.mxu0 0.0
    %4323 = vmatpush.msra.mxu0 0.0
    %4324 = vmatpush.msra.mxu0 0.0
    %4325 = vmatpush.msra.mxu0 0.0
    %4326 = vmatpush.msra.mxu0 %v3679
    %4327 = vmatmul.f32.gmra.mxu0 %v4300
    %v4328 = vpop.f32.mrf.mxu0
    %v4329 = vadd.f32 0.0, %v4328
    %4330 = vmatmul.f32.gmra.mxu0 %v4303
    %v4331 = vpop.f32.mrf.mxu0
    %v4332 = vadd.f32 0.0, %v4331
    %4333 = vmatmul.f32.gmra.mxu0 %v4306
    %v4334 = vpop.f32.mrf.mxu0
    %v4335 = vadd.f32 0.0, %v4334
    %4336 = vmatmul.f32.gmra.mxu0 %v4309
    %v4337 = vpop.f32.mrf.mxu0
    %v4338 = vadd.f32 0.0, %v4337
    %4339 = vdwg.mxu0
    %v4341 = vsel %vm493, %v3951, 0
    %v4344 = vsel %vm493, %v3977, 0
    %v4347 = vsel %vm493, %v4003, 0
    %v4350 = vsel %vm493, %v4029, 0
    %4352 = vmatpush.msra.mxu0 0.0
    %4353 = vmatpush.msra.mxu0 0.0
    %4354 = vmatpush.msra.mxu0 0.0
    %4355 = vmatpush.msra.mxu0 0.0
    %4356 = vmatpush.msra.mxu0 0.0
    %4357 = vmatpush.msra.mxu0 0.0
    %4358 = vmatpush.msra.mxu0 0.0
    %4359 = vmatpush.msra.mxu0 0.0
    %4360 = vmatpush.msra.mxu0 0.0
    %4361 = vmatpush.msra.mxu0 0.0
    %4362 = vmatpush.msra.mxu0 0.0
    %4363 = vmatpush.msra.mxu0 0.0
    %4364 = vmatpush.msra.mxu0 0.0
    %4365 = vmatpush.msra.mxu0 0.0
    %4366 = vmatpush.msra.mxu0 0.0
    %4367 = vmatpush.msra.mxu0 %v3678
    %4368 = vmatmul.f32.gmra.mxu0 %v4341
    %v4369 = vpop.f32.mrf.mxu0
    %v4370 = vadd.f32 %v4329, %v4369
    %4371 = vmatmul.f32.gmra.mxu0 %v4344
    %v4372 = vpop.f32.mrf.mxu0
    %v4373 = vadd.f32 %v4332, %v4372
    %4374 = vmatmul.f32.gmra.mxu0 %v4347
    %v4375 = vpop.f32.mrf.mxu0
    %v4376 = vadd.f32 %v4335, %v4375
    %4377 = vmatmul.f32.gmra.mxu0 %v4350
    %v4378 = vpop.f32.mrf.mxu0
    %v4379 = vadd.f32 %v4338, %v4378
    %4380 = vdwg.mxu0
    %4381 = vrot.lane.b32.xlu0 %v3716, 112
    %v4382 = vpop.permute.xlu0 %4381
    %4383 = vrot.lane.b32.xlu0 %v3760, 112
    %v4384 = vpop.permute.xlu0 %4383
    %v4385 = vsel %vm493, %v4382, 0
    %v4387 = vsel %vm493, %v4384, 0
    %4389 = vmatpush.xpose.msra.mxu0 0.0
    %4390 = vmatpush.xpose.msra.mxu0 0.0
    %4391 = vmatpush.xpose.msra.mxu0 0.0
    %4392 = vmatpush.xpose.msra.mxu0 0.0
    %4393 = vmatpush.xpose.msra.mxu0 0.0
    %4394 = vmatpush.xpose.msra.mxu0 0.0
    %4395 = vmatpush.xpose.msra.mxu0 0.0
    %4396 = vmatpush.xpose.msra.mxu0 0.0
    %4397 = vmatpush.xpose.msra.mxu0 0.0
    %4398 = vmatpush.xpose.msra.mxu0 0.0
    %4399 = vmatpush.xpose.msra.mxu0 0.0
    %4400 = vmatpush.xpose.msra.mxu0 0.0
    %4401 = vmatpush.xpose.msra.mxu0 0.0
    %4402 = vmatpush.xpose.msra.mxu0 0.0
    %4403 = vmatpush.xpose.msra.mxu0 0.0
    %4404 = vmatpush.xpose.msra.mxu0 %v4387
    %4405 = vmatmul.f32.gmra.mxu0 %v4385
    %v4406 = vpop.f32.mrf.mxu0
    %v4407 = vadd.f32 0.0, %v4406
    %4408 = vdwg.mxu0
    %4409 = vrot.lane.b32.xlu0 %v3719, 112
    %v4410 = vpop.permute.xlu0 %4409
    %4411 = vrot.lane.b32.xlu0 %v3763, 112
    %v4412 = vpop.permute.xlu0 %4411
    %v4413 = vsel %vm493, %v4410, 0
    %v4415 = vsel %vm493, %v4412, 0
    %4417 = vmatpush.xpose.msra.mxu0 0.0
    %4418 = vmatpush.xpose.msra.mxu0 0.0
    %4419 = vmatpush.xpose.msra.mxu0 0.0
    %4420 = vmatpush.xpose.msra.mxu0 0.0
    %4421 = vmatpush.xpose.msra.mxu0 0.0
    %4422 = vmatpush.xpose.msra.mxu0 0.0
    %4423 = vmatpush.xpose.msra.mxu0 0.0
    %4424 = vmatpush.xpose.msra.mxu0 0.0
    %4425 = vmatpush.xpose.msra.mxu0 0.0
    %4426 = vmatpush.xpose.msra.mxu0 0.0
    %4427 = vmatpush.xpose.msra.mxu0 0.0
    %4428 = vmatpush.xpose.msra.mxu0 0.0
    %4429 = vmatpush.xpose.msra.mxu0 0.0
    %4430 = vmatpush.xpose.msra.mxu0 0.0
    %4431 = vmatpush.xpose.msra.mxu0 0.0
    %4432 = vmatpush.xpose.msra.mxu0 %v4415
    %4433 = vmatmul.f32.gmra.mxu0 %v4413
    %v4434 = vpop.f32.mrf.mxu0
    %v4435 = vadd.f32 0.0, %v4434
    %4436 = vdwg.mxu0
    %4437 = vrot.lane.b32.xlu0 %v3722, 112
    %v4438 = vpop.permute.xlu0 %4437
    %4439 = vrot.lane.b32.xlu0 %v3766, 112
    %v4440 = vpop.permute.xlu0 %4439
    %v4441 = vsel %vm493, %v4438, 0
    %v4443 = vsel %vm493, %v4440, 0
    %4445 = vmatpush.xpose.msra.mxu0 0.0
    %4446 = vmatpush.xpose.msra.mxu0 0.0
    %4447 = vmatpush.xpose.msra.mxu0 0.0
    %4448 = vmatpush.xpose.msra.mxu0 0.0
    %4449 = vmatpush.xpose.msra.mxu0 0.0
    %4450 = vmatpush.xpose.msra.mxu0 0.0
    %4451 = vmatpush.xpose.msra.mxu0 0.0
    %4452 = vmatpush.xpose.msra.mxu0 0.0
    %4453 = vmatpush.xpose.msra.mxu0 0.0
    %4454 = vmatpush.xpose.msra.mxu0 0.0
    %4455 = vmatpush.xpose.msra.mxu0 0.0
    %4456 = vmatpush.xpose.msra.mxu0 0.0
    %4457 = vmatpush.xpose.msra.mxu0 0.0
    %4458 = vmatpush.xpose.msra.mxu0 0.0
    %4459 = vmatpush.xpose.msra.mxu0 0.0
    %4460 = vmatpush.xpose.msra.mxu0 %v4443
    %4461 = vmatmul.f32.gmra.mxu0 %v4441
    %v4462 = vpop.f32.mrf.mxu0
    %v4463 = vadd.f32 0.0, %v4462
    %4464 = vdwg.mxu0
    %4465 = vrot.lane.b32.xlu0 %v3725, 112
    %v4466 = vpop.permute.xlu0 %4465
    %4467 = vrot.lane.b32.xlu0 %v3769, 112
    %v4468 = vpop.permute.xlu0 %4467
    %v4469 = vsel %vm493, %v4466, 0
    %v4471 = vsel %vm493, %v4468, 0
    %4473 = vmatpush.xpose.msra.mxu0 0.0
    %4474 = vmatpush.xpose.msra.mxu0 0.0
    %4475 = vmatpush.xpose.msra.mxu0 0.0
    %4476 = vmatpush.xpose.msra.mxu0 0.0
    %4477 = vmatpush.xpose.msra.mxu0 0.0
    %4478 = vmatpush.xpose.msra.mxu0 0.0
    %4479 = vmatpush.xpose.msra.mxu0 0.0
    %4480 = vmatpush.xpose.msra.mxu0 0.0
    %4481 = vmatpush.xpose.msra.mxu0 0.0
    %4482 = vmatpush.xpose.msra.mxu0 0.0
    %4483 = vmatpush.xpose.msra.mxu0 0.0
    %4484 = vmatpush.xpose.msra.mxu0 0.0
    %4485 = vmatpush.xpose.msra.mxu0 0.0
    %4486 = vmatpush.xpose.msra.mxu0 0.0
    %4487 = vmatpush.xpose.msra.mxu0 0.0
    %4488 = vmatpush.xpose.msra.mxu0 %v4471
    %4489 = vmatmul.f32.gmra.mxu0 %v4469
    %v4490 = vpop.f32.mrf.mxu0
    %v4491 = vadd.f32 0.0, %v4490
    %4492 = vdwg.mxu0
    %v4493 = vmul.f32 %v4407, 0.35355338
    %v4494 = vmul.f32 %v4435, 0.35355338
    %v4495 = vmul.f32 %v4463, 0.35355338
    %v4496 = vmul.f32 %v4491, 0.35355338
    %v4497 = vadd.f32 %v4493, %v604
    %v4498 = vadd.f32 %v4494, %v604
    %v4499 = vadd.f32 %v4495, %v604
    %v4500 = vadd.f32 %v4496, %v604
    %v4501 = vsel %vm493, %v4497, -inf
    %4502 = vmax.xlane.f32.xlu0 %v4501
    %v4503 = vpop.xlane.xlu0 %4502
    %v4504 = vsel %vm493, %v4498, -inf
    %4505 = vmax.xlane.f32.xlu0 %v4504
    %v4506 = vpop.xlane.xlu0 %4505
    %v4507 = vsel %vm493, %v4499, -inf
    %4508 = vmax.xlane.f32.xlu0 %v4507
    %v4509 = vpop.xlane.xlu0 %4508
    %v4510 = vsel %vm493, %v4500, -inf
    %4511 = vmax.xlane.f32.xlu0 %v4510
    %v4512 = vpop.xlane.xlu0 %4511
    %v4513 = vsub.f32 %v4497, %v4503
    %v4514 = vsub.f32 %v4498, %v4506
    %v4515 = vsub.f32 %v4499, %v4509
    %v4516 = vsub.f32 %v4500, %v4512
    %v4517 = vmul.f32 %v4513, 1.442695
    %v4518 = vpow.pop %v4517
    %v4519 = vmul.f32 %v4514, 1.442695
    %v4520 = vpow.pop %v4519
    %v4521 = vmul.f32 %v4515, 1.442695
    %v4522 = vpow.pop %v4521
    %v4523 = vmul.f32 %v4516, 1.442695
    %v4524 = vpow.pop %v4523
    %v4525 = vsel %vm493, %v4518, 0.0
    %4526 = vadd.xlane.f32.xlu0 %v4525
    %v4527 = vpop.xlane.xlu0 %4526
    %v4528 = vsel %vm493, %v4520, 0.0
    %4529 = vadd.xlane.f32.xlu0 %v4528
    %v4530 = vpop.xlane.xlu0 %4529
    %v4531 = vsel %vm493, %v4522, 0.0
    %4532 = vadd.xlane.f32.xlu0 %v4531
    %v4533 = vpop.xlane.xlu0 %4532
    %v4534 = vsel %vm493, %v4524, 0.0
    %4535 = vadd.xlane.f32.xlu0 %v4534
    %v4536 = vpop.xlane.xlu0 %4535
    %v4537 = vrcp.pop %v4527
    %v4538 = vrcp.pop %v4530
    %v4539 = vrcp.pop %v4533
    %v4540 = vrcp.pop %v4536
    %v4541 = vmul.f32 %v4518, %v4537
    %v4542 = vmul.f32 %v4520, %v4538
    %v4543 = vmul.f32 %v4522, %v4539
    %v4544 = vmul.f32 %v4524, %v4540
    %4545 = vrot.lane.b32.xlu0 %v3760, 80
    %v4546 = vpop.permute.xlu0 %4545
    %v4549 = vsel %vm493, %v4541, 0
    %4551 = vmatpush.msra.mxu0 0.0
    %4552 = vmatpush.msra.mxu0 0.0
    %4553 = vmatpush.msra.mxu0 0.0
    %4554 = vmatpush.msra.mxu0 0.0
    %4555 = vmatpush.msra.mxu0 0.0
    %4556 = vmatpush.msra.mxu0 0.0
    %4557 = vmatpush.msra.mxu0 0.0
    %4558 = vmatpush.msra.mxu0 0.0
    %4559 = vmatpush.msra.mxu0 0.0
    %4560 = vmatpush.msra.mxu0 0.0
    %4561 = vmatpush.msra.mxu0 0.0
    %4562 = vmatpush.msra.mxu0 0.0
    %4563 = vmatpush.msra.mxu0 0.0
    %4564 = vmatpush.msra.mxu0 0.0
    %4565 = vmatpush.msra.mxu0 0.0
    %4566 = vmatpush.msra.mxu0 %v4546
    %4567 = vmatmul.f32.gmra.mxu0 %v4549
    %v4568 = vpop.f32.mrf.mxu0
    %v4569 = vadd.f32 0.0, %v4568
    %4570 = vdwg.mxu0
    %4571 = vrot.lane.b32.xlu0 %v3763, 80
    %v4572 = vpop.permute.xlu0 %4571
    %v4575 = vsel %vm493, %v4542, 0
    %4577 = vmatpush.msra.mxu0 0.0
    %4578 = vmatpush.msra.mxu0 0.0
    %4579 = vmatpush.msra.mxu0 0.0
    %4580 = vmatpush.msra.mxu0 0.0
    %4581 = vmatpush.msra.mxu0 0.0
    %4582 = vmatpush.msra.mxu0 0.0
    %4583 = vmatpush.msra.mxu0 0.0
    %4584 = vmatpush.msra.mxu0 0.0
    %4585 = vmatpush.msra.mxu0 0.0
    %4586 = vmatpush.msra.mxu0 0.0
    %4587 = vmatpush.msra.mxu0 0.0
    %4588 = vmatpush.msra.mxu0 0.0
    %4589 = vmatpush.msra.mxu0 0.0
    %4590 = vmatpush.msra.mxu0 0.0
    %4591 = vmatpush.msra.mxu0 0.0
    %4592 = vmatpush.msra.mxu0 %v4572
    %4593 = vmatmul.f32.gmra.mxu0 %v4575
    %v4594 = vpop.f32.mrf.mxu0
    %v4595 = vadd.f32 0.0, %v4594
    %4596 = vdwg.mxu0
    %4597 = vrot.lane.b32.xlu0 %v3766, 80
    %v4598 = vpop.permute.xlu0 %4597
    %v4601 = vsel %vm493, %v4543, 0
    %4603 = vmatpush.msra.mxu0 0.0
    %4604 = vmatpush.msra.mxu0 0.0
    %4605 = vmatpush.msra.mxu0 0.0
    %4606 = vmatpush.msra.mxu0 0.0
    %4607 = vmatpush.msra.mxu0 0.0
    %4608 = vmatpush.msra.mxu0 0.0
    %4609 = vmatpush.msra.mxu0 0.0
    %4610 = vmatpush.msra.mxu0 0.0
    %4611 = vmatpush.msra.mxu0 0.0
    %4612 = vmatpush.msra.mxu0 0.0
    %4613 = vmatpush.msra.mxu0 0.0
    %4614 = vmatpush.msra.mxu0 0.0
    %4615 = vmatpush.msra.mxu0 0.0
    %4616 = vmatpush.msra.mxu0 0.0
    %4617 = vmatpush.msra.mxu0 0.0
    %4618 = vmatpush.msra.mxu0 %v4598
    %4619 = vmatmul.f32.gmra.mxu0 %v4601
    %v4620 = vpop.f32.mrf.mxu0
    %v4621 = vadd.f32 0.0, %v4620
    %4622 = vdwg.mxu0
    %4623 = vrot.lane.b32.xlu0 %v3769, 80
    %v4624 = vpop.permute.xlu0 %4623
    %v4627 = vsel %vm493, %v4544, 0
    %4629 = vmatpush.msra.mxu0 0.0
    %4630 = vmatpush.msra.mxu0 0.0
    %4631 = vmatpush.msra.mxu0 0.0
    %4632 = vmatpush.msra.mxu0 0.0
    %4633 = vmatpush.msra.mxu0 0.0
    %4634 = vmatpush.msra.mxu0 0.0
    %4635 = vmatpush.msra.mxu0 0.0
    %4636 = vmatpush.msra.mxu0 0.0
    %4637 = vmatpush.msra.mxu0 0.0
    %4638 = vmatpush.msra.mxu0 0.0
    %4639 = vmatpush.msra.mxu0 0.0
    %4640 = vmatpush.msra.mxu0 0.0
    %4641 = vmatpush.msra.mxu0 0.0
    %4642 = vmatpush.msra.mxu0 0.0
    %4643 = vmatpush.msra.mxu0 0.0
    %4644 = vmatpush.msra.mxu0 %v4624
    %4645 = vmatmul.f32.gmra.mxu0 %v4627
    %v4646 = vpop.f32.mrf.mxu0
    %v4647 = vadd.f32 0.0, %v4646
    %4648 = vdwg.mxu0
    %v4650 = vsel %vm493, %v4569, 0
    %v4653 = vsel %vm493, %v4595, 0
    %v4656 = vsel %vm493, %v4621, 0
    %v4659 = vsel %vm493, %v4647, 0
    %4661 = vmatpush.msra.mxu0 0.0
    %4662 = vmatpush.msra.mxu0 0.0
    %4663 = vmatpush.msra.mxu0 0.0
    %4664 = vmatpush.msra.mxu0 0.0
    %4665 = vmatpush.msra.mxu0 0.0
    %4666 = vmatpush.msra.mxu0 0.0
    %4667 = vmatpush.msra.mxu0 0.0
    %4668 = vmatpush.msra.mxu0 0.0
    %4669 = vmatpush.msra.mxu0 0.0
    %4670 = vmatpush.msra.mxu0 0.0
    %4671 = vmatpush.msra.mxu0 0.0
    %4672 = vmatpush.msra.mxu0 0.0
    %4673 = vmatpush.msra.mxu0 0.0
    %4674 = vmatpush.msra.mxu0 0.0
    %4675 = vmatpush.msra.mxu0 0.0
    %4676 = vmatpush.msra.mxu0 %v3680
    %4677 = vmatmul.f32.gmra.mxu0 %v4650
    %v4678 = vpop.f32.mrf.mxu0
    %v4679 = vadd.f32 0.0, %v4678
    %4680 = vmatmul.f32.gmra.mxu0 %v4653
    %v4681 = vpop.f32.mrf.mxu0
    %v4682 = vadd.f32 0.0, %v4681
    %4683 = vmatmul.f32.gmra.mxu0 %v4656
    %v4684 = vpop.f32.mrf.mxu0
    %v4685 = vadd.f32 0.0, %v4684
    %4686 = vmatmul.f32.gmra.mxu0 %v4659
    %v4687 = vpop.f32.mrf.mxu0
    %v4688 = vadd.f32 0.0, %v4687
    %4689 = vdwg.mxu0
    %v4690 = vadd.f32 %v4370, %v4679
    %v4691 = vadd.f32 %v4373, %v4682
    %v4692 = vadd.f32 %v4376, %v4685
    %v4693 = vadd.f32 %v4379, %v4688
    %4694 = vrot.lane.b32.xlu0 %v3716, 104
    %v4695 = vpop.permute.xlu0 %4694
    %4696 = vrot.lane.b32.xlu0 %v3760, 104
    %v4697 = vpop.permute.xlu0 %4696
    %v4698 = vsel %vm493, %v4695, 0
    %v4700 = vsel %vm493, %v4697, 0
    %4702 = vmatpush.xpose.msra.mxu0 0.0
    %4703 = vmatpush.xpose.msra.mxu0 0.0
    %4704 = vmatpush.xpose.msra.mxu0 0.0
    %4705 = vmatpush.xpose.msra.mxu0 0.0
    %4706 = vmatpush.xpose.msra.mxu0 0.0
    %4707 = vmatpush.xpose.msra.mxu0 0.0
    %4708 = vmatpush.xpose.msra.mxu0 0.0
    %4709 = vmatpush.xpose.msra.mxu0 0.0
    %4710 = vmatpush.xpose.msra.mxu0 0.0
    %4711 = vmatpush.xpose.msra.mxu0 0.0
    %4712 = vmatpush.xpose.msra.mxu0 0.0
    %4713 = vmatpush.xpose.msra.mxu0 0.0
    %4714 = vmatpush.xpose.msra.mxu0 0.0
    %4715 = vmatpush.xpose.msra.mxu0 0.0
    %4716 = vmatpush.xpose.msra.mxu0 0.0
    %4717 = vmatpush.xpose.msra.mxu0 %v4700
    %4718 = vmatmul.f32.gmra.mxu0 %v4698
    %v4719 = vpop.f32.mrf.mxu0
    %v4720 = vadd.f32 0.0, %v4719
    %4721 = vdwg.mxu0
    %4722 = vrot.lane.b32.xlu0 %v3719, 104
    %v4723 = vpop.permute.xlu0 %4722
    %4724 = vrot.lane.b32.xlu0 %v3763, 104
    %v4725 = vpop.permute.xlu0 %4724
    %v4726 = vsel %vm493, %v4723, 0
    %v4728 = vsel %vm493, %v4725, 0
    %4730 = vmatpush.xpose.msra.mxu0 0.0
    %4731 = vmatpush.xpose.msra.mxu0 0.0
    %4732 = vmatpush.xpose.msra.mxu0 0.0
    %4733 = vmatpush.xpose.msra.mxu0 0.0
    %4734 = vmatpush.xpose.msra.mxu0 0.0
    %4735 = vmatpush.xpose.msra.mxu0 0.0
    %4736 = vmatpush.xpose.msra.mxu0 0.0
    %4737 = vmatpush.xpose.msra.mxu0 0.0
    %4738 = vmatpush.xpose.msra.mxu0 0.0
    %4739 = vmatpush.xpose.msra.mxu0 0.0
    %4740 = vmatpush.xpose.msra.mxu0 0.0
    %4741 = vmatpush.xpose.msra.mxu0 0.0
    %4742 = vmatpush.xpose.msra.mxu0 0.0
    %4743 = vmatpush.xpose.msra.mxu0 0.0
    %4744 = vmatpush.xpose.msra.mxu0 0.0
    %4745 = vmatpush.xpose.msra.mxu0 %v4728
    %4746 = vmatmul.f32.gmra.mxu0 %v4726
    %v4747 = vpop.f32.mrf.mxu0
    %v4748 = vadd.f32 0.0, %v4747
    %4749 = vdwg.mxu0
    %4750 = vrot.lane.b32.xlu0 %v3722, 104
    %v4751 = vpop.permute.xlu0 %4750
    %4752 = vrot.lane.b32.xlu0 %v3766, 104
    %v4753 = vpop.permute.xlu0 %4752
    %v4754 = vsel %vm493, %v4751, 0
    %v4756 = vsel %vm493, %v4753, 0
    %4758 = vmatpush.xpose.msra.mxu0 0.0
    %4759 = vmatpush.xpose.msra.mxu0 0.0
    %4760 = vmatpush.xpose.msra.mxu0 0.0
    %4761 = vmatpush.xpose.msra.mxu0 0.0
    %4762 = vmatpush.xpose.msra.mxu0 0.0
    %4763 = vmatpush.xpose.msra.mxu0 0.0
    %4764 = vmatpush.xpose.msra.mxu0 0.0
    %4765 = vmatpush.xpose.msra.mxu0 0.0
    %4766 = vmatpush.xpose.msra.mxu0 0.0
    %4767 = vmatpush.xpose.msra.mxu0 0.0
    %4768 = vmatpush.xpose.msra.mxu0 0.0
    %4769 = vmatpush.xpose.msra.mxu0 0.0
    %4770 = vmatpush.xpose.msra.mxu0 0.0
    %4771 = vmatpush.xpose.msra.mxu0 0.0
    %4772 = vmatpush.xpose.msra.mxu0 0.0
    %4773 = vmatpush.xpose.msra.mxu0 %v4756
    %4774 = vmatmul.f32.gmra.mxu0 %v4754
    %v4775 = vpop.f32.mrf.mxu0
    %v4776 = vadd.f32 0.0, %v4775
    %4777 = vdwg.mxu0
    %4778 = vrot.lane.b32.xlu0 %v3725, 104
    %v4779 = vpop.permute.xlu0 %4778
    %4780 = vrot.lane.b32.xlu0 %v3769, 104
    %v4781 = vpop.permute.xlu0 %4780
    %v4782 = vsel %vm493, %v4779, 0
    %v4784 = vsel %vm493, %v4781, 0
    %4786 = vmatpush.xpose.msra.mxu0 0.0
    %4787 = vmatpush.xpose.msra.mxu0 0.0
    %4788 = vmatpush.xpose.msra.mxu0 0.0
    %4789 = vmatpush.xpose.msra.mxu0 0.0
    %4790 = vmatpush.xpose.msra.mxu0 0.0
    %4791 = vmatpush.xpose.msra.mxu0 0.0
    %4792 = vmatpush.xpose.msra.mxu0 0.0
    %4793 = vmatpush.xpose.msra.mxu0 0.0
    %4794 = vmatpush.xpose.msra.mxu0 0.0
    %4795 = vmatpush.xpose.msra.mxu0 0.0
    %4796 = vmatpush.xpose.msra.mxu0 0.0
    %4797 = vmatpush.xpose.msra.mxu0 0.0
    %4798 = vmatpush.xpose.msra.mxu0 0.0
    %4799 = vmatpush.xpose.msra.mxu0 0.0
    %4800 = vmatpush.xpose.msra.mxu0 0.0
    %4801 = vmatpush.xpose.msra.mxu0 %v4784
    %4802 = vmatmul.f32.gmra.mxu0 %v4782
    %v4803 = vpop.f32.mrf.mxu0
    %v4804 = vadd.f32 0.0, %v4803
    %4805 = vdwg.mxu0
    %v4806 = vmul.f32 %v4720, 0.35355338
    %v4807 = vmul.f32 %v4748, 0.35355338
    %v4808 = vmul.f32 %v4776, 0.35355338
    %v4809 = vmul.f32 %v4804, 0.35355338
    %v4810 = vadd.f32 %v4806, %v604
    %v4811 = vadd.f32 %v4807, %v604
    %v4812 = vadd.f32 %v4808, %v604
    %v4813 = vadd.f32 %v4809, %v604
    %v4814 = vsel %vm493, %v4810, -inf
    %4815 = vmax.xlane.f32.xlu0 %v4814
    %v4816 = vpop.xlane.xlu0 %4815
    %v4817 = vsel %vm493, %v4811, -inf
    %4818 = vmax.xlane.f32.xlu0 %v4817
    %v4819 = vpop.xlane.xlu0 %4818
    %v4820 = vsel %vm493, %v4812, -inf
    %4821 = vmax.xlane.f32.xlu0 %v4820
    %v4822 = vpop.xlane.xlu0 %4821
    %v4823 = vsel %vm493, %v4813, -inf
    %4824 = vmax.xlane.f32.xlu0 %v4823
    %v4825 = vpop.xlane.xlu0 %4824
    %v4826 = vsub.f32 %v4810, %v4816
    %v4827 = vsub.f32 %v4811, %v4819
    %v4828 = vsub.f32 %v4812, %v4822
    %v4829 = vsub.f32 %v4813, %v4825
    %v4830 = vmul.f32 %v4826, 1.442695
    %v4831 = vpow.pop %v4830
    %v4832 = vmul.f32 %v4827, 1.442695
    %v4833 = vpow.pop %v4832
    %v4834 = vmul.f32 %v4828, 1.442695
    %v4835 = vpow.pop %v4834
    %v4836 = vmul.f32 %v4829, 1.442695
    %v4837 = vpow.pop %v4836
    %v4838 = vsel %vm493, %v4831, 0.0
    %4839 = vadd.xlane.f32.xlu0 %v4838
    %v4840 = vpop.xlane.xlu0 %4839
    %v4841 = vsel %vm493, %v4833, 0.0
    %4842 = vadd.xlane.f32.xlu0 %v4841
    %v4843 = vpop.xlane.xlu0 %4842
    %v4844 = vsel %vm493, %v4835, 0.0
    %4845 = vadd.xlane.f32.xlu0 %v4844
    %v4846 = vpop.xlane.xlu0 %4845
    %v4847 = vsel %vm493, %v4837, 0.0
    %4848 = vadd.xlane.f32.xlu0 %v4847
    %v4849 = vpop.xlane.xlu0 %4848
    %v4850 = vrcp.pop %v4840
    %v4851 = vrcp.pop %v4843
    %v4852 = vrcp.pop %v4846
    %v4853 = vrcp.pop %v4849
    %v4854 = vmul.f32 %v4831, %v4850
    %v4855 = vmul.f32 %v4833, %v4851
    %v4856 = vmul.f32 %v4835, %v4852
    %v4857 = vmul.f32 %v4837, %v4853
    %4858 = vrot.lane.b32.xlu0 %v3760, 72
    %v4859 = vpop.permute.xlu0 %4858
    %v4862 = vsel %vm493, %v4854, 0
    %4864 = vmatpush.msra.mxu0 0.0
    %4865 = vmatpush.msra.mxu0 0.0
    %4866 = vmatpush.msra.mxu0 0.0
    %4867 = vmatpush.msra.mxu0 0.0
    %4868 = vmatpush.msra.mxu0 0.0
    %4869 = vmatpush.msra.mxu0 0.0
    %4870 = vmatpush.msra.mxu0 0.0
    %4871 = vmatpush.msra.mxu0 0.0
    %4872 = vmatpush.msra.mxu0 0.0
    %4873 = vmatpush.msra.mxu0 0.0
    %4874 = vmatpush.msra.mxu0 0.0
    %4875 = vmatpush.msra.mxu0 0.0
    %4876 = vmatpush.msra.mxu0 0.0
    %4877 = vmatpush.msra.mxu0 0.0
    %4878 = vmatpush.msra.mxu0 0.0
    %4879 = vmatpush.msra.mxu0 %v4859
    %4880 = vmatmul.f32.gmra.mxu0 %v4862
    %v4881 = vpop.f32.mrf.mxu0
    %v4882 = vadd.f32 0.0, %v4881
    %4883 = vdwg.mxu0
    %4884 = vrot.lane.b32.xlu0 %v3763, 72
    %v4885 = vpop.permute.xlu0 %4884
    %v4888 = vsel %vm493, %v4855, 0
    %4890 = vmatpush.msra.mxu0 0.0
    %4891 = vmatpush.msra.mxu0 0.0
    %4892 = vmatpush.msra.mxu0 0.0
    %4893 = vmatpush.msra.mxu0 0.0
    %4894 = vmatpush.msra.mxu0 0.0
    %4895 = vmatpush.msra.mxu0 0.0
    %4896 = vmatpush.msra.mxu0 0.0
    %4897 = vmatpush.msra.mxu0 0.0
    %4898 = vmatpush.msra.mxu0 0.0
    %4899 = vmatpush.msra.mxu0 0.0
    %4900 = vmatpush.msra.mxu0 0.0
    %4901 = vmatpush.msra.mxu0 0.0
    %4902 = vmatpush.msra.mxu0 0.0
    %4903 = vmatpush.msra.mxu0 0.0
    %4904 = vmatpush.msra.mxu0 0.0
    %4905 = vmatpush.msra.mxu0 %v4885
    %4906 = vmatmul.f32.gmra.mxu0 %v4888
    %v4907 = vpop.f32.mrf.mxu0
    %v4908 = vadd.f32 0.0, %v4907
    %4909 = vdwg.mxu0
    %4910 = vrot.lane.b32.xlu0 %v3766, 72
    %v4911 = vpop.permute.xlu0 %4910
    %v4914 = vsel %vm493, %v4856, 0
    %4916 = vmatpush.msra.mxu0 0.0
    %4917 = vmatpush.msra.mxu0 0.0
    %4918 = vmatpush.msra.mxu0 0.0
    %4919 = vmatpush.msra.mxu0 0.0
    %4920 = vmatpush.msra.mxu0 0.0
    %4921 = vmatpush.msra.mxu0 0.0
    %4922 = vmatpush.msra.mxu0 0.0
    %4923 = vmatpush.msra.mxu0 0.0
    %4924 = vmatpush.msra.mxu0 0.0
    %4925 = vmatpush.msra.mxu0 0.0
    %4926 = vmatpush.msra.mxu0 0.0
    %4927 = vmatpush.msra.mxu0 0.0
    %4928 = vmatpush.msra.mxu0 0.0
    %4929 = vmatpush.msra.mxu0 0.0
    %4930 = vmatpush.msra.mxu0 0.0
    %4931 = vmatpush.msra.mxu0 %v4911
    %4932 = vmatmul.f32.gmra.mxu0 %v4914
    %v4933 = vpop.f32.mrf.mxu0
    %v4934 = vadd.f32 0.0, %v4933
    %4935 = vdwg.mxu0
    %4936 = vrot.lane.b32.xlu0 %v3769, 72
    %v4937 = vpop.permute.xlu0 %4936
    %v4940 = vsel %vm493, %v4857, 0
    %4942 = vmatpush.msra.mxu0 0.0
    %4943 = vmatpush.msra.mxu0 0.0
    %4944 = vmatpush.msra.mxu0 0.0
    %4945 = vmatpush.msra.mxu0 0.0
    %4946 = vmatpush.msra.mxu0 0.0
    %4947 = vmatpush.msra.mxu0 0.0
    %4948 = vmatpush.msra.mxu0 0.0
    %4949 = vmatpush.msra.mxu0 0.0
    %4950 = vmatpush.msra.mxu0 0.0
    %4951 = vmatpush.msra.mxu0 0.0
    %4952 = vmatpush.msra.mxu0 0.0
    %4953 = vmatpush.msra.mxu0 0.0
    %4954 = vmatpush.msra.mxu0 0.0
    %4955 = vmatpush.msra.mxu0 0.0
    %4956 = vmatpush.msra.mxu0 0.0
    %4957 = vmatpush.msra.mxu0 %v4937
    %4958 = vmatmul.f32.gmra.mxu0 %v4940
    %v4959 = vpop.f32.mrf.mxu0
    %v4960 = vadd.f32 0.0, %v4959
    %4961 = vdwg.mxu0
    %v4963 = vsel %vm493, %v4882, 0
    %v4966 = vsel %vm493, %v4908, 0
    %v4969 = vsel %vm493, %v4934, 0
    %v4972 = vsel %vm493, %v4960, 0
    %4974 = vmatpush.msra.mxu0 0.0
    %4975 = vmatpush.msra.mxu0 0.0
    %4976 = vmatpush.msra.mxu0 0.0
    %4977 = vmatpush.msra.mxu0 0.0
    %4978 = vmatpush.msra.mxu0 0.0
    %4979 = vmatpush.msra.mxu0 0.0
    %4980 = vmatpush.msra.mxu0 0.0
    %4981 = vmatpush.msra.mxu0 0.0
    %4982 = vmatpush.msra.mxu0 0.0
    %4983 = vmatpush.msra.mxu0 0.0
    %4984 = vmatpush.msra.mxu0 0.0
    %4985 = vmatpush.msra.mxu0 0.0
    %4986 = vmatpush.msra.mxu0 0.0
    %4987 = vmatpush.msra.mxu0 0.0
    %4988 = vmatpush.msra.mxu0 0.0
    %4989 = vmatpush.msra.mxu0 %v3681
    %4990 = vmatmul.f32.gmra.mxu0 %v4963
    %v4991 = vpop.f32.mrf.mxu0
    %v4992 = vadd.f32 0.0, %v4991
    %4993 = vmatmul.f32.gmra.mxu0 %v4966
    %v4994 = vpop.f32.mrf.mxu0
    %v4995 = vadd.f32 0.0, %v4994
    %4996 = vmatmul.f32.gmra.mxu0 %v4969
    %v4997 = vpop.f32.mrf.mxu0
    %v4998 = vadd.f32 0.0, %v4997
    %4999 = vmatmul.f32.gmra.mxu0 %v4972
    %v5000 = vpop.f32.mrf.mxu0
    %v5001 = vadd.f32 0.0, %v5000
    %5002 = vdwg.mxu0
    %v5003 = vadd.f32 %v4690, %v4992
    %v5004 = vadd.f32 %v4691, %v4995
    %v5005 = vadd.f32 %v4692, %v4998
    %v5006 = vadd.f32 %v4693, %v5001
    %v5008 = vperm.slane %v3682, 0
    %v5010 = vadd.f32 %v5003, %v5008
    %v5011 = vadd.f32 %v5004, %v5008
    %v5012 = vadd.f32 %v5005, %v5008
    %v5013 = vadd.f32 %v5006, %v5008
    %v5014 = vadd.f32 %v3664, %v5010
    %v5015 = vadd.f32 %v3665, %v5011
    %v5016 = vadd.f32 %v3666, %v5012
    %v5017 = vadd.f32 %v3667, %v5013
    %v5018 = vld [vmem:[%s33] sm:$0x1]
    %v5019 = vld [vmem:[%s31] sm:$0x1]
    %v5020 = vsel %vm326, %v5014, 0.0
    %5021 = vadd.xlane.f32.xlu0 %v5020
    %v5022 = vpop.xlane.xlu0 %5021
    %v5023 = vsel %vm326, %v5015, 0.0
    %5024 = vadd.xlane.f32.xlu0 %v5023
    %v5025 = vpop.xlane.xlu0 %5024
    %v5026 = vsel %vm326, %v5016, 0.0
    %5027 = vadd.xlane.f32.xlu0 %v5026
    %v5028 = vpop.xlane.xlu0 %5027
    %v5029 = vsel %vm326, %v5017, 0.0
    %5030 = vadd.xlane.f32.xlu0 %v5029
    %v5031 = vpop.xlane.xlu0 %5030
    %v5032 = vmul.f32 %v5022, %v345
    %v5033 = vmul.f32 %v5025, %v345
    %v5034 = vmul.f32 %v5028, %v345
    %v5035 = vmul.f32 %v5031, %v345
    %v5036 = vsub.f32 %v5014, %v5032
    %v5037 = vsub.f32 %v5015, %v5033
    %v5038 = vsub.f32 %v5016, %v5034
    %v5039 = vsub.f32 %v5017, %v5035
    %v5040 = vmul.f32 %v5036, %v5036
    %v5041 = vmul.f32 %v5037, %v5037
    %v5042 = vmul.f32 %v5038, %v5038
    %v5043 = vmul.f32 %v5039, %v5039
    %v5044 = vsel %vm326, %v5040, 0.0
    %5045 = vadd.xlane.f32.xlu0 %v5044
    %v5046 = vpop.xlane.xlu0 %5045
    %v5047 = vsel %vm326, %v5041, 0.0
    %5048 = vadd.xlane.f32.xlu0 %v5047
    %v5049 = vpop.xlane.xlu0 %5048
    %v5050 = vsel %vm326, %v5042, 0.0
    %5051 = vadd.xlane.f32.xlu0 %v5050
    %v5052 = vpop.xlane.xlu0 %5051
    %v5053 = vsel %vm326, %v5043, 0.0
    %5054 = vadd.xlane.f32.xlu0 %v5053
    %v5055 = vpop.xlane.xlu0 %5054
    %v5056 = vmul.f32 %v5046, %v345
    %v5057 = vmul.f32 %v5049, %v345
    %v5058 = vmul.f32 %v5052, %v345
    %v5059 = vmul.f32 %v5055, %v345
    %v5060 = vadd.f32 %v5056, 1e-06
    %v5061 = vadd.f32 %v5057, 1e-06
    %v5062 = vadd.f32 %v5058, 1e-06
    %v5063 = vadd.f32 %v5059, 1e-06
    %v5064 = vrsqrt.pop %v5060
    %v5065 = vmul.f32 %v5064, %v5060
    %v5066 = vmul.f32 %v5065, %v5064
    %v5067 = vmul.f32 0.5, %v5066
    %v5068 = vsub.f32 1.5, %v5067
    %v5069 = vmul.f32 %v5064, %v5068
    %vm5070 = vweird.f32 %v5060
    %vm5071 = vweird.f32 %v5064
    %vm5072 = vmor %vm5070, %vm5071
    %v5073 = vsel %vm5072, %v5064, %v5069
    %v5074 = vrsqrt.pop %v5061
    %v5075 = vmul.f32 %v5074, %v5061
    %v5076 = vmul.f32 %v5075, %v5074
    %v5077 = vmul.f32 0.5, %v5076
    %v5078 = vsub.f32 1.5, %v5077
    %v5079 = vmul.f32 %v5074, %v5078
    %vm5080 = vweird.f32 %v5061
    %vm5081 = vweird.f32 %v5074
    %vm5082 = vmor %vm5080, %vm5081
    %v5083 = vsel %vm5082, %v5074, %v5079
    %v5084 = vrsqrt.pop %v5062
    %v5085 = vmul.f32 %v5084, %v5062
    %v5086 = vmul.f32 %v5085, %v5084
    %v5087 = vmul.f32 0.5, %v5086
    %v5088 = vsub.f32 1.5, %v5087
    %v5089 = vmul.f32 %v5084, %v5088
    %vm5090 = vweird.f32 %v5062
    %vm5091 = vweird.f32 %v5084
    %vm5092 = vmor %vm5090, %vm5091
    %v5093 = vsel %vm5092, %v5084, %v5089
    %v5094 = vrsqrt.pop %v5063
    %v5095 = vmul.f32 %v5094, %v5063
    %v5096 = vmul.f32 %v5095, %v5094
    %v5097 = vmul.f32 0.5, %v5096
    %v5098 = vsub.f32 1.5, %v5097
    %v5099 = vmul.f32 %v5094, %v5098
    %vm5100 = vweird.f32 %v5063
    %vm5101 = vweird.f32 %v5094
    %vm5102 = vmor %vm5100, %vm5101
    %v5103 = vsel %vm5102, %v5094, %v5099
    %v5104 = vmul.f32 %v5036, %v5073
    %v5105 = vmul.f32 %v5037, %v5083
    %v5106 = vmul.f32 %v5038, %v5093
    %v5107 = vmul.f32 %v5039, %v5103
    %v5109 = vperm.slane %v5018, 0
    %v5111 = vmul.f32 %v5104, %v5109
    %v5112 = vmul.f32 %v5105, %v5109
    %v5113 = vmul.f32 %v5106, %v5109
    %v5114 = vmul.f32 %v5107, %v5109
    %v5116 = vperm.slane %v5019, 0
    %v5118 = vadd.f32 %v5111, %v5116
    %v5119 = vadd.f32 %v5112, %v5116
    %v5120 = vadd.f32 %v5113, %v5116
    %v5121 = vadd.f32 %v5114, %v5116
    %v5122 = vld [vmem:[%s47] sm:$0xff]
    %v5123 = vld [vmem:[%s47 + $0x8] sm:$0xff]
    %v5124 = vld [vmem:[%s47 + $0x10] sm:$0xff]
    %v5125 = vld [vmem:[%s47 + $0x18] sm:$0xff]
    %v5126 = vld [vmem:[%s43] sm:$0x1]
    %v5127 = vld [vmem:[%s49] sm:$0xff]
    %v5128 = vld [vmem:[%s49 + $0x8] sm:$0xff]
    %v5129 = vld [vmem:[%s49 + $0x10] sm:$0xff]
    %v5130 = vld [vmem:[%s49 + $0x18] sm:$0xff]
    %v5131 = vld [vmem:[%s49 + $0x20] sm:$0xff]
    %v5132 = vld [vmem:[%s49 + $0x28] sm:$0xff]
    %v5133 = vld [vmem:[%s49 + $0x30] sm:$0xff]
    %v5134 = vld [vmem:[%s49 + $0x38] sm:$0xff]
    %v5135 = vld [vmem:[%s49 + $0x40] sm:$0xff]
    %v5136 = vld [vmem:[%s49 + $0x48] sm:$0xff]
    %v5137 = vld [vmem:[%s49 + $0x50] sm:$0xff]
    %v5138 = vld [vmem:[%s49 + $0x58] sm:$0xff]
    %v5139 = vld [vmem:[%s49 + $0x60] sm:$0xff]
    %v5140 = vld [vmem:[%s49 + $0x68] sm:$0xff]
    %v5141 = vld [vmem:[%s49 + $0x70] sm:$0xff]
    %v5142 = vld [vmem:[%s49 + $0x78] sm:$0xff]
    %v5143 = vld [vmem:[%s45] sm:$0x1]
    %v5145 = vperm.slane %v5126, 0
    %v5148 = vsel %vm326, %v5118, 0
    %v5151 = vsel %vm326, %v5119, 0
    %v5154 = vsel %vm326, %v5120, 0
    %v5157 = vsel %vm326, %v5121, 0
    %5159 = vmatpush.msra.mxu0 0.0
    %5160 = vmatpush.msra.mxu0 0.0
    %5161 = vmatpush.msra.mxu0 0.0
    %5162 = vmatpush.msra.mxu0 0.0
    %5163 = vmatpush.msra.mxu0 0.0
    %5164 = vmatpush.msra.mxu0 0.0
    %5165 = vmatpush.msra.mxu0 0.0
    %5166 = vmatpush.msra.mxu0 0.0
    %5167 = vmatpush.msra.mxu0 0.0
    %5168 = vmatpush.msra.mxu0 0.0
    %5169 = vmatpush.msra.mxu0 0.0
    %5170 = vmatpush.msra.mxu0 0.0
    %5171 = vmatpush.msra.mxu0 %v5125
    %5172 = vmatpush.msra.mxu0 %v5124
    %5173 = vmatpush.msra.mxu0 %v5123
    %5174 = vmatpush.msra.mxu0 %v5122
    %5175 = vmatmul.f32.gmra.mxu0 %v5148
    %v5176 = vpop.f32.mrf.mxu0
    %v5177 = vadd.f32 %v5145, %v5176
    %5178 = vmatmul.f32.gmra.mxu0 %v5151
    %v5179 = vpop.f32.mrf.mxu0
    %v5180 = vadd.f32 %v5145, %v5179
    %5181 = vmatmul.f32.gmra.mxu0 %v5154
    %v5182 = vpop.f32.mrf.mxu0
    %v5183 = vadd.f32 %v5145, %v5182
    %5184 = vmatmul.f32.gmra.mxu0 %v5157
    %v5185 = vpop.f32.mrf.mxu0
    %v5186 = vadd.f32 %v5145, %v5185
    %5187 = vdwg.mxu0
    %v5188 = vmul.f32 %v5177, %v5177
    %v5189 = vmul.f32 %v5180, %v5180
    %v5190 = vmul.f32 %v5183, %v5183
    %v5191 = vmul.f32 %v5186, %v5186
    %v5192 = vmul.f32 %v5177, %v5188
    %v5193 = vmul.f32 %v5180, %v5189
    %v5194 = vmul.f32 %v5183, %v5190
    %v5195 = vmul.f32 %v5186, %v5191
    %v5196 = vmul.f32 %v5192, 0.044715
    %v5197 = vmul.f32 %v5193, 0.044715
    %v5198 = vmul.f32 %v5194, 0.044715
    %v5199 = vmul.f32 %v5195, 0.044715
    %v5200 = vadd.f32 %v5177, %v5196
    %v5201 = vadd.f32 %v5180, %v5197
    %v5202 = vadd.f32 %v5183, %v5198
    %v5203 = vadd.f32 %v5186, %v5199
    %v5204 = vmul.f32 %v5200, 0.7978846
    %v5205 = vmul.f32 %v5201, 0.7978846
    %v5206 = vmul.f32 %v5202, 0.7978846
    %v5207 = vmul.f32 %v5203, 0.7978846
    %v5208 = vtanh.pop %v5204
    %v5209 = vtanh.pop %v5205
    %v5210 = vtanh.pop %v5206
    %v5211 = vtanh.pop %v5207
    %v5212 = vadd.f32 %v5208, 1.0
    %v5213 = vadd.f32 %v5209, 1.0
    %v5214 = vadd.f32 %v5210, 1.0
    %v5215 = vadd.f32 %v5211, 1.0
    %v5216 = vmul.f32 %v5212, 0.5
    %v5217 = vmul.f32 %v5213, 0.5
    %v5218 = vmul.f32 %v5214, 0.5
    %v5219 = vmul.f32 %v5215, 0.5
    %v5220 = vmul.f32 %v5177, %v5216
    %v5221 = vmul.f32 %v5180, %v5217
    %v5222 = vmul.f32 %v5183, %v5218
    %v5223 = vmul.f32 %v5186, %v5219
    %v5225 = vperm.slane %v5143, 0
    %5227 = vmatpush.msra.mxu0 %v5142
    %5228 = vmatpush.msra.mxu0 %v5141
    %5229 = vmatpush.msra.mxu0 %v5140
    %5230 = vmatpush.msra.mxu0 %v5139
    %5231 = vmatpush.msra.mxu0 %v5138
    %5232 = vmatpush.msra.mxu0 %v5137
    %5233 = vmatpush.msra.mxu0 %v5136
    %5234 = vmatpush.msra.mxu0 %v5135
    %5235 = vmatpush.msra.mxu0 %v5134
    %5236 = vmatpush.msra.mxu0 %v5133
    %5237 = vmatpush.msra.mxu0 %v5132
    %5238 = vmatpush.msra.mxu0 %v5131
    %5239 = vmatpush.msra.mxu0 %v5130
    %5240 = vmatpush.msra.mxu0 %v5129
    %5241 = vmatpush.msra.mxu0 %v5128
    %5242 = vmatpush.msra.mxu0 %v5127
    %5243 = vmatmul.f32.gmra.mxu0 %v5220
    %v5244 = vpop.f32.mrf.mxu0
    %v5245 = vadd.f32 %v5225, %v5244
    %5246 = vmatmul.f32.gmra.mxu0 %v5221
    %v5247 = vpop.f32.mrf.mxu0
    %v5248 = vadd.f32 %v5225, %v5247
    %5249 = vmatmul.f32.gmra.mxu0 %v5222
    %v5250 = vpop.f32.mrf.mxu0
    %v5251 = vadd.f32 %v5225, %v5250
    %5252 = vmatmul.f32.gmra.mxu0 %v5223
    %v5253 = vpop.f32.mrf.mxu0
    %v5254 = vadd.f32 %v5225, %v5253
    %5255 = vdwg.mxu0
    %v5256 = vadd.f32 %v5118, %v5245
    %v5257 = vadd.f32 %v5119, %v5248
    %v5258 = vadd.f32 %v5120, %v5251
    %v5259 = vadd.f32 %v5121, %v5254
    %v5260 = vld [vmem:[%s37] sm:$0x1]
    %v5261 = vld [vmem:[%s35] sm:$0x1]
    %v5262 = vsel %vm326, %v5256, 0.0
    %5263 = vadd.xlane.f32.xlu0 %v5262
    %v5264 = vpop.xlane.xlu0 %5263
    %v5265 = vsel %vm326, %v5257, 0.0
    %5266 = vadd.xlane.f32.xlu0 %v5265
    %v5267 = vpop.xlane.xlu0 %5266
    %v5268 = vsel %vm326, %v5258, 0.0
    %5269 = vadd.xlane.f32.xlu0 %v5268
    %v5270 = vpop.xlane.xlu0 %5269
    %v5271 = vsel %vm326, %v5259, 0.0
    %5272 = vadd.xlane.f32.xlu0 %v5271
    %v5273 = vpop.xlane.xlu0 %5272
    %v5274 = vmul.f32 %v5264, %v345
    %v5275 = vmul.f32 %v5267, %v345
    %v5276 = vmul.f32 %v5270, %v345
    %v5277 = vmul.f32 %v5273, %v345
    %v5278 = vsub.f32 %v5256, %v5274
    %v5279 = vsub.f32 %v5257, %v5275
    %v5280 = vsub.f32 %v5258, %v5276
    %v5281 = vsub.f32 %v5259, %v5277
    %v5282 = vmul.f32 %v5278, %v5278
    %v5283 = vmul.f32 %v5279, %v5279
    %v5284 = vmul.f32 %v5280, %v5280
    %v5285 = vmul.f32 %v5281, %v5281
    %v5286 = vsel %vm326, %v5282, 0.0
    %5287 = vadd.xlane.f32.xlu0 %v5286
    %v5288 = vpop.xlane.xlu0 %5287
    %v5289 = vsel %vm326, %v5283, 0.0
    %5290 = vadd.xlane.f32.xlu0 %v5289
    %v5291 = vpop.xlane.xlu0 %5290
    %v5292 = vsel %vm326, %v5284, 0.0
    %5293 = vadd.xlane.f32.xlu0 %v5292
    %v5294 = vpop.xlane.xlu0 %5293
    %v5295 = vsel %vm326, %v5285, 0.0
    %5296 = vadd.xlane.f32.xlu0 %v5295
    %v5297 = vpop.xlane.xlu0 %5296
    %v5298 = vmul.f32 %v5288, %v345
    %v5299 = vmul.f32 %v5291, %v345
    %v5300 = vmul.f32 %v5294, %v345
    %v5301 = vmul.f32 %v5297, %v345
    %v5302 = vadd.f32 %v5298, 1e-06
    %v5303 = vadd.f32 %v5299, 1e-06
    %v5304 = vadd.f32 %v5300, 1e-06
    %v5305 = vadd.f32 %v5301, 1e-06
    %v5306 = vrsqrt.pop %v5302
    %v5307 = vmul.f32 %v5306, %v5302
    %v5308 = vmul.f32 %v5307, %v5306
    %v5309 = vmul.f32 0.5, %v5308
    %v5310 = vsub.f32 1.5, %v5309
    %v5311 = vmul.f32 %v5306, %v5310
    %vm5312 = vweird.f32 %v5302
    %vm5313 = vweird.f32 %v5306
    %vm5314 = vmor %vm5312, %vm5313
    %v5315 = vsel %vm5314, %v5306, %v5311
    %v5316 = vrsqrt.pop %v5303
    %v5317 = vmul.f32 %v5316, %v5303
    %v5318 = vmul.f32 %v5317, %v5316
    %v5319 = vmul.f32 0.5, %v5318
    %v5320 = vsub.f32 1.5, %v5319
    %v5321 = vmul.f32 %v5316, %v5320
    %vm5322 = vweird.f32 %v5303
    %vm5323 = vweird.f32 %v5316
    %vm5324 = vmor %vm5322, %vm5323
    %v5325 = vsel %vm5324, %v5316, %v5321
    %v5326 = vrsqrt.pop %v5304
    %v5327 = vmul.f32 %v5326, %v5304
    %v5328 = vmul.f32 %v5327, %v5326
    %v5329 = vmul.f32 0.5, %v5328
    %v5330 = vsub.f32 1.5, %v5329
    %v5331 = vmul.f32 %v5326, %v5330
    %vm5332 = vweird.f32 %v5304
    %vm5333 = vweird.f32 %v5326
    %vm5334 = vmor %vm5332, %vm5333
    %v5335 = vsel %vm5334, %v5326, %v5331
    %v5336 = vrsqrt.pop %v5305
    %v5337 = vmul.f32 %v5336, %v5305
    %v5338 = vmul.f32 %v5337, %v5336
    %v5339 = vmul.f32 0.5, %v5338
    %v5340 = vsub.f32 1.5, %v5339
    %v5341 = vmul.f32 %v5336, %v5340
    %vm5342 = vweird.f32 %v5305
    %vm5343 = vweird.f32 %v5336
    %vm5344 = vmor %vm5342, %vm5343
    %v5345 = vsel %vm5344, %v5336, %v5341
    %v5346 = vmul.f32 %v5278, %v5315
    %v5347 = vmul.f32 %v5279, %v5325
    %v5348 = vmul.f32 %v5280, %v5335
    %v5349 = vmul.f32 %v5281, %v5345
    %v5351 = vperm.slane %v5260, 0
    %v5353 = vmul.f32 %v5346, %v5351
    %v5354 = vmul.f32 %v5347, %v5351
    %v5355 = vmul.f32 %v5348, %v5351
    %v5356 = vmul.f32 %v5349, %v5351
    %v5358 = vperm.slane %v5261, 0
    %v5360 = vadd.f32 %v5353, %v5358
    %v5361 = vadd.f32 %v5354, %v5358
    %v5362 = vadd.f32 %v5355, %v5358
    %v5363 = vadd.f32 %v5356, %v5358
    %5364 = vst.msk [vmem:[#allocation3] sm:$0x1] %vm296, %v5360
    %5365 = vst.msk [vmem:[#allocation3 + $0x1] sm:$0x1] %vm296, %v5361
    %5366 = vst.msk [vmem:[#allocation3 + $0x2] sm:$0x1] %vm296, %v5362
    %5367 = vst.msk [vmem:[#allocation3 + $0x3] sm:$0x1] %vm296, %v5363
    %v5368 = vld [vmem:[#allocation3] sm:$0xf]
    %v5369 = vld [vmem:[%s9] sm:$0xff]
    %v5370 = vld [vmem:[%s9 + $0x8] sm:$0xff]
    %v5371 = vld [vmem:[%s9 + $0x10] sm:$0xff]
    %v5372 = vld [vmem:[%s9 + $0x18] sm:$0xff]
    %v5373 = vld [vmem:[%s7] sm:$0x1]
    %v5375 = vperm.slane %v5373, 0
    %v5378 = vsel %vm326, %v5368, 0
    %5380 = vmatpush.msra.mxu0 0.0
    %5381 = vmatpush.msra.mxu0 0.0
    %5382 = vmatpush.msra.mxu0 0.0
    %5383 = vmatpush.msra.mxu0 0.0
    %5384 = vmatpush.msra.mxu0 0.0
    %5385 = vmatpush.msra.mxu0 0.0
    %5386 = vmatpush.msra.mxu0 0.0
    %5387 = vmatpush.msra.mxu0 0.0
    %5388 = vmatpush.msra.mxu0 0.0
    %5389 = vmatpush.msra.mxu0 0.0
    %5390 = vmatpush.msra.mxu0 0.0
    %5391 = vmatpush.msra.mxu0 0.0
    %5392 = vmatpush.msra.mxu0 %v5372
    %5393 = vmatpush.msra.mxu0 %v5371
    %5394 = vmatpush.msra.mxu0 %v5370
    %5395 = vmatpush.msra.mxu0 %v5369
    %5396 = vmatmul.f32.gmra.mxu0 %v5378
    %v5397 = vpop.f32.mrf.mxu0
    %v5398 = vadd.f32 %v5375, %v5397
    %5399 = vdwg.mxu0
    %5401 = vrot.lane.b32.xlu0 %v5398, 127
    %v5402 = vpop.permute.xlu0 %5401
    %vm5404 = vcmask 1024
    %5405 = vst.msk [vmem:[#allocation4] sm:$0x3] %vm5404, %v5402
    %vm5406 = vcmask 11274
    %5407 = vst.msk [vmem:[#allocation4 - $0x2] sm:$0xc] %vm5406, %v5398
    %v5408 = vld [vmem:[#allocation4] sm:$0x3]
    %vm5409 = vcmask 9216
    %v5410 = vsel %vm5409, %v5408, -inf
    %5411 = vmax.xlane.f32.xlu0 %v5410
    %v5412 = vpop.xlane.xlu0 %5411
    %v5413 = vsub.f32 %v5408, %v5412
    %v5414 = vmul.f32 %v5413, 1.442695
    %v5415 = vpow.pop %v5414
    %v5416 = vsel %vm5409, %v5415, 0.0
    %5417 = vadd.xlane.f32.xlu0 %v5416
    %v5418 = vpop.xlane.xlu0 %5417
    %v5419 = vrcp.pop %v5418
    %v5420 = vmul.f32 %v5418, %v5419
    %v5421 = vsub.f32 1.0, %v5420
    %v5422 = vmul.f32 %v5419, %v5421
    %v5423 = vadd.f32 %v5419, %v5422
    %vm5424 = vweird.f32 %v5418
    %vm5425 = vweird.f32 %v5419
    %vm5426 = vmor %vm5424, %vm5425
    %v5427 = vsel %vm5426, %v5419, %v5423
    %v5428 = vand.u32 2147483647, %v5418
    %vm5429 = vcmp.eq.f32.partialorder %v5428, 8.507059e+37
    %v5430 = vand.u32 %v5418, 2147483648
    %v5431 = vor.u32 1.1754944e-38, %v5430
    %v5432 = vsel %vm5429, %v5431, %v5427
    %v5433 = vmul.f32 %v5415, %v5432
    %5434 = vst.msk [vmem:[#allocation8] sm:$0x3] %vm5409, %v5433
    // Predicated region
    $region194: #{forward.1} parent=1 // pred_check
      _
    $region195: #{forward.1} parent=1 // pred_check_branch
      %5436 = sbr.rel (0) target = $region197
    $region196: #{forward.1} parent=1 // pred_region
      %5438 = vsyncadd [#allocation7], 0
      %s5440 = sshll.u32 [#allocation8], 4
      %s5441 = int_to_ptr.vmem [resolvable:$true] %s5440
      %s5442 = sshll.u32 %s95, 4
      %s5443 = int_to_ptr.hbm [resolvable:$true] %s5442
      %5445 = dma.vmem_to_hbm [thread:$0]  %s5441, 32, %s5443, [#allocation7]
    $region197: #{forward.1} parent=1 // pred_fallthru
      _
    // Predicated region
    $region198: #{forward.1} parent=1 // pred_check
      _
    $region199: #{forward.1} parent=1 // pred_check_branch
      %5447 = sbr.rel (0) target = $region201
    $region200: #{forward.1} parent=1 // pred_region
      %5449 = dma.done [#allocation7], 32
    $region201: #{forward.1} parent=1 // pred_fallthru
      _
    %5450 = vsyncpa [#allocation6], 1
    %5451 = vsyncpa [#allocation7], 1

</llo_original>
